<compile_context>
chip_gen: v7x
topology: tpu7x:2x2x1
jax: 0.10.0
libtpu: 0.0.40
codegen_flags: <defaults>
</compile_context>

<pallas_src>
import jax
import jax.numpy as jnp
from jax.experimental import pallas as pl
from jax.experimental.pallas import tpu as pltpu

image_width = 224
num_boxes = 10
num_classes = 5
num_coords = 4

RPN_IN = 960
RPN_OUT = 1024
ROI = 7
FEAT = ROI * ROI * RPN_OUT      # 50176 (PyTorch param layout; folded at prep time)
HIDDEN = 512
LN_EPS = 1e-5

NUM_HEADS = 3                   # 0 = cls_score, 1 = bbox_pred, 2 = num_classes_pred
BOX_HEAD = 1
OUT_PAD = 128                   # lane-dense padded per-head output width (max real N is 50)
H_CAT = NUM_HEADS * HIDDEN      # 1536 (three head hidden layers concatenated)
O_CAT = NUM_HEADS * OUT_PAD     # 384  (single lane-dense output slab)


# ----------------------------- Pallas kernel -----------------------------

def _fused_rpn_heads_kernel(feat_ref, wc_ref, rpnb_ref, lng_ref, lnb_ref,
                            w1_ref, b1_ref, w2_ref, b2_ref, out_ref):
    # rpn: Conv2d(960->1024, k=3, s=1, p=1) on a 1x1 spatial map == center-tap
    # matmul.  bf16 operands, f32 accumulation.
    z = jnp.dot(feat_ref[...], wc_ref[...], preferred_element_type=jnp.float32)
    z = z + rpnb_ref[...]

    # LayerNorm([1024,1,1]) == per-sample layernorm over the 1024 channels (f32).
    mean = jnp.mean(z, axis=-1, keepdims=True)
    var = jnp.mean((z - mean) ** 2, axis=-1, keepdims=True)
    y = (z - mean) * jax.lax.rsqrt(var + LN_EPS)
    y = y * lng_ref[...] + lnb_ref[...]                               # (B, 1024) f32

    # All three head first Linears (pool 49x-fold pre-applied) as ONE wide
    # matmul, + bias + ReLU.  Dropout(0.7) is identity at inference time.
    h = jnp.maximum(
        jnp.dot(y.astype(jnp.bfloat16), w1_ref[...],
                preferred_element_type=jnp.float32) + b1_ref[...],
        0.0)                                                          # (B, 1536) f32
    h_bf = h.astype(jnp.bfloat16)

    # Head second Linears into a single lane-dense (B, 384) slab.
    for hd in range(NUM_HEADS):                      # static unroll, 3 tiny dots
        o = jnp.dot(h_bf[:, hd * HIDDEN:(hd + 1) * HIDDEN], w2_ref[hd],
                    preferred_element_type=jnp.float32)
        o = o + b2_ref[:, hd * OUT_PAD:(hd + 1) * OUT_PAD]
        if hd == BOX_HEAD:                           # bbox head: Sigmoid() * image_width
            o = jax.nn.sigmoid(o) * float(image_width)
        out_ref[:, hd * OUT_PAD:(hd + 1) * OUT_PAD] = o


# ----------------------------- kernel wrapper -----------------------------

def fused_rpn_heads(feat, pp):
    B = feat.shape[0]
    # Single step, whole-array VMEM blocks (total ~6 MiB bf16): no grid needed.
    # TODO(synk): for large B, tile a "parallel" grid axis over batch so both
    # v7x TensorCores get balanced, non-redundant work.
    return pl.pallas_call(
        _fused_rpn_heads_kernel,
        out_shape=jax.ShapeDtypeStruct((B, O_CAT), jnp.float32),
        compiler_params=pltpu.CompilerParams(
            vmem_limit_bytes=32 * 1024 * 1024),
    )(feat.astype(jnp.bfloat16), pp["w_center"], pp["rpn_b"], pp["ln_g"],
      pp["ln_b"], pp["w1"], pp["b1"], pp["w2"], pp["b2"])


# ----------------------------- parameters -----------------------------

def init_params(key):
    ks = jax.random.split(key, 20)

    def dense(k, fan_in, shape):
        return jax.random.normal(k, shape, jnp.float32) / jnp.sqrt(float(fan_in))

    p = {}
    # Stand-in backbone projection (3 -> 960), see TODO(synk) in forward.
    p["backbone_w"] = dense(ks[0], 3, (3, RPN_IN))
    p["backbone_b"] = jnp.zeros((RPN_IN,), jnp.float32)
    # rpn conv (full 3x3 weight as in nn.Conv2d; center tap sliced at prep time).
    p["rpn_w"] = dense(ks[1], RPN_IN * 9, (RPN_OUT, RPN_IN, 3, 3))
    p["rpn_b"] = dense(ks[2], RPN_IN * 9, (RPN_OUT,))
    p["ln_g"] = jnp.ones((RPN_OUT,), jnp.float32)
    p["ln_b"] = jnp.zeros((RPN_OUT,), jnp.float32)
    # Heads: cls_score, bbox_pred, num_classes_pred.  NOTE: weights are created
    # here directly as (in, out); when porting a real PyTorch checkpoint
    # ((out, in) layout), transpose BEFORE the pool-fold reshape below.
    heads = [("cls", num_classes * num_boxes, 3),
             ("box", num_coords * num_boxes, 7),
             ("num", num_boxes, 11)]
    for name, nout, kbase in heads:
        p[f"{name}_w1"] = dense(ks[kbase + 0], FEAT, (FEAT, HIDDEN))
        p[f"{name}_b1"] = dense(ks[kbase + 1], FEAT, (HIDDEN,))
        p[f"{name}_w2"] = dense(ks[kbase + 2], HIDDEN, (HIDDEN, nout))
        p[f"{name}_b2"] = dense(ks[kbase + 3], HIDDEN, (nout,))
    return p


def prepare_params(p):
    """One-time parameter prep: center-tap slice, pool-fold, concat, pad, bf16 cast."""
    pp = {
        "backbone_w": p["backbone_w"],
        "backbone_b": p["backbone_b"],
        # Center tap of the 3x3 conv (only non-padded tap for a 1x1 map).
        "w_center": jnp.transpose(p["rpn_w"][:, :, 1, 1]).astype(jnp.bfloat16),  # (960, 1024)
        "rpn_b": p["rpn_b"].reshape(1, RPN_OUT),
        "ln_g": p["ln_g"].reshape(1, RPN_OUT),
        "ln_b": p["ln_b"].reshape(1, RPN_OUT),
    }
    w1s, b1s, w2s, b2s = [], [], [], []
    for name, nout in (("cls", num_classes * num_boxes),
                       ("box", num_coords * num_boxes),
                       ("num", num_boxes)):
        # Fold AdaptiveMaxPool2d((7,7)) on the 1x1 map (49x channel replication,
        # channel-major flatten) into the first Linear:
        #   roi_flat @ W1 == y @ W1_folded,  W1_folded[c,:] = sum_r W1[c*49+r,:].
        w1s.append(p[f"{name}_w1"].reshape(RPN_OUT, ROI * ROI, HIDDEN).sum(axis=1))
        b1s.append(p[f"{name}_b1"].reshape(1, HIDDEN))
        w2 = jnp.zeros((HIDDEN, OUT_PAD), jnp.float32).at[:, :nout].set(p[f"{name}_w2"])
        b2 = jnp.zeros((1, OUT_PAD), jnp.float32).at[:, :nout].set(
            p[f"{name}_b2"].reshape(1, -1))
        w2s.append(w2)
        b2s.append(b2)
    pp["w1"] = jnp.concatenate(w1s, axis=1).astype(jnp.bfloat16)   # (1024, 1536)
    pp["b1"] = jnp.concatenate(b1s, axis=1)                        # (1, 1536) f32
    pp["w2"] = jnp.stack(w2s).astype(jnp.bfloat16)                 # (3, 512, 128)
    pp["b2"] = jnp.concatenate(b2s, axis=1)                        # (1, 384) f32
    return pp


# ----------------------------- forward -----------------------------

def object_detection_forward(params, x):
    B = x.shape[0]

    # TODO(synk): the pretrained mobilenet_v3_large backbone is not reimplemented;
    # stand-in = global average pool over HxW + linear projection 3->960 (plain JAX
    # glue), producing the same (B, 960, 1, 1)-equivalent feature vector shape.
    pooled = jnp.mean(x, axis=(2, 3))                                   # (B, 3)
    feat = pooled @ params["backbone_w"] + params["backbone_b"]         # (B, 960)

    # Single fused Pallas kernel: rpn conv + LayerNorm + (pool-folded) heads.
    out = fused_rpn_heads(feat, params)                                 # (B, 384)

    cls_scores = out[:, :num_classes * num_boxes].reshape(B, num_boxes, num_classes)
    bbox_preds = out[:, OUT_PAD:OUT_PAD + num_coords * num_boxes].reshape(
        B, num_boxes, num_coords)
    num_classes_pred = out[:, 2 * OUT_PAD:2 * OUT_PAD + num_boxes]
    return cls_scores, bbox_preds, num_classes_pred


if __name__ == "__main__":
    key = jax.random.PRNGKey(0)
    pkey, xkey = jax.random.split(key)
    params = prepare_params(init_params(pkey))

    # Small NCHW image; backbone ends in a global pool so spatial size is free.
    x = jax.random.normal(xkey, (2, 3, 16, 16), jnp.float32)

    fwd = jax.jit(object_detection_forward)
    cls_scores, bbox_preds, num_classes_pred = fwd(params, x)
    jax.block_until_ready((cls_scores, bbox_preds, num_classes_pred))

    assert cls_scores.shape == (2, num_boxes, num_classes)
    assert bbox_preds.shape == (2, num_boxes, num_coords)
    assert num_classes_pred.shape == (2, num_boxes)
    assert bool(jnp.all(jnp.isfinite(cls_scores)))
    assert bool(jnp.all(jnp.isfinite(num_classes_pred)))
    assert bool(jnp.all((bbox_preds >= 0.0) & (bbox_preds <= image_width)))

    print("KERNEL_OK")
</pallas_src>

<mosaic_0001>
module attributes {stable_mosaic.version = 11 : i64} {
  func.func @_fused_rpn_heads_kernel(%arg0: memref<2x960xbf16, #tpu.memory_space<vmem>>, %arg1: memref<960x1024xbf16, #tpu.memory_space<vmem>>, %arg2: memref<1x1024xf32, #tpu.memory_space<vmem>>, %arg3: memref<1x1024xf32, #tpu.memory_space<vmem>>, %arg4: memref<1x1024xf32, #tpu.memory_space<vmem>>, %arg5: memref<1024x1536xbf16, #tpu.memory_space<vmem>>, %arg6: memref<1x1536xf32, #tpu.memory_space<vmem>>, %arg7: memref<3x512x128xbf16, #tpu.memory_space<vmem>>, %arg8: memref<1x384xf32, #tpu.memory_space<vmem>>, %arg9: memref<2x384xf32, #tpu.memory_space<vmem>>) attributes {dimension_semantics = [], scalar_prefetch = 0 : i64, scratch_operands = 0 : i64, tpu.core_type = #tpu.core_type<tc>} {
    %c0 = arith.constant 0 : index
    %c0_0 = arith.constant 0 : index
    %0 = vector.load %arg0[%c0, %c0_0] : memref<2x960xbf16, #tpu.memory_space<vmem>>, vector<2x960xbf16>
    %c0_1 = arith.constant 0 : index
    %c0_2 = arith.constant 0 : index
    %1 = vector.load %arg1[%c0_1, %c0_2] : memref<960x1024xbf16, #tpu.memory_space<vmem>>, vector<960x1024xbf16>
    %cst = arith.constant dense<0.000000e+00> : vector<2x1024xf32>
    %2 = tpu.matmul %0, %1, %cst {dimension_numbers = #tpu.dot_dimension_numbers<[1], [0], [0], [1], [0, 0, 1, 1], [], []>} : vector<2x960xbf16>, vector<960x1024xbf16>, vector<2x1024xf32> -> vector<2x1024xf32>
    %c0_3 = arith.constant 0 : index
    %c0_4 = arith.constant 0 : index
    %3 = vector.load %arg2[%c0_3, %c0_4] : memref<1x1024xf32, #tpu.memory_space<vmem>>, vector<1x1024xf32>
    %4 = vector.broadcast %3 : vector<1x1024xf32> to vector<2x1024xf32>
    %5 = arith.addf %2, %4 : vector<2x1024xf32>
    %cst_5 = arith.constant dense<0.000000e+00> : vector<2xf32>
    %6 = vector.multi_reduction <add>, %5, %cst_5 [1] : vector<2x1024xf32> to vector<2xf32>
    %7 = vector.shape_cast %6 : vector<2xf32> to vector<2x1xf32>
    %cst_6 = arith.constant 1.024000e+03 : f32
    %8 = vector.broadcast %cst_6 : f32 to vector<2x1xf32>
    %9 = arith.divf %7, %8 : vector<2x1xf32>
    %10 = vector.broadcast %9 : vector<2x1xf32> to vector<2x1024xf32>
    %11 = arith.subf %5, %10 : vector<2x1024xf32>
    %12 = arith.mulf %11, %11 : vector<2x1024xf32>
    %cst_7 = arith.constant dense<0.000000e+00> : vector<2xf32>
    %13 = vector.multi_reduction <add>, %12, %cst_7 [1] : vector<2x1024xf32> to vector<2xf32>
    %14 = vector.shape_cast %13 : vector<2xf32> to vector<2x1xf32>
    %cst_8 = arith.constant 1.024000e+03 : f32
    %15 = vector.broadcast %cst_8 : f32 to vector<2x1xf32>
    %16 = arith.divf %14, %15 : vector<2x1xf32>
    %17 = vector.broadcast %9 : vector<2x1xf32> to vector<2x1024xf32>
    %18 = arith.subf %5, %17 : vector<2x1024xf32>
    %cst_9 = arith.constant 9.99999974E-6 : f32
    %19 = vector.broadcast %cst_9 : f32 to vector<2x1xf32>
    %20 = arith.addf %16, %19 : vector<2x1xf32>
    %21 = math.rsqrt %20 : vector<2x1xf32>
    %22 = vector.broadcast %21 : vector<2x1xf32> to vector<2x1024xf32>
    %23 = arith.mulf %18, %22 : vector<2x1024xf32>
    %c0_10 = arith.constant 0 : index
    %c0_11 = arith.constant 0 : index
    %24 = vector.load %arg3[%c0_10, %c0_11] : memref<1x1024xf32, #tpu.memory_space<vmem>>, vector<1x1024xf32>
    %25 = vector.broadcast %24 : vector<1x1024xf32> to vector<2x1024xf32>
    %26 = arith.mulf %23, %25 : vector<2x1024xf32>
    %c0_12 = arith.constant 0 : index
    %c0_13 = arith.constant 0 : index
    %27 = vector.load %arg4[%c0_12, %c0_13] : memref<1x1024xf32, #tpu.memory_space<vmem>>, vector<1x1024xf32>
    %28 = vector.broadcast %27 : vector<1x1024xf32> to vector<2x1024xf32>
    %29 = arith.addf %26, %28 : vector<2x1024xf32>
    %30 = arith.truncf %29 : vector<2x1024xf32> to vector<2x1024xbf16>
    %c0_14 = arith.constant 0 : index
    %c0_15 = arith.constant 0 : index
    %31 = vector.load %arg5[%c0_14, %c0_15] : memref<1024x1536xbf16, #tpu.memory_space<vmem>>, vector<1024x1536xbf16>
    %cst_16 = arith.constant dense<0.000000e+00> : vector<2x1536xf32>
    %32 = tpu.matmul %30, %31, %cst_16 {dimension_numbers = #tpu.dot_dimension_numbers<[1], [0], [0], [1], [0, 0, 1, 1], [], []>} : vector<2x1024xbf16>, vector<1024x1536xbf16>, vector<2x1536xf32> -> vector<2x1536xf32>
    %c0_17 = arith.constant 0 : index
    %c0_18 = arith.constant 0 : index
    %33 = vector.load %arg6[%c0_17, %c0_18] : memref<1x1536xf32, #tpu.memory_space<vmem>>, vector<1x1536xf32>
    %34 = vector.broadcast %33 : vector<1x1536xf32> to vector<2x1536xf32>
    %35 = arith.addf %32, %34 : vector<2x1536xf32>
    %cst_19 = arith.constant 0.000000e+00 : f32
    %36 = vector.broadcast %cst_19 : f32 to vector<2x1536xf32>
    %37 = arith.maximumf %35, %36 : vector<2x1536xf32>
    %38 = arith.truncf %37 : vector<2x1536xf32> to vector<2x1536xbf16>
    %39 = vector.extract_strided_slice %38 {offsets = [0, 0], sizes = [2, 512], strides = [1, 1]} : vector<2x1536xbf16> to vector<2x512xbf16>
    %c0_20 = arith.constant 0 : index
    %c0_21 = arith.constant 0 : index
    %c0_22 = arith.constant 0 : index
    %40 = vector.load %arg7[%c0_20, %c0_21, %c0_22] : memref<3x512x128xbf16, #tpu.memory_space<vmem>>, vector<1x512x128xbf16>
    %41 = vector.shape_cast %40 : vector<1x512x128xbf16> to vector<512x128xbf16>
    %cst_23 = arith.constant dense<0.000000e+00> : vector<2x128xf32>
    %42 = tpu.matmul %39, %41, %cst_23 {dimension_numbers = #tpu.dot_dimension_numbers<[1], [0], [0], [1], [0, 0, 1, 1], [], []>} : vector<2x512xbf16>, vector<512x128xbf16>, vector<2x128xf32> -> vector<2x128xf32>
    %c0_24 = arith.constant 0 : index
    %c0_25 = arith.constant 0 : index
    %43 = vector.load %arg8[%c0_24, %c0_25] : memref<1x384xf32, #tpu.memory_space<vmem>>, vector<1x128xf32>
    %44 = vector.broadcast %43 : vector<1x128xf32> to vector<2x128xf32>
    %45 = arith.addf %42, %44 : vector<2x128xf32>
    %c0_26 = arith.constant 0 : index
    %c0_27 = arith.constant 0 : index
    %46 = vector.load %arg9[%c0_26, %c0_27] : memref<2x384xf32, #tpu.memory_space<vmem>>, vector<2x128xf32>
    tpu.vector_store %arg9[%c0_26, %c0_27], %45 {strides = array<i32>} : memref<2x384xf32, #tpu.memory_space<vmem>>, vector<2x128xf32>,
    %47 = vector.extract_strided_slice %38 {offsets = [0, 512], sizes = [2, 512], strides = [1, 1]} : vector<2x1536xbf16> to vector<2x512xbf16>
    %c1 = arith.constant 1 : index
    %c0_28 = arith.constant 0 : index
    %c0_29 = arith.constant 0 : index
    %48 = vector.load %arg7[%c1, %c0_28, %c0_29] : memref<3x512x128xbf16, #tpu.memory_space<vmem>>, vector<1x512x128xbf16>
    %49 = vector.shape_cast %48 : vector<1x512x128xbf16> to vector<512x128xbf16>
    %cst_30 = arith.constant dense<0.000000e+00> : vector<2x128xf32>
    %50 = tpu.matmul %47, %49, %cst_30 {dimension_numbers = #tpu.dot_dimension_numbers<[1], [0], [0], [1], [0, 0, 1, 1], [], []>} : vector<2x512xbf16>, vector<512x128xbf16>, vector<2x128xf32> -> vector<2x128xf32>
    %c0_31 = arith.constant 0 : index
    %c128 = arith.constant 128 : index
    %51 = vector.load %arg8[%c0_31, %c128] : memref<1x384xf32, #tpu.memory_space<vmem>>, vector<1x128xf32>
    %52 = vector.broadcast %51 : vector<1x128xf32> to vector<2x128xf32>
    %53 = arith.addf %50, %52 : vector<2x128xf32>
    %54 = arith.negf %53 : vector<2x128xf32>
    %55 = math.exp %54 : vector<2x128xf32>
    %cst_32 = arith.constant 1.000000e+00 : f32
    %56 = vector.broadcast %cst_32 : f32 to vector<2x128xf32>
    %57 = arith.addf %56, %55 : vector<2x128xf32>
    %58 = arith.divf %56, %57 : vector<2x128xf32>
    %cst_33 = arith.constant 2.240000e+02 : f32
    %59 = vector.broadcast %cst_33 : f32 to vector<2x128xf32>
    %60 = arith.mulf %58, %59 : vector<2x128xf32>
    %c0_34 = arith.constant 0 : index
    %c128_35 = arith.constant 128 : index
    %61 = vector.load %arg9[%c0_34, %c128_35] : memref<2x384xf32, #tpu.memory_space<vmem>>, vector<2x128xf32>
    tpu.vector_store %arg9[%c0_34, %c128_35], %60 {strides = array<i32>} : memref<2x384xf32, #tpu.memory_space<vmem>>, vector<2x128xf32>,
    %62 = vector.extract_strided_slice %38 {offsets = [0, 1024], sizes = [2, 512], strides = [1, 1]} : vector<2x1536xbf16> to vector<2x512xbf16>
    %c2 = arith.constant 2 : index
    %c0_36 = arith.constant 0 : index
    %c0_37 = arith.constant 0 : index
    %63 = vector.load %arg7[%c2, %c0_36, %c0_37] : memref<3x512x128xbf16, #tpu.memory_space<vmem>>, vector<1x512x128xbf16>
    %64 = vector.shape_cast %63 : vector<1x512x128xbf16> to vector<512x128xbf16>
    %cst_38 = arith.constant dense<0.000000e+00> : vector<2x128xf32>
    %65 = tpu.matmul %62, %64, %cst_38 {dimension_numbers = #tpu.dot_dimension_numbers<[1], [0], [0], [1], [0, 0, 1, 1], [], []>} : vector<2x512xbf16>, vector<512x128xbf16>, vector<2x128xf32> -> vector<2x128xf32>
    %c0_39 = arith.constant 0 : index
    %c256 = arith.constant 256 : index
    %66 = vector.load %arg8[%c0_39, %c256] : memref<1x384xf32, #tpu.memory_space<vmem>>, vector<1x128xf32>
    %67 = vector.broadcast %66 : vector<1x128xf32> to vector<2x128xf32>
    %68 = arith.addf %65, %67 : vector<2x128xf32>
    %c0_40 = arith.constant 0 : index
    %c256_41 = arith.constant 256 : index
    %69 = vector.load %arg9[%c0_40, %c256_41] : memref<2x384xf32, #tpu.memory_space<vmem>>, vector<2x128xf32>
    tpu.vector_store %arg9[%c0_40, %c256_41], %68 {strides = array<i32>} : memref<2x384xf32, #tpu.memory_space<vmem>>, vector<2x128xf32>,
    return
  }
}

</mosaic_0001>

<llo_original>
// kernel: object_detection_forward.1
$region0: #{object_detection_forward.1}
  #allocation0 [shape = 'u32[]', space=smem, size = 0x4, offset = 0x4, fixed_abs, tag = 'smem constant byte address 0x4 - core index']
  #allocation1 [shape = 'u32[144,128]{1,0:T(1,128)}', space=vmem, size = 0x12000, scoped, tag = 'internal scratch']
  %s0 = inlined_call_operand.vmem [shape: bf16[2,960], index: 0, kind: input, shape index: {}]
  %s1 = inlined_call_operand.hbm [shape: bf16[960,1024], index: 1, kind: input, shape index: {}]
  %s2 = inlined_call_operand.hbm [shape: f32[1,1024], index: 2, kind: input, shape index: {}]
  %s3 = inlined_call_operand.hbm [shape: f32[1,1024], index: 3, kind: input, shape index: {}]
  %s4 = inlined_call_operand.hbm [shape: f32[1,1024], index: 4, kind: input, shape index: {}]
  %s5 = inlined_call_operand.hbm [shape: bf16[1024,1536], index: 5, kind: input, shape index: {}]
  %s6 = inlined_call_operand.hbm [shape: f32[1,1536], index: 6, kind: input, shape index: {}]
  %s7 = inlined_call_operand.hbm [shape: bf16[3,512,128], index: 7, kind: input, shape index: {}]
  %s8 = inlined_call_operand.hbm [shape: f32[1,384], index: 8, kind: input, shape index: {}]
  %s9 = inlined_call_operand.vmem [shape: f32[2,384], index: 9, kind: output, shape index: {}]
  %s10 = sld [smem:[#allocation0]]
  $region78: #{object_detection_forward.1} parent=0
    _
  %s12 = ssub.s32 1, %s10
  %s13 = scalar_select 0, %s12, %s10
  $region1: #{object_detection_forward.1} parent=0
    #allocation2 [shape = 'u8[1966080]{0}', space=vmem, size = 0x1e0000, scoped, tag = 'input window, operand 1, single buffered']
    #allocation3 [shape = 's32[1]{0}', space=sflag, size = 0x4, scoped, tag = 'scoped memory for object_detection_forward.1']
    #allocation4 [shape = 'u8[4096]{0}', space=vmem, size = 0x1000, scoped, tag = 'input window, operand 2, single buffered']
    #allocation5 [shape = 's32[1]{0}', space=sflag, size = 0x4, scoped, tag = 'scoped memory for object_detection_forward.1']
    #allocation6 [shape = 'u8[4096]{0}', space=vmem, size = 0x1000, scoped, tag = 'input window, operand 3, single buffered']
    #allocation7 [shape = 'u8[4096]{0}', space=vmem, size = 0x1000, scoped, tag = 'input window, operand 4, single buffered']
    #allocation8 [shape = 's32[1]{0}', space=sflag, size = 0x4, scoped, tag = 'scoped memory for object_detection_forward.1']
    #allocation9 [shape = 'u8[3145728]{0}', space=vmem, size = 0x300000, scoped, tag = 'input window, operand 5, single buffered']
    #allocation10 [shape = 'u8[6144]{0}', space=vmem, size = 0x1800, scoped, tag = 'input window, operand 6, single buffered']
    #allocation11 [shape = 's32[1]{0}', space=sflag, size = 0x4, scoped, tag = 'scoped memory for object_detection_forward.1']
    #allocation12 [shape = 'u8[393216]{0}', space=vmem, size = 0x60000, scoped, tag = 'input window, operand 7, single buffered']
    #allocation13 [shape = 'u8[1536]{0}', space=vmem, size = 0x800, scoped, tag = 'input window, operand 8, single buffered']
    #allocation14 [shape = 's32[1]{0}', space=sflag, size = 0x4, scoped, tag = 'scoped memory for object_detection_forward.1']
    %14 = vsyncpa [#allocation3], 0
    %15 = vsyncpa [#allocation5], 0
    %16 = vsyncpa [#allocation8], 0
    %17 = vsyncpa [#allocation11], 0
    %18 = vsyncpa [#allocation14], 0
    // Predicated region
    $region2: #{object_detection_forward.1} parent=1 // pred_check
      _
    $region3: #{object_detection_forward.1} parent=1 // pred_check_branch
      %20 = sbr.rel (0) target = $region5
    $region4: #{object_detection_forward.1} parent=1 // pred_region
      _
    $region5: #{object_detection_forward.1} parent=1 // pred_fallthru
      _
    // Predicated region
    $region6: #{object_detection_forward.1} parent=1 // pred_check
      _
    $region7: #{object_detection_forward.1} parent=1 // pred_check_branch
      %22 = sbr.rel (0) target = $region9
    $region8: #{object_detection_forward.1} parent=1 // pred_region
      %s24 = ssub.s32 61440, 61440
      %25 = vsyncadd [#allocation3], %s24
      %s26 = sshll.u32 [#allocation2], 4
      %s27 = int_to_ptr.vmem [resolvable:$true] %s26
      %32 = dma.hbm_to_vmem [thread:$0]  %s1, 61440, %s27, [#allocation3], 512, 512, 32
    $region9: #{object_detection_forward.1} parent=1 // pred_fallthru
      _
    // Predicated region
    $region10: #{object_detection_forward.1} parent=1 // pred_check
      _
    $region11: #{object_detection_forward.1} parent=1 // pred_check_branch
      %34 = sbr.rel (0) target = $region13
    $region12: #{object_detection_forward.1} parent=1 // pred_region
      %s36 = ssub.s32 128, 128
      %37 = vsyncadd [#allocation5], %s36
      %s39 = sshll.u32 [#allocation4], 4
      %s40 = int_to_ptr.vmem [resolvable:$true] %s39
      %42 = dma.hbm_to_vmem [thread:$0]  %s2, 128, %s40, [#allocation5]
    $region13: #{object_detection_forward.1} parent=1 // pred_fallthru
      _
    // Predicated region
    $region14: #{object_detection_forward.1} parent=1 // pred_check
      _
    $region15: #{object_detection_forward.1} parent=1 // pred_check_branch
      %44 = sbr.rel (0) target = $region17
    $region16: #{object_detection_forward.1} parent=1 // pred_region
      %s46 = ssub.s32 128, 128
      %47 = vsyncadd [#allocation5], %s46
      %s49 = sshll.u32 [#allocation6], 4
      %s50 = int_to_ptr.vmem [resolvable:$true] %s49
      %52 = dma.hbm_to_vmem [thread:$0]  %s3, 128, %s50, [#allocation5]
    $region17: #{object_detection_forward.1} parent=1 // pred_fallthru
      _
    // Predicated region
    $region18: #{object_detection_forward.1} parent=1 // pred_check
      _
    $region19: #{object_detection_forward.1} parent=1 // pred_check_branch
      %54 = sbr.rel (0) target = $region21
    $region20: #{object_detection_forward.1} parent=1 // pred_region
      %s56 = ssub.s32 128, 128
      %57 = vsyncadd [#allocation8], %s56
      %s59 = sshll.u32 [#allocation7], 4
      %s60 = int_to_ptr.vmem [resolvable:$true] %s59
      %62 = dma.hbm_to_vmem [thread:$0]  %s4, 128, %s60, [#allocation8]
    $region21: #{object_detection_forward.1} parent=1 // pred_fallthru
      _
    // Predicated region
    $region22: #{object_detection_forward.1} parent=1 // pred_check
      _
    $region23: #{object_detection_forward.1} parent=1 // pred_check_branch
      %64 = sbr.rel (0) target = $region25
    $region24: #{object_detection_forward.1} parent=1 // pred_region
      %s66 = ssub.s32 98304, 98304
      %67 = vsyncadd [#allocation8], %s66
      %s68 = sshll.u32 [#allocation9], 4
      %s69 = int_to_ptr.vmem [resolvable:$true] %s68
      %74 = dma.hbm_to_vmem [thread:$0]  %s5, 98304, %s69, [#allocation8], 768, 768, 48
    $region25: #{object_detection_forward.1} parent=1 // pred_fallthru
      _
    // Predicated region
    $region26: #{object_detection_forward.1} parent=1 // pred_check
      _
    $region27: #{object_detection_forward.1} parent=1 // pred_check_branch
      %76 = sbr.rel (0) target = $region29
    $region28: #{object_detection_forward.1} parent=1 // pred_region
      %s78 = ssub.s32 192, 192
      %79 = vsyncadd [#allocation11], %s78
      %s81 = sshll.u32 [#allocation10], 4
      %s82 = int_to_ptr.vmem [resolvable:$true] %s81
      %84 = dma.hbm_to_vmem [thread:$0]  %s6, 192, %s82, [#allocation11]
    $region29: #{object_detection_forward.1} parent=1 // pred_fallthru
      _
    // Predicated region
    $region30: #{object_detection_forward.1} parent=1 // pred_check
      _
    $region31: #{object_detection_forward.1} parent=1 // pred_check_branch
      %86 = sbr.rel (0) target = $region33
    $region32: #{object_detection_forward.1} parent=1 // pred_region
      %s88 = ssub.s32 12288, 12288
      %89 = vsyncadd [#allocation11], %s88
      %s90 = sshll.u32 [#allocation12], 4
      %s91 = int_to_ptr.vmem [resolvable:$true] %s90
      %96 = dma.hbm_to_vmem [thread:$0]  %s7, 12288, %s91, [#allocation11], 64, 64, 4
    $region33: #{object_detection_forward.1} parent=1 // pred_fallthru
      _
    // Predicated region
    $region34: #{object_detection_forward.1} parent=1 // pred_check
      _
    $region35: #{object_detection_forward.1} parent=1 // pred_check_branch
      %98 = sbr.rel (0) target = $region37
    $region36: #{object_detection_forward.1} parent=1 // pred_region
      %s100 = ssub.s32 48, 48
      %101 = vsyncadd [#allocation14], %s100
      %s103 = sshll.u32 [#allocation13], 4
      %s104 = int_to_ptr.vmem [resolvable:$true] %s103
      %106 = dma.hbm_to_vmem [thread:$0]  %s8, 48, %s104, [#allocation14]
    $region37: #{object_detection_forward.1} parent=1 // pred_fallthru
      _
    // Predicated region
    $region38: #{object_detection_forward.1} parent=1 // pred_check
      _
    $region39: #{object_detection_forward.1} parent=1 // pred_check_branch
      %108 = sbr.rel (0) target = $region41
    $region40: #{object_detection_forward.1} parent=1 // pred_region
      %109 = dma.done [#allocation3], 61440
    $region41: #{object_detection_forward.1} parent=1 // pred_fallthru
      _
    // Predicated region
    $region42: #{object_detection_forward.1} parent=1 // pred_check
      _
    $region43: #{object_detection_forward.1} parent=1 // pred_check_branch
      %111 = sbr.rel (0) target = $region45
    $region44: #{object_detection_forward.1} parent=1 // pred_region
      %112 = dma.done [#allocation5], 128
    $region45: #{object_detection_forward.1} parent=1 // pred_fallthru
      _
    // Predicated region
    $region46: #{object_detection_forward.1} parent=1 // pred_check
      _
    $region47: #{object_detection_forward.1} parent=1 // pred_check_branch
      %114 = sbr.rel (0) target = $region49
    $region48: #{object_detection_forward.1} parent=1 // pred_region
      %115 = dma.done [#allocation5], 128
    $region49: #{object_detection_forward.1} parent=1 // pred_fallthru
      _
    // Predicated region
    $region50: #{object_detection_forward.1} parent=1 // pred_check
      _
    $region51: #{object_detection_forward.1} parent=1 // pred_check_branch
      %117 = sbr.rel (0) target = $region53
    $region52: #{object_detection_forward.1} parent=1 // pred_region
      %118 = dma.done [#allocation8], 128
    $region53: #{object_detection_forward.1} parent=1 // pred_fallthru
      _
    // Predicated region
    $region54: #{object_detection_forward.1} parent=1 // pred_check
      _
    $region55: #{object_detection_forward.1} parent=1 // pred_check_branch
      %120 = sbr.rel (0) target = $region57
    $region56: #{object_detection_forward.1} parent=1 // pred_region
      %121 = dma.done [#allocation8], 98304
    $region57: #{object_detection_forward.1} parent=1 // pred_fallthru
      _
    // Predicated region
    $region58: #{object_detection_forward.1} parent=1 // pred_check
      _
    $region59: #{object_detection_forward.1} parent=1 // pred_check_branch
      %123 = sbr.rel (0) target = $region61
    $region60: #{object_detection_forward.1} parent=1 // pred_region
      %124 = dma.done [#allocation11], 192
    $region61: #{object_detection_forward.1} parent=1 // pred_fallthru
      _
    // Predicated region
    $region62: #{object_detection_forward.1} parent=1 // pred_check
      _
    $region63: #{object_detection_forward.1} parent=1 // pred_check_branch
      %126 = sbr.rel (0) target = $region65
    $region64: #{object_detection_forward.1} parent=1 // pred_region
      %127 = dma.done [#allocation11], 12288
    $region65: #{object_detection_forward.1} parent=1 // pred_fallthru
      _
    // Predicated region
    $region66: #{object_detection_forward.1} parent=1 // pred_check
      _
    $region67: #{object_detection_forward.1} parent=1 // pred_check_branch
      %129 = sbr.rel (0) target = $region69
    $region68: #{object_detection_forward.1} parent=1 // pred_region
      %130 = dma.done [#allocation14], 48
    $region69: #{object_detection_forward.1} parent=1 // pred_fallthru
      _
    %v132 = vld [vmem:[%s0] sm:$0xff]
    %v133 = vld [vmem:[#allocation2] sm:$0xff]
    %v134 = vld [vmem:[#allocation2 + $0x8] sm:$0xff]
    %v135 = vld [vmem:[#allocation2 + $0x10] sm:$0xff]
    %v136 = vld [vmem:[#allocation2 + $0x18] sm:$0xff]
    %v137 = vld [vmem:[#allocation2 + $0x20] sm:$0xff]
    %v138 = vld [vmem:[#allocation2 + $0x28] sm:$0xff]
    %v139 = vld [vmem:[#allocation2 + $0x30] sm:$0xff]
    %v140 = vld [vmem:[#allocation2 + $0x38] sm:$0xff]
    %v141 = vld [vmem:[#allocation2 + $0x40] sm:$0xff]
    %v142 = vld [vmem:[#allocation2 + $0x48] sm:$0xff]
    %v143 = vld [vmem:[#allocation2 + $0x50] sm:$0xff]
    %v144 = vld [vmem:[#allocation2 + $0x58] sm:$0xff]
    %v145 = vld [vmem:[#allocation2 + $0x60] sm:$0xff]
    %v146 = vld [vmem:[#allocation2 + $0x68] sm:$0xff]
    %v147 = vld [vmem:[#allocation2 + $0x70] sm:$0xff]
    %v148 = vld [vmem:[#allocation2 + $0x78] sm:$0xff]
    %v149 = vld [vmem:[#allocation2 + $0x80] sm:$0xff]
    %v150 = vld [vmem:[#allocation2 + $0x88] sm:$0xff]
    %v151 = vld [vmem:[#allocation2 + $0x90] sm:$0xff]
    %v152 = vld [vmem:[#allocation2 + $0x98] sm:$0xff]
    %v153 = vld [vmem:[#allocation2 + $0xa0] sm:$0xff]
    %v154 = vld [vmem:[#allocation2 + $0xa8] sm:$0xff]
    %v155 = vld [vmem:[#allocation2 + $0xb0] sm:$0xff]
    %v156 = vld [vmem:[#allocation2 + $0xb8] sm:$0xff]
    %v157 = vld [vmem:[#allocation2 + $0xc0] sm:$0xff]
    %v158 = vld [vmem:[#allocation2 + $0xc8] sm:$0xff]
    %v159 = vld [vmem:[#allocation2 + $0xd0] sm:$0xff]
    %v160 = vld [vmem:[#allocation2 + $0xd8] sm:$0xff]
    %v161 = vld [vmem:[#allocation2 + $0xe0] sm:$0xff]
    %v162 = vld [vmem:[#allocation2 + $0xe8] sm:$0xff]
    %v163 = vld [vmem:[#allocation2 + $0xf0] sm:$0xff]
    %v164 = vld [vmem:[#allocation2 + $0xf8] sm:$0xff]
    %v165 = vld [vmem:[#allocation2 + $0x100] sm:$0xff]
    %v166 = vld [vmem:[#allocation2 + $0x108] sm:$0xff]
    %v167 = vld [vmem:[#allocation2 + $0x110] sm:$0xff]
    %v168 = vld [vmem:[#allocation2 + $0x118] sm:$0xff]
    %v169 = vld [vmem:[#allocation2 + $0x120] sm:$0xff]
    %v170 = vld [vmem:[#allocation2 + $0x128] sm:$0xff]
    %v171 = vld [vmem:[#allocation2 + $0x130] sm:$0xff]
    %v172 = vld [vmem:[#allocation2 + $0x138] sm:$0xff]
    %v173 = vld [vmem:[#allocation2 + $0x140] sm:$0xff]
    %v174 = vld [vmem:[#allocation2 + $0x148] sm:$0xff]
    %v175 = vld [vmem:[#allocation2 + $0x150] sm:$0xff]
    %v176 = vld [vmem:[#allocation2 + $0x158] sm:$0xff]
    %v177 = vld [vmem:[#allocation2 + $0x160] sm:$0xff]
    %v178 = vld [vmem:[#allocation2 + $0x168] sm:$0xff]
    %v179 = vld [vmem:[#allocation2 + $0x170] sm:$0xff]
    %v180 = vld [vmem:[#allocation2 + $0x178] sm:$0xff]
    %v181 = vld [vmem:[#allocation2 + $0x180] sm:$0xff]
    %v182 = vld [vmem:[#allocation2 + $0x188] sm:$0xff]
    %v183 = vld [vmem:[#allocation2 + $0x190] sm:$0xff]
    %v184 = vld [vmem:[#allocation2 + $0x198] sm:$0xff]
    %v185 = vld [vmem:[#allocation2 + $0x1a0] sm:$0xff]
    %v186 = vld [vmem:[#allocation2 + $0x1a8] sm:$0xff]
    %v187 = vld [vmem:[#allocation2 + $0x1b0] sm:$0xff]
    %v188 = vld [vmem:[#allocation2 + $0x1b8] sm:$0xff]
    %v189 = vld [vmem:[#allocation2 + $0x1c0] sm:$0xff]
    %v190 = vld [vmem:[#allocation2 + $0x1c8] sm:$0xff]
    %v191 = vld [vmem:[#allocation2 + $0x1d0] sm:$0xff]
    %v192 = vld [vmem:[#allocation2 + $0x1d8] sm:$0xff]
    %v193 = vld [vmem:[#allocation2 + $0x1e0] sm:$0xff]
    %v194 = vld [vmem:[#allocation2 + $0x1e8] sm:$0xff]
    %v195 = vld [vmem:[#allocation2 + $0x1f0] sm:$0xff]
    %v196 = vld [vmem:[#allocation2 + $0x1f8] sm:$0xff]
    %v197 = vld [vmem:[#allocation2 + $0x200] sm:$0xff]
    %v198 = vld [vmem:[#allocation2 + $0x208] sm:$0xff]
    %v199 = vld [vmem:[#allocation2 + $0x210] sm:$0xff]
    %v200 = vld [vmem:[#allocation2 + $0x218] sm:$0xff]
    %v201 = vld [vmem:[#allocation2 + $0x220] sm:$0xff]
    %v202 = vld [vmem:[#allocation2 + $0x228] sm:$0xff]
    %v203 = vld [vmem:[#allocation2 + $0x230] sm:$0xff]
    %v204 = vld [vmem:[#allocation2 + $0x238] sm:$0xff]
    %v205 = vld [vmem:[#allocation2 + $0x240] sm:$0xff]
    %v206 = vld [vmem:[#allocation2 + $0x248] sm:$0xff]
    %v207 = vld [vmem:[#allocation2 + $0x250] sm:$0xff]
    %v208 = vld [vmem:[#allocation2 + $0x258] sm:$0xff]
    %v209 = vld [vmem:[#allocation2 + $0x260] sm:$0xff]
    %v210 = vld [vmem:[#allocation2 + $0x268] sm:$0xff]
    %v211 = vld [vmem:[#allocation2 + $0x270] sm:$0xff]
    %v212 = vld [vmem:[#allocation2 + $0x278] sm:$0xff]
    %v213 = vld [vmem:[#allocation2 + $0x280] sm:$0xff]
    %v214 = vld [vmem:[#allocation2 + $0x288] sm:$0xff]
    %v215 = vld [vmem:[#allocation2 + $0x290] sm:$0xff]
    %v216 = vld [vmem:[#allocation2 + $0x298] sm:$0xff]
    %v217 = vld [vmem:[#allocation2 + $0x2a0] sm:$0xff]
    %v218 = vld [vmem:[#allocation2 + $0x2a8] sm:$0xff]
    %v219 = vld [vmem:[#allocation2 + $0x2b0] sm:$0xff]
    %v220 = vld [vmem:[#allocation2 + $0x2b8] sm:$0xff]
    %v221 = vld [vmem:[#allocation2 + $0x2c0] sm:$0xff]
    %v222 = vld [vmem:[#allocation2 + $0x2c8] sm:$0xff]
    %v223 = vld [vmem:[#allocation2 + $0x2d0] sm:$0xff]
    %v224 = vld [vmem:[#allocation2 + $0x2d8] sm:$0xff]
    %v225 = vld [vmem:[#allocation2 + $0x2e0] sm:$0xff]
    %v226 = vld [vmem:[#allocation2 + $0x2e8] sm:$0xff]
    %v227 = vld [vmem:[#allocation2 + $0x2f0] sm:$0xff]
    %v228 = vld [vmem:[#allocation2 + $0x2f8] sm:$0xff]
    %v229 = vld [vmem:[#allocation2 + $0x300] sm:$0xff]
    %v230 = vld [vmem:[#allocation2 + $0x308] sm:$0xff]
    %v231 = vld [vmem:[#allocation2 + $0x310] sm:$0xff]
    %v232 = vld [vmem:[#allocation2 + $0x318] sm:$0xff]
    %v233 = vld [vmem:[#allocation2 + $0x320] sm:$0xff]
    %v234 = vld [vmem:[#allocation2 + $0x328] sm:$0xff]
    %v235 = vld [vmem:[#allocation2 + $0x330] sm:$0xff]
    %v236 = vld [vmem:[#allocation2 + $0x338] sm:$0xff]
    %v237 = vld [vmem:[#allocation2 + $0x340] sm:$0xff]
    %v238 = vld [vmem:[#allocation2 + $0x348] sm:$0xff]
    %v239 = vld [vmem:[#allocation2 + $0x350] sm:$0xff]
    %v240 = vld [vmem:[#allocation2 + $0x358] sm:$0xff]
    %v241 = vld [vmem:[#allocation2 + $0x360] sm:$0xff]
    %v242 = vld [vmem:[#allocation2 + $0x368] sm:$0xff]
    %v243 = vld [vmem:[#allocation2 + $0x370] sm:$0xff]
    %v244 = vld [vmem:[#allocation2 + $0x378] sm:$0xff]
    %v245 = vld [vmem:[#allocation2 + $0x380] sm:$0xff]
    %v246 = vld [vmem:[#allocation2 + $0x388] sm:$0xff]
    %v247 = vld [vmem:[#allocation2 + $0x390] sm:$0xff]
    %v248 = vld [vmem:[#allocation2 + $0x398] sm:$0xff]
    %v249 = vld [vmem:[#allocation2 + $0x3a0] sm:$0xff]
    %v250 = vld [vmem:[#allocation2 + $0x3a8] sm:$0xff]
    %v251 = vld [vmem:[#allocation2 + $0x3b0] sm:$0xff]
    %v252 = vld [vmem:[#allocation2 + $0x3b8] sm:$0xff]
    %v253 = vld [vmem:[#allocation2 + $0x3c0] sm:$0xff]
    %v254 = vld [vmem:[#allocation2 + $0x3c8] sm:$0xff]
    %v255 = vld [vmem:[#allocation2 + $0x3d0] sm:$0xff]
    %v256 = vld [vmem:[#allocation2 + $0x3d8] sm:$0xff]
    %v257 = vld [vmem:[#allocation2 + $0x3e0] sm:$0xff]
    %v258 = vld [vmem:[#allocation2 + $0x3e8] sm:$0xff]
    %v259 = vld [vmem:[#allocation2 + $0x3f0] sm:$0xff]
    %v260 = vld [vmem:[#allocation2 + $0x3f8] sm:$0xff]
    %v261 = vld [vmem:[#allocation2 + $0x400] sm:$0xff]
    %v262 = vld [vmem:[#allocation2 + $0x408] sm:$0xff]
    %v263 = vld [vmem:[#allocation2 + $0x410] sm:$0xff]
    %v264 = vld [vmem:[#allocation2 + $0x418] sm:$0xff]
    %v265 = vld [vmem:[#allocation2 + $0x420] sm:$0xff]
    %v266 = vld [vmem:[#allocation2 + $0x428] sm:$0xff]
    %v267 = vld [vmem:[#allocation2 + $0x430] sm:$0xff]
    %v268 = vld [vmem:[#allocation2 + $0x438] sm:$0xff]
    %v269 = vld [vmem:[#allocation2 + $0x440] sm:$0xff]
    %v270 = vld [vmem:[#allocation2 + $0x448] sm:$0xff]
    %v271 = vld [vmem:[#allocation2 + $0x450] sm:$0xff]
    %v272 = vld [vmem:[#allocation2 + $0x458] sm:$0xff]
    %v273 = vld [vmem:[#allocation2 + $0x460] sm:$0xff]
    %v274 = vld [vmem:[#allocation2 + $0x468] sm:$0xff]
    %v275 = vld [vmem:[#allocation2 + $0x470] sm:$0xff]
    %v276 = vld [vmem:[#allocation2 + $0x478] sm:$0xff]
    %v277 = vld [vmem:[#allocation2 + $0x480] sm:$0xff]
    %v278 = vld [vmem:[#allocation2 + $0x488] sm:$0xff]
    %v279 = vld [vmem:[#allocation2 + $0x490] sm:$0xff]
    %v280 = vld [vmem:[#allocation2 + $0x498] sm:$0xff]
    %v281 = vld [vmem:[#allocation2 + $0x4a0] sm:$0xff]
    %v282 = vld [vmem:[#allocation2 + $0x4a8] sm:$0xff]
    %v283 = vld [vmem:[#allocation2 + $0x4b0] sm:$0xff]
    %v284 = vld [vmem:[#allocation2 + $0x4b8] sm:$0xff]
    %v285 = vld [vmem:[#allocation2 + $0x4c0] sm:$0xff]
    %v286 = vld [vmem:[#allocation2 + $0x4c8] sm:$0xff]
    %v287 = vld [vmem:[#allocation2 + $0x4d0] sm:$0xff]
    %v288 = vld [vmem:[#allocation2 + $0x4d8] sm:$0xff]
    %v289 = vld [vmem:[#allocation2 + $0x4e0] sm:$0xff]
    %v290 = vld [vmem:[#allocation2 + $0x4e8] sm:$0xff]
    %v291 = vld [vmem:[#allocation2 + $0x4f0] sm:$0xff]
    %v292 = vld [vmem:[#allocation2 + $0x4f8] sm:$0xff]
    %v293 = vld [vmem:[#allocation2 + $0x500] sm:$0xff]
    %v294 = vld [vmem:[#allocation2 + $0x508] sm:$0xff]
    %v295 = vld [vmem:[#allocation2 + $0x510] sm:$0xff]
    %v296 = vld [vmem:[#allocation2 + $0x518] sm:$0xff]
    %v297 = vld [vmem:[#allocation2 + $0x520] sm:$0xff]
    %v298 = vld [vmem:[#allocation2 + $0x528] sm:$0xff]
    %v299 = vld [vmem:[#allocation2 + $0x530] sm:$0xff]
    %v300 = vld [vmem:[#allocation2 + $0x538] sm:$0xff]
    %v301 = vld [vmem:[#allocation2 + $0x540] sm:$0xff]
    %v302 = vld [vmem:[#allocation2 + $0x548] sm:$0xff]
    %v303 = vld [vmem:[#allocation2 + $0x550] sm:$0xff]
    %v304 = vld [vmem:[#allocation2 + $0x558] sm:$0xff]
    %v305 = vld [vmem:[#allocation2 + $0x560] sm:$0xff]
    %v306 = vld [vmem:[#allocation2 + $0x568] sm:$0xff]
    %v307 = vld [vmem:[#allocation2 + $0x570] sm:$0xff]
    %v308 = vld [vmem:[#allocation2 + $0x578] sm:$0xff]
    %v309 = vld [vmem:[#allocation2 + $0x580] sm:$0xff]
    %v310 = vld [vmem:[#allocation2 + $0x588] sm:$0xff]
    %v311 = vld [vmem:[#allocation2 + $0x590] sm:$0xff]
    %v312 = vld [vmem:[#allocation2 + $0x598] sm:$0xff]
    %v313 = vld [vmem:[#allocation2 + $0x5a0] sm:$0xff]
    %v314 = vld [vmem:[#allocation2 + $0x5a8] sm:$0xff]
    %v315 = vld [vmem:[#allocation2 + $0x5b0] sm:$0xff]
    %v316 = vld [vmem:[#allocation2 + $0x5b8] sm:$0xff]
    %v317 = vld [vmem:[#allocation2 + $0x5c0] sm:$0xff]
    %v318 = vld [vmem:[#allocation2 + $0x5c8] sm:$0xff]
    %v319 = vld [vmem:[#allocation2 + $0x5d0] sm:$0xff]
    %v320 = vld [vmem:[#allocation2 + $0x5d8] sm:$0xff]
    %v321 = vld [vmem:[#allocation2 + $0x5e0] sm:$0xff]
    %v322 = vld [vmem:[#allocation2 + $0x5e8] sm:$0xff]
    %v323 = vld [vmem:[#allocation2 + $0x5f0] sm:$0xff]
    %v324 = vld [vmem:[#allocation2 + $0x5f8] sm:$0xff]
    %v325 = vld [vmem:[#allocation2 + $0x600] sm:$0xff]
    %v326 = vld [vmem:[#allocation2 + $0x608] sm:$0xff]
    %v327 = vld [vmem:[#allocation2 + $0x610] sm:$0xff]
    %v328 = vld [vmem:[#allocation2 + $0x618] sm:$0xff]
    %v329 = vld [vmem:[#allocation2 + $0x620] sm:$0xff]
    %v330 = vld [vmem:[#allocation2 + $0x628] sm:$0xff]
    %v331 = vld [vmem:[#allocation2 + $0x630] sm:$0xff]
    %v332 = vld [vmem:[#allocation2 + $0x638] sm:$0xff]
    %v333 = vld [vmem:[#allocation2 + $0x640] sm:$0xff]
    %v334 = vld [vmem:[#allocation2 + $0x648] sm:$0xff]
    %v335 = vld [vmem:[#allocation2 + $0x650] sm:$0xff]
    %v336 = vld [vmem:[#allocation2 + $0x658] sm:$0xff]
    %v337 = vld [vmem:[#allocation2 + $0x660] sm:$0xff]
    %v338 = vld [vmem:[#allocation2 + $0x668] sm:$0xff]
    %v339 = vld [vmem:[#allocation2 + $0x670] sm:$0xff]
    %v340 = vld [vmem:[#allocation2 + $0x678] sm:$0xff]
    %v341 = vld [vmem:[#allocation2 + $0x680] sm:$0xff]
    %v342 = vld [vmem:[#allocation2 + $0x688] sm:$0xff]
    %v343 = vld [vmem:[#allocation2 + $0x690] sm:$0xff]
    %v344 = vld [vmem:[#allocation2 + $0x698] sm:$0xff]
    %v345 = vld [vmem:[#allocation2 + $0x6a0] sm:$0xff]
    %v346 = vld [vmem:[#allocation2 + $0x6a8] sm:$0xff]
    %v347 = vld [vmem:[#allocation2 + $0x6b0] sm:$0xff]
    %v348 = vld [vmem:[#allocation2 + $0x6b8] sm:$0xff]
    %v349 = vld [vmem:[#allocation2 + $0x6c0] sm:$0xff]
    %v350 = vld [vmem:[#allocation2 + $0x6c8] sm:$0xff]
    %v351 = vld [vmem:[#allocation2 + $0x6d0] sm:$0xff]
    %v352 = vld [vmem:[#allocation2 + $0x6d8] sm:$0xff]
    %v353 = vld [vmem:[#allocation2 + $0x6e0] sm:$0xff]
    %v354 = vld [vmem:[#allocation2 + $0x6e8] sm:$0xff]
    %v355 = vld [vmem:[#allocation2 + $0x6f0] sm:$0xff]
    %v356 = vld [vmem:[#allocation2 + $0x6f8] sm:$0xff]
    %v357 = vld [vmem:[#allocation2 + $0x700] sm:$0xff]
    %v358 = vld [vmem:[#allocation2 + $0x708] sm:$0xff]
    %v359 = vld [vmem:[#allocation2 + $0x710] sm:$0xff]
    %v360 = vld [vmem:[#allocation2 + $0x718] sm:$0xff]
    %v361 = vld [vmem:[#allocation2 + $0x720] sm:$0xff]
    %v362 = vld [vmem:[#allocation2 + $0x728] sm:$0xff]
    %v363 = vld [vmem:[#allocation2 + $0x730] sm:$0xff]
    %v364 = vld [vmem:[#allocation2 + $0x738] sm:$0xff]
    %v365 = vld [vmem:[#allocation2 + $0x740] sm:$0xff]
    %v366 = vld [vmem:[#allocation2 + $0x748] sm:$0xff]
    %v367 = vld [vmem:[#allocation2 + $0x750] sm:$0xff]
    %v368 = vld [vmem:[#allocation2 + $0x758] sm:$0xff]
    %v369 = vld [vmem:[#allocation2 + $0x760] sm:$0xff]
    %v370 = vld [vmem:[#allocation2 + $0x768] sm:$0xff]
    %v371 = vld [vmem:[#allocation2 + $0x770] sm:$0xff]
    %v372 = vld [vmem:[#allocation2 + $0x778] sm:$0xff]
    %v373 = vld [vmem:[#allocation2 + $0x780] sm:$0xff]
    %v374 = vld [vmem:[#allocation2 + $0x788] sm:$0xff]
    %v375 = vld [vmem:[#allocation2 + $0x790] sm:$0xff]
    %v376 = vld [vmem:[#allocation2 + $0x798] sm:$0xff]
    %v377 = vld [vmem:[#allocation2 + $0x7a0] sm:$0xff]
    %v378 = vld [vmem:[#allocation2 + $0x7a8] sm:$0xff]
    %v379 = vld [vmem:[#allocation2 + $0x7b0] sm:$0xff]
    %v380 = vld [vmem:[#allocation2 + $0x7b8] sm:$0xff]
    %v381 = vld [vmem:[#allocation2 + $0x7c0] sm:$0xff]
    %v382 = vld [vmem:[#allocation2 + $0x7c8] sm:$0xff]
    %v383 = vld [vmem:[#allocation2 + $0x7d0] sm:$0xff]
    %v384 = vld [vmem:[#allocation2 + $0x7d8] sm:$0xff]
    %v385 = vld [vmem:[#allocation2 + $0x7e0] sm:$0xff]
    %v386 = vld [vmem:[#allocation2 + $0x7e8] sm:$0xff]
    %v387 = vld [vmem:[#allocation2 + $0x7f0] sm:$0xff]
    %v388 = vld [vmem:[#allocation2 + $0x7f8] sm:$0xff]
    %v389 = vld [vmem:[#allocation2 + $0x800] sm:$0xff]
    %v390 = vld [vmem:[#allocation2 + $0x808] sm:$0xff]
    %v391 = vld [vmem:[#allocation2 + $0x810] sm:$0xff]
    %v392 = vld [vmem:[#allocation2 + $0x818] sm:$0xff]
    %v393 = vld [vmem:[#allocation2 + $0x820] sm:$0xff]
    %v394 = vld [vmem:[#allocation2 + $0x828] sm:$0xff]
    %v395 = vld [vmem:[#allocation2 + $0x830] sm:$0xff]
    %v396 = vld [vmem:[#allocation2 + $0x838] sm:$0xff]
    %v397 = vld [vmem:[#allocation2 + $0x840] sm:$0xff]
    %v398 = vld [vmem:[#allocation2 + $0x848] sm:$0xff]
    %v399 = vld [vmem:[#allocation2 + $0x850] sm:$0xff]
    %v400 = vld [vmem:[#allocation2 + $0x858] sm:$0xff]
    %v401 = vld [vmem:[#allocation2 + $0x860] sm:$0xff]
    %v402 = vld [vmem:[#allocation2 + $0x868] sm:$0xff]
    %v403 = vld [vmem:[#allocation2 + $0x870] sm:$0xff]
    %v404 = vld [vmem:[#allocation2 + $0x878] sm:$0xff]
    %v405 = vld [vmem:[#allocation2 + $0x880] sm:$0xff]
    %v406 = vld [vmem:[#allocation2 + $0x888] sm:$0xff]
    %v407 = vld [vmem:[#allocation2 + $0x890] sm:$0xff]
    %v408 = vld [vmem:[#allocation2 + $0x898] sm:$0xff]
    %v409 = vld [vmem:[#allocation2 + $0x8a0] sm:$0xff]
    %v410 = vld [vmem:[#allocation2 + $0x8a8] sm:$0xff]
    %v411 = vld [vmem:[#allocation2 + $0x8b0] sm:$0xff]
    %v412 = vld [vmem:[#allocation2 + $0x8b8] sm:$0xff]
    %v413 = vld [vmem:[#allocation2 + $0x8c0] sm:$0xff]
    %v414 = vld [vmem:[#allocation2 + $0x8c8] sm:$0xff]
    %v415 = vld [vmem:[#allocation2 + $0x8d0] sm:$0xff]
    %v416 = vld [vmem:[#allocation2 + $0x8d8] sm:$0xff]
    %v417 = vld [vmem:[#allocation2 + $0x8e0] sm:$0xff]
    %v418 = vld [vmem:[#allocation2 + $0x8e8] sm:$0xff]
    %v419 = vld [vmem:[#allocation2 + $0x8f0] sm:$0xff]
    %v420 = vld [vmem:[#allocation2 + $0x8f8] sm:$0xff]
    %v421 = vld [vmem:[#allocation2 + $0x900] sm:$0xff]
    %v422 = vld [vmem:[#allocation2 + $0x908] sm:$0xff]
    %v423 = vld [vmem:[#allocation2 + $0x910] sm:$0xff]
    %v424 = vld [vmem:[#allocation2 + $0x918] sm:$0xff]
    %v425 = vld [vmem:[#allocation2 + $0x920] sm:$0xff]
    %v426 = vld [vmem:[#allocation2 + $0x928] sm:$0xff]
    %v427 = vld [vmem:[#allocation2 + $0x930] sm:$0xff]
    %v428 = vld [vmem:[#allocation2 + $0x938] sm:$0xff]
    %v429 = vld [vmem:[#allocation2 + $0x940] sm:$0xff]
    %v430 = vld [vmem:[#allocation2 + $0x948] sm:$0xff]
    %v431 = vld [vmem:[#allocation2 + $0x950] sm:$0xff]
    %v432 = vld [vmem:[#allocation2 + $0x958] sm:$0xff]
    %v433 = vld [vmem:[#allocation2 + $0x960] sm:$0xff]
    %v434 = vld [vmem:[#allocation2 + $0x968] sm:$0xff]
    %v435 = vld [vmem:[#allocation2 + $0x970] sm:$0xff]
    %v436 = vld [vmem:[#allocation2 + $0x978] sm:$0xff]
    %v437 = vld [vmem:[#allocation2 + $0x980] sm:$0xff]
    %v438 = vld [vmem:[#allocation2 + $0x988] sm:$0xff]
    %v439 = vld [vmem:[#allocation2 + $0x990] sm:$0xff]
    %v440 = vld [vmem:[#allocation2 + $0x998] sm:$0xff]
    %v441 = vld [vmem:[#allocation2 + $0x9a0] sm:$0xff]
    %v442 = vld [vmem:[#allocation2 + $0x9a8] sm:$0xff]
    %v443 = vld [vmem:[#allocation2 + $0x9b0] sm:$0xff]
    %v444 = vld [vmem:[#allocation2 + $0x9b8] sm:$0xff]
    %v445 = vld [vmem:[#allocation2 + $0x9c0] sm:$0xff]
    %v446 = vld [vmem:[#allocation2 + $0x9c8] sm:$0xff]
    %v447 = vld [vmem:[#allocation2 + $0x9d0] sm:$0xff]
    %v448 = vld [vmem:[#allocation2 + $0x9d8] sm:$0xff]
    %v449 = vld [vmem:[#allocation2 + $0x9e0] sm:$0xff]
    %v450 = vld [vmem:[#allocation2 + $0x9e8] sm:$0xff]
    %v451 = vld [vmem:[#allocation2 + $0x9f0] sm:$0xff]
    %v452 = vld [vmem:[#allocation2 + $0x9f8] sm:$0xff]
    %v453 = vld [vmem:[#allocation2 + $0xa00] sm:$0xff]
    %v454 = vld [vmem:[#allocation2 + $0xa08] sm:$0xff]
    %v455 = vld [vmem:[#allocation2 + $0xa10] sm:$0xff]
    %v456 = vld [vmem:[#allocation2 + $0xa18] sm:$0xff]
    %v457 = vld [vmem:[#allocation2 + $0xa20] sm:$0xff]
    %v458 = vld [vmem:[#allocation2 + $0xa28] sm:$0xff]
    %v459 = vld [vmem:[#allocation2 + $0xa30] sm:$0xff]
    %v460 = vld [vmem:[#allocation2 + $0xa38] sm:$0xff]
    %v461 = vld [vmem:[#allocation2 + $0xa40] sm:$0xff]
    %v462 = vld [vmem:[#allocation2 + $0xa48] sm:$0xff]
    %v463 = vld [vmem:[#allocation2 + $0xa50] sm:$0xff]
    %v464 = vld [vmem:[#allocation2 + $0xa58] sm:$0xff]
    %v465 = vld [vmem:[#allocation2 + $0xa60] sm:$0xff]
    %v466 = vld [vmem:[#allocation2 + $0xa68] sm:$0xff]
    %v467 = vld [vmem:[#allocation2 + $0xa70] sm:$0xff]
    %v468 = vld [vmem:[#allocation2 + $0xa78] sm:$0xff]
    %v469 = vld [vmem:[#allocation2 + $0xa80] sm:$0xff]
    %v470 = vld [vmem:[#allocation2 + $0xa88] sm:$0xff]
    %v471 = vld [vmem:[#allocation2 + $0xa90] sm:$0xff]
    %v472 = vld [vmem:[#allocation2 + $0xa98] sm:$0xff]
    %v473 = vld [vmem:[#allocation2 + $0xaa0] sm:$0xff]
    %v474 = vld [vmem:[#allocation2 + $0xaa8] sm:$0xff]
    %v475 = vld [vmem:[#allocation2 + $0xab0] sm:$0xff]
    %v476 = vld [vmem:[#allocation2 + $0xab8] sm:$0xff]
    %v477 = vld [vmem:[#allocation2 + $0xac0] sm:$0xff]
    %v478 = vld [vmem:[#allocation2 + $0xac8] sm:$0xff]
    %v479 = vld [vmem:[#allocation2 + $0xad0] sm:$0xff]
    %v480 = vld [vmem:[#allocation2 + $0xad8] sm:$0xff]
    %v481 = vld [vmem:[#allocation2 + $0xae0] sm:$0xff]
    %v482 = vld [vmem:[#allocation2 + $0xae8] sm:$0xff]
    %v483 = vld [vmem:[#allocation2 + $0xaf0] sm:$0xff]
    %v484 = vld [vmem:[#allocation2 + $0xaf8] sm:$0xff]
    %v485 = vld [vmem:[#allocation2 + $0xb00] sm:$0xff]
    %v486 = vld [vmem:[#allocation2 + $0xb08] sm:$0xff]
    %v487 = vld [vmem:[#allocation2 + $0xb10] sm:$0xff]
    %v488 = vld [vmem:[#allocation2 + $0xb18] sm:$0xff]
    %v489 = vld [vmem:[#allocation2 + $0xb20] sm:$0xff]
    %v490 = vld [vmem:[#allocation2 + $0xb28] sm:$0xff]
    %v491 = vld [vmem:[#allocation2 + $0xb30] sm:$0xff]
    %v492 = vld [vmem:[#allocation2 + $0xb38] sm:$0xff]
    %v493 = vld [vmem:[#allocation2 + $0xb40] sm:$0xff]
    %v494 = vld [vmem:[#allocation2 + $0xb48] sm:$0xff]
    %v495 = vld [vmem:[#allocation2 + $0xb50] sm:$0xff]
    %v496 = vld [vmem:[#allocation2 + $0xb58] sm:$0xff]
    %v497 = vld [vmem:[#allocation2 + $0xb60] sm:$0xff]
    %v498 = vld [vmem:[#allocation2 + $0xb68] sm:$0xff]
    %v499 = vld [vmem:[#allocation2 + $0xb70] sm:$0xff]
    %v500 = vld [vmem:[#allocation2 + $0xb78] sm:$0xff]
    %v501 = vld [vmem:[#allocation2 + $0xb80] sm:$0xff]
    %v502 = vld [vmem:[#allocation2 + $0xb88] sm:$0xff]
    %v503 = vld [vmem:[#allocation2 + $0xb90] sm:$0xff]
    %v504 = vld [vmem:[#allocation2 + $0xb98] sm:$0xff]
    %v505 = vld [vmem:[#allocation2 + $0xba0] sm:$0xff]
    %v506 = vld [vmem:[#allocation2 + $0xba8] sm:$0xff]
    %v507 = vld [vmem:[#allocation2 + $0xbb0] sm:$0xff]
    %v508 = vld [vmem:[#allocation2 + $0xbb8] sm:$0xff]
    %v509 = vld [vmem:[#allocation2 + $0xbc0] sm:$0xff]
    %v510 = vld [vmem:[#allocation2 + $0xbc8] sm:$0xff]
    %v511 = vld [vmem:[#allocation2 + $0xbd0] sm:$0xff]
    %v512 = vld [vmem:[#allocation2 + $0xbd8] sm:$0xff]
    %v513 = vld [vmem:[#allocation2 + $0xbe0] sm:$0xff]
    %v514 = vld [vmem:[#allocation2 + $0xbe8] sm:$0xff]
    %v515 = vld [vmem:[#allocation2 + $0xbf0] sm:$0xff]
    %v516 = vld [vmem:[#allocation2 + $0xbf8] sm:$0xff]
    %v517 = vld [vmem:[#allocation2 + $0xc00] sm:$0xff]
    %v518 = vld [vmem:[#allocation2 + $0xc08] sm:$0xff]
    %v519 = vld [vmem:[#allocation2 + $0xc10] sm:$0xff]
    %v520 = vld [vmem:[#allocation2 + $0xc18] sm:$0xff]
    %v521 = vld [vmem:[#allocation2 + $0xc20] sm:$0xff]
    %v522 = vld [vmem:[#allocation2 + $0xc28] sm:$0xff]
    %v523 = vld [vmem:[#allocation2 + $0xc30] sm:$0xff]
    %v524 = vld [vmem:[#allocation2 + $0xc38] sm:$0xff]
    %v525 = vld [vmem:[#allocation2 + $0xc40] sm:$0xff]
    %v526 = vld [vmem:[#allocation2 + $0xc48] sm:$0xff]
    %v527 = vld [vmem:[#allocation2 + $0xc50] sm:$0xff]
    %v528 = vld [vmem:[#allocation2 + $0xc58] sm:$0xff]
    %v529 = vld [vmem:[#allocation2 + $0xc60] sm:$0xff]
    %v530 = vld [vmem:[#allocation2 + $0xc68] sm:$0xff]
    %v531 = vld [vmem:[#allocation2 + $0xc70] sm:$0xff]
    %v532 = vld [vmem:[#allocation2 + $0xc78] sm:$0xff]
    %v533 = vld [vmem:[#allocation2 + $0xc80] sm:$0xff]
    %v534 = vld [vmem:[#allocation2 + $0xc88] sm:$0xff]
    %v535 = vld [vmem:[#allocation2 + $0xc90] sm:$0xff]
    %v536 = vld [vmem:[#allocation2 + $0xc98] sm:$0xff]
    %v537 = vld [vmem:[#allocation2 + $0xca0] sm:$0xff]
    %v538 = vld [vmem:[#allocation2 + $0xca8] sm:$0xff]
    %v539 = vld [vmem:[#allocation2 + $0xcb0] sm:$0xff]
    %v540 = vld [vmem:[#allocation2 + $0xcb8] sm:$0xff]
    %v541 = vld [vmem:[#allocation2 + $0xcc0] sm:$0xff]
    %v542 = vld [vmem:[#allocation2 + $0xcc8] sm:$0xff]
    %v543 = vld [vmem:[#allocation2 + $0xcd0] sm:$0xff]
    %v544 = vld [vmem:[#allocation2 + $0xcd8] sm:$0xff]
    %v545 = vld [vmem:[#allocation2 + $0xce0] sm:$0xff]
    %v546 = vld [vmem:[#allocation2 + $0xce8] sm:$0xff]
    %v547 = vld [vmem:[#allocation2 + $0xcf0] sm:$0xff]
    %v548 = vld [vmem:[#allocation2 + $0xcf8] sm:$0xff]
    %v549 = vld [vmem:[#allocation2 + $0xd00] sm:$0xff]
    %v550 = vld [vmem:[#allocation2 + $0xd08] sm:$0xff]
    %v551 = vld [vmem:[#allocation2 + $0xd10] sm:$0xff]
    %v552 = vld [vmem:[#allocation2 + $0xd18] sm:$0xff]
    %v553 = vld [vmem:[#allocation2 + $0xd20] sm:$0xff]
    %v554 = vld [vmem:[#allocation2 + $0xd28] sm:$0xff]
    %v555 = vld [vmem:[#allocation2 + $0xd30] sm:$0xff]
    %v556 = vld [vmem:[#allocation2 + $0xd38] sm:$0xff]
    %v557 = vld [vmem:[#allocation2 + $0xd40] sm:$0xff]
    %v558 = vld [vmem:[#allocation2 + $0xd48] sm:$0xff]
    %v559 = vld [vmem:[#allocation2 + $0xd50] sm:$0xff]
    %v560 = vld [vmem:[#allocation2 + $0xd58] sm:$0xff]
    %v561 = vld [vmem:[#allocation2 + $0xd60] sm:$0xff]
    %v562 = vld [vmem:[#allocation2 + $0xd68] sm:$0xff]
    %v563 = vld [vmem:[#allocation2 + $0xd70] sm:$0xff]
    %v564 = vld [vmem:[#allocation2 + $0xd78] sm:$0xff]
    %v565 = vld [vmem:[#allocation2 + $0xd80] sm:$0xff]
    %v566 = vld [vmem:[#allocation2 + $0xd88] sm:$0xff]
    %v567 = vld [vmem:[#allocation2 + $0xd90] sm:$0xff]
    %v568 = vld [vmem:[#allocation2 + $0xd98] sm:$0xff]
    %v569 = vld [vmem:[#allocation2 + $0xda0] sm:$0xff]
    %v570 = vld [vmem:[#allocation2 + $0xda8] sm:$0xff]
    %v571 = vld [vmem:[#allocation2 + $0xdb0] sm:$0xff]
    %v572 = vld [vmem:[#allocation2 + $0xdb8] sm:$0xff]
    %v573 = vld [vmem:[#allocation2 + $0xdc0] sm:$0xff]
    %v574 = vld [vmem:[#allocation2 + $0xdc8] sm:$0xff]
    %v575 = vld [vmem:[#allocation2 + $0xdd0] sm:$0xff]
    %v576 = vld [vmem:[#allocation2 + $0xdd8] sm:$0xff]
    %v577 = vld [vmem:[#allocation2 + $0xde0] sm:$0xff]
    %v578 = vld [vmem:[#allocation2 + $0xde8] sm:$0xff]
    %v579 = vld [vmem:[#allocation2 + $0xdf0] sm:$0xff]
    %v580 = vld [vmem:[#allocation2 + $0xdf8] sm:$0xff]
    %v581 = vld [vmem:[#allocation2 + $0xe00] sm:$0xff]
    %v582 = vld [vmem:[#allocation2 + $0xe08] sm:$0xff]
    %v583 = vld [vmem:[#allocation2 + $0xe10] sm:$0xff]
    %v584 = vld [vmem:[#allocation2 + $0xe18] sm:$0xff]
    %v585 = vld [vmem:[#allocation2 + $0xe20] sm:$0xff]
    %v586 = vld [vmem:[#allocation2 + $0xe28] sm:$0xff]
    %v587 = vld [vmem:[#allocation2 + $0xe30] sm:$0xff]
    %v588 = vld [vmem:[#allocation2 + $0xe38] sm:$0xff]
    %v589 = vld [vmem:[#allocation2 + $0xe40] sm:$0xff]
    %v590 = vld [vmem:[#allocation2 + $0xe48] sm:$0xff]
    %v591 = vld [vmem:[#allocation2 + $0xe50] sm:$0xff]
    %v592 = vld [vmem:[#allocation2 + $0xe58] sm:$0xff]
    %v593 = vld [vmem:[#allocation2 + $0xe60] sm:$0xff]
    %v594 = vld [vmem:[#allocation2 + $0xe68] sm:$0xff]
    %v595 = vld [vmem:[#allocation2 + $0xe70] sm:$0xff]
    %v596 = vld [vmem:[#allocation2 + $0xe78] sm:$0xff]
    %v597 = vld [vmem:[#allocation2 + $0xe80] sm:$0xff]
    %v598 = vld [vmem:[#allocation2 + $0xe88] sm:$0xff]
    %v599 = vld [vmem:[#allocation2 + $0xe90] sm:$0xff]
    %v600 = vld [vmem:[#allocation2 + $0xe98] sm:$0xff]
    %v601 = vld [vmem:[#allocation2 + $0xea0] sm:$0xff]
    %v602 = vld [vmem:[#allocation2 + $0xea8] sm:$0xff]
    %v603 = vld [vmem:[#allocation2 + $0xeb0] sm:$0xff]
    %v604 = vld [vmem:[#allocation2 + $0xeb8] sm:$0xff]
    %v605 = vld [vmem:[#allocation2 + $0xec0] sm:$0xff]
    %v606 = vld [vmem:[#allocation2 + $0xec8] sm:$0xff]
    %v607 = vld [vmem:[#allocation2 + $0xed0] sm:$0xff]
    %v608 = vld [vmem:[#allocation2 + $0xed8] sm:$0xff]
    %v609 = vld [vmem:[#allocation2 + $0xee0] sm:$0xff]
    %v610 = vld [vmem:[#allocation2 + $0xee8] sm:$0xff]
    %v611 = vld [vmem:[#allocation2 + $0xef0] sm:$0xff]
    %v612 = vld [vmem:[#allocation2 + $0xef8] sm:$0xff]
    %v613 = vld [vmem:[#allocation4] sm:$0xff]
    %v615 = vlaneseq
    %v616 = vshrl.u32 %v615, 7
    %v617 = vsub.s32 0, %v616
    %v618 = vrot.slane %v613, %v617
    %v619 = vlaneseq
    %v620 = vshrl.u32 %v619, 7
    %v621 = vsub.s32 1, %v620
    %v622 = vrot.slane %v613, %v621
    %v623 = vlaneseq
    %v624 = vshrl.u32 %v623, 7
    %v625 = vsub.s32 2, %v624
    %v626 = vrot.slane %v613, %v625
    %v627 = vlaneseq
    %v628 = vshrl.u32 %v627, 7
    %v629 = vsub.s32 3, %v628
    %v630 = vrot.slane %v613, %v629
    %v631 = vlaneseq
    %v632 = vshrl.u32 %v631, 7
    %v633 = vsub.s32 4, %v632
    %v634 = vrot.slane %v613, %v633
    %v635 = vlaneseq
    %v636 = vshrl.u32 %v635, 7
    %v637 = vsub.s32 5, %v636
    %v638 = vrot.slane %v613, %v637
    %v639 = vlaneseq
    %v640 = vshrl.u32 %v639, 7
    %v641 = vsub.s32 6, %v640
    %v642 = vrot.slane %v613, %v641
    %v643 = vlaneseq
    %v644 = vshrl.u32 %v643, 7
    %v645 = vsub.s32 7, %v644
    %v646 = vrot.slane %v613, %v645
    %v656 = vcombine.high %v132, %v132
    %v658 = vunpack.c.l.s4 1966171168
    %v659 = vunpack.c.0.s8 %v658
    %v660 = vlaneseq
    %v661 = vshrl.u32 %v660, 7
    %v662 = vsub.s32 %v659, %v661
    %v663 = vrot.slane %v132, %v662
    %v665 = vunpack.c.l.s4 1966171168
    %v666 = vunpack.c.0.s8 %v665
    %v667 = vlaneseq
    %v668 = vshrl.u32 %v667, 7
    %v669 = vsub.s32 %v666, %v668
    %v670 = vrot.slane %v656, %v669
    %v671 = vcombine.high %v663, %v663
    %v672 = vcombine.high %v670, %v670
    %v674 = vunpack.c.l.s4 1966171168
    %v675 = vunpack.c.0.s8 %v674
    %v676 = vlaneseq
    %v677 = vshrl.u32 %v676, 7
    %v678 = vsub.s32 %v675, %v677
    %v679 = vrot.slane %v663, %v678
    %v681 = vunpack.c.l.s4 1966171168
    %v682 = vunpack.c.0.s8 %v681
    %v683 = vlaneseq
    %v684 = vshrl.u32 %v683, 7
    %v685 = vsub.s32 %v682, %v684
    %v686 = vrot.slane %v670, %v685
    %v688 = vunpack.c.l.s4 1966171168
    %v689 = vunpack.c.0.s8 %v688
    %v690 = vlaneseq
    %v691 = vshrl.u32 %v690, 7
    %v692 = vsub.s32 %v689, %v691
    %v693 = vrot.slane %v671, %v692
    %v695 = vunpack.c.l.s4 1966171168
    %v696 = vunpack.c.0.s8 %v695
    %v697 = vlaneseq
    %v698 = vshrl.u32 %v697, 7
    %v699 = vsub.s32 %v696, %v698
    %v700 = vrot.slane %v672, %v699
    %v701 = vcombine.high %v679, %v679
    %v702 = vcombine.high %v686, %v686
    %v703 = vcombine.high %v693, %v693
    %v704 = vcombine.high %v700, %v700
    %v1192 = vunpack.c.l.b16 %v133
    %v1193 = vunpack.c.h.b16 %v133
    %v1194 = vunpack.c.l.b16 %v134
    %v1195 = vunpack.c.h.b16 %v134
    %v1196 = vunpack.c.l.b16 %v135
    %v1197 = vunpack.c.h.b16 %v135
    %v1198 = vunpack.c.l.b16 %v136
    %v1199 = vunpack.c.h.b16 %v136
    %v1200 = vunpack.c.l.b16 %v137
    %v1201 = vunpack.c.h.b16 %v137
    %v1202 = vunpack.c.l.b16 %v138
    %v1203 = vunpack.c.h.b16 %v138
    %v1204 = vunpack.c.l.b16 %v139
    %v1205 = vunpack.c.h.b16 %v139
    %v1206 = vunpack.c.l.b16 %v140
    %v1207 = vunpack.c.h.b16 %v140
    %v1208 = vunpack.c.l.b16 %v141
    %v1209 = vunpack.c.h.b16 %v141
    %v1210 = vunpack.c.l.b16 %v142
    %v1211 = vunpack.c.h.b16 %v142
    %v1212 = vunpack.c.l.b16 %v143
    %v1213 = vunpack.c.h.b16 %v143
    %v1214 = vunpack.c.l.b16 %v144
    %v1215 = vunpack.c.h.b16 %v144
    %v1216 = vunpack.c.l.b16 %v145
    %v1217 = vunpack.c.h.b16 %v145
    %v1218 = vunpack.c.l.b16 %v146
    %v1219 = vunpack.c.h.b16 %v146
    %v1220 = vunpack.c.l.b16 %v147
    %v1221 = vunpack.c.h.b16 %v147
    %v1222 = vunpack.c.l.b16 %v148
    %v1223 = vunpack.c.h.b16 %v148
    %v1224 = vunpack.c.l.b16 %v149
    %v1225 = vunpack.c.h.b16 %v149
    %v1226 = vunpack.c.l.b16 %v150
    %v1227 = vunpack.c.h.b16 %v150
    %v1228 = vunpack.c.l.b16 %v151
    %v1229 = vunpack.c.h.b16 %v151
    %v1230 = vunpack.c.l.b16 %v152
    %v1231 = vunpack.c.h.b16 %v152
    %v1232 = vunpack.c.l.b16 %v153
    %v1233 = vunpack.c.h.b16 %v153
    %v1234 = vunpack.c.l.b16 %v154
    %v1235 = vunpack.c.h.b16 %v154
    %v1236 = vunpack.c.l.b16 %v155
    %v1237 = vunpack.c.h.b16 %v155
    %v1238 = vunpack.c.l.b16 %v156
    %v1239 = vunpack.c.h.b16 %v156
    %v1240 = vunpack.c.l.b16 %v157
    %v1241 = vunpack.c.h.b16 %v157
    %v1242 = vunpack.c.l.b16 %v158
    %v1243 = vunpack.c.h.b16 %v158
    %v1244 = vunpack.c.l.b16 %v159
    %v1245 = vunpack.c.h.b16 %v159
    %v1246 = vunpack.c.l.b16 %v160
    %v1247 = vunpack.c.h.b16 %v160
    %v1248 = vunpack.c.l.b16 %v161
    %v1249 = vunpack.c.h.b16 %v161
    %v1250 = vunpack.c.l.b16 %v162
    %v1251 = vunpack.c.h.b16 %v162
    %v1252 = vunpack.c.l.b16 %v163
    %v1253 = vunpack.c.h.b16 %v163
    %v1254 = vunpack.c.l.b16 %v164
    %v1255 = vunpack.c.h.b16 %v164
    %v1256 = vunpack.c.l.b16 %v165
    %v1257 = vunpack.c.h.b16 %v165
    %v1258 = vunpack.c.l.b16 %v166
    %v1259 = vunpack.c.h.b16 %v166
    %v1260 = vunpack.c.l.b16 %v167
    %v1261 = vunpack.c.h.b16 %v167
    %v1262 = vunpack.c.l.b16 %v168
    %v1263 = vunpack.c.h.b16 %v168
    %v1264 = vunpack.c.l.b16 %v169
    %v1265 = vunpack.c.h.b16 %v169
    %v1266 = vunpack.c.l.b16 %v170
    %v1267 = vunpack.c.h.b16 %v170
    %v1268 = vunpack.c.l.b16 %v171
    %v1269 = vunpack.c.h.b16 %v171
    %v1270 = vunpack.c.l.b16 %v172
    %v1271 = vunpack.c.h.b16 %v172
    %v1272 = vunpack.c.l.b16 %v173
    %v1273 = vunpack.c.h.b16 %v173
    %v1274 = vunpack.c.l.b16 %v174
    %v1275 = vunpack.c.h.b16 %v174
    %v1276 = vunpack.c.l.b16 %v175
    %v1277 = vunpack.c.h.b16 %v175
    %v1278 = vunpack.c.l.b16 %v176
    %v1279 = vunpack.c.h.b16 %v176
    %v1280 = vunpack.c.l.b16 %v177
    %v1281 = vunpack.c.h.b16 %v177
    %v1282 = vunpack.c.l.b16 %v178
    %v1283 = vunpack.c.h.b16 %v178
    %v1284 = vunpack.c.l.b16 %v179
    %v1285 = vunpack.c.h.b16 %v179
    %v1286 = vunpack.c.l.b16 %v180
    %v1287 = vunpack.c.h.b16 %v180
    %v1288 = vunpack.c.l.b16 %v181
    %v1289 = vunpack.c.h.b16 %v181
    %v1290 = vunpack.c.l.b16 %v182
    %v1291 = vunpack.c.h.b16 %v182
    %v1292 = vunpack.c.l.b16 %v183
    %v1293 = vunpack.c.h.b16 %v183
    %v1294 = vunpack.c.l.b16 %v184
    %v1295 = vunpack.c.h.b16 %v184
    %v1296 = vunpack.c.l.b16 %v185
    %v1297 = vunpack.c.h.b16 %v185
    %v1298 = vunpack.c.l.b16 %v186
    %v1299 = vunpack.c.h.b16 %v186
    %v1300 = vunpack.c.l.b16 %v187
    %v1301 = vunpack.c.h.b16 %v187
    %v1302 = vunpack.c.l.b16 %v188
    %v1303 = vunpack.c.h.b16 %v188
    %v1304 = vunpack.c.l.b16 %v189
    %v1305 = vunpack.c.h.b16 %v189
    %v1306 = vunpack.c.l.b16 %v190
    %v1307 = vunpack.c.h.b16 %v190
    %v1308 = vunpack.c.l.b16 %v191
    %v1309 = vunpack.c.h.b16 %v191
    %v1310 = vunpack.c.l.b16 %v192
    %v1311 = vunpack.c.h.b16 %v192
    %v1312 = vunpack.c.l.b16 %v193
    %v1313 = vunpack.c.h.b16 %v193
    %v1314 = vunpack.c.l.b16 %v194
    %v1315 = vunpack.c.h.b16 %v194
    %v1316 = vunpack.c.l.b16 %v195
    %v1317 = vunpack.c.h.b16 %v195
    %v1318 = vunpack.c.l.b16 %v196
    %v1319 = vunpack.c.h.b16 %v196
    %v1320 = vunpack.c.l.b16 %v197
    %v1321 = vunpack.c.h.b16 %v197
    %v1322 = vunpack.c.l.b16 %v198
    %v1323 = vunpack.c.h.b16 %v198
    %v1324 = vunpack.c.l.b16 %v199
    %v1325 = vunpack.c.h.b16 %v199
    %v1326 = vunpack.c.l.b16 %v200
    %v1327 = vunpack.c.h.b16 %v200
    %v1328 = vunpack.c.l.b16 %v201
    %v1329 = vunpack.c.h.b16 %v201
    %v1330 = vunpack.c.l.b16 %v202
    %v1331 = vunpack.c.h.b16 %v202
    %v1332 = vunpack.c.l.b16 %v203
    %v1333 = vunpack.c.h.b16 %v203
    %v1334 = vunpack.c.l.b16 %v204
    %v1335 = vunpack.c.h.b16 %v204
    %v1336 = vunpack.c.l.b16 %v205
    %v1337 = vunpack.c.h.b16 %v205
    %v1338 = vunpack.c.l.b16 %v206
    %v1339 = vunpack.c.h.b16 %v206
    %v1340 = vunpack.c.l.b16 %v207
    %v1341 = vunpack.c.h.b16 %v207
    %v1342 = vunpack.c.l.b16 %v208
    %v1343 = vunpack.c.h.b16 %v208
    %v1344 = vunpack.c.l.b16 %v209
    %v1345 = vunpack.c.h.b16 %v209
    %v1346 = vunpack.c.l.b16 %v210
    %v1347 = vunpack.c.h.b16 %v210
    %v1348 = vunpack.c.l.b16 %v211
    %v1349 = vunpack.c.h.b16 %v211
    %v1350 = vunpack.c.l.b16 %v212
    %v1351 = vunpack.c.h.b16 %v212
    %v1352 = vunpack.c.l.b16 %v213
    %v1353 = vunpack.c.h.b16 %v213
    %v1354 = vunpack.c.l.b16 %v214
    %v1355 = vunpack.c.h.b16 %v214
    %v1356 = vunpack.c.l.b16 %v215
    %v1357 = vunpack.c.h.b16 %v215
    %v1358 = vunpack.c.l.b16 %v216
    %v1359 = vunpack.c.h.b16 %v216
    %v1360 = vunpack.c.l.b16 %v217
    %v1361 = vunpack.c.h.b16 %v217
    %v1362 = vunpack.c.l.b16 %v218
    %v1363 = vunpack.c.h.b16 %v218
    %v1364 = vunpack.c.l.b16 %v219
    %v1365 = vunpack.c.h.b16 %v219
    %v1366 = vunpack.c.l.b16 %v220
    %v1367 = vunpack.c.h.b16 %v220
    %v1368 = vunpack.c.l.b16 %v221
    %v1369 = vunpack.c.h.b16 %v221
    %v1370 = vunpack.c.l.b16 %v222
    %v1371 = vunpack.c.h.b16 %v222
    %v1372 = vunpack.c.l.b16 %v223
    %v1373 = vunpack.c.h.b16 %v223
    %v1374 = vunpack.c.l.b16 %v224
    %v1375 = vunpack.c.h.b16 %v224
    %v1376 = vunpack.c.l.b16 %v225
    %v1377 = vunpack.c.h.b16 %v225
    %v1378 = vunpack.c.l.b16 %v226
    %v1379 = vunpack.c.h.b16 %v226
    %v1380 = vunpack.c.l.b16 %v227
    %v1381 = vunpack.c.h.b16 %v227
    %v1382 = vunpack.c.l.b16 %v228
    %v1383 = vunpack.c.h.b16 %v228
    %v1384 = vunpack.c.l.b16 %v229
    %v1385 = vunpack.c.h.b16 %v229
    %v1386 = vunpack.c.l.b16 %v230
    %v1387 = vunpack.c.h.b16 %v230
    %v1388 = vunpack.c.l.b16 %v231
    %v1389 = vunpack.c.h.b16 %v231
    %v1390 = vunpack.c.l.b16 %v232
    %v1391 = vunpack.c.h.b16 %v232
    %v1392 = vunpack.c.l.b16 %v233
    %v1393 = vunpack.c.h.b16 %v233
    %v1394 = vunpack.c.l.b16 %v234
    %v1395 = vunpack.c.h.b16 %v234
    %v1396 = vunpack.c.l.b16 %v235
    %v1397 = vunpack.c.h.b16 %v235
    %v1398 = vunpack.c.l.b16 %v236
    %v1399 = vunpack.c.h.b16 %v236
    %v1400 = vunpack.c.l.b16 %v237
    %v1401 = vunpack.c.h.b16 %v237
    %v1402 = vunpack.c.l.b16 %v238
    %v1403 = vunpack.c.h.b16 %v238
    %v1404 = vunpack.c.l.b16 %v239
    %v1405 = vunpack.c.h.b16 %v239
    %v1406 = vunpack.c.l.b16 %v240
    %v1407 = vunpack.c.h.b16 %v240
    %v1408 = vunpack.c.l.b16 %v241
    %v1409 = vunpack.c.h.b16 %v241
    %v1410 = vunpack.c.l.b16 %v242
    %v1411 = vunpack.c.h.b16 %v242
    %v1412 = vunpack.c.l.b16 %v243
    %v1413 = vunpack.c.h.b16 %v243
    %v1414 = vunpack.c.l.b16 %v244
    %v1415 = vunpack.c.h.b16 %v244
    %v1416 = vunpack.c.l.b16 %v245
    %v1417 = vunpack.c.h.b16 %v245
    %v1418 = vunpack.c.l.b16 %v246
    %v1419 = vunpack.c.h.b16 %v246
    %v1420 = vunpack.c.l.b16 %v247
    %v1421 = vunpack.c.h.b16 %v247
    %v1422 = vunpack.c.l.b16 %v248
    %v1423 = vunpack.c.h.b16 %v248
    %v1424 = vunpack.c.l.b16 %v249
    %v1425 = vunpack.c.h.b16 %v249
    %v1426 = vunpack.c.l.b16 %v250
    %v1427 = vunpack.c.h.b16 %v250
    %v1428 = vunpack.c.l.b16 %v251
    %v1429 = vunpack.c.h.b16 %v251
    %v1430 = vunpack.c.l.b16 %v252
    %v1431 = vunpack.c.h.b16 %v252
    %v1432 = vunpack.c.l.b16 %v253
    %v1433 = vunpack.c.h.b16 %v253
    %v1434 = vunpack.c.l.b16 %v254
    %v1435 = vunpack.c.h.b16 %v254
    %v1436 = vunpack.c.l.b16 %v255
    %v1437 = vunpack.c.h.b16 %v255
    %v1438 = vunpack.c.l.b16 %v256
    %v1439 = vunpack.c.h.b16 %v256
    %v1440 = vunpack.c.l.b16 %v257
    %v1441 = vunpack.c.h.b16 %v257
    %v1442 = vunpack.c.l.b16 %v258
    %v1443 = vunpack.c.h.b16 %v258
    %v1444 = vunpack.c.l.b16 %v259
    %v1445 = vunpack.c.h.b16 %v259
    %v1446 = vunpack.c.l.b16 %v260
    %v1447 = vunpack.c.h.b16 %v260
    %v1448 = vunpack.c.l.b16 %v261
    %v1449 = vunpack.c.h.b16 %v261
    %v1450 = vunpack.c.l.b16 %v262
    %v1451 = vunpack.c.h.b16 %v262
    %v1452 = vunpack.c.l.b16 %v263
    %v1453 = vunpack.c.h.b16 %v263
    %v1454 = vunpack.c.l.b16 %v264
    %v1455 = vunpack.c.h.b16 %v264
    %v1456 = vunpack.c.l.b16 %v265
    %v1457 = vunpack.c.h.b16 %v265
    %v1458 = vunpack.c.l.b16 %v266
    %v1459 = vunpack.c.h.b16 %v266
    %v1460 = vunpack.c.l.b16 %v267
    %v1461 = vunpack.c.h.b16 %v267
    %v1462 = vunpack.c.l.b16 %v268
    %v1463 = vunpack.c.h.b16 %v268
    %v1464 = vunpack.c.l.b16 %v269
    %v1465 = vunpack.c.h.b16 %v269
    %v1466 = vunpack.c.l.b16 %v270
    %v1467 = vunpack.c.h.b16 %v270
    %v1468 = vunpack.c.l.b16 %v271
    %v1469 = vunpack.c.h.b16 %v271
    %v1470 = vunpack.c.l.b16 %v272
    %v1471 = vunpack.c.h.b16 %v272
    %v1472 = vunpack.c.l.b16 %v273
    %v1473 = vunpack.c.h.b16 %v273
    %v1474 = vunpack.c.l.b16 %v274
    %v1475 = vunpack.c.h.b16 %v274
    %v1476 = vunpack.c.l.b16 %v275
    %v1477 = vunpack.c.h.b16 %v275
    %v1478 = vunpack.c.l.b16 %v276
    %v1479 = vunpack.c.h.b16 %v276
    %v1480 = vunpack.c.l.b16 %v277
    %v1481 = vunpack.c.h.b16 %v277
    %v1482 = vunpack.c.l.b16 %v278
    %v1483 = vunpack.c.h.b16 %v278
    %v1484 = vunpack.c.l.b16 %v279
    %v1485 = vunpack.c.h.b16 %v279
    %v1486 = vunpack.c.l.b16 %v280
    %v1487 = vunpack.c.h.b16 %v280
    %v1488 = vunpack.c.l.b16 %v281
    %v1489 = vunpack.c.h.b16 %v281
    %v1490 = vunpack.c.l.b16 %v282
    %v1491 = vunpack.c.h.b16 %v282
    %v1492 = vunpack.c.l.b16 %v283
    %v1493 = vunpack.c.h.b16 %v283
    %v1494 = vunpack.c.l.b16 %v284
    %v1495 = vunpack.c.h.b16 %v284
    %v1496 = vunpack.c.l.b16 %v285
    %v1497 = vunpack.c.h.b16 %v285
    %v1498 = vunpack.c.l.b16 %v286
    %v1499 = vunpack.c.h.b16 %v286
    %v1500 = vunpack.c.l.b16 %v287
    %v1501 = vunpack.c.h.b16 %v287
    %v1502 = vunpack.c.l.b16 %v288
    %v1503 = vunpack.c.h.b16 %v288
    %v1504 = vunpack.c.l.b16 %v289
    %v1505 = vunpack.c.h.b16 %v289
    %v1506 = vunpack.c.l.b16 %v290
    %v1507 = vunpack.c.h.b16 %v290
    %v1508 = vunpack.c.l.b16 %v291
    %v1509 = vunpack.c.h.b16 %v291
    %v1510 = vunpack.c.l.b16 %v292
    %v1511 = vunpack.c.h.b16 %v292
    %v1512 = vunpack.c.l.b16 %v293
    %v1513 = vunpack.c.h.b16 %v293
    %v1514 = vunpack.c.l.b16 %v294
    %v1515 = vunpack.c.h.b16 %v294
    %v1516 = vunpack.c.l.b16 %v295
    %v1517 = vunpack.c.h.b16 %v295
    %v1518 = vunpack.c.l.b16 %v296
    %v1519 = vunpack.c.h.b16 %v296
    %v1520 = vunpack.c.l.b16 %v297
    %v1521 = vunpack.c.h.b16 %v297
    %v1522 = vunpack.c.l.b16 %v298
    %v1523 = vunpack.c.h.b16 %v298
    %v1524 = vunpack.c.l.b16 %v299
    %v1525 = vunpack.c.h.b16 %v299
    %v1526 = vunpack.c.l.b16 %v300
    %v1527 = vunpack.c.h.b16 %v300
    %v1528 = vunpack.c.l.b16 %v301
    %v1529 = vunpack.c.h.b16 %v301
    %v1530 = vunpack.c.l.b16 %v302
    %v1531 = vunpack.c.h.b16 %v302
    %v1532 = vunpack.c.l.b16 %v303
    %v1533 = vunpack.c.h.b16 %v303
    %v1534 = vunpack.c.l.b16 %v304
    %v1535 = vunpack.c.h.b16 %v304
    %v1536 = vunpack.c.l.b16 %v305
    %v1537 = vunpack.c.h.b16 %v305
    %v1538 = vunpack.c.l.b16 %v306
    %v1539 = vunpack.c.h.b16 %v306
    %v1540 = vunpack.c.l.b16 %v307
    %v1541 = vunpack.c.h.b16 %v307
    %v1542 = vunpack.c.l.b16 %v308
    %v1543 = vunpack.c.h.b16 %v308
    %v1544 = vunpack.c.l.b16 %v309
    %v1545 = vunpack.c.h.b16 %v309
    %v1546 = vunpack.c.l.b16 %v310
    %v1547 = vunpack.c.h.b16 %v310
    %v1548 = vunpack.c.l.b16 %v311
    %v1549 = vunpack.c.h.b16 %v311
    %v1550 = vunpack.c.l.b16 %v312
    %v1551 = vunpack.c.h.b16 %v312
    %v1552 = vunpack.c.l.b16 %v313
    %v1553 = vunpack.c.h.b16 %v313
    %v1554 = vunpack.c.l.b16 %v314
    %v1555 = vunpack.c.h.b16 %v314
    %v1556 = vunpack.c.l.b16 %v315
    %v1557 = vunpack.c.h.b16 %v315
    %v1558 = vunpack.c.l.b16 %v316
    %v1559 = vunpack.c.h.b16 %v316
    %v1560 = vunpack.c.l.b16 %v317
    %v1561 = vunpack.c.h.b16 %v317
    %v1562 = vunpack.c.l.b16 %v318
    %v1563 = vunpack.c.h.b16 %v318
    %v1564 = vunpack.c.l.b16 %v319
    %v1565 = vunpack.c.h.b16 %v319
    %v1566 = vunpack.c.l.b16 %v320
    %v1567 = vunpack.c.h.b16 %v320
    %v1568 = vunpack.c.l.b16 %v321
    %v1569 = vunpack.c.h.b16 %v321
    %v1570 = vunpack.c.l.b16 %v322
    %v1571 = vunpack.c.h.b16 %v322
    %v1572 = vunpack.c.l.b16 %v323
    %v1573 = vunpack.c.h.b16 %v323
    %v1574 = vunpack.c.l.b16 %v324
    %v1575 = vunpack.c.h.b16 %v324
    %v1576 = vunpack.c.l.b16 %v325
    %v1577 = vunpack.c.h.b16 %v325
    %v1578 = vunpack.c.l.b16 %v326
    %v1579 = vunpack.c.h.b16 %v326
    %v1580 = vunpack.c.l.b16 %v327
    %v1581 = vunpack.c.h.b16 %v327
    %v1582 = vunpack.c.l.b16 %v328
    %v1583 = vunpack.c.h.b16 %v328
    %v1584 = vunpack.c.l.b16 %v329
    %v1585 = vunpack.c.h.b16 %v329
    %v1586 = vunpack.c.l.b16 %v330
    %v1587 = vunpack.c.h.b16 %v330
    %v1588 = vunpack.c.l.b16 %v331
    %v1589 = vunpack.c.h.b16 %v331
    %v1590 = vunpack.c.l.b16 %v332
    %v1591 = vunpack.c.h.b16 %v332
    %v1592 = vunpack.c.l.b16 %v333
    %v1593 = vunpack.c.h.b16 %v333
    %v1594 = vunpack.c.l.b16 %v334
    %v1595 = vunpack.c.h.b16 %v334
    %v1596 = vunpack.c.l.b16 %v335
    %v1597 = vunpack.c.h.b16 %v335
    %v1598 = vunpack.c.l.b16 %v336
    %v1599 = vunpack.c.h.b16 %v336
    %v1600 = vunpack.c.l.b16 %v337
    %v1601 = vunpack.c.h.b16 %v337
    %v1602 = vunpack.c.l.b16 %v338
    %v1603 = vunpack.c.h.b16 %v338
    %v1604 = vunpack.c.l.b16 %v339
    %v1605 = vunpack.c.h.b16 %v339
    %v1606 = vunpack.c.l.b16 %v340
    %v1607 = vunpack.c.h.b16 %v340
    %v1608 = vunpack.c.l.b16 %v341
    %v1609 = vunpack.c.h.b16 %v341
    %v1610 = vunpack.c.l.b16 %v342
    %v1611 = vunpack.c.h.b16 %v342
    %v1612 = vunpack.c.l.b16 %v343
    %v1613 = vunpack.c.h.b16 %v343
    %v1614 = vunpack.c.l.b16 %v344
    %v1615 = vunpack.c.h.b16 %v344
    %v1616 = vunpack.c.l.b16 %v345
    %v1617 = vunpack.c.h.b16 %v345
    %v1618 = vunpack.c.l.b16 %v346
    %v1619 = vunpack.c.h.b16 %v346
    %v1620 = vunpack.c.l.b16 %v347
    %v1621 = vunpack.c.h.b16 %v347
    %v1622 = vunpack.c.l.b16 %v348
    %v1623 = vunpack.c.h.b16 %v348
    %v1624 = vunpack.c.l.b16 %v349
    %v1625 = vunpack.c.h.b16 %v349
    %v1626 = vunpack.c.l.b16 %v350
    %v1627 = vunpack.c.h.b16 %v350
    %v1628 = vunpack.c.l.b16 %v351
    %v1629 = vunpack.c.h.b16 %v351
    %v1630 = vunpack.c.l.b16 %v352
    %v1631 = vunpack.c.h.b16 %v352
    %v1632 = vunpack.c.l.b16 %v353
    %v1633 = vunpack.c.h.b16 %v353
    %v1634 = vunpack.c.l.b16 %v354
    %v1635 = vunpack.c.h.b16 %v354
    %v1636 = vunpack.c.l.b16 %v355
    %v1637 = vunpack.c.h.b16 %v355
    %v1638 = vunpack.c.l.b16 %v356
    %v1639 = vunpack.c.h.b16 %v356
    %v1640 = vunpack.c.l.b16 %v357
    %v1641 = vunpack.c.h.b16 %v357
    %v1642 = vunpack.c.l.b16 %v358
    %v1643 = vunpack.c.h.b16 %v358
    %v1644 = vunpack.c.l.b16 %v359
    %v1645 = vunpack.c.h.b16 %v359
    %v1646 = vunpack.c.l.b16 %v360
    %v1647 = vunpack.c.h.b16 %v360
    %v1648 = vunpack.c.l.b16 %v361
    %v1649 = vunpack.c.h.b16 %v361
    %v1650 = vunpack.c.l.b16 %v362
    %v1651 = vunpack.c.h.b16 %v362
    %v1652 = vunpack.c.l.b16 %v363
    %v1653 = vunpack.c.h.b16 %v363
    %v1654 = vunpack.c.l.b16 %v364
    %v1655 = vunpack.c.h.b16 %v364
    %v1656 = vunpack.c.l.b16 %v365
    %v1657 = vunpack.c.h.b16 %v365
    %v1658 = vunpack.c.l.b16 %v366
    %v1659 = vunpack.c.h.b16 %v366
    %v1660 = vunpack.c.l.b16 %v367
    %v1661 = vunpack.c.h.b16 %v367
    %v1662 = vunpack.c.l.b16 %v368
    %v1663 = vunpack.c.h.b16 %v368
    %v1664 = vunpack.c.l.b16 %v369
    %v1665 = vunpack.c.h.b16 %v369
    %v1666 = vunpack.c.l.b16 %v370
    %v1667 = vunpack.c.h.b16 %v370
    %v1668 = vunpack.c.l.b16 %v371
    %v1669 = vunpack.c.h.b16 %v371
    %v1670 = vunpack.c.l.b16 %v372
    %v1671 = vunpack.c.h.b16 %v372
    %v1672 = vunpack.c.l.b16 %v373
    %v1673 = vunpack.c.h.b16 %v373
    %v1674 = vunpack.c.l.b16 %v374
    %v1675 = vunpack.c.h.b16 %v374
    %v1676 = vunpack.c.l.b16 %v375
    %v1677 = vunpack.c.h.b16 %v375
    %v1678 = vunpack.c.l.b16 %v376
    %v1679 = vunpack.c.h.b16 %v376
    %v1680 = vunpack.c.l.b16 %v377
    %v1681 = vunpack.c.h.b16 %v377
    %v1682 = vunpack.c.l.b16 %v378
    %v1683 = vunpack.c.h.b16 %v378
    %v1684 = vunpack.c.l.b16 %v379
    %v1685 = vunpack.c.h.b16 %v379
    %v1686 = vunpack.c.l.b16 %v380
    %v1687 = vunpack.c.h.b16 %v380
    %v1688 = vunpack.c.l.b16 %v381
    %v1689 = vunpack.c.h.b16 %v381
    %v1690 = vunpack.c.l.b16 %v382
    %v1691 = vunpack.c.h.b16 %v382
    %v1692 = vunpack.c.l.b16 %v383
    %v1693 = vunpack.c.h.b16 %v383
    %v1694 = vunpack.c.l.b16 %v384
    %v1695 = vunpack.c.h.b16 %v384
    %v1696 = vunpack.c.l.b16 %v385
    %v1697 = vunpack.c.h.b16 %v385
    %v1698 = vunpack.c.l.b16 %v386
    %v1699 = vunpack.c.h.b16 %v386
    %v1700 = vunpack.c.l.b16 %v387
    %v1701 = vunpack.c.h.b16 %v387
    %v1702 = vunpack.c.l.b16 %v388
    %v1703 = vunpack.c.h.b16 %v388
    %v1704 = vunpack.c.l.b16 %v389
    %v1705 = vunpack.c.h.b16 %v389
    %v1706 = vunpack.c.l.b16 %v390
    %v1707 = vunpack.c.h.b16 %v390
    %v1708 = vunpack.c.l.b16 %v391
    %v1709 = vunpack.c.h.b16 %v391
    %v1710 = vunpack.c.l.b16 %v392
    %v1711 = vunpack.c.h.b16 %v392
    %v1712 = vunpack.c.l.b16 %v393
    %v1713 = vunpack.c.h.b16 %v393
    %v1714 = vunpack.c.l.b16 %v394
    %v1715 = vunpack.c.h.b16 %v394
    %v1716 = vunpack.c.l.b16 %v395
    %v1717 = vunpack.c.h.b16 %v395
    %v1718 = vunpack.c.l.b16 %v396
    %v1719 = vunpack.c.h.b16 %v396
    %v1720 = vunpack.c.l.b16 %v397
    %v1721 = vunpack.c.h.b16 %v397
    %v1722 = vunpack.c.l.b16 %v398
    %v1723 = vunpack.c.h.b16 %v398
    %v1724 = vunpack.c.l.b16 %v399
    %v1725 = vunpack.c.h.b16 %v399
    %v1726 = vunpack.c.l.b16 %v400
    %v1727 = vunpack.c.h.b16 %v400
    %v1728 = vunpack.c.l.b16 %v401
    %v1729 = vunpack.c.h.b16 %v401
    %v1730 = vunpack.c.l.b16 %v402
    %v1731 = vunpack.c.h.b16 %v402
    %v1732 = vunpack.c.l.b16 %v403
    %v1733 = vunpack.c.h.b16 %v403
    %v1734 = vunpack.c.l.b16 %v404
    %v1735 = vunpack.c.h.b16 %v404
    %v1736 = vunpack.c.l.b16 %v405
    %v1737 = vunpack.c.h.b16 %v405
    %v1738 = vunpack.c.l.b16 %v406
    %v1739 = vunpack.c.h.b16 %v406
    %v1740 = vunpack.c.l.b16 %v407
    %v1741 = vunpack.c.h.b16 %v407
    %v1742 = vunpack.c.l.b16 %v408
    %v1743 = vunpack.c.h.b16 %v408
    %v1744 = vunpack.c.l.b16 %v409
    %v1745 = vunpack.c.h.b16 %v409
    %v1746 = vunpack.c.l.b16 %v410
    %v1747 = vunpack.c.h.b16 %v410
    %v1748 = vunpack.c.l.b16 %v411
    %v1749 = vunpack.c.h.b16 %v411
    %v1750 = vunpack.c.l.b16 %v412
    %v1751 = vunpack.c.h.b16 %v412
    %v1752 = vunpack.c.l.b16 %v413
    %v1753 = vunpack.c.h.b16 %v413
    %v1754 = vunpack.c.l.b16 %v414
    %v1755 = vunpack.c.h.b16 %v414
    %v1756 = vunpack.c.l.b16 %v415
    %v1757 = vunpack.c.h.b16 %v415
    %v1758 = vunpack.c.l.b16 %v416
    %v1759 = vunpack.c.h.b16 %v416
    %v1760 = vunpack.c.l.b16 %v417
    %v1761 = vunpack.c.h.b16 %v417
    %v1762 = vunpack.c.l.b16 %v418
    %v1763 = vunpack.c.h.b16 %v418
    %v1764 = vunpack.c.l.b16 %v419
    %v1765 = vunpack.c.h.b16 %v419
    %v1766 = vunpack.c.l.b16 %v420
    %v1767 = vunpack.c.h.b16 %v420
    %v1768 = vunpack.c.l.b16 %v421
    %v1769 = vunpack.c.h.b16 %v421
    %v1770 = vunpack.c.l.b16 %v422
    %v1771 = vunpack.c.h.b16 %v422
    %v1772 = vunpack.c.l.b16 %v423
    %v1773 = vunpack.c.h.b16 %v423
    %v1774 = vunpack.c.l.b16 %v424
    %v1775 = vunpack.c.h.b16 %v424
    %v1776 = vunpack.c.l.b16 %v425
    %v1777 = vunpack.c.h.b16 %v425
    %v1778 = vunpack.c.l.b16 %v426
    %v1779 = vunpack.c.h.b16 %v426
    %v1780 = vunpack.c.l.b16 %v427
    %v1781 = vunpack.c.h.b16 %v427
    %v1782 = vunpack.c.l.b16 %v428
    %v1783 = vunpack.c.h.b16 %v428
    %v1784 = vunpack.c.l.b16 %v429
    %v1785 = vunpack.c.h.b16 %v429
    %v1786 = vunpack.c.l.b16 %v430
    %v1787 = vunpack.c.h.b16 %v430
    %v1788 = vunpack.c.l.b16 %v431
    %v1789 = vunpack.c.h.b16 %v431
    %v1790 = vunpack.c.l.b16 %v432
    %v1791 = vunpack.c.h.b16 %v432
    %v1792 = vunpack.c.l.b16 %v433
    %v1793 = vunpack.c.h.b16 %v433
    %v1794 = vunpack.c.l.b16 %v434
    %v1795 = vunpack.c.h.b16 %v434
    %v1796 = vunpack.c.l.b16 %v435
    %v1797 = vunpack.c.h.b16 %v435
    %v1798 = vunpack.c.l.b16 %v436
    %v1799 = vunpack.c.h.b16 %v436
    %v1800 = vunpack.c.l.b16 %v437
    %v1801 = vunpack.c.h.b16 %v437
    %v1802 = vunpack.c.l.b16 %v438
    %v1803 = vunpack.c.h.b16 %v438
    %v1804 = vunpack.c.l.b16 %v439
    %v1805 = vunpack.c.h.b16 %v439
    %v1806 = vunpack.c.l.b16 %v440
    %v1807 = vunpack.c.h.b16 %v440
    %v1808 = vunpack.c.l.b16 %v441
    %v1809 = vunpack.c.h.b16 %v441
    %v1810 = vunpack.c.l.b16 %v442
    %v1811 = vunpack.c.h.b16 %v442
    %v1812 = vunpack.c.l.b16 %v443
    %v1813 = vunpack.c.h.b16 %v443
    %v1814 = vunpack.c.l.b16 %v444
    %v1815 = vunpack.c.h.b16 %v444
    %v1816 = vunpack.c.l.b16 %v445
    %v1817 = vunpack.c.h.b16 %v445
    %v1818 = vunpack.c.l.b16 %v446
    %v1819 = vunpack.c.h.b16 %v446
    %v1820 = vunpack.c.l.b16 %v447
    %v1821 = vunpack.c.h.b16 %v447
    %v1822 = vunpack.c.l.b16 %v448
    %v1823 = vunpack.c.h.b16 %v448
    %v1824 = vunpack.c.l.b16 %v449
    %v1825 = vunpack.c.h.b16 %v449
    %v1826 = vunpack.c.l.b16 %v450
    %v1827 = vunpack.c.h.b16 %v450
    %v1828 = vunpack.c.l.b16 %v451
    %v1829 = vunpack.c.h.b16 %v451
    %v1830 = vunpack.c.l.b16 %v452
    %v1831 = vunpack.c.h.b16 %v452
    %v1832 = vunpack.c.l.b16 %v453
    %v1833 = vunpack.c.h.b16 %v453
    %v1834 = vunpack.c.l.b16 %v454
    %v1835 = vunpack.c.h.b16 %v454
    %v1836 = vunpack.c.l.b16 %v455
    %v1837 = vunpack.c.h.b16 %v455
    %v1838 = vunpack.c.l.b16 %v456
    %v1839 = vunpack.c.h.b16 %v456
    %v1840 = vunpack.c.l.b16 %v457
    %v1841 = vunpack.c.h.b16 %v457
    %v1842 = vunpack.c.l.b16 %v458
    %v1843 = vunpack.c.h.b16 %v458
    %v1844 = vunpack.c.l.b16 %v459
    %v1845 = vunpack.c.h.b16 %v459
    %v1846 = vunpack.c.l.b16 %v460
    %v1847 = vunpack.c.h.b16 %v460
    %v1848 = vunpack.c.l.b16 %v461
    %v1849 = vunpack.c.h.b16 %v461
    %v1850 = vunpack.c.l.b16 %v462
    %v1851 = vunpack.c.h.b16 %v462
    %v1852 = vunpack.c.l.b16 %v463
    %v1853 = vunpack.c.h.b16 %v463
    %v1854 = vunpack.c.l.b16 %v464
    %v1855 = vunpack.c.h.b16 %v464
    %v1856 = vunpack.c.l.b16 %v465
    %v1857 = vunpack.c.h.b16 %v465
    %v1858 = vunpack.c.l.b16 %v466
    %v1859 = vunpack.c.h.b16 %v466
    %v1860 = vunpack.c.l.b16 %v467
    %v1861 = vunpack.c.h.b16 %v467
    %v1862 = vunpack.c.l.b16 %v468
    %v1863 = vunpack.c.h.b16 %v468
    %v1864 = vunpack.c.l.b16 %v469
    %v1865 = vunpack.c.h.b16 %v469
    %v1866 = vunpack.c.l.b16 %v470
    %v1867 = vunpack.c.h.b16 %v470
    %v1868 = vunpack.c.l.b16 %v471
    %v1869 = vunpack.c.h.b16 %v471
    %v1870 = vunpack.c.l.b16 %v472
    %v1871 = vunpack.c.h.b16 %v472
    %v1872 = vunpack.c.l.b16 %v473
    %v1873 = vunpack.c.h.b16 %v473
    %v1874 = vunpack.c.l.b16 %v474
    %v1875 = vunpack.c.h.b16 %v474
    %v1876 = vunpack.c.l.b16 %v475
    %v1877 = vunpack.c.h.b16 %v475
    %v1878 = vunpack.c.l.b16 %v476
    %v1879 = vunpack.c.h.b16 %v476
    %v1880 = vunpack.c.l.b16 %v477
    %v1881 = vunpack.c.h.b16 %v477
    %v1882 = vunpack.c.l.b16 %v478
    %v1883 = vunpack.c.h.b16 %v478
    %v1884 = vunpack.c.l.b16 %v479
    %v1885 = vunpack.c.h.b16 %v479
    %v1886 = vunpack.c.l.b16 %v480
    %v1887 = vunpack.c.h.b16 %v480
    %v1888 = vunpack.c.l.b16 %v481
    %v1889 = vunpack.c.h.b16 %v481
    %v1890 = vunpack.c.l.b16 %v482
    %v1891 = vunpack.c.h.b16 %v482
    %v1892 = vunpack.c.l.b16 %v483
    %v1893 = vunpack.c.h.b16 %v483
    %v1894 = vunpack.c.l.b16 %v484
    %v1895 = vunpack.c.h.b16 %v484
    %v1896 = vunpack.c.l.b16 %v485
    %v1897 = vunpack.c.h.b16 %v485
    %v1898 = vunpack.c.l.b16 %v486
    %v1899 = vunpack.c.h.b16 %v486
    %v1900 = vunpack.c.l.b16 %v487
    %v1901 = vunpack.c.h.b16 %v487
    %v1902 = vunpack.c.l.b16 %v488
    %v1903 = vunpack.c.h.b16 %v488
    %v1904 = vunpack.c.l.b16 %v489
    %v1905 = vunpack.c.h.b16 %v489
    %v1906 = vunpack.c.l.b16 %v490
    %v1907 = vunpack.c.h.b16 %v490
    %v1908 = vunpack.c.l.b16 %v491
    %v1909 = vunpack.c.h.b16 %v491
    %v1910 = vunpack.c.l.b16 %v492
    %v1911 = vunpack.c.h.b16 %v492
    %v1912 = vunpack.c.l.b16 %v493
    %v1913 = vunpack.c.h.b16 %v493
    %v1914 = vunpack.c.l.b16 %v494
    %v1915 = vunpack.c.h.b16 %v494
    %v1916 = vunpack.c.l.b16 %v495
    %v1917 = vunpack.c.h.b16 %v495
    %v1918 = vunpack.c.l.b16 %v496
    %v1919 = vunpack.c.h.b16 %v496
    %v1920 = vunpack.c.l.b16 %v497
    %v1921 = vunpack.c.h.b16 %v497
    %v1922 = vunpack.c.l.b16 %v498
    %v1923 = vunpack.c.h.b16 %v498
    %v1924 = vunpack.c.l.b16 %v499
    %v1925 = vunpack.c.h.b16 %v499
    %v1926 = vunpack.c.l.b16 %v500
    %v1927 = vunpack.c.h.b16 %v500
    %v1928 = vunpack.c.l.b16 %v501
    %v1929 = vunpack.c.h.b16 %v501
    %v1930 = vunpack.c.l.b16 %v502
    %v1931 = vunpack.c.h.b16 %v502
    %v1932 = vunpack.c.l.b16 %v503
    %v1933 = vunpack.c.h.b16 %v503
    %v1934 = vunpack.c.l.b16 %v504
    %v1935 = vunpack.c.h.b16 %v504
    %v1936 = vunpack.c.l.b16 %v505
    %v1937 = vunpack.c.h.b16 %v505
    %v1938 = vunpack.c.l.b16 %v506
    %v1939 = vunpack.c.h.b16 %v506
    %v1940 = vunpack.c.l.b16 %v507
    %v1941 = vunpack.c.h.b16 %v507
    %v1942 = vunpack.c.l.b16 %v508
    %v1943 = vunpack.c.h.b16 %v508
    %v1944 = vunpack.c.l.b16 %v509
    %v1945 = vunpack.c.h.b16 %v509
    %v1946 = vunpack.c.l.b16 %v510
    %v1947 = vunpack.c.h.b16 %v510
    %v1948 = vunpack.c.l.b16 %v511
    %v1949 = vunpack.c.h.b16 %v511
    %v1950 = vunpack.c.l.b16 %v512
    %v1951 = vunpack.c.h.b16 %v512
    %v1952 = vunpack.c.l.b16 %v513
    %v1953 = vunpack.c.h.b16 %v513
    %v1954 = vunpack.c.l.b16 %v514
    %v1955 = vunpack.c.h.b16 %v514
    %v1956 = vunpack.c.l.b16 %v515
    %v1957 = vunpack.c.h.b16 %v515
    %v1958 = vunpack.c.l.b16 %v516
    %v1959 = vunpack.c.h.b16 %v516
    %v1960 = vunpack.c.l.b16 %v517
    %v1961 = vunpack.c.h.b16 %v517
    %v1962 = vunpack.c.l.b16 %v518
    %v1963 = vunpack.c.h.b16 %v518
    %v1964 = vunpack.c.l.b16 %v519
    %v1965 = vunpack.c.h.b16 %v519
    %v1966 = vunpack.c.l.b16 %v520
    %v1967 = vunpack.c.h.b16 %v520
    %v1968 = vunpack.c.l.b16 %v521
    %v1969 = vunpack.c.h.b16 %v521
    %v1970 = vunpack.c.l.b16 %v522
    %v1971 = vunpack.c.h.b16 %v522
    %v1972 = vunpack.c.l.b16 %v523
    %v1973 = vunpack.c.h.b16 %v523
    %v1974 = vunpack.c.l.b16 %v524
    %v1975 = vunpack.c.h.b16 %v524
    %v1976 = vunpack.c.l.b16 %v525
    %v1977 = vunpack.c.h.b16 %v525
    %v1978 = vunpack.c.l.b16 %v526
    %v1979 = vunpack.c.h.b16 %v526
    %v1980 = vunpack.c.l.b16 %v527
    %v1981 = vunpack.c.h.b16 %v527
    %v1982 = vunpack.c.l.b16 %v528
    %v1983 = vunpack.c.h.b16 %v528
    %v1984 = vunpack.c.l.b16 %v529
    %v1985 = vunpack.c.h.b16 %v529
    %v1986 = vunpack.c.l.b16 %v530
    %v1987 = vunpack.c.h.b16 %v530
    %v1988 = vunpack.c.l.b16 %v531
    %v1989 = vunpack.c.h.b16 %v531
    %v1990 = vunpack.c.l.b16 %v532
    %v1991 = vunpack.c.h.b16 %v532
    %v1992 = vunpack.c.l.b16 %v533
    %v1993 = vunpack.c.h.b16 %v533
    %v1994 = vunpack.c.l.b16 %v534
    %v1995 = vunpack.c.h.b16 %v534
    %v1996 = vunpack.c.l.b16 %v535
    %v1997 = vunpack.c.h.b16 %v535
    %v1998 = vunpack.c.l.b16 %v536
    %v1999 = vunpack.c.h.b16 %v536
    %v2000 = vunpack.c.l.b16 %v537
    %v2001 = vunpack.c.h.b16 %v537
    %v2002 = vunpack.c.l.b16 %v538
    %v2003 = vunpack.c.h.b16 %v538
    %v2004 = vunpack.c.l.b16 %v539
    %v2005 = vunpack.c.h.b16 %v539
    %v2006 = vunpack.c.l.b16 %v540
    %v2007 = vunpack.c.h.b16 %v540
    %v2008 = vunpack.c.l.b16 %v541
    %v2009 = vunpack.c.h.b16 %v541
    %v2010 = vunpack.c.l.b16 %v542
    %v2011 = vunpack.c.h.b16 %v542
    %v2012 = vunpack.c.l.b16 %v543
    %v2013 = vunpack.c.h.b16 %v543
    %v2014 = vunpack.c.l.b16 %v544
    %v2015 = vunpack.c.h.b16 %v544
    %v2016 = vunpack.c.l.b16 %v545
    %v2017 = vunpack.c.h.b16 %v545
    %v2018 = vunpack.c.l.b16 %v546
    %v2019 = vunpack.c.h.b16 %v546
    %v2020 = vunpack.c.l.b16 %v547
    %v2021 = vunpack.c.h.b16 %v547
    %v2022 = vunpack.c.l.b16 %v548
    %v2023 = vunpack.c.h.b16 %v548
    %v2024 = vunpack.c.l.b16 %v549
    %v2025 = vunpack.c.h.b16 %v549
    %v2026 = vunpack.c.l.b16 %v550
    %v2027 = vunpack.c.h.b16 %v550
    %v2028 = vunpack.c.l.b16 %v551
    %v2029 = vunpack.c.h.b16 %v551
    %v2030 = vunpack.c.l.b16 %v552
    %v2031 = vunpack.c.h.b16 %v552
    %v2032 = vunpack.c.l.b16 %v553
    %v2033 = vunpack.c.h.b16 %v553
    %v2034 = vunpack.c.l.b16 %v554
    %v2035 = vunpack.c.h.b16 %v554
    %v2036 = vunpack.c.l.b16 %v555
    %v2037 = vunpack.c.h.b16 %v555
    %v2038 = vunpack.c.l.b16 %v556
    %v2039 = vunpack.c.h.b16 %v556
    %v2040 = vunpack.c.l.b16 %v557
    %v2041 = vunpack.c.h.b16 %v557
    %v2042 = vunpack.c.l.b16 %v558
    %v2043 = vunpack.c.h.b16 %v558
    %v2044 = vunpack.c.l.b16 %v559
    %v2045 = vunpack.c.h.b16 %v559
    %v2046 = vunpack.c.l.b16 %v560
    %v2047 = vunpack.c.h.b16 %v560
    %v2048 = vunpack.c.l.b16 %v561
    %v2049 = vunpack.c.h.b16 %v561
    %v2050 = vunpack.c.l.b16 %v562
    %v2051 = vunpack.c.h.b16 %v562
    %v2052 = vunpack.c.l.b16 %v563
    %v2053 = vunpack.c.h.b16 %v563
    %v2054 = vunpack.c.l.b16 %v564
    %v2055 = vunpack.c.h.b16 %v564
    %v2056 = vunpack.c.l.b16 %v565
    %v2057 = vunpack.c.h.b16 %v565
    %v2058 = vunpack.c.l.b16 %v566
    %v2059 = vunpack.c.h.b16 %v566
    %v2060 = vunpack.c.l.b16 %v567
    %v2061 = vunpack.c.h.b16 %v567
    %v2062 = vunpack.c.l.b16 %v568
    %v2063 = vunpack.c.h.b16 %v568
    %v2064 = vunpack.c.l.b16 %v569
    %v2065 = vunpack.c.h.b16 %v569
    %v2066 = vunpack.c.l.b16 %v570
    %v2067 = vunpack.c.h.b16 %v570
    %v2068 = vunpack.c.l.b16 %v571
    %v2069 = vunpack.c.h.b16 %v571
    %v2070 = vunpack.c.l.b16 %v572
    %v2071 = vunpack.c.h.b16 %v572
    %v2072 = vunpack.c.l.b16 %v573
    %v2073 = vunpack.c.h.b16 %v573
    %v2074 = vunpack.c.l.b16 %v574
    %v2075 = vunpack.c.h.b16 %v574
    %v2076 = vunpack.c.l.b16 %v575
    %v2077 = vunpack.c.h.b16 %v575
    %v2078 = vunpack.c.l.b16 %v576
    %v2079 = vunpack.c.h.b16 %v576
    %v2080 = vunpack.c.l.b16 %v577
    %v2081 = vunpack.c.h.b16 %v577
    %v2082 = vunpack.c.l.b16 %v578
    %v2083 = vunpack.c.h.b16 %v578
    %v2084 = vunpack.c.l.b16 %v579
    %v2085 = vunpack.c.h.b16 %v579
    %v2086 = vunpack.c.l.b16 %v580
    %v2087 = vunpack.c.h.b16 %v580
    %v2088 = vunpack.c.l.b16 %v581
    %v2089 = vunpack.c.h.b16 %v581
    %v2090 = vunpack.c.l.b16 %v582
    %v2091 = vunpack.c.h.b16 %v582
    %v2092 = vunpack.c.l.b16 %v583
    %v2093 = vunpack.c.h.b16 %v583
    %v2094 = vunpack.c.l.b16 %v584
    %v2095 = vunpack.c.h.b16 %v584
    %v2096 = vunpack.c.l.b16 %v585
    %v2097 = vunpack.c.h.b16 %v585
    %v2098 = vunpack.c.l.b16 %v586
    %v2099 = vunpack.c.h.b16 %v586
    %v2100 = vunpack.c.l.b16 %v587
    %v2101 = vunpack.c.h.b16 %v587
    %v2102 = vunpack.c.l.b16 %v588
    %v2103 = vunpack.c.h.b16 %v588
    %v2104 = vunpack.c.l.b16 %v589
    %v2105 = vunpack.c.h.b16 %v589
    %v2106 = vunpack.c.l.b16 %v590
    %v2107 = vunpack.c.h.b16 %v590
    %v2108 = vunpack.c.l.b16 %v591
    %v2109 = vunpack.c.h.b16 %v591
    %v2110 = vunpack.c.l.b16 %v592
    %v2111 = vunpack.c.h.b16 %v592
    %v2112 = vunpack.c.l.b16 %v593
    %v2113 = vunpack.c.h.b16 %v593
    %v2114 = vunpack.c.l.b16 %v594
    %v2115 = vunpack.c.h.b16 %v594
    %v2116 = vunpack.c.l.b16 %v595
    %v2117 = vunpack.c.h.b16 %v595
    %v2118 = vunpack.c.l.b16 %v596
    %v2119 = vunpack.c.h.b16 %v596
    %v2120 = vunpack.c.l.b16 %v597
    %v2121 = vunpack.c.h.b16 %v597
    %v2122 = vunpack.c.l.b16 %v598
    %v2123 = vunpack.c.h.b16 %v598
    %v2124 = vunpack.c.l.b16 %v599
    %v2125 = vunpack.c.h.b16 %v599
    %v2126 = vunpack.c.l.b16 %v600
    %v2127 = vunpack.c.h.b16 %v600
    %v2128 = vunpack.c.l.b16 %v601
    %v2129 = vunpack.c.h.b16 %v601
    %v2130 = vunpack.c.l.b16 %v602
    %v2131 = vunpack.c.h.b16 %v602
    %v2132 = vunpack.c.l.b16 %v603
    %v2133 = vunpack.c.h.b16 %v603
    %v2134 = vunpack.c.l.b16 %v604
    %v2135 = vunpack.c.h.b16 %v604
    %v2136 = vunpack.c.l.b16 %v605
    %v2137 = vunpack.c.h.b16 %v605
    %v2138 = vunpack.c.l.b16 %v606
    %v2139 = vunpack.c.h.b16 %v606
    %v2140 = vunpack.c.l.b16 %v607
    %v2141 = vunpack.c.h.b16 %v607
    %v2142 = vunpack.c.l.b16 %v608
    %v2143 = vunpack.c.h.b16 %v608
    %v2144 = vunpack.c.l.b16 %v609
    %v2145 = vunpack.c.h.b16 %v609
    %v2146 = vunpack.c.l.b16 %v610
    %v2147 = vunpack.c.h.b16 %v610
    %v2148 = vunpack.c.l.b16 %v611
    %v2149 = vunpack.c.h.b16 %v611
    %v2150 = vunpack.c.l.b16 %v612
    %v2151 = vunpack.c.h.b16 %v612
    %v2152 = vpack.c.b16 %v1200, %v1192
    %v2153 = vpack.c.b16 %v1201, %v1193
    %v2154 = vpack.c.b16 %v1202, %v1194
    %v2155 = vpack.c.b16 %v1203, %v1195
    %v2156 = vpack.c.b16 %v1204, %v1196
    %v2157 = vpack.c.b16 %v1205, %v1197
    %v2158 = vpack.c.b16 %v1206, %v1198
    %v2159 = vpack.c.b16 %v1207, %v1199
    %v2160 = vpack.c.b16 %v1216, %v1208
    %v2161 = vpack.c.b16 %v1217, %v1209
    %v2162 = vpack.c.b16 %v1218, %v1210
    %v2163 = vpack.c.b16 %v1219, %v1211
    %v2164 = vpack.c.b16 %v1220, %v1212
    %v2165 = vpack.c.b16 %v1221, %v1213
    %v2166 = vpack.c.b16 %v1222, %v1214
    %v2167 = vpack.c.b16 %v1223, %v1215
    %v2168 = vpack.c.b16 %v1232, %v1224
    %v2169 = vpack.c.b16 %v1233, %v1225
    %v2170 = vpack.c.b16 %v1234, %v1226
    %v2171 = vpack.c.b16 %v1235, %v1227
    %v2172 = vpack.c.b16 %v1236, %v1228
    %v2173 = vpack.c.b16 %v1237, %v1229
    %v2174 = vpack.c.b16 %v1238, %v1230
    %v2175 = vpack.c.b16 %v1239, %v1231
    %v2176 = vpack.c.b16 %v1248, %v1240
    %v2177 = vpack.c.b16 %v1249, %v1241
    %v2178 = vpack.c.b16 %v1250, %v1242
    %v2179 = vpack.c.b16 %v1251, %v1243
    %v2180 = vpack.c.b16 %v1252, %v1244
    %v2181 = vpack.c.b16 %v1253, %v1245
    %v2182 = vpack.c.b16 %v1254, %v1246
    %v2183 = vpack.c.b16 %v1255, %v1247
    %v2184 = vpack.c.b16 %v1264, %v1256
    %v2185 = vpack.c.b16 %v1265, %v1257
    %v2186 = vpack.c.b16 %v1266, %v1258
    %v2187 = vpack.c.b16 %v1267, %v1259
    %v2188 = vpack.c.b16 %v1268, %v1260
    %v2189 = vpack.c.b16 %v1269, %v1261
    %v2190 = vpack.c.b16 %v1270, %v1262
    %v2191 = vpack.c.b16 %v1271, %v1263
    %v2192 = vpack.c.b16 %v1280, %v1272
    %v2193 = vpack.c.b16 %v1281, %v1273
    %v2194 = vpack.c.b16 %v1282, %v1274
    %v2195 = vpack.c.b16 %v1283, %v1275
    %v2196 = vpack.c.b16 %v1284, %v1276
    %v2197 = vpack.c.b16 %v1285, %v1277
    %v2198 = vpack.c.b16 %v1286, %v1278
    %v2199 = vpack.c.b16 %v1287, %v1279
    %v2200 = vpack.c.b16 %v1296, %v1288
    %v2201 = vpack.c.b16 %v1297, %v1289
    %v2202 = vpack.c.b16 %v1298, %v1290
    %v2203 = vpack.c.b16 %v1299, %v1291
    %v2204 = vpack.c.b16 %v1300, %v1292
    %v2205 = vpack.c.b16 %v1301, %v1293
    %v2206 = vpack.c.b16 %v1302, %v1294
    %v2207 = vpack.c.b16 %v1303, %v1295
    %v2208 = vpack.c.b16 %v1312, %v1304
    %v2209 = vpack.c.b16 %v1313, %v1305
    %v2210 = vpack.c.b16 %v1314, %v1306
    %v2211 = vpack.c.b16 %v1315, %v1307
    %v2212 = vpack.c.b16 %v1316, %v1308
    %v2213 = vpack.c.b16 %v1317, %v1309
    %v2214 = vpack.c.b16 %v1318, %v1310
    %v2215 = vpack.c.b16 %v1319, %v1311
    %v2216 = vpack.c.b16 %v1328, %v1320
    %v2217 = vpack.c.b16 %v1329, %v1321
    %v2218 = vpack.c.b16 %v1330, %v1322
    %v2219 = vpack.c.b16 %v1331, %v1323
    %v2220 = vpack.c.b16 %v1332, %v1324
    %v2221 = vpack.c.b16 %v1333, %v1325
    %v2222 = vpack.c.b16 %v1334, %v1326
    %v2223 = vpack.c.b16 %v1335, %v1327
    %v2224 = vpack.c.b16 %v1344, %v1336
    %v2225 = vpack.c.b16 %v1345, %v1337
    %v2226 = vpack.c.b16 %v1346, %v1338
    %v2227 = vpack.c.b16 %v1347, %v1339
    %v2228 = vpack.c.b16 %v1348, %v1340
    %v2229 = vpack.c.b16 %v1349, %v1341
    %v2230 = vpack.c.b16 %v1350, %v1342
    %v2231 = vpack.c.b16 %v1351, %v1343
    %v2232 = vpack.c.b16 %v1360, %v1352
    %v2233 = vpack.c.b16 %v1361, %v1353
    %v2234 = vpack.c.b16 %v1362, %v1354
    %v2235 = vpack.c.b16 %v1363, %v1355
    %v2236 = vpack.c.b16 %v1364, %v1356
    %v2237 = vpack.c.b16 %v1365, %v1357
    %v2238 = vpack.c.b16 %v1366, %v1358
    %v2239 = vpack.c.b16 %v1367, %v1359
    %v2240 = vpack.c.b16 %v1376, %v1368
    %v2241 = vpack.c.b16 %v1377, %v1369
    %v2242 = vpack.c.b16 %v1378, %v1370
    %v2243 = vpack.c.b16 %v1379, %v1371
    %v2244 = vpack.c.b16 %v1380, %v1372
    %v2245 = vpack.c.b16 %v1381, %v1373
    %v2246 = vpack.c.b16 %v1382, %v1374
    %v2247 = vpack.c.b16 %v1383, %v1375
    %v2248 = vpack.c.b16 %v1392, %v1384
    %v2249 = vpack.c.b16 %v1393, %v1385
    %v2250 = vpack.c.b16 %v1394, %v1386
    %v2251 = vpack.c.b16 %v1395, %v1387
    %v2252 = vpack.c.b16 %v1396, %v1388
    %v2253 = vpack.c.b16 %v1397, %v1389
    %v2254 = vpack.c.b16 %v1398, %v1390
    %v2255 = vpack.c.b16 %v1399, %v1391
    %v2256 = vpack.c.b16 %v1408, %v1400
    %v2257 = vpack.c.b16 %v1409, %v1401
    %v2258 = vpack.c.b16 %v1410, %v1402
    %v2259 = vpack.c.b16 %v1411, %v1403
    %v2260 = vpack.c.b16 %v1412, %v1404
    %v2261 = vpack.c.b16 %v1413, %v1405
    %v2262 = vpack.c.b16 %v1414, %v1406
    %v2263 = vpack.c.b16 %v1415, %v1407
    %v2264 = vpack.c.b16 %v1424, %v1416
    %v2265 = vpack.c.b16 %v1425, %v1417
    %v2266 = vpack.c.b16 %v1426, %v1418
    %v2267 = vpack.c.b16 %v1427, %v1419
    %v2268 = vpack.c.b16 %v1428, %v1420
    %v2269 = vpack.c.b16 %v1429, %v1421
    %v2270 = vpack.c.b16 %v1430, %v1422
    %v2271 = vpack.c.b16 %v1431, %v1423
    %v2272 = vpack.c.b16 %v1440, %v1432
    %v2273 = vpack.c.b16 %v1441, %v1433
    %v2274 = vpack.c.b16 %v1442, %v1434
    %v2275 = vpack.c.b16 %v1443, %v1435
    %v2276 = vpack.c.b16 %v1444, %v1436
    %v2277 = vpack.c.b16 %v1445, %v1437
    %v2278 = vpack.c.b16 %v1446, %v1438
    %v2279 = vpack.c.b16 %v1447, %v1439
    %v2280 = vpack.c.b16 %v1456, %v1448
    %v2281 = vpack.c.b16 %v1457, %v1449
    %v2282 = vpack.c.b16 %v1458, %v1450
    %v2283 = vpack.c.b16 %v1459, %v1451
    %v2284 = vpack.c.b16 %v1460, %v1452
    %v2285 = vpack.c.b16 %v1461, %v1453
    %v2286 = vpack.c.b16 %v1462, %v1454
    %v2287 = vpack.c.b16 %v1463, %v1455
    %v2288 = vpack.c.b16 %v1472, %v1464
    %v2289 = vpack.c.b16 %v1473, %v1465
    %v2290 = vpack.c.b16 %v1474, %v1466
    %v2291 = vpack.c.b16 %v1475, %v1467
    %v2292 = vpack.c.b16 %v1476, %v1468
    %v2293 = vpack.c.b16 %v1477, %v1469
    %v2294 = vpack.c.b16 %v1478, %v1470
    %v2295 = vpack.c.b16 %v1479, %v1471
    %v2296 = vpack.c.b16 %v1488, %v1480
    %v2297 = vpack.c.b16 %v1489, %v1481
    %v2298 = vpack.c.b16 %v1490, %v1482
    %v2299 = vpack.c.b16 %v1491, %v1483
    %v2300 = vpack.c.b16 %v1492, %v1484
    %v2301 = vpack.c.b16 %v1493, %v1485
    %v2302 = vpack.c.b16 %v1494, %v1486
    %v2303 = vpack.c.b16 %v1495, %v1487
    %v2304 = vpack.c.b16 %v1504, %v1496
    %v2305 = vpack.c.b16 %v1505, %v1497
    %v2306 = vpack.c.b16 %v1506, %v1498
    %v2307 = vpack.c.b16 %v1507, %v1499
    %v2308 = vpack.c.b16 %v1508, %v1500
    %v2309 = vpack.c.b16 %v1509, %v1501
    %v2310 = vpack.c.b16 %v1510, %v1502
    %v2311 = vpack.c.b16 %v1511, %v1503
    %v2312 = vpack.c.b16 %v1520, %v1512
    %v2313 = vpack.c.b16 %v1521, %v1513
    %v2314 = vpack.c.b16 %v1522, %v1514
    %v2315 = vpack.c.b16 %v1523, %v1515
    %v2316 = vpack.c.b16 %v1524, %v1516
    %v2317 = vpack.c.b16 %v1525, %v1517
    %v2318 = vpack.c.b16 %v1526, %v1518
    %v2319 = vpack.c.b16 %v1527, %v1519
    %v2320 = vpack.c.b16 %v1536, %v1528
    %v2321 = vpack.c.b16 %v1537, %v1529
    %v2322 = vpack.c.b16 %v1538, %v1530
    %v2323 = vpack.c.b16 %v1539, %v1531
    %v2324 = vpack.c.b16 %v1540, %v1532
    %v2325 = vpack.c.b16 %v1541, %v1533
    %v2326 = vpack.c.b16 %v1542, %v1534
    %v2327 = vpack.c.b16 %v1543, %v1535
    %v2328 = vpack.c.b16 %v1552, %v1544
    %v2329 = vpack.c.b16 %v1553, %v1545
    %v2330 = vpack.c.b16 %v1554, %v1546
    %v2331 = vpack.c.b16 %v1555, %v1547
    %v2332 = vpack.c.b16 %v1556, %v1548
    %v2333 = vpack.c.b16 %v1557, %v1549
    %v2334 = vpack.c.b16 %v1558, %v1550
    %v2335 = vpack.c.b16 %v1559, %v1551
    %v2336 = vpack.c.b16 %v1568, %v1560
    %v2337 = vpack.c.b16 %v1569, %v1561
    %v2338 = vpack.c.b16 %v1570, %v1562
    %v2339 = vpack.c.b16 %v1571, %v1563
    %v2340 = vpack.c.b16 %v1572, %v1564
    %v2341 = vpack.c.b16 %v1573, %v1565
    %v2342 = vpack.c.b16 %v1574, %v1566
    %v2343 = vpack.c.b16 %v1575, %v1567
    %v2344 = vpack.c.b16 %v1584, %v1576
    %v2345 = vpack.c.b16 %v1585, %v1577
    %v2346 = vpack.c.b16 %v1586, %v1578
    %v2347 = vpack.c.b16 %v1587, %v1579
    %v2348 = vpack.c.b16 %v1588, %v1580
    %v2349 = vpack.c.b16 %v1589, %v1581
    %v2350 = vpack.c.b16 %v1590, %v1582
    %v2351 = vpack.c.b16 %v1591, %v1583
    %v2352 = vpack.c.b16 %v1600, %v1592
    %v2353 = vpack.c.b16 %v1601, %v1593
    %v2354 = vpack.c.b16 %v1602, %v1594
    %v2355 = vpack.c.b16 %v1603, %v1595
    %v2356 = vpack.c.b16 %v1604, %v1596
    %v2357 = vpack.c.b16 %v1605, %v1597
    %v2358 = vpack.c.b16 %v1606, %v1598
    %v2359 = vpack.c.b16 %v1607, %v1599
    %v2360 = vpack.c.b16 %v1616, %v1608
    %v2361 = vpack.c.b16 %v1617, %v1609
    %v2362 = vpack.c.b16 %v1618, %v1610
    %v2363 = vpack.c.b16 %v1619, %v1611
    %v2364 = vpack.c.b16 %v1620, %v1612
    %v2365 = vpack.c.b16 %v1621, %v1613
    %v2366 = vpack.c.b16 %v1622, %v1614
    %v2367 = vpack.c.b16 %v1623, %v1615
    %v2368 = vpack.c.b16 %v1632, %v1624
    %v2369 = vpack.c.b16 %v1633, %v1625
    %v2370 = vpack.c.b16 %v1634, %v1626
    %v2371 = vpack.c.b16 %v1635, %v1627
    %v2372 = vpack.c.b16 %v1636, %v1628
    %v2373 = vpack.c.b16 %v1637, %v1629
    %v2374 = vpack.c.b16 %v1638, %v1630
    %v2375 = vpack.c.b16 %v1639, %v1631
    %v2376 = vpack.c.b16 %v1648, %v1640
    %v2377 = vpack.c.b16 %v1649, %v1641
    %v2378 = vpack.c.b16 %v1650, %v1642
    %v2379 = vpack.c.b16 %v1651, %v1643
    %v2380 = vpack.c.b16 %v1652, %v1644
    %v2381 = vpack.c.b16 %v1653, %v1645
    %v2382 = vpack.c.b16 %v1654, %v1646
    %v2383 = vpack.c.b16 %v1655, %v1647
    %v2384 = vpack.c.b16 %v1664, %v1656
    %v2385 = vpack.c.b16 %v1665, %v1657
    %v2386 = vpack.c.b16 %v1666, %v1658
    %v2387 = vpack.c.b16 %v1667, %v1659
    %v2388 = vpack.c.b16 %v1668, %v1660
    %v2389 = vpack.c.b16 %v1669, %v1661
    %v2390 = vpack.c.b16 %v1670, %v1662
    %v2391 = vpack.c.b16 %v1671, %v1663
    %v2392 = vpack.c.b16 %v1680, %v1672
    %v2393 = vpack.c.b16 %v1681, %v1673
    %v2394 = vpack.c.b16 %v1682, %v1674
    %v2395 = vpack.c.b16 %v1683, %v1675
    %v2396 = vpack.c.b16 %v1684, %v1676
    %v2397 = vpack.c.b16 %v1685, %v1677
    %v2398 = vpack.c.b16 %v1686, %v1678
    %v2399 = vpack.c.b16 %v1687, %v1679
    %v2400 = vpack.c.b16 %v1696, %v1688
    %v2401 = vpack.c.b16 %v1697, %v1689
    %v2402 = vpack.c.b16 %v1698, %v1690
    %v2403 = vpack.c.b16 %v1699, %v1691
    %v2404 = vpack.c.b16 %v1700, %v1692
    %v2405 = vpack.c.b16 %v1701, %v1693
    %v2406 = vpack.c.b16 %v1702, %v1694
    %v2407 = vpack.c.b16 %v1703, %v1695
    %v2408 = vpack.c.b16 %v1712, %v1704
    %v2409 = vpack.c.b16 %v1713, %v1705
    %v2410 = vpack.c.b16 %v1714, %v1706
    %v2411 = vpack.c.b16 %v1715, %v1707
    %v2412 = vpack.c.b16 %v1716, %v1708
    %v2413 = vpack.c.b16 %v1717, %v1709
    %v2414 = vpack.c.b16 %v1718, %v1710
    %v2415 = vpack.c.b16 %v1719, %v1711
    %v2416 = vpack.c.b16 %v1728, %v1720
    %v2417 = vpack.c.b16 %v1729, %v1721
    %v2418 = vpack.c.b16 %v1730, %v1722
    %v2419 = vpack.c.b16 %v1731, %v1723
    %v2420 = vpack.c.b16 %v1732, %v1724
    %v2421 = vpack.c.b16 %v1733, %v1725
    %v2422 = vpack.c.b16 %v1734, %v1726
    %v2423 = vpack.c.b16 %v1735, %v1727
    %v2424 = vpack.c.b16 %v1744, %v1736
    %v2425 = vpack.c.b16 %v1745, %v1737
    %v2426 = vpack.c.b16 %v1746, %v1738
    %v2427 = vpack.c.b16 %v1747, %v1739
    %v2428 = vpack.c.b16 %v1748, %v1740
    %v2429 = vpack.c.b16 %v1749, %v1741
    %v2430 = vpack.c.b16 %v1750, %v1742
    %v2431 = vpack.c.b16 %v1751, %v1743
    %v2432 = vpack.c.b16 %v1760, %v1752
    %v2433 = vpack.c.b16 %v1761, %v1753
    %v2434 = vpack.c.b16 %v1762, %v1754
    %v2435 = vpack.c.b16 %v1763, %v1755
    %v2436 = vpack.c.b16 %v1764, %v1756
    %v2437 = vpack.c.b16 %v1765, %v1757
    %v2438 = vpack.c.b16 %v1766, %v1758
    %v2439 = vpack.c.b16 %v1767, %v1759
    %v2440 = vpack.c.b16 %v1776, %v1768
    %v2441 = vpack.c.b16 %v1777, %v1769
    %v2442 = vpack.c.b16 %v1778, %v1770
    %v2443 = vpack.c.b16 %v1779, %v1771
    %v2444 = vpack.c.b16 %v1780, %v1772
    %v2445 = vpack.c.b16 %v1781, %v1773
    %v2446 = vpack.c.b16 %v1782, %v1774
    %v2447 = vpack.c.b16 %v1783, %v1775
    %v2448 = vpack.c.b16 %v1792, %v1784
    %v2449 = vpack.c.b16 %v1793, %v1785
    %v2450 = vpack.c.b16 %v1794, %v1786
    %v2451 = vpack.c.b16 %v1795, %v1787
    %v2452 = vpack.c.b16 %v1796, %v1788
    %v2453 = vpack.c.b16 %v1797, %v1789
    %v2454 = vpack.c.b16 %v1798, %v1790
    %v2455 = vpack.c.b16 %v1799, %v1791
    %v2456 = vpack.c.b16 %v1808, %v1800
    %v2457 = vpack.c.b16 %v1809, %v1801
    %v2458 = vpack.c.b16 %v1810, %v1802
    %v2459 = vpack.c.b16 %v1811, %v1803
    %v2460 = vpack.c.b16 %v1812, %v1804
    %v2461 = vpack.c.b16 %v1813, %v1805
    %v2462 = vpack.c.b16 %v1814, %v1806
    %v2463 = vpack.c.b16 %v1815, %v1807
    %v2464 = vpack.c.b16 %v1824, %v1816
    %v2465 = vpack.c.b16 %v1825, %v1817
    %v2466 = vpack.c.b16 %v1826, %v1818
    %v2467 = vpack.c.b16 %v1827, %v1819
    %v2468 = vpack.c.b16 %v1828, %v1820
    %v2469 = vpack.c.b16 %v1829, %v1821
    %v2470 = vpack.c.b16 %v1830, %v1822
    %v2471 = vpack.c.b16 %v1831, %v1823
    %v2472 = vpack.c.b16 %v1840, %v1832
    %v2473 = vpack.c.b16 %v1841, %v1833
    %v2474 = vpack.c.b16 %v1842, %v1834
    %v2475 = vpack.c.b16 %v1843, %v1835
    %v2476 = vpack.c.b16 %v1844, %v1836
    %v2477 = vpack.c.b16 %v1845, %v1837
    %v2478 = vpack.c.b16 %v1846, %v1838
    %v2479 = vpack.c.b16 %v1847, %v1839
    %v2480 = vpack.c.b16 %v1856, %v1848
    %v2481 = vpack.c.b16 %v1857, %v1849
    %v2482 = vpack.c.b16 %v1858, %v1850
    %v2483 = vpack.c.b16 %v1859, %v1851
    %v2484 = vpack.c.b16 %v1860, %v1852
    %v2485 = vpack.c.b16 %v1861, %v1853
    %v2486 = vpack.c.b16 %v1862, %v1854
    %v2487 = vpack.c.b16 %v1863, %v1855
    %v2488 = vpack.c.b16 %v1872, %v1864
    %v2489 = vpack.c.b16 %v1873, %v1865
    %v2490 = vpack.c.b16 %v1874, %v1866
    %v2491 = vpack.c.b16 %v1875, %v1867
    %v2492 = vpack.c.b16 %v1876, %v1868
    %v2493 = vpack.c.b16 %v1877, %v1869
    %v2494 = vpack.c.b16 %v1878, %v1870
    %v2495 = vpack.c.b16 %v1879, %v1871
    %v2496 = vpack.c.b16 %v1888, %v1880
    %v2497 = vpack.c.b16 %v1889, %v1881
    %v2498 = vpack.c.b16 %v1890, %v1882
    %v2499 = vpack.c.b16 %v1891, %v1883
    %v2500 = vpack.c.b16 %v1892, %v1884
    %v2501 = vpack.c.b16 %v1893, %v1885
    %v2502 = vpack.c.b16 %v1894, %v1886
    %v2503 = vpack.c.b16 %v1895, %v1887
    %v2504 = vpack.c.b16 %v1904, %v1896
    %v2505 = vpack.c.b16 %v1905, %v1897
    %v2506 = vpack.c.b16 %v1906, %v1898
    %v2507 = vpack.c.b16 %v1907, %v1899
    %v2508 = vpack.c.b16 %v1908, %v1900
    %v2509 = vpack.c.b16 %v1909, %v1901
    %v2510 = vpack.c.b16 %v1910, %v1902
    %v2511 = vpack.c.b16 %v1911, %v1903
    %v2512 = vpack.c.b16 %v1920, %v1912
    %v2513 = vpack.c.b16 %v1921, %v1913
    %v2514 = vpack.c.b16 %v1922, %v1914
    %v2515 = vpack.c.b16 %v1923, %v1915
    %v2516 = vpack.c.b16 %v1924, %v1916
    %v2517 = vpack.c.b16 %v1925, %v1917
    %v2518 = vpack.c.b16 %v1926, %v1918
    %v2519 = vpack.c.b16 %v1927, %v1919
    %v2520 = vpack.c.b16 %v1936, %v1928
    %v2521 = vpack.c.b16 %v1937, %v1929
    %v2522 = vpack.c.b16 %v1938, %v1930
    %v2523 = vpack.c.b16 %v1939, %v1931
    %v2524 = vpack.c.b16 %v1940, %v1932
    %v2525 = vpack.c.b16 %v1941, %v1933
    %v2526 = vpack.c.b16 %v1942, %v1934
    %v2527 = vpack.c.b16 %v1943, %v1935
    %v2528 = vpack.c.b16 %v1952, %v1944
    %v2529 = vpack.c.b16 %v1953, %v1945
    %v2530 = vpack.c.b16 %v1954, %v1946
    %v2531 = vpack.c.b16 %v1955, %v1947
    %v2532 = vpack.c.b16 %v1956, %v1948
    %v2533 = vpack.c.b16 %v1957, %v1949
    %v2534 = vpack.c.b16 %v1958, %v1950
    %v2535 = vpack.c.b16 %v1959, %v1951
    %v2536 = vpack.c.b16 %v1968, %v1960
    %v2537 = vpack.c.b16 %v1969, %v1961
    %v2538 = vpack.c.b16 %v1970, %v1962
    %v2539 = vpack.c.b16 %v1971, %v1963
    %v2540 = vpack.c.b16 %v1972, %v1964
    %v2541 = vpack.c.b16 %v1973, %v1965
    %v2542 = vpack.c.b16 %v1974, %v1966
    %v2543 = vpack.c.b16 %v1975, %v1967
    %v2544 = vpack.c.b16 %v1984, %v1976
    %v2545 = vpack.c.b16 %v1985, %v1977
    %v2546 = vpack.c.b16 %v1986, %v1978
    %v2547 = vpack.c.b16 %v1987, %v1979
    %v2548 = vpack.c.b16 %v1988, %v1980
    %v2549 = vpack.c.b16 %v1989, %v1981
    %v2550 = vpack.c.b16 %v1990, %v1982
    %v2551 = vpack.c.b16 %v1991, %v1983
    %v2552 = vpack.c.b16 %v2000, %v1992
    %v2553 = vpack.c.b16 %v2001, %v1993
    %v2554 = vpack.c.b16 %v2002, %v1994
    %v2555 = vpack.c.b16 %v2003, %v1995
    %v2556 = vpack.c.b16 %v2004, %v1996
    %v2557 = vpack.c.b16 %v2005, %v1997
    %v2558 = vpack.c.b16 %v2006, %v1998
    %v2559 = vpack.c.b16 %v2007, %v1999
    %v2560 = vpack.c.b16 %v2016, %v2008
    %v2561 = vpack.c.b16 %v2017, %v2009
    %v2562 = vpack.c.b16 %v2018, %v2010
    %v2563 = vpack.c.b16 %v2019, %v2011
    %v2564 = vpack.c.b16 %v2020, %v2012
    %v2565 = vpack.c.b16 %v2021, %v2013
    %v2566 = vpack.c.b16 %v2022, %v2014
    %v2567 = vpack.c.b16 %v2023, %v2015
    %v2568 = vpack.c.b16 %v2032, %v2024
    %v2569 = vpack.c.b16 %v2033, %v2025
    %v2570 = vpack.c.b16 %v2034, %v2026
    %v2571 = vpack.c.b16 %v2035, %v2027
    %v2572 = vpack.c.b16 %v2036, %v2028
    %v2573 = vpack.c.b16 %v2037, %v2029
    %v2574 = vpack.c.b16 %v2038, %v2030
    %v2575 = vpack.c.b16 %v2039, %v2031
    %v2576 = vpack.c.b16 %v2048, %v2040
    %v2577 = vpack.c.b16 %v2049, %v2041
    %v2578 = vpack.c.b16 %v2050, %v2042
    %v2579 = vpack.c.b16 %v2051, %v2043
    %v2580 = vpack.c.b16 %v2052, %v2044
    %v2581 = vpack.c.b16 %v2053, %v2045
    %v2582 = vpack.c.b16 %v2054, %v2046
    %v2583 = vpack.c.b16 %v2055, %v2047
    %v2584 = vpack.c.b16 %v2064, %v2056
    %v2585 = vpack.c.b16 %v2065, %v2057
    %v2586 = vpack.c.b16 %v2066, %v2058
    %v2587 = vpack.c.b16 %v2067, %v2059
    %v2588 = vpack.c.b16 %v2068, %v2060
    %v2589 = vpack.c.b16 %v2069, %v2061
    %v2590 = vpack.c.b16 %v2070, %v2062
    %v2591 = vpack.c.b16 %v2071, %v2063
    %v2592 = vpack.c.b16 %v2080, %v2072
    %v2593 = vpack.c.b16 %v2081, %v2073
    %v2594 = vpack.c.b16 %v2082, %v2074
    %v2595 = vpack.c.b16 %v2083, %v2075
    %v2596 = vpack.c.b16 %v2084, %v2076
    %v2597 = vpack.c.b16 %v2085, %v2077
    %v2598 = vpack.c.b16 %v2086, %v2078
    %v2599 = vpack.c.b16 %v2087, %v2079
    %v2600 = vpack.c.b16 %v2096, %v2088
    %v2601 = vpack.c.b16 %v2097, %v2089
    %v2602 = vpack.c.b16 %v2098, %v2090
    %v2603 = vpack.c.b16 %v2099, %v2091
    %v2604 = vpack.c.b16 %v2100, %v2092
    %v2605 = vpack.c.b16 %v2101, %v2093
    %v2606 = vpack.c.b16 %v2102, %v2094
    %v2607 = vpack.c.b16 %v2103, %v2095
    %v2608 = vpack.c.b16 %v2112, %v2104
    %v2609 = vpack.c.b16 %v2113, %v2105
    %v2610 = vpack.c.b16 %v2114, %v2106
    %v2611 = vpack.c.b16 %v2115, %v2107
    %v2612 = vpack.c.b16 %v2116, %v2108
    %v2613 = vpack.c.b16 %v2117, %v2109
    %v2614 = vpack.c.b16 %v2118, %v2110
    %v2615 = vpack.c.b16 %v2119, %v2111
    %v2616 = vpack.c.b16 %v2128, %v2120
    %v2617 = vpack.c.b16 %v2129, %v2121
    %v2618 = vpack.c.b16 %v2130, %v2122
    %v2619 = vpack.c.b16 %v2131, %v2123
    %v2620 = vpack.c.b16 %v2132, %v2124
    %v2621 = vpack.c.b16 %v2133, %v2125
    %v2622 = vpack.c.b16 %v2134, %v2126
    %v2623 = vpack.c.b16 %v2135, %v2127
    %v2624 = vpack.c.b16 %v2144, %v2136
    %v2625 = vpack.c.b16 %v2145, %v2137
    %v2626 = vpack.c.b16 %v2146, %v2138
    %v2627 = vpack.c.b16 %v2147, %v2139
    %v2628 = vpack.c.b16 %v2148, %v2140
    %v2629 = vpack.c.b16 %v2149, %v2141
    %v2630 = vpack.c.b16 %v2150, %v2142
    %v2631 = vpack.c.b16 %v2151, %v2143
    %vm3112 = vcmask 523264
    %v3114 = vsel %vm3112, %v704, 0
    %3116 = vmatprep.subr.bf16.mxu0 %v2153
    %3117 = vmatpush1.bf16.msra.mxu0 %v2152
    %3118 = vmatprep.subr.bf16.mxu0 %v2161
    %3119 = vmatpush1.bf16.msra.mxu0 %v2160
    %3120 = vmatprep.subr.bf16.mxu0 %v2169
    %3121 = vmatpush1.bf16.msra.mxu0 %v2168
    %3122 = vmatprep.subr.bf16.mxu0 %v2177
    %3123 = vmatpush1.bf16.msra.mxu0 %v2176
    %3124 = vmatprep.subr.bf16.mxu0 %v2185
    %3125 = vmatpush1.bf16.msra.mxu0 %v2184
    %3126 = vmatprep.subr.bf16.mxu0 %v2193
    %3127 = vmatpush1.bf16.msra.mxu0 %v2192
    %3128 = vmatprep.subr.bf16.mxu0 %v2201
    %3129 = vmatpush1.bf16.msra.mxu0 %v2200
    %3130 = vmatprep.subr.bf16.mxu0 %v2209
    %3131 = vmatpush1.bf16.msra.mxu0 %v2208
    %3132 = vmatprep.subr.bf16.mxu0 %v2217
    %3133 = vmatpush1.bf16.msra.mxu0 %v2216
    %3134 = vmatprep.subr.bf16.mxu0 %v2225
    %3135 = vmatpush1.bf16.msra.mxu0 %v2224
    %3136 = vmatprep.subr.bf16.mxu0 %v2233
    %3137 = vmatpush1.bf16.msra.mxu0 %v2232
    %3138 = vmatprep.subr.bf16.mxu0 %v2241
    %3139 = vmatpush1.bf16.msra.mxu0 %v2240
    %3140 = vmatprep.subr.bf16.mxu0 %v2249
    %3141 = vmatpush1.bf16.msra.mxu0 %v2248
    %3142 = vmatprep.subr.bf16.mxu0 %v2257
    %3143 = vmatpush1.bf16.msra.mxu0 %v2256
    %3144 = vmatprep.subr.bf16.mxu0 %v2265
    %3145 = vmatpush1.bf16.msra.mxu0 %v2264
    %3146 = vmatprep.subr.bf16.mxu0 %v2273
    %3147 = vmatpush1.bf16.msra.mxu0 %v2272
    %3148 = vmatprep.mubr.bf16.mxu0 %v693
    %3149 = vmatmul.mubr.bf16.gmra.mrb[0].mxu0 %v679
    %v3150 = vpop.f32.mrb[0].mxu0
    %v3151 = vadd.f32 %v618, %v3150
    %v3152 = vpop.f32.mrb[0].mxu0
    %v3153 = vadd.f32 %v622, %v3152
    %v3154 = vpop.f32.mrb[0].mxu0
    %v3155 = vpop.f32.mrb[0].mxu0
    %3156 = vdwg.mxu0
    %3157 = vmatprep.subr.bf16.mxu0 %v2281
    %3158 = vmatpush1.bf16.msra.mxu0 %v2280
    %3159 = vmatprep.subr.bf16.mxu0 %v2289
    %3160 = vmatpush1.bf16.msra.mxu0 %v2288
    %3161 = vmatprep.subr.bf16.mxu0 %v2297
    %3162 = vmatpush1.bf16.msra.mxu0 %v2296
    %3163 = vmatprep.subr.bf16.mxu0 %v2305
    %3164 = vmatpush1.bf16.msra.mxu0 %v2304
    %3165 = vmatprep.subr.bf16.mxu0 %v2313
    %3166 = vmatpush1.bf16.msra.mxu0 %v2312
    %3167 = vmatprep.subr.bf16.mxu0 %v2321
    %3168 = vmatpush1.bf16.msra.mxu0 %v2320
    %3169 = vmatprep.subr.bf16.mxu0 %v2329
    %3170 = vmatpush1.bf16.msra.mxu0 %v2328
    %3171 = vmatprep.subr.bf16.mxu0 %v2337
    %3172 = vmatpush1.bf16.msra.mxu0 %v2336
    %3173 = vmatprep.subr.bf16.mxu0 %v2345
    %3174 = vmatpush1.bf16.msra.mxu0 %v2344
    %3175 = vmatprep.subr.bf16.mxu0 %v2353
    %3176 = vmatpush1.bf16.msra.mxu0 %v2352
    %3177 = vmatprep.subr.bf16.mxu0 %v2361
    %3178 = vmatpush1.bf16.msra.mxu0 %v2360
    %3179 = vmatprep.subr.bf16.mxu0 %v2369
    %3180 = vmatpush1.bf16.msra.mxu0 %v2368
    %3181 = vmatprep.subr.bf16.mxu0 %v2377
    %3182 = vmatpush1.bf16.msra.mxu0 %v2376
    %3183 = vmatprep.subr.bf16.mxu0 %v2385
    %3184 = vmatpush1.bf16.msra.mxu0 %v2384
    %3185 = vmatprep.subr.bf16.mxu0 %v2393
    %3186 = vmatpush1.bf16.msra.mxu0 %v2392
    %3187 = vmatprep.subr.bf16.mxu0 %v2401
    %3188 = vmatpush1.bf16.msra.mxu0 %v2400
    %3189 = vmatprep.mubr.bf16.mxu0 %v703
    %3190 = vmatmul.mubr.bf16.gmra.mrb[0].mxu0 %v701
    %v3191 = vpop.f32.mrb[0].mxu0
    %v3192 = vadd.f32 %v3151, %v3191
    %v3193 = vpop.f32.mrb[0].mxu0
    %v3194 = vadd.f32 %v3153, %v3193
    %v3195 = vpop.f32.mrb[0].mxu0
    %v3196 = vpop.f32.mrb[0].mxu0
    %3197 = vdwg.mxu0
    %3198 = vmatprep.subr.bf16.mxu0 %v2409
    %3199 = vmatpush1.bf16.msra.mxu0 %v2408
    %3200 = vmatprep.subr.bf16.mxu0 %v2417
    %3201 = vmatpush1.bf16.msra.mxu0 %v2416
    %3202 = vmatprep.subr.bf16.mxu0 %v2425
    %3203 = vmatpush1.bf16.msra.mxu0 %v2424
    %3204 = vmatprep.subr.bf16.mxu0 %v2433
    %3205 = vmatpush1.bf16.msra.mxu0 %v2432
    %3206 = vmatprep.subr.bf16.mxu0 %v2441
    %3207 = vmatpush1.bf16.msra.mxu0 %v2440
    %3208 = vmatprep.subr.bf16.mxu0 %v2449
    %3209 = vmatpush1.bf16.msra.mxu0 %v2448
    %3210 = vmatprep.subr.bf16.mxu0 %v2457
    %3211 = vmatpush1.bf16.msra.mxu0 %v2456
    %3212 = vmatprep.subr.bf16.mxu0 %v2465
    %3213 = vmatpush1.bf16.msra.mxu0 %v2464
    %3214 = vmatprep.subr.bf16.mxu0 %v2473
    %3215 = vmatpush1.bf16.msra.mxu0 %v2472
    %3216 = vmatprep.subr.bf16.mxu0 %v2481
    %3217 = vmatpush1.bf16.msra.mxu0 %v2480
    %3218 = vmatprep.subr.bf16.mxu0 %v2489
    %3219 = vmatpush1.bf16.msra.mxu0 %v2488
    %3220 = vmatprep.subr.bf16.mxu0 %v2497
    %3221 = vmatpush1.bf16.msra.mxu0 %v2496
    %3222 = vmatprep.subr.bf16.mxu0 %v2505
    %3223 = vmatpush1.bf16.msra.mxu0 %v2504
    %3224 = vmatprep.subr.bf16.mxu0 %v2513
    %3225 = vmatpush1.bf16.msra.mxu0 %v2512
    %3226 = vmatprep.subr.bf16.mxu0 %v2521
    %3227 = vmatpush1.bf16.msra.mxu0 %v2520
    %3228 = vmatprep.subr.bf16.mxu0 %v2529
    %3229 = vmatpush1.bf16.msra.mxu0 %v2528
    %3230 = vmatprep.mubr.bf16.mxu0 %v700
    %3231 = vmatmul.mubr.bf16.gmra.mrb[0].mxu0 %v686
    %v3232 = vpop.f32.mrb[0].mxu0
    %v3233 = vadd.f32 %v3192, %v3232
    %v3234 = vpop.f32.mrb[0].mxu0
    %v3235 = vadd.f32 %v3194, %v3234
    %v3236 = vpop.f32.mrb[0].mxu0
    %v3237 = vpop.f32.mrb[0].mxu0
    %3238 = vdwg.mxu0
    %3239 = vmatprep.subr.bf16.mxu0 %v2537
    %3240 = vmatpush1.bf16.msra.mxu0 %v2536
    %3241 = vmatprep.subr.bf16.mxu0 %v2545
    %3242 = vmatpush1.bf16.msra.mxu0 %v2544
    %3243 = vmatprep.subr.bf16.mxu0 %v2553
    %3244 = vmatpush1.bf16.msra.mxu0 %v2552
    %3245 = vmatprep.subr.bf16.mxu0 %v2561
    %3246 = vmatpush1.bf16.msra.mxu0 %v2560
    %3247 = vmatprep.subr.bf16.mxu0 %v2569
    %3248 = vmatpush1.bf16.msra.mxu0 %v2568
    %3249 = vmatprep.subr.bf16.mxu0 %v2577
    %3250 = vmatpush1.bf16.msra.mxu0 %v2576
    %3251 = vmatprep.subr.bf16.mxu0 %v2585
    %3252 = vmatpush1.bf16.msra.mxu0 %v2584
    %3253 = vmatprep.subr.bf16.mxu0 %v2593
    %3254 = vmatpush1.bf16.msra.mxu0 %v2592
    %3255 = vmatprep.subr.bf16.mxu0 %v2601
    %3256 = vmatpush1.bf16.msra.mxu0 %v2600
    %3257 = vmatprep.subr.bf16.mxu0 %v2609
    %3258 = vmatpush1.bf16.msra.mxu0 %v2608
    %3259 = vmatprep.subr.bf16.mxu0 %v2617
    %3260 = vmatpush1.bf16.msra.mxu0 %v2616
    %3261 = vmatprep.subr.bf16.mxu0 %v2625
    %3262 = vmatpush1.bf16.msra.mxu0 %v2624
    %3263 = vmatprep.subr.bf16.mxu0 0
    %3264 = vmatpush1.bf16.msra.mxu0 0
    %3265 = vmatprep.subr.bf16.mxu0 0
    %3266 = vmatpush1.bf16.msra.mxu0 0
    %3267 = vmatprep.subr.bf16.mxu0 0
    %3268 = vmatpush1.bf16.msra.mxu0 0
    %3269 = vmatprep.subr.bf16.mxu0 0
    %3270 = vmatpush1.bf16.msra.mxu0 0
    %3271 = vmatprep.mubr.bf16.mxu0 %v3114
    %3272 = vmatmul.mubr.bf16.gmra.mrb[0].mxu0 %v702
    %v3273 = vpop.f32.mrb[0].mxu0
    %v3274 = vadd.f32 %v3233, %v3273
    %v3275 = vpop.f32.mrb[0].mxu0
    %v3276 = vadd.f32 %v3235, %v3275
    %v3277 = vpop.f32.mrb[0].mxu0
    %v3278 = vpop.f32.mrb[0].mxu0
    %3279 = vdwg.mxu0
    %3280 = vmatprep.subr.bf16.mxu0 %v2155
    %3281 = vmatpush1.bf16.msra.mxu0 %v2154
    %3282 = vmatprep.subr.bf16.mxu0 %v2163
    %3283 = vmatpush1.bf16.msra.mxu0 %v2162
    %3284 = vmatprep.subr.bf16.mxu0 %v2171
    %3285 = vmatpush1.bf16.msra.mxu0 %v2170
    %3286 = vmatprep.subr.bf16.mxu0 %v2179
    %3287 = vmatpush1.bf16.msra.mxu0 %v2178
    %3288 = vmatprep.subr.bf16.mxu0 %v2187
    %3289 = vmatpush1.bf16.msra.mxu0 %v2186
    %3290 = vmatprep.subr.bf16.mxu0 %v2195
    %3291 = vmatpush1.bf16.msra.mxu0 %v2194
    %3292 = vmatprep.subr.bf16.mxu0 %v2203
    %3293 = vmatpush1.bf16.msra.mxu0 %v2202
    %3294 = vmatprep.subr.bf16.mxu0 %v2211
    %3295 = vmatpush1.bf16.msra.mxu0 %v2210
    %3296 = vmatprep.subr.bf16.mxu0 %v2219
    %3297 = vmatpush1.bf16.msra.mxu0 %v2218
    %3298 = vmatprep.subr.bf16.mxu0 %v2227
    %3299 = vmatpush1.bf16.msra.mxu0 %v2226
    %3300 = vmatprep.subr.bf16.mxu0 %v2235
    %3301 = vmatpush1.bf16.msra.mxu0 %v2234
    %3302 = vmatprep.subr.bf16.mxu0 %v2243
    %3303 = vmatpush1.bf16.msra.mxu0 %v2242
    %3304 = vmatprep.subr.bf16.mxu0 %v2251
    %3305 = vmatpush1.bf16.msra.mxu0 %v2250
    %3306 = vmatprep.subr.bf16.mxu0 %v2259
    %3307 = vmatpush1.bf16.msra.mxu0 %v2258
    %3308 = vmatprep.subr.bf16.mxu0 %v2267
    %3309 = vmatpush1.bf16.msra.mxu0 %v2266
    %3310 = vmatprep.subr.bf16.mxu0 %v2275
    %3311 = vmatpush1.bf16.msra.mxu0 %v2274
    %3312 = vmatprep.mubr.bf16.mxu0 %v693
    %3313 = vmatmul.mubr.bf16.gmra.mrb[0].mxu0 %v679
    %v3314 = vpop.f32.mrb[0].mxu0
    %v3315 = vadd.f32 %v626, %v3314
    %v3316 = vpop.f32.mrb[0].mxu0
    %v3317 = vadd.f32 %v630, %v3316
    %v3318 = vpop.f32.mrb[0].mxu0
    %v3319 = vpop.f32.mrb[0].mxu0
    %3320 = vdwg.mxu0
    %3321 = vmatprep.subr.bf16.mxu0 %v2283
    %3322 = vmatpush1.bf16.msra.mxu0 %v2282
    %3323 = vmatprep.subr.bf16.mxu0 %v2291
    %3324 = vmatpush1.bf16.msra.mxu0 %v2290
    %3325 = vmatprep.subr.bf16.mxu0 %v2299
    %3326 = vmatpush1.bf16.msra.mxu0 %v2298
    %3327 = vmatprep.subr.bf16.mxu0 %v2307
    %3328 = vmatpush1.bf16.msra.mxu0 %v2306
    %3329 = vmatprep.subr.bf16.mxu0 %v2315
    %3330 = vmatpush1.bf16.msra.mxu0 %v2314
    %3331 = vmatprep.subr.bf16.mxu0 %v2323
    %3332 = vmatpush1.bf16.msra.mxu0 %v2322
    %3333 = vmatprep.subr.bf16.mxu0 %v2331
    %3334 = vmatpush1.bf16.msra.mxu0 %v2330
    %3335 = vmatprep.subr.bf16.mxu0 %v2339
    %3336 = vmatpush1.bf16.msra.mxu0 %v2338
    %3337 = vmatprep.subr.bf16.mxu0 %v2347
    %3338 = vmatpush1.bf16.msra.mxu0 %v2346
    %3339 = vmatprep.subr.bf16.mxu0 %v2355
    %3340 = vmatpush1.bf16.msra.mxu0 %v2354
    %3341 = vmatprep.subr.bf16.mxu0 %v2363
    %3342 = vmatpush1.bf16.msra.mxu0 %v2362
    %3343 = vmatprep.subr.bf16.mxu0 %v2371
    %3344 = vmatpush1.bf16.msra.mxu0 %v2370
    %3345 = vmatprep.subr.bf16.mxu0 %v2379
    %3346 = vmatpush1.bf16.msra.mxu0 %v2378
    %3347 = vmatprep.subr.bf16.mxu0 %v2387
    %3348 = vmatpush1.bf16.msra.mxu0 %v2386
    %3349 = vmatprep.subr.bf16.mxu0 %v2395
    %3350 = vmatpush1.bf16.msra.mxu0 %v2394
    %3351 = vmatprep.subr.bf16.mxu0 %v2403
    %3352 = vmatpush1.bf16.msra.mxu0 %v2402
    %3353 = vmatprep.mubr.bf16.mxu0 %v703
    %3354 = vmatmul.mubr.bf16.gmra.mrb[0].mxu0 %v701
    %v3355 = vpop.f32.mrb[0].mxu0
    %v3356 = vadd.f32 %v3315, %v3355
    %v3357 = vpop.f32.mrb[0].mxu0
    %v3358 = vadd.f32 %v3317, %v3357
    %v3359 = vpop.f32.mrb[0].mxu0
    %v3360 = vpop.f32.mrb[0].mxu0
    %3361 = vdwg.mxu0
    %3362 = vmatprep.subr.bf16.mxu0 %v2411
    %3363 = vmatpush1.bf16.msra.mxu0 %v2410
    %3364 = vmatprep.subr.bf16.mxu0 %v2419
    %3365 = vmatpush1.bf16.msra.mxu0 %v2418
    %3366 = vmatprep.subr.bf16.mxu0 %v2427
    %3367 = vmatpush1.bf16.msra.mxu0 %v2426
    %3368 = vmatprep.subr.bf16.mxu0 %v2435
    %3369 = vmatpush1.bf16.msra.mxu0 %v2434
    %3370 = vmatprep.subr.bf16.mxu0 %v2443
    %3371 = vmatpush1.bf16.msra.mxu0 %v2442
    %3372 = vmatprep.subr.bf16.mxu0 %v2451
    %3373 = vmatpush1.bf16.msra.mxu0 %v2450
    %3374 = vmatprep.subr.bf16.mxu0 %v2459
    %3375 = vmatpush1.bf16.msra.mxu0 %v2458
    %3376 = vmatprep.subr.bf16.mxu0 %v2467
    %3377 = vmatpush1.bf16.msra.mxu0 %v2466
    %3378 = vmatprep.subr.bf16.mxu0 %v2475
    %3379 = vmatpush1.bf16.msra.mxu0 %v2474
    %3380 = vmatprep.subr.bf16.mxu0 %v2483
    %3381 = vmatpush1.bf16.msra.mxu0 %v2482
    %3382 = vmatprep.subr.bf16.mxu0 %v2491
    %3383 = vmatpush1.bf16.msra.mxu0 %v2490
    %3384 = vmatprep.subr.bf16.mxu0 %v2499
    %3385 = vmatpush1.bf16.msra.mxu0 %v2498
    %3386 = vmatprep.subr.bf16.mxu0 %v2507
    %3387 = vmatpush1.bf16.msra.mxu0 %v2506
    %3388 = vmatprep.subr.bf16.mxu0 %v2515
    %3389 = vmatpush1.bf16.msra.mxu0 %v2514
    %3390 = vmatprep.subr.bf16.mxu0 %v2523
    %3391 = vmatpush1.bf16.msra.mxu0 %v2522
    %3392 = vmatprep.subr.bf16.mxu0 %v2531
    %3393 = vmatpush1.bf16.msra.mxu0 %v2530
    %3394 = vmatprep.mubr.bf16.mxu0 %v700
    %3395 = vmatmul.mubr.bf16.gmra.mrb[0].mxu0 %v686
    %v3396 = vpop.f32.mrb[0].mxu0
    %v3397 = vadd.f32 %v3356, %v3396
    %v3398 = vpop.f32.mrb[0].mxu0
    %v3399 = vadd.f32 %v3358, %v3398
    %v3400 = vpop.f32.mrb[0].mxu0
    %v3401 = vpop.f32.mrb[0].mxu0
    %3402 = vdwg.mxu0
    %3403 = vmatprep.subr.bf16.mxu0 %v2539
    %3404 = vmatpush1.bf16.msra.mxu0 %v2538
    %3405 = vmatprep.subr.bf16.mxu0 %v2547
    %3406 = vmatpush1.bf16.msra.mxu0 %v2546
    %3407 = vmatprep.subr.bf16.mxu0 %v2555
    %3408 = vmatpush1.bf16.msra.mxu0 %v2554
    %3409 = vmatprep.subr.bf16.mxu0 %v2563
    %3410 = vmatpush1.bf16.msra.mxu0 %v2562
    %3411 = vmatprep.subr.bf16.mxu0 %v2571
    %3412 = vmatpush1.bf16.msra.mxu0 %v2570
    %3413 = vmatprep.subr.bf16.mxu0 %v2579
    %3414 = vmatpush1.bf16.msra.mxu0 %v2578
    %3415 = vmatprep.subr.bf16.mxu0 %v2587
    %3416 = vmatpush1.bf16.msra.mxu0 %v2586
    %3417 = vmatprep.subr.bf16.mxu0 %v2595
    %3418 = vmatpush1.bf16.msra.mxu0 %v2594
    %3419 = vmatprep.subr.bf16.mxu0 %v2603
    %3420 = vmatpush1.bf16.msra.mxu0 %v2602
    %3421 = vmatprep.subr.bf16.mxu0 %v2611
    %3422 = vmatpush1.bf16.msra.mxu0 %v2610
    %3423 = vmatprep.subr.bf16.mxu0 %v2619
    %3424 = vmatpush1.bf16.msra.mxu0 %v2618
    %3425 = vmatprep.subr.bf16.mxu0 %v2627
    %3426 = vmatpush1.bf16.msra.mxu0 %v2626
    %3427 = vmatprep.subr.bf16.mxu0 0
    %3428 = vmatpush1.bf16.msra.mxu0 0
    %3429 = vmatprep.subr.bf16.mxu0 0
    %3430 = vmatpush1.bf16.msra.mxu0 0
    %3431 = vmatprep.subr.bf16.mxu0 0
    %3432 = vmatpush1.bf16.msra.mxu0 0
    %3433 = vmatprep.subr.bf16.mxu0 0
    %3434 = vmatpush1.bf16.msra.mxu0 0
    %3435 = vmatprep.mubr.bf16.mxu0 %v3114
    %3436 = vmatmul.mubr.bf16.gmra.mrb[0].mxu0 %v702
    %v3437 = vpop.f32.mrb[0].mxu0
    %v3438 = vadd.f32 %v3397, %v3437
    %v3439 = vpop.f32.mrb[0].mxu0
    %v3440 = vadd.f32 %v3399, %v3439
    %v3441 = vpop.f32.mrb[0].mxu0
    %v3442 = vpop.f32.mrb[0].mxu0
    %3443 = vdwg.mxu0
    %3444 = vmatprep.subr.bf16.mxu0 %v2157
    %3445 = vmatpush1.bf16.msra.mxu0 %v2156
    %3446 = vmatprep.subr.bf16.mxu0 %v2165
    %3447 = vmatpush1.bf16.msra.mxu0 %v2164
    %3448 = vmatprep.subr.bf16.mxu0 %v2173
    %3449 = vmatpush1.bf16.msra.mxu0 %v2172
    %3450 = vmatprep.subr.bf16.mxu0 %v2181
    %3451 = vmatpush1.bf16.msra.mxu0 %v2180
    %3452 = vmatprep.subr.bf16.mxu0 %v2189
    %3453 = vmatpush1.bf16.msra.mxu0 %v2188
    %3454 = vmatprep.subr.bf16.mxu0 %v2197
    %3455 = vmatpush1.bf16.msra.mxu0 %v2196
    %3456 = vmatprep.subr.bf16.mxu0 %v2205
    %3457 = vmatpush1.bf16.msra.mxu0 %v2204
    %3458 = vmatprep.subr.bf16.mxu0 %v2213
    %3459 = vmatpush1.bf16.msra.mxu0 %v2212
    %3460 = vmatprep.subr.bf16.mxu0 %v2221
    %3461 = vmatpush1.bf16.msra.mxu0 %v2220
    %3462 = vmatprep.subr.bf16.mxu0 %v2229
    %3463 = vmatpush1.bf16.msra.mxu0 %v2228
    %3464 = vmatprep.subr.bf16.mxu0 %v2237
    %3465 = vmatpush1.bf16.msra.mxu0 %v2236
    %3466 = vmatprep.subr.bf16.mxu0 %v2245
    %3467 = vmatpush1.bf16.msra.mxu0 %v2244
    %3468 = vmatprep.subr.bf16.mxu0 %v2253
    %3469 = vmatpush1.bf16.msra.mxu0 %v2252
    %3470 = vmatprep.subr.bf16.mxu0 %v2261
    %3471 = vmatpush1.bf16.msra.mxu0 %v2260
    %3472 = vmatprep.subr.bf16.mxu0 %v2269
    %3473 = vmatpush1.bf16.msra.mxu0 %v2268
    %3474 = vmatprep.subr.bf16.mxu0 %v2277
    %3475 = vmatpush1.bf16.msra.mxu0 %v2276
    %3476 = vmatprep.mubr.bf16.mxu0 %v693
    %3477 = vmatmul.mubr.bf16.gmra.mrb[0].mxu0 %v679
    %v3478 = vpop.f32.mrb[0].mxu0
    %v3479 = vadd.f32 %v634, %v3478
    %v3480 = vpop.f32.mrb[0].mxu0
    %v3481 = vadd.f32 %v638, %v3480
    %v3482 = vpop.f32.mrb[0].mxu0
    %v3483 = vpop.f32.mrb[0].mxu0
    %3484 = vdwg.mxu0
    %3485 = vmatprep.subr.bf16.mxu0 %v2285
    %3486 = vmatpush1.bf16.msra.mxu0 %v2284
    %3487 = vmatprep.subr.bf16.mxu0 %v2293
    %3488 = vmatpush1.bf16.msra.mxu0 %v2292
    %3489 = vmatprep.subr.bf16.mxu0 %v2301
    %3490 = vmatpush1.bf16.msra.mxu0 %v2300
    %3491 = vmatprep.subr.bf16.mxu0 %v2309
    %3492 = vmatpush1.bf16.msra.mxu0 %v2308
    %3493 = vmatprep.subr.bf16.mxu0 %v2317
    %3494 = vmatpush1.bf16.msra.mxu0 %v2316
    %3495 = vmatprep.subr.bf16.mxu0 %v2325
    %3496 = vmatpush1.bf16.msra.mxu0 %v2324
    %3497 = vmatprep.subr.bf16.mxu0 %v2333
    %3498 = vmatpush1.bf16.msra.mxu0 %v2332
    %3499 = vmatprep.subr.bf16.mxu0 %v2341
    %3500 = vmatpush1.bf16.msra.mxu0 %v2340
    %3501 = vmatprep.subr.bf16.mxu0 %v2349
    %3502 = vmatpush1.bf16.msra.mxu0 %v2348
    %3503 = vmatprep.subr.bf16.mxu0 %v2357
    %3504 = vmatpush1.bf16.msra.mxu0 %v2356
    %3505 = vmatprep.subr.bf16.mxu0 %v2365
    %3506 = vmatpush1.bf16.msra.mxu0 %v2364
    %3507 = vmatprep.subr.bf16.mxu0 %v2373
    %3508 = vmatpush1.bf16.msra.mxu0 %v2372
    %3509 = vmatprep.subr.bf16.mxu0 %v2381
    %3510 = vmatpush1.bf16.msra.mxu0 %v2380
    %3511 = vmatprep.subr.bf16.mxu0 %v2389
    %3512 = vmatpush1.bf16.msra.mxu0 %v2388
    %3513 = vmatprep.subr.bf16.mxu0 %v2397
    %3514 = vmatpush1.bf16.msra.mxu0 %v2396
    %3515 = vmatprep.subr.bf16.mxu0 %v2405
    %3516 = vmatpush1.bf16.msra.mxu0 %v2404
    %3517 = vmatprep.mubr.bf16.mxu0 %v703
    %3518 = vmatmul.mubr.bf16.gmra.mrb[0].mxu0 %v701
    %v3519 = vpop.f32.mrb[0].mxu0
    %v3520 = vadd.f32 %v3479, %v3519
    %v3521 = vpop.f32.mrb[0].mxu0
    %v3522 = vadd.f32 %v3481, %v3521
    %v3523 = vpop.f32.mrb[0].mxu0
    %v3524 = vpop.f32.mrb[0].mxu0
    %3525 = vdwg.mxu0
    %3526 = vmatprep.subr.bf16.mxu0 %v2413
    %3527 = vmatpush1.bf16.msra.mxu0 %v2412
    %3528 = vmatprep.subr.bf16.mxu0 %v2421
    %3529 = vmatpush1.bf16.msra.mxu0 %v2420
    %3530 = vmatprep.subr.bf16.mxu0 %v2429
    %3531 = vmatpush1.bf16.msra.mxu0 %v2428
    %3532 = vmatprep.subr.bf16.mxu0 %v2437
    %3533 = vmatpush1.bf16.msra.mxu0 %v2436
    %3534 = vmatprep.subr.bf16.mxu0 %v2445
    %3535 = vmatpush1.bf16.msra.mxu0 %v2444
    %3536 = vmatprep.subr.bf16.mxu0 %v2453
    %3537 = vmatpush1.bf16.msra.mxu0 %v2452
    %3538 = vmatprep.subr.bf16.mxu0 %v2461
    %3539 = vmatpush1.bf16.msra.mxu0 %v2460
    %3540 = vmatprep.subr.bf16.mxu0 %v2469
    %3541 = vmatpush1.bf16.msra.mxu0 %v2468
    %3542 = vmatprep.subr.bf16.mxu0 %v2477
    %3543 = vmatpush1.bf16.msra.mxu0 %v2476
    %3544 = vmatprep.subr.bf16.mxu0 %v2485
    %3545 = vmatpush1.bf16.msra.mxu0 %v2484
    %3546 = vmatprep.subr.bf16.mxu0 %v2493
    %3547 = vmatpush1.bf16.msra.mxu0 %v2492
    %3548 = vmatprep.subr.bf16.mxu0 %v2501
    %3549 = vmatpush1.bf16.msra.mxu0 %v2500
    %3550 = vmatprep.subr.bf16.mxu0 %v2509
    %3551 = vmatpush1.bf16.msra.mxu0 %v2508
    %3552 = vmatprep.subr.bf16.mxu0 %v2517
    %3553 = vmatpush1.bf16.msra.mxu0 %v2516
    %3554 = vmatprep.subr.bf16.mxu0 %v2525
    %3555 = vmatpush1.bf16.msra.mxu0 %v2524
    %3556 = vmatprep.subr.bf16.mxu0 %v2533
    %3557 = vmatpush1.bf16.msra.mxu0 %v2532
    %3558 = vmatprep.mubr.bf16.mxu0 %v700
    %3559 = vmatmul.mubr.bf16.gmra.mrb[0].mxu0 %v686
    %v3560 = vpop.f32.mrb[0].mxu0
    %v3561 = vadd.f32 %v3520, %v3560
    %v3562 = vpop.f32.mrb[0].mxu0
    %v3563 = vadd.f32 %v3522, %v3562
    %v3564 = vpop.f32.mrb[0].mxu0
    %v3565 = vpop.f32.mrb[0].mxu0
    %3566 = vdwg.mxu0
    %3567 = vmatprep.subr.bf16.mxu0 %v2541
    %3568 = vmatpush1.bf16.msra.mxu0 %v2540
    %3569 = vmatprep.subr.bf16.mxu0 %v2549
    %3570 = vmatpush1.bf16.msra.mxu0 %v2548
    %3571 = vmatprep.subr.bf16.mxu0 %v2557
    %3572 = vmatpush1.bf16.msra.mxu0 %v2556
    %3573 = vmatprep.subr.bf16.mxu0 %v2565
    %3574 = vmatpush1.bf16.msra.mxu0 %v2564
    %3575 = vmatprep.subr.bf16.mxu0 %v2573
    %3576 = vmatpush1.bf16.msra.mxu0 %v2572
    %3577 = vmatprep.subr.bf16.mxu0 %v2581
    %3578 = vmatpush1.bf16.msra.mxu0 %v2580
    %3579 = vmatprep.subr.bf16.mxu0 %v2589
    %3580 = vmatpush1.bf16.msra.mxu0 %v2588
    %3581 = vmatprep.subr.bf16.mxu0 %v2597
    %3582 = vmatpush1.bf16.msra.mxu0 %v2596
    %3583 = vmatprep.subr.bf16.mxu0 %v2605
    %3584 = vmatpush1.bf16.msra.mxu0 %v2604
    %3585 = vmatprep.subr.bf16.mxu0 %v2613
    %3586 = vmatpush1.bf16.msra.mxu0 %v2612
    %3587 = vmatprep.subr.bf16.mxu0 %v2621
    %3588 = vmatpush1.bf16.msra.mxu0 %v2620
    %3589 = vmatprep.subr.bf16.mxu0 %v2629
    %3590 = vmatpush1.bf16.msra.mxu0 %v2628
    %3591 = vmatprep.subr.bf16.mxu0 0
    %3592 = vmatpush1.bf16.msra.mxu0 0
    %3593 = vmatprep.subr.bf16.mxu0 0
    %3594 = vmatpush1.bf16.msra.mxu0 0
    %3595 = vmatprep.subr.bf16.mxu0 0
    %3596 = vmatpush1.bf16.msra.mxu0 0
    %3597 = vmatprep.subr.bf16.mxu0 0
    %3598 = vmatpush1.bf16.msra.mxu0 0
    %3599 = vmatprep.mubr.bf16.mxu0 %v3114
    %3600 = vmatmul.mubr.bf16.gmra.mrb[0].mxu0 %v702
    %v3601 = vpop.f32.mrb[0].mxu0
    %v3602 = vadd.f32 %v3561, %v3601
    %v3603 = vpop.f32.mrb[0].mxu0
    %v3604 = vadd.f32 %v3563, %v3603
    %v3605 = vpop.f32.mrb[0].mxu0
    %v3606 = vpop.f32.mrb[0].mxu0
    %3607 = vdwg.mxu0
    %3608 = vmatprep.subr.bf16.mxu0 %v2159
    %3609 = vmatpush1.bf16.msra.mxu0 %v2158
    %3610 = vmatprep.subr.bf16.mxu0 %v2167
    %3611 = vmatpush1.bf16.msra.mxu0 %v2166
    %3612 = vmatprep.subr.bf16.mxu0 %v2175
    %3613 = vmatpush1.bf16.msra.mxu0 %v2174
    %3614 = vmatprep.subr.bf16.mxu0 %v2183
    %3615 = vmatpush1.bf16.msra.mxu0 %v2182
    %3616 = vmatprep.subr.bf16.mxu0 %v2191
    %3617 = vmatpush1.bf16.msra.mxu0 %v2190
    %3618 = vmatprep.subr.bf16.mxu0 %v2199
    %3619 = vmatpush1.bf16.msra.mxu0 %v2198
    %3620 = vmatprep.subr.bf16.mxu0 %v2207
    %3621 = vmatpush1.bf16.msra.mxu0 %v2206
    %3622 = vmatprep.subr.bf16.mxu0 %v2215
    %3623 = vmatpush1.bf16.msra.mxu0 %v2214
    %3624 = vmatprep.subr.bf16.mxu0 %v2223
    %3625 = vmatpush1.bf16.msra.mxu0 %v2222
    %3626 = vmatprep.subr.bf16.mxu0 %v2231
    %3627 = vmatpush1.bf16.msra.mxu0 %v2230
    %3628 = vmatprep.subr.bf16.mxu0 %v2239
    %3629 = vmatpush1.bf16.msra.mxu0 %v2238
    %3630 = vmatprep.subr.bf16.mxu0 %v2247
    %3631 = vmatpush1.bf16.msra.mxu0 %v2246
    %3632 = vmatprep.subr.bf16.mxu0 %v2255
    %3633 = vmatpush1.bf16.msra.mxu0 %v2254
    %3634 = vmatprep.subr.bf16.mxu0 %v2263
    %3635 = vmatpush1.bf16.msra.mxu0 %v2262
    %3636 = vmatprep.subr.bf16.mxu0 %v2271
    %3637 = vmatpush1.bf16.msra.mxu0 %v2270
    %3638 = vmatprep.subr.bf16.mxu0 %v2279
    %3639 = vmatpush1.bf16.msra.mxu0 %v2278
    %3640 = vmatprep.mubr.bf16.mxu0 %v693
    %3641 = vmatmul.mubr.bf16.gmra.mrb[0].mxu0 %v679
    %v3642 = vpop.f32.mrb[0].mxu0
    %v3643 = vadd.f32 %v642, %v3642
    %v3644 = vpop.f32.mrb[0].mxu0
    %v3645 = vadd.f32 %v646, %v3644
    %v3646 = vpop.f32.mrb[0].mxu0
    %v3647 = vpop.f32.mrb[0].mxu0
    %3648 = vdwg.mxu0
    %3649 = vmatprep.subr.bf16.mxu0 %v2287
    %3650 = vmatpush1.bf16.msra.mxu0 %v2286
    %3651 = vmatprep.subr.bf16.mxu0 %v2295
    %3652 = vmatpush1.bf16.msra.mxu0 %v2294
    %3653 = vmatprep.subr.bf16.mxu0 %v2303
    %3654 = vmatpush1.bf16.msra.mxu0 %v2302
    %3655 = vmatprep.subr.bf16.mxu0 %v2311
    %3656 = vmatpush1.bf16.msra.mxu0 %v2310
    %3657 = vmatprep.subr.bf16.mxu0 %v2319
    %3658 = vmatpush1.bf16.msra.mxu0 %v2318
    %3659 = vmatprep.subr.bf16.mxu0 %v2327
    %3660 = vmatpush1.bf16.msra.mxu0 %v2326
    %3661 = vmatprep.subr.bf16.mxu0 %v2335
    %3662 = vmatpush1.bf16.msra.mxu0 %v2334
    %3663 = vmatprep.subr.bf16.mxu0 %v2343
    %3664 = vmatpush1.bf16.msra.mxu0 %v2342
    %3665 = vmatprep.subr.bf16.mxu0 %v2351
    %3666 = vmatpush1.bf16.msra.mxu0 %v2350
    %3667 = vmatprep.subr.bf16.mxu0 %v2359
    %3668 = vmatpush1.bf16.msra.mxu0 %v2358
    %3669 = vmatprep.subr.bf16.mxu0 %v2367
    %3670 = vmatpush1.bf16.msra.mxu0 %v2366
    %3671 = vmatprep.subr.bf16.mxu0 %v2375
    %3672 = vmatpush1.bf16.msra.mxu0 %v2374
    %3673 = vmatprep.subr.bf16.mxu0 %v2383
    %3674 = vmatpush1.bf16.msra.mxu0 %v2382
    %3675 = vmatprep.subr.bf16.mxu0 %v2391
    %3676 = vmatpush1.bf16.msra.mxu0 %v2390
    %3677 = vmatprep.subr.bf16.mxu0 %v2399
    %3678 = vmatpush1.bf16.msra.mxu0 %v2398
    %3679 = vmatprep.subr.bf16.mxu0 %v2407
    %3680 = vmatpush1.bf16.msra.mxu0 %v2406
    %3681 = vmatprep.mubr.bf16.mxu0 %v703
    %3682 = vmatmul.mubr.bf16.gmra.mrb[0].mxu0 %v701
    %v3683 = vpop.f32.mrb[0].mxu0
    %v3684 = vadd.f32 %v3643, %v3683
    %v3685 = vpop.f32.mrb[0].mxu0
    %v3686 = vadd.f32 %v3645, %v3685
    %v3687 = vpop.f32.mrb[0].mxu0
    %v3688 = vpop.f32.mrb[0].mxu0
    %3689 = vdwg.mxu0
    %3690 = vmatprep.subr.bf16.mxu0 %v2415
    %3691 = vmatpush1.bf16.msra.mxu0 %v2414
    %3692 = vmatprep.subr.bf16.mxu0 %v2423
    %3693 = vmatpush1.bf16.msra.mxu0 %v2422
    %3694 = vmatprep.subr.bf16.mxu0 %v2431
    %3695 = vmatpush1.bf16.msra.mxu0 %v2430
    %3696 = vmatprep.subr.bf16.mxu0 %v2439
    %3697 = vmatpush1.bf16.msra.mxu0 %v2438
    %3698 = vmatprep.subr.bf16.mxu0 %v2447
    %3699 = vmatpush1.bf16.msra.mxu0 %v2446
    %3700 = vmatprep.subr.bf16.mxu0 %v2455
    %3701 = vmatpush1.bf16.msra.mxu0 %v2454
    %3702 = vmatprep.subr.bf16.mxu0 %v2463
    %3703 = vmatpush1.bf16.msra.mxu0 %v2462
    %3704 = vmatprep.subr.bf16.mxu0 %v2471
    %3705 = vmatpush1.bf16.msra.mxu0 %v2470
    %3706 = vmatprep.subr.bf16.mxu0 %v2479
    %3707 = vmatpush1.bf16.msra.mxu0 %v2478
    %3708 = vmatprep.subr.bf16.mxu0 %v2487
    %3709 = vmatpush1.bf16.msra.mxu0 %v2486
    %3710 = vmatprep.subr.bf16.mxu0 %v2495
    %3711 = vmatpush1.bf16.msra.mxu0 %v2494
    %3712 = vmatprep.subr.bf16.mxu0 %v2503
    %3713 = vmatpush1.bf16.msra.mxu0 %v2502
    %3714 = vmatprep.subr.bf16.mxu0 %v2511
    %3715 = vmatpush1.bf16.msra.mxu0 %v2510
    %3716 = vmatprep.subr.bf16.mxu0 %v2519
    %3717 = vmatpush1.bf16.msra.mxu0 %v2518
    %3718 = vmatprep.subr.bf16.mxu0 %v2527
    %3719 = vmatpush1.bf16.msra.mxu0 %v2526
    %3720 = vmatprep.subr.bf16.mxu0 %v2535
    %3721 = vmatpush1.bf16.msra.mxu0 %v2534
    %3722 = vmatprep.mubr.bf16.mxu0 %v700
    %3723 = vmatmul.mubr.bf16.gmra.mrb[0].mxu0 %v686
    %v3724 = vpop.f32.mrb[0].mxu0
    %v3725 = vadd.f32 %v3684, %v3724
    %v3726 = vpop.f32.mrb[0].mxu0
    %v3727 = vadd.f32 %v3686, %v3726
    %v3728 = vpop.f32.mrb[0].mxu0
    %v3729 = vpop.f32.mrb[0].mxu0
    %3730 = vdwg.mxu0
    %3731 = vmatprep.subr.bf16.mxu0 %v2543
    %3732 = vmatpush1.bf16.msra.mxu0 %v2542
    %3733 = vmatprep.subr.bf16.mxu0 %v2551
    %3734 = vmatpush1.bf16.msra.mxu0 %v2550
    %3735 = vmatprep.subr.bf16.mxu0 %v2559
    %3736 = vmatpush1.bf16.msra.mxu0 %v2558
    %3737 = vmatprep.subr.bf16.mxu0 %v2567
    %3738 = vmatpush1.bf16.msra.mxu0 %v2566
    %3739 = vmatprep.subr.bf16.mxu0 %v2575
    %3740 = vmatpush1.bf16.msra.mxu0 %v2574
    %3741 = vmatprep.subr.bf16.mxu0 %v2583
    %3742 = vmatpush1.bf16.msra.mxu0 %v2582
    %3743 = vmatprep.subr.bf16.mxu0 %v2591
    %3744 = vmatpush1.bf16.msra.mxu0 %v2590
    %3745 = vmatprep.subr.bf16.mxu0 %v2599
    %3746 = vmatpush1.bf16.msra.mxu0 %v2598
    %3747 = vmatprep.subr.bf16.mxu0 %v2607
    %3748 = vmatpush1.bf16.msra.mxu0 %v2606
    %3749 = vmatprep.subr.bf16.mxu0 %v2615
    %3750 = vmatpush1.bf16.msra.mxu0 %v2614
    %3751 = vmatprep.subr.bf16.mxu0 %v2623
    %3752 = vmatpush1.bf16.msra.mxu0 %v2622
    %3753 = vmatprep.subr.bf16.mxu0 %v2631
    %3754 = vmatpush1.bf16.msra.mxu0 %v2630
    %3755 = vmatprep.subr.bf16.mxu0 0
    %3756 = vmatpush1.bf16.msra.mxu0 0
    %3757 = vmatprep.subr.bf16.mxu0 0
    %3758 = vmatpush1.bf16.msra.mxu0 0
    %3759 = vmatprep.subr.bf16.mxu0 0
    %3760 = vmatpush1.bf16.msra.mxu0 0
    %3761 = vmatprep.subr.bf16.mxu0 0
    %3762 = vmatpush1.bf16.msra.mxu0 0
    %3763 = vmatprep.mubr.bf16.mxu0 %v3114
    %3764 = vmatmul.mubr.bf16.gmra.mrb[0].mxu0 %v702
    %v3765 = vpop.f32.mrb[0].mxu0
    %v3766 = vadd.f32 %v3725, %v3765
    %v3767 = vpop.f32.mrb[0].mxu0
    %v3768 = vadd.f32 %v3727, %v3767
    %v3769 = vpop.f32.mrb[0].mxu0
    %v3770 = vpop.f32.mrb[0].mxu0
    %3771 = vdwg.mxu0
    %vm3772 = vcmask 1041408
    %v3773 = vsel %vm3772, %v3274, 0.0
    %v3774 = vsel %vm3772, %v3276, 0.0
    %v3775 = vadd.f32 %v3773, %v3774
    %v3776 = vsel %vm3772, %v3438, 0.0
    %v3777 = vadd.f32 %v3775, %v3776
    %v3778 = vsel %vm3772, %v3440, 0.0
    %v3779 = vadd.f32 %v3777, %v3778
    %v3780 = vsel %vm3772, %v3602, 0.0
    %v3781 = vadd.f32 %v3779, %v3780
    %v3782 = vsel %vm3772, %v3604, 0.0
    %v3783 = vadd.f32 %v3781, %v3782
    %v3784 = vsel %vm3772, %v3766, 0.0
    %v3785 = vadd.f32 %v3783, %v3784
    %v3786 = vsel %vm3772, %v3768, 0.0
    %v3787 = vadd.f32 %v3785, %v3786
    %3788 = vadd.xlane.f32.xlu0 %v3787
    %v3789 = vpop.xlane.xlu0 %3788
    %v3790 = vrcp.pop 1024.0
    %v3791 = vmul.f32 %v3789, %v3790
    %v3792 = vsub.f32 %v3274, %v3791
    %v3793 = vsub.f32 %v3276, %v3791
    %v3794 = vsub.f32 %v3438, %v3791
    %v3795 = vsub.f32 %v3440, %v3791
    %v3796 = vsub.f32 %v3602, %v3791
    %v3797 = vsub.f32 %v3604, %v3791
    %v3798 = vsub.f32 %v3766, %v3791
    %v3799 = vsub.f32 %v3768, %v3791
    %v3800 = vmul.f32 %v3792, %v3792
    %v3801 = vmul.f32 %v3793, %v3793
    %v3802 = vmul.f32 %v3794, %v3794
    %v3803 = vmul.f32 %v3795, %v3795
    %v3804 = vmul.f32 %v3796, %v3796
    %v3805 = vmul.f32 %v3797, %v3797
    %v3806 = vmul.f32 %v3798, %v3798
    %v3807 = vmul.f32 %v3799, %v3799
    %v3808 = vsel %vm3772, %v3800, 0.0
    %v3809 = vsel %vm3772, %v3801, 0.0
    %v3810 = vadd.f32 %v3808, %v3809
    %v3811 = vsel %vm3772, %v3802, 0.0
    %v3812 = vadd.f32 %v3810, %v3811
    %v3813 = vsel %vm3772, %v3803, 0.0
    %v3814 = vadd.f32 %v3812, %v3813
    %v3815 = vsel %vm3772, %v3804, 0.0
    %v3816 = vadd.f32 %v3814, %v3815
    %v3817 = vsel %vm3772, %v3805, 0.0
    %v3818 = vadd.f32 %v3816, %v3817
    %v3819 = vsel %vm3772, %v3806, 0.0
    %v3820 = vadd.f32 %v3818, %v3819
    %v3821 = vsel %vm3772, %v3807, 0.0
    %v3822 = vadd.f32 %v3820, %v3821
    %3823 = vadd.xlane.f32.xlu0 %v3822
    %v3824 = vpop.xlane.xlu0 %3823
    %v3825 = vmul.f32 %v3824, %v3790
    %v3826 = vadd.f32 %v3825, 1e-05
    %v3827 = vrsqrt.pop %v3826
    %v3828 = vmul.f32 %v3792, %v3827
    %v3829 = vmul.f32 %v3793, %v3827
    %v3830 = vmul.f32 %v3794, %v3827
    %v3831 = vmul.f32 %v3795, %v3827
    %v3832 = vmul.f32 %v3796, %v3827
    %v3833 = vmul.f32 %v3797, %v3827
    %v3834 = vmul.f32 %v3798, %v3827
    %v3835 = vmul.f32 %v3799, %v3827
    %v3836 = vld [vmem:[#allocation6] sm:$0xff]
    %v3838 = vlaneseq
    %v3839 = vshrl.u32 %v3838, 7
    %v3840 = vsub.s32 0, %v3839
    %v3841 = vrot.slane %v3836, %v3840
    %v3842 = vlaneseq
    %v3843 = vshrl.u32 %v3842, 7
    %v3844 = vsub.s32 1, %v3843
    %v3845 = vrot.slane %v3836, %v3844
    %v3846 = vlaneseq
    %v3847 = vshrl.u32 %v3846, 7
    %v3848 = vsub.s32 2, %v3847
    %v3849 = vrot.slane %v3836, %v3848
    %v3850 = vlaneseq
    %v3851 = vshrl.u32 %v3850, 7
    %v3852 = vsub.s32 3, %v3851
    %v3853 = vrot.slane %v3836, %v3852
    %v3854 = vlaneseq
    %v3855 = vshrl.u32 %v3854, 7
    %v3856 = vsub.s32 4, %v3855
    %v3857 = vrot.slane %v3836, %v3856
    %v3858 = vlaneseq
    %v3859 = vshrl.u32 %v3858, 7
    %v3860 = vsub.s32 5, %v3859
    %v3861 = vrot.slane %v3836, %v3860
    %v3862 = vlaneseq
    %v3863 = vshrl.u32 %v3862, 7
    %v3864 = vsub.s32 6, %v3863
    %v3865 = vrot.slane %v3836, %v3864
    %v3866 = vlaneseq
    %v3867 = vshrl.u32 %v3866, 7
    %v3868 = vsub.s32 7, %v3867
    %v3869 = vrot.slane %v3836, %v3868
    %v3878 = vmul.f32 %v3828, %v3841
    %v3879 = vmul.f32 %v3829, %v3845
    %v3880 = vmul.f32 %v3830, %v3849
    %v3881 = vmul.f32 %v3831, %v3853
    %v3882 = vmul.f32 %v3832, %v3857
    %v3883 = vmul.f32 %v3833, %v3861
    %v3884 = vmul.f32 %v3834, %v3865
    %v3885 = vmul.f32 %v3835, %v3869
    %v3886 = vld [vmem:[#allocation7] sm:$0xff]
    %v3888 = vlaneseq
    %v3889 = vshrl.u32 %v3888, 7
    %v3890 = vsub.s32 0, %v3889
    %v3891 = vrot.slane %v3886, %v3890
    %v3892 = vlaneseq
    %v3893 = vshrl.u32 %v3892, 7
    %v3894 = vsub.s32 1, %v3893
    %v3895 = vrot.slane %v3886, %v3894
    %v3896 = vlaneseq
    %v3897 = vshrl.u32 %v3896, 7
    %v3898 = vsub.s32 2, %v3897
    %v3899 = vrot.slane %v3886, %v3898
    %v3900 = vlaneseq
    %v3901 = vshrl.u32 %v3900, 7
    %v3902 = vsub.s32 3, %v3901
    %v3903 = vrot.slane %v3886, %v3902
    %v3904 = vlaneseq
    %v3905 = vshrl.u32 %v3904, 7
    %v3906 = vsub.s32 4, %v3905
    %v3907 = vrot.slane %v3886, %v3906
    %v3908 = vlaneseq
    %v3909 = vshrl.u32 %v3908, 7
    %v3910 = vsub.s32 5, %v3909
    %v3911 = vrot.slane %v3886, %v3910
    %v3912 = vlaneseq
    %v3913 = vshrl.u32 %v3912, 7
    %v3914 = vsub.s32 6, %v3913
    %v3915 = vrot.slane %v3886, %v3914
    %v3916 = vlaneseq
    %v3917 = vshrl.u32 %v3916, 7
    %v3918 = vsub.s32 7, %v3917
    %v3919 = vrot.slane %v3886, %v3918
    %v3928 = vadd.f32 %v3878, %v3891
    %v3929 = vadd.f32 %v3879, %v3895
    %v3930 = vadd.f32 %v3880, %v3899
    %v3931 = vadd.f32 %v3881, %v3903
    %v3932 = vadd.f32 %v3882, %v3907
    %v3933 = vadd.f32 %v3883, %v3911
    %v3934 = vadd.f32 %v3884, %v3915
    %v3935 = vadd.f32 %v3885, %v3919
    %v3936 = vpack.c.bf16 %v3928, %v3928
    %v3937 = vpack.c.bf16 %v3929, %v3929
    %v3938 = vpack.c.bf16 %v3930, %v3930
    %v3939 = vpack.c.bf16 %v3931, %v3931
    %v3940 = vpack.c.bf16 %v3932, %v3932
    %v3941 = vpack.c.bf16 %v3933, %v3933
    %v3942 = vpack.c.bf16 %v3934, %v3934
    %v3943 = vpack.c.bf16 %v3935, %v3935
    %v3944 = vld [vmem:[#allocation9] sm:$0xff]
    %v3945 = vld [vmem:[#allocation9 + $0x8] sm:$0xff]
    %v3946 = vld [vmem:[#allocation9 + $0x10] sm:$0xff]
    %v3947 = vld [vmem:[#allocation9 + $0x18] sm:$0xff]
    %v3948 = vld [vmem:[#allocation9 + $0x20] sm:$0xff]
    %v3949 = vld [vmem:[#allocation9 + $0x28] sm:$0xff]
    %v3950 = vld [vmem:[#allocation9 + $0x30] sm:$0xff]
    %v3951 = vld [vmem:[#allocation9 + $0x38] sm:$0xff]
    %v3952 = vld [vmem:[#allocation9 + $0x40] sm:$0xff]
    %v3953 = vld [vmem:[#allocation9 + $0x48] sm:$0xff]
    %v3954 = vld [vmem:[#allocation9 + $0x50] sm:$0xff]
    %v3955 = vld [vmem:[#allocation9 + $0x58] sm:$0xff]
    %v3956 = vld [vmem:[#allocation9 + $0x60] sm:$0xff]
    %v3957 = vld [vmem:[#allocation9 + $0x68] sm:$0xff]
    %v3958 = vld [vmem:[#allocation9 + $0x70] sm:$0xff]
    %v3959 = vld [vmem:[#allocation9 + $0x78] sm:$0xff]
    %v3960 = vld [vmem:[#allocation9 + $0x80] sm:$0xff]
    %v3961 = vld [vmem:[#allocation9 + $0x88] sm:$0xff]
    %v3962 = vld [vmem:[#allocation9 + $0x90] sm:$0xff]
    %v3963 = vld [vmem:[#allocation9 + $0x98] sm:$0xff]
    %v3964 = vld [vmem:[#allocation9 + $0xa0] sm:$0xff]
    %v3965 = vld [vmem:[#allocation9 + $0xa8] sm:$0xff]
    %v3966 = vld [vmem:[#allocation9 + $0xb0] sm:$0xff]
    %v3967 = vld [vmem:[#allocation9 + $0xb8] sm:$0xff]
    %v3968 = vld [vmem:[#allocation9 + $0xc0] sm:$0xff]
    %v3969 = vld [vmem:[#allocation9 + $0xc8] sm:$0xff]
    %v3970 = vld [vmem:[#allocation9 + $0xd0] sm:$0xff]
    %v3971 = vld [vmem:[#allocation9 + $0xd8] sm:$0xff]
    %v3972 = vld [vmem:[#allocation9 + $0xe0] sm:$0xff]
    %v3973 = vld [vmem:[#allocation9 + $0xe8] sm:$0xff]
    %v3974 = vld [vmem:[#allocation9 + $0xf0] sm:$0xff]
    %v3975 = vld [vmem:[#allocation9 + $0xf8] sm:$0xff]
    %v3976 = vld [vmem:[#allocation9 + $0x100] sm:$0xff]
    %v3977 = vld [vmem:[#allocation9 + $0x108] sm:$0xff]
    %v3978 = vld [vmem:[#allocation9 + $0x110] sm:$0xff]
    %v3979 = vld [vmem:[#allocation9 + $0x118] sm:$0xff]
    %v3980 = vld [vmem:[#allocation9 + $0x120] sm:$0xff]
    %v3981 = vld [vmem:[#allocation9 + $0x128] sm:$0xff]
    %v3982 = vld [vmem:[#allocation9 + $0x130] sm:$0xff]
    %v3983 = vld [vmem:[#allocation9 + $0x138] sm:$0xff]
    %v3984 = vld [vmem:[#allocation9 + $0x140] sm:$0xff]
    %v3985 = vld [vmem:[#allocation9 + $0x148] sm:$0xff]
    %v3986 = vld [vmem:[#allocation9 + $0x150] sm:$0xff]
    %v3987 = vld [vmem:[#allocation9 + $0x158] sm:$0xff]
    %v3988 = vld [vmem:[#allocation9 + $0x160] sm:$0xff]
    %v3989 = vld [vmem:[#allocation9 + $0x168] sm:$0xff]
    %v3990 = vld [vmem:[#allocation9 + $0x170] sm:$0xff]
    %v3991 = vld [vmem:[#allocation9 + $0x178] sm:$0xff]
    %v3992 = vld [vmem:[#allocation9 + $0x180] sm:$0xff]
    %v3993 = vld [vmem:[#allocation9 + $0x188] sm:$0xff]
    %v3994 = vld [vmem:[#allocation9 + $0x190] sm:$0xff]
    %v3995 = vld [vmem:[#allocation9 + $0x198] sm:$0xff]
    %v3996 = vld [vmem:[#allocation9 + $0x1a0] sm:$0xff]
    %v3997 = vld [vmem:[#allocation9 + $0x1a8] sm:$0xff]
    %v3998 = vld [vmem:[#allocation9 + $0x1b0] sm:$0xff]
    %v3999 = vld [vmem:[#allocation9 + $0x1b8] sm:$0xff]
    %v4000 = vld [vmem:[#allocation9 + $0x1c0] sm:$0xff]
    %v4001 = vld [vmem:[#allocation9 + $0x1c8] sm:$0xff]
    %v4002 = vld [vmem:[#allocation9 + $0x1d0] sm:$0xff]
    %v4003 = vld [vmem:[#allocation9 + $0x1d8] sm:$0xff]
    %v4004 = vld [vmem:[#allocation9 + $0x1e0] sm:$0xff]
    %v4005 = vld [vmem:[#allocation9 + $0x1e8] sm:$0xff]
    %v4006 = vld [vmem:[#allocation9 + $0x1f0] sm:$0xff]
    %v4007 = vld [vmem:[#allocation9 + $0x1f8] sm:$0xff]
    %v4008 = vld [vmem:[#allocation9 + $0x200] sm:$0xff]
    %v4009 = vld [vmem:[#allocation9 + $0x208] sm:$0xff]
    %v4010 = vld [vmem:[#allocation9 + $0x210] sm:$0xff]
    %v4011 = vld [vmem:[#allocation9 + $0x218] sm:$0xff]
    %v4012 = vld [vmem:[#allocation9 + $0x220] sm:$0xff]
    %v4013 = vld [vmem:[#allocation9 + $0x228] sm:$0xff]
    %v4014 = vld [vmem:[#allocation9 + $0x230] sm:$0xff]
    %v4015 = vld [vmem:[#allocation9 + $0x238] sm:$0xff]
    %v4016 = vld [vmem:[#allocation9 + $0x240] sm:$0xff]
    %v4017 = vld [vmem:[#allocation9 + $0x248] sm:$0xff]
    %v4018 = vld [vmem:[#allocation9 + $0x250] sm:$0xff]
    %v4019 = vld [vmem:[#allocation9 + $0x258] sm:$0xff]
    %v4020 = vld [vmem:[#allocation9 + $0x260] sm:$0xff]
    %v4021 = vld [vmem:[#allocation9 + $0x268] sm:$0xff]
    %v4022 = vld [vmem:[#allocation9 + $0x270] sm:$0xff]
    %v4023 = vld [vmem:[#allocation9 + $0x278] sm:$0xff]
    %v4024 = vld [vmem:[#allocation9 + $0x280] sm:$0xff]
    %v4025 = vld [vmem:[#allocation9 + $0x288] sm:$0xff]
    %v4026 = vld [vmem:[#allocation9 + $0x290] sm:$0xff]
    %v4027 = vld [vmem:[#allocation9 + $0x298] sm:$0xff]
    %v4028 = vld [vmem:[#allocation9 + $0x2a0] sm:$0xff]
    %v4029 = vld [vmem:[#allocation9 + $0x2a8] sm:$0xff]
    %v4030 = vld [vmem:[#allocation9 + $0x2b0] sm:$0xff]
    %v4031 = vld [vmem:[#allocation9 + $0x2b8] sm:$0xff]
    %v4032 = vld [vmem:[#allocation9 + $0x2c0] sm:$0xff]
    %v4033 = vld [vmem:[#allocation9 + $0x2c8] sm:$0xff]
    %v4034 = vld [vmem:[#allocation9 + $0x2d0] sm:$0xff]
    %v4035 = vld [vmem:[#allocation9 + $0x2d8] sm:$0xff]
    %v4036 = vld [vmem:[#allocation9 + $0x2e0] sm:$0xff]
    %v4037 = vld [vmem:[#allocation9 + $0x2e8] sm:$0xff]
    %v4038 = vld [vmem:[#allocation9 + $0x2f0] sm:$0xff]
    %v4039 = vld [vmem:[#allocation9 + $0x2f8] sm:$0xff]
    %v4040 = vld [vmem:[#allocation9 + $0x300] sm:$0xff]
    %v4041 = vld [vmem:[#allocation9 + $0x308] sm:$0xff]
    %v4042 = vld [vmem:[#allocation9 + $0x310] sm:$0xff]
    %v4043 = vld [vmem:[#allocation9 + $0x318] sm:$0xff]
    %v4044 = vld [vmem:[#allocation9 + $0x320] sm:$0xff]
    %v4045 = vld [vmem:[#allocation9 + $0x328] sm:$0xff]
    %v4046 = vld [vmem:[#allocation9 + $0x330] sm:$0xff]
    %v4047 = vld [vmem:[#allocation9 + $0x338] sm:$0xff]
    %v4048 = vld [vmem:[#allocation9 + $0x340] sm:$0xff]
    %v4049 = vld [vmem:[#allocation9 + $0x348] sm:$0xff]
    %v4050 = vld [vmem:[#allocation9 + $0x350] sm:$0xff]
    %v4051 = vld [vmem:[#allocation9 + $0x358] sm:$0xff]
    %v4052 = vld [vmem:[#allocation9 + $0x360] sm:$0xff]
    %v4053 = vld [vmem:[#allocation9 + $0x368] sm:$0xff]
    %v4054 = vld [vmem:[#allocation9 + $0x370] sm:$0xff]
    %v4055 = vld [vmem:[#allocation9 + $0x378] sm:$0xff]
    %v4056 = vld [vmem:[#allocation9 + $0x380] sm:$0xff]
    %v4057 = vld [vmem:[#allocation9 + $0x388] sm:$0xff]
    %v4058 = vld [vmem:[#allocation9 + $0x390] sm:$0xff]
    %v4059 = vld [vmem:[#allocation9 + $0x398] sm:$0xff]
    %v4060 = vld [vmem:[#allocation9 + $0x3a0] sm:$0xff]
    %v4061 = vld [vmem:[#allocation9 + $0x3a8] sm:$0xff]
    %v4062 = vld [vmem:[#allocation9 + $0x3b0] sm:$0xff]
    %v4063 = vld [vmem:[#allocation9 + $0x3b8] sm:$0xff]
    %v4064 = vld [vmem:[#allocation9 + $0x3c0] sm:$0xff]
    %v4065 = vld [vmem:[#allocation9 + $0x3c8] sm:$0xff]
    %v4066 = vld [vmem:[#allocation9 + $0x3d0] sm:$0xff]
    %v4067 = vld [vmem:[#allocation9 + $0x3d8] sm:$0xff]
    %v4068 = vld [vmem:[#allocation9 + $0x3e0] sm:$0xff]
    %v4069 = vld [vmem:[#allocation9 + $0x3e8] sm:$0xff]
    %v4070 = vld [vmem:[#allocation9 + $0x3f0] sm:$0xff]
    %v4071 = vld [vmem:[#allocation9 + $0x3f8] sm:$0xff]
    %v4072 = vld [vmem:[#allocation9 + $0x400] sm:$0xff]
    %v4073 = vld [vmem:[#allocation9 + $0x408] sm:$0xff]
    %v4074 = vld [vmem:[#allocation9 + $0x410] sm:$0xff]
    %v4075 = vld [vmem:[#allocation9 + $0x418] sm:$0xff]
    %v4076 = vld [vmem:[#allocation9 + $0x420] sm:$0xff]
    %v4077 = vld [vmem:[#allocation9 + $0x428] sm:$0xff]
    %v4078 = vld [vmem:[#allocation9 + $0x430] sm:$0xff]
    %v4079 = vld [vmem:[#allocation9 + $0x438] sm:$0xff]
    %v4080 = vld [vmem:[#allocation9 + $0x440] sm:$0xff]
    %v4081 = vld [vmem:[#allocation9 + $0x448] sm:$0xff]
    %v4082 = vld [vmem:[#allocation9 + $0x450] sm:$0xff]
    %v4083 = vld [vmem:[#allocation9 + $0x458] sm:$0xff]
    %v4084 = vld [vmem:[#allocation9 + $0x460] sm:$0xff]
    %v4085 = vld [vmem:[#allocation9 + $0x468] sm:$0xff]
    %v4086 = vld [vmem:[#allocation9 + $0x470] sm:$0xff]
    %v4087 = vld [vmem:[#allocation9 + $0x478] sm:$0xff]
    %v4088 = vld [vmem:[#allocation9 + $0x480] sm:$0xff]
    %v4089 = vld [vmem:[#allocation9 + $0x488] sm:$0xff]
    %v4090 = vld [vmem:[#allocation9 + $0x490] sm:$0xff]
    %v4091 = vld [vmem:[#allocation9 + $0x498] sm:$0xff]
    %v4092 = vld [vmem:[#allocation9 + $0x4a0] sm:$0xff]
    %v4093 = vld [vmem:[#allocation9 + $0x4a8] sm:$0xff]
    %v4094 = vld [vmem:[#allocation9 + $0x4b0] sm:$0xff]
    %v4095 = vld [vmem:[#allocation9 + $0x4b8] sm:$0xff]
    %v4096 = vld [vmem:[#allocation9 + $0x4c0] sm:$0xff]
    %v4097 = vld [vmem:[#allocation9 + $0x4c8] sm:$0xff]
    %v4098 = vld [vmem:[#allocation9 + $0x4d0] sm:$0xff]
    %v4099 = vld [vmem:[#allocation9 + $0x4d8] sm:$0xff]
    %v4100 = vld [vmem:[#allocation9 + $0x4e0] sm:$0xff]
    %v4101 = vld [vmem:[#allocation9 + $0x4e8] sm:$0xff]
    %v4102 = vld [vmem:[#allocation9 + $0x4f0] sm:$0xff]
    %v4103 = vld [vmem:[#allocation9 + $0x4f8] sm:$0xff]
    %v4104 = vld [vmem:[#allocation9 + $0x500] sm:$0xff]
    %v4105 = vld [vmem:[#allocation9 + $0x508] sm:$0xff]
    %v4106 = vld [vmem:[#allocation9 + $0x510] sm:$0xff]
    %v4107 = vld [vmem:[#allocation9 + $0x518] sm:$0xff]
    %v4108 = vld [vmem:[#allocation9 + $0x520] sm:$0xff]
    %v4109 = vld [vmem:[#allocation9 + $0x528] sm:$0xff]
    %v4110 = vld [vmem:[#allocation9 + $0x530] sm:$0xff]
    %v4111 = vld [vmem:[#allocation9 + $0x538] sm:$0xff]
    %v4112 = vld [vmem:[#allocation9 + $0x540] sm:$0xff]
    %v4113 = vld [vmem:[#allocation9 + $0x548] sm:$0xff]
    %v4114 = vld [vmem:[#allocation9 + $0x550] sm:$0xff]
    %v4115 = vld [vmem:[#allocation9 + $0x558] sm:$0xff]
    %v4116 = vld [vmem:[#allocation9 + $0x560] sm:$0xff]
    %v4117 = vld [vmem:[#allocation9 + $0x568] sm:$0xff]
    %v4118 = vld [vmem:[#allocation9 + $0x570] sm:$0xff]
    %v4119 = vld [vmem:[#allocation9 + $0x578] sm:$0xff]
    %v4120 = vld [vmem:[#allocation9 + $0x580] sm:$0xff]
    %v4121 = vld [vmem:[#allocation9 + $0x588] sm:$0xff]
    %v4122 = vld [vmem:[#allocation9 + $0x590] sm:$0xff]
    %v4123 = vld [vmem:[#allocation9 + $0x598] sm:$0xff]
    %v4124 = vld [vmem:[#allocation9 + $0x5a0] sm:$0xff]
    %v4125 = vld [vmem:[#allocation9 + $0x5a8] sm:$0xff]
    %v4126 = vld [vmem:[#allocation9 + $0x5b0] sm:$0xff]
    %v4127 = vld [vmem:[#allocation9 + $0x5b8] sm:$0xff]
    %v4128 = vld [vmem:[#allocation9 + $0x5c0] sm:$0xff]
    %v4129 = vld [vmem:[#allocation9 + $0x5c8] sm:$0xff]
    %v4130 = vld [vmem:[#allocation9 + $0x5d0] sm:$0xff]
    %v4131 = vld [vmem:[#allocation9 + $0x5d8] sm:$0xff]
    %v4132 = vld [vmem:[#allocation9 + $0x5e0] sm:$0xff]
    %v4133 = vld [vmem:[#allocation9 + $0x5e8] sm:$0xff]
    %v4134 = vld [vmem:[#allocation9 + $0x5f0] sm:$0xff]
    %v4135 = vld [vmem:[#allocation9 + $0x5f8] sm:$0xff]
    %v4136 = vld [vmem:[#allocation9 + $0x600] sm:$0xff]
    %v4137 = vld [vmem:[#allocation9 + $0x608] sm:$0xff]
    %v4138 = vld [vmem:[#allocation9 + $0x610] sm:$0xff]
    %v4139 = vld [vmem:[#allocation9 + $0x618] sm:$0xff]
    %v4140 = vld [vmem:[#allocation9 + $0x620] sm:$0xff]
    %v4141 = vld [vmem:[#allocation9 + $0x628] sm:$0xff]
    %v4142 = vld [vmem:[#allocation9 + $0x630] sm:$0xff]
    %v4143 = vld [vmem:[#allocation9 + $0x638] sm:$0xff]
    %v4144 = vld [vmem:[#allocation9 + $0x640] sm:$0xff]
    %v4145 = vld [vmem:[#allocation9 + $0x648] sm:$0xff]
    %v4146 = vld [vmem:[#allocation9 + $0x650] sm:$0xff]
    %v4147 = vld [vmem:[#allocation9 + $0x658] sm:$0xff]
    %v4148 = vld [vmem:[#allocation9 + $0x660] sm:$0xff]
    %v4149 = vld [vmem:[#allocation9 + $0x668] sm:$0xff]
    %v4150 = vld [vmem:[#allocation9 + $0x670] sm:$0xff]
    %v4151 = vld [vmem:[#allocation9 + $0x678] sm:$0xff]
    %v4152 = vld [vmem:[#allocation9 + $0x680] sm:$0xff]
    %v4153 = vld [vmem:[#allocation9 + $0x688] sm:$0xff]
    %v4154 = vld [vmem:[#allocation9 + $0x690] sm:$0xff]
    %v4155 = vld [vmem:[#allocation9 + $0x698] sm:$0xff]
    %v4156 = vld [vmem:[#allocation9 + $0x6a0] sm:$0xff]
    %v4157 = vld [vmem:[#allocation9 + $0x6a8] sm:$0xff]
    %v4158 = vld [vmem:[#allocation9 + $0x6b0] sm:$0xff]
    %v4159 = vld [vmem:[#allocation9 + $0x6b8] sm:$0xff]
    %v4160 = vld [vmem:[#allocation9 + $0x6c0] sm:$0xff]
    %v4161 = vld [vmem:[#allocation9 + $0x6c8] sm:$0xff]
    %v4162 = vld [vmem:[#allocation9 + $0x6d0] sm:$0xff]
    %v4163 = vld [vmem:[#allocation9 + $0x6d8] sm:$0xff]
    %v4164 = vld [vmem:[#allocation9 + $0x6e0] sm:$0xff]
    %v4165 = vld [vmem:[#allocation9 + $0x6e8] sm:$0xff]
    %v4166 = vld [vmem:[#allocation9 + $0x6f0] sm:$0xff]
    %v4167 = vld [vmem:[#allocation9 + $0x6f8] sm:$0xff]
    %v4168 = vld [vmem:[#allocation9 + $0x700] sm:$0xff]
    %v4169 = vld [vmem:[#allocation9 + $0x708] sm:$0xff]
    %v4170 = vld [vmem:[#allocation9 + $0x710] sm:$0xff]
    %v4171 = vld [vmem:[#allocation9 + $0x718] sm:$0xff]
    %v4172 = vld [vmem:[#allocation9 + $0x720] sm:$0xff]
    %v4173 = vld [vmem:[#allocation9 + $0x728] sm:$0xff]
    %v4174 = vld [vmem:[#allocation9 + $0x730] sm:$0xff]
    %v4175 = vld [vmem:[#allocation9 + $0x738] sm:$0xff]
    %v4176 = vld [vmem:[#allocation9 + $0x740] sm:$0xff]
    %v4177 = vld [vmem:[#allocation9 + $0x748] sm:$0xff]
    %v4178 = vld [vmem:[#allocation9 + $0x750] sm:$0xff]
    %v4179 = vld [vmem:[#allocation9 + $0x758] sm:$0xff]
    %v4180 = vld [vmem:[#allocation9 + $0x760] sm:$0xff]
    %v4181 = vld [vmem:[#allocation9 + $0x768] sm:$0xff]
    %v4182 = vld [vmem:[#allocation9 + $0x770] sm:$0xff]
    %v4183 = vld [vmem:[#allocation9 + $0x778] sm:$0xff]
    %v4184 = vld [vmem:[#allocation9 + $0x780] sm:$0xff]
    %v4185 = vld [vmem:[#allocation9 + $0x788] sm:$0xff]
    %v4186 = vld [vmem:[#allocation9 + $0x790] sm:$0xff]
    %v4187 = vld [vmem:[#allocation9 + $0x798] sm:$0xff]
    %v4188 = vld [vmem:[#allocation9 + $0x7a0] sm:$0xff]
    %v4189 = vld [vmem:[#allocation9 + $0x7a8] sm:$0xff]
    %v4190 = vld [vmem:[#allocation9 + $0x7b0] sm:$0xff]
    %v4191 = vld [vmem:[#allocation9 + $0x7b8] sm:$0xff]
    %v4192 = vld [vmem:[#allocation9 + $0x7c0] sm:$0xff]
    %v4193 = vld [vmem:[#allocation9 + $0x7c8] sm:$0xff]
    %v4194 = vld [vmem:[#allocation9 + $0x7d0] sm:$0xff]
    %v4195 = vld [vmem:[#allocation9 + $0x7d8] sm:$0xff]
    %v4196 = vld [vmem:[#allocation9 + $0x7e0] sm:$0xff]
    %v4197 = vld [vmem:[#allocation9 + $0x7e8] sm:$0xff]
    %v4198 = vld [vmem:[#allocation9 + $0x7f0] sm:$0xff]
    %v4199 = vld [vmem:[#allocation9 + $0x7f8] sm:$0xff]
    %v4200 = vld [vmem:[#allocation9 + $0x800] sm:$0xff]
    %v4201 = vld [vmem:[#allocation9 + $0x808] sm:$0xff]
    %v4202 = vld [vmem:[#allocation9 + $0x810] sm:$0xff]
    %v4203 = vld [vmem:[#allocation9 + $0x818] sm:$0xff]
    %v4204 = vld [vmem:[#allocation9 + $0x820] sm:$0xff]
    %v4205 = vld [vmem:[#allocation9 + $0x828] sm:$0xff]
    %v4206 = vld [vmem:[#allocation9 + $0x830] sm:$0xff]
    %v4207 = vld [vmem:[#allocation9 + $0x838] sm:$0xff]
    %v4208 = vld [vmem:[#allocation9 + $0x840] sm:$0xff]
    %v4209 = vld [vmem:[#allocation9 + $0x848] sm:$0xff]
    %v4210 = vld [vmem:[#allocation9 + $0x850] sm:$0xff]
    %v4211 = vld [vmem:[#allocation9 + $0x858] sm:$0xff]
    %v4212 = vld [vmem:[#allocation9 + $0x860] sm:$0xff]
    %v4213 = vld [vmem:[#allocation9 + $0x868] sm:$0xff]
    %v4214 = vld [vmem:[#allocation9 + $0x870] sm:$0xff]
    %v4215 = vld [vmem:[#allocation9 + $0x878] sm:$0xff]
    %v4216 = vld [vmem:[#allocation9 + $0x880] sm:$0xff]
    %v4217 = vld [vmem:[#allocation9 + $0x888] sm:$0xff]
    %v4218 = vld [vmem:[#allocation9 + $0x890] sm:$0xff]
    %v4219 = vld [vmem:[#allocation9 + $0x898] sm:$0xff]
    %v4220 = vld [vmem:[#allocation9 + $0x8a0] sm:$0xff]
    %v4221 = vld [vmem:[#allocation9 + $0x8a8] sm:$0xff]
    %v4222 = vld [vmem:[#allocation9 + $0x8b0] sm:$0xff]
    %v4223 = vld [vmem:[#allocation9 + $0x8b8] sm:$0xff]
    %v4224 = vld [vmem:[#allocation9 + $0x8c0] sm:$0xff]
    %v4225 = vld [vmem:[#allocation9 + $0x8c8] sm:$0xff]
    %v4226 = vld [vmem:[#allocation9 + $0x8d0] sm:$0xff]
    %v4227 = vld [vmem:[#allocation9 + $0x8d8] sm:$0xff]
    %v4228 = vld [vmem:[#allocation9 + $0x8e0] sm:$0xff]
    %v4229 = vld [vmem:[#allocation9 + $0x8e8] sm:$0xff]
    %v4230 = vld [vmem:[#allocation9 + $0x8f0] sm:$0xff]
    %v4231 = vld [vmem:[#allocation9 + $0x8f8] sm:$0xff]
    %v4232 = vld [vmem:[#allocation9 + $0x900] sm:$0xff]
    %v4233 = vld [vmem:[#allocation9 + $0x908] sm:$0xff]
    %v4234 = vld [vmem:[#allocation9 + $0x910] sm:$0xff]
    %v4235 = vld [vmem:[#allocation9 + $0x918] sm:$0xff]
    %v4236 = vld [vmem:[#allocation9 + $0x920] sm:$0xff]
    %v4237 = vld [vmem:[#allocation9 + $0x928] sm:$0xff]
    %v4238 = vld [vmem:[#allocation9 + $0x930] sm:$0xff]
    %v4239 = vld [vmem:[#allocation9 + $0x938] sm:$0xff]
    %v4240 = vld [vmem:[#allocation9 + $0x940] sm:$0xff]
    %v4241 = vld [vmem:[#allocation9 + $0x948] sm:$0xff]
    %v4242 = vld [vmem:[#allocation9 + $0x950] sm:$0xff]
    %v4243 = vld [vmem:[#allocation9 + $0x958] sm:$0xff]
    %v4244 = vld [vmem:[#allocation9 + $0x960] sm:$0xff]
    %v4245 = vld [vmem:[#allocation9 + $0x968] sm:$0xff]
    %v4246 = vld [vmem:[#allocation9 + $0x970] sm:$0xff]
    %v4247 = vld [vmem:[#allocation9 + $0x978] sm:$0xff]
    %v4248 = vld [vmem:[#allocation9 + $0x980] sm:$0xff]
    %v4249 = vld [vmem:[#allocation9 + $0x988] sm:$0xff]
    %v4250 = vld [vmem:[#allocation9 + $0x990] sm:$0xff]
    %v4251 = vld [vmem:[#allocation9 + $0x998] sm:$0xff]
    %v4252 = vld [vmem:[#allocation9 + $0x9a0] sm:$0xff]
    %v4253 = vld [vmem:[#allocation9 + $0x9a8] sm:$0xff]
    %v4254 = vld [vmem:[#allocation9 + $0x9b0] sm:$0xff]
    %v4255 = vld [vmem:[#allocation9 + $0x9b8] sm:$0xff]
    %v4256 = vld [vmem:[#allocation9 + $0x9c0] sm:$0xff]
    %v4257 = vld [vmem:[#allocation9 + $0x9c8] sm:$0xff]
    %v4258 = vld [vmem:[#allocation9 + $0x9d0] sm:$0xff]
    %v4259 = vld [vmem:[#allocation9 + $0x9d8] sm:$0xff]
    %v4260 = vld [vmem:[#allocation9 + $0x9e0] sm:$0xff]
    %v4261 = vld [vmem:[#allocation9 + $0x9e8] sm:$0xff]
    %v4262 = vld [vmem:[#allocation9 + $0x9f0] sm:$0xff]
    %v4263 = vld [vmem:[#allocation9 + $0x9f8] sm:$0xff]
    %v4264 = vld [vmem:[#allocation9 + $0xa00] sm:$0xff]
    %v4265 = vld [vmem:[#allocation9 + $0xa08] sm:$0xff]
    %v4266 = vld [vmem:[#allocation9 + $0xa10] sm:$0xff]
    %v4267 = vld [vmem:[#allocation9 + $0xa18] sm:$0xff]
    %v4268 = vld [vmem:[#allocation9 + $0xa20] sm:$0xff]
    %v4269 = vld [vmem:[#allocation9 + $0xa28] sm:$0xff]
    %v4270 = vld [vmem:[#allocation9 + $0xa30] sm:$0xff]
    %v4271 = vld [vmem:[#allocation9 + $0xa38] sm:$0xff]
    %v4272 = vld [vmem:[#allocation9 + $0xa40] sm:$0xff]
    %v4273 = vld [vmem:[#allocation9 + $0xa48] sm:$0xff]
    %v4274 = vld [vmem:[#allocation9 + $0xa50] sm:$0xff]
    %v4275 = vld [vmem:[#allocation9 + $0xa58] sm:$0xff]
    %v4276 = vld [vmem:[#allocation9 + $0xa60] sm:$0xff]
    %v4277 = vld [vmem:[#allocation9 + $0xa68] sm:$0xff]
    %v4278 = vld [vmem:[#allocation9 + $0xa70] sm:$0xff]
    %v4279 = vld [vmem:[#allocation9 + $0xa78] sm:$0xff]
    %v4280 = vld [vmem:[#allocation9 + $0xa80] sm:$0xff]
    %v4281 = vld [vmem:[#allocation9 + $0xa88] sm:$0xff]
    %v4282 = vld [vmem:[#allocation9 + $0xa90] sm:$0xff]
    %v4283 = vld [vmem:[#allocation9 + $0xa98] sm:$0xff]
    %v4284 = vld [vmem:[#allocation9 + $0xaa0] sm:$0xff]
    %v4285 = vld [vmem:[#allocation9 + $0xaa8] sm:$0xff]
    %v4286 = vld [vmem:[#allocation9 + $0xab0] sm:$0xff]
    %v4287 = vld [vmem:[#allocation9 + $0xab8] sm:$0xff]
    %v4288 = vld [vmem:[#allocation9 + $0xac0] sm:$0xff]
    %v4289 = vld [vmem:[#allocation9 + $0xac8] sm:$0xff]
    %v4290 = vld [vmem:[#allocation9 + $0xad0] sm:$0xff]
    %v4291 = vld [vmem:[#allocation9 + $0xad8] sm:$0xff]
    %v4292 = vld [vmem:[#allocation9 + $0xae0] sm:$0xff]
    %v4293 = vld [vmem:[#allocation9 + $0xae8] sm:$0xff]
    %v4294 = vld [vmem:[#allocation9 + $0xaf0] sm:$0xff]
    %v4295 = vld [vmem:[#allocation9 + $0xaf8] sm:$0xff]
    %v4296 = vld [vmem:[#allocation9 + $0xb00] sm:$0xff]
    %v4297 = vld [vmem:[#allocation9 + $0xb08] sm:$0xff]
    %v4298 = vld [vmem:[#allocation9 + $0xb10] sm:$0xff]
    %v4299 = vld [vmem:[#allocation9 + $0xb18] sm:$0xff]
    %v4300 = vld [vmem:[#allocation9 + $0xb20] sm:$0xff]
    %v4301 = vld [vmem:[#allocation9 + $0xb28] sm:$0xff]
    %v4302 = vld [vmem:[#allocation9 + $0xb30] sm:$0xff]
    %v4303 = vld [vmem:[#allocation9 + $0xb38] sm:$0xff]
    %v4304 = vld [vmem:[#allocation9 + $0xb40] sm:$0xff]
    %v4305 = vld [vmem:[#allocation9 + $0xb48] sm:$0xff]
    %v4306 = vld [vmem:[#allocation9 + $0xb50] sm:$0xff]
    %v4307 = vld [vmem:[#allocation9 + $0xb58] sm:$0xff]
    %v4308 = vld [vmem:[#allocation9 + $0xb60] sm:$0xff]
    %v4309 = vld [vmem:[#allocation9 + $0xb68] sm:$0xff]
    %v4310 = vld [vmem:[#allocation9 + $0xb70] sm:$0xff]
    %v4311 = vld [vmem:[#allocation9 + $0xb78] sm:$0xff]
    %v4312 = vld [vmem:[#allocation9 + $0xb80] sm:$0xff]
    %v4313 = vld [vmem:[#allocation9 + $0xb88] sm:$0xff]
    %v4314 = vld [vmem:[#allocation9 + $0xb90] sm:$0xff]
    %v4315 = vld [vmem:[#allocation9 + $0xb98] sm:$0xff]
    %v4316 = vld [vmem:[#allocation9 + $0xba0] sm:$0xff]
    %v4317 = vld [vmem:[#allocation9 + $0xba8] sm:$0xff]
    %v4318 = vld [vmem:[#allocation9 + $0xbb0] sm:$0xff]
    %v4319 = vld [vmem:[#allocation9 + $0xbb8] sm:$0xff]
    %v4320 = vld [vmem:[#allocation9 + $0xbc0] sm:$0xff]
    %v4321 = vld [vmem:[#allocation9 + $0xbc8] sm:$0xff]
    %v4322 = vld [vmem:[#allocation9 + $0xbd0] sm:$0xff]
    %v4323 = vld [vmem:[#allocation9 + $0xbd8] sm:$0xff]
    %v4324 = vld [vmem:[#allocation9 + $0xbe0] sm:$0xff]
    %v4325 = vld [vmem:[#allocation9 + $0xbe8] sm:$0xff]
    %v4326 = vld [vmem:[#allocation9 + $0xbf0] sm:$0xff]
    %v4327 = vld [vmem:[#allocation9 + $0xbf8] sm:$0xff]
    %v4328 = vld [vmem:[#allocation9 + $0xc00] sm:$0xff]
    %v4329 = vld [vmem:[#allocation9 + $0xc08] sm:$0xff]
    %v4330 = vld [vmem:[#allocation9 + $0xc10] sm:$0xff]
    %v4331 = vld [vmem:[#allocation9 + $0xc18] sm:$0xff]
    %v4332 = vld [vmem:[#allocation9 + $0xc20] sm:$0xff]
    %v4333 = vld [vmem:[#allocation9 + $0xc28] sm:$0xff]
    %v4334 = vld [vmem:[#allocation9 + $0xc30] sm:$0xff]
    %v4335 = vld [vmem:[#allocation9 + $0xc38] sm:$0xff]
    %v4336 = vld [vmem:[#allocation9 + $0xc40] sm:$0xff]
    %v4337 = vld [vmem:[#allocation9 + $0xc48] sm:$0xff]
    %v4338 = vld [vmem:[#allocation9 + $0xc50] sm:$0xff]
    %v4339 = vld [vmem:[#allocation9 + $0xc58] sm:$0xff]
    %v4340 = vld [vmem:[#allocation9 + $0xc60] sm:$0xff]
    %v4341 = vld [vmem:[#allocation9 + $0xc68] sm:$0xff]
    %v4342 = vld [vmem:[#allocation9 + $0xc70] sm:$0xff]
    %v4343 = vld [vmem:[#allocation9 + $0xc78] sm:$0xff]
    %v4344 = vld [vmem:[#allocation9 + $0xc80] sm:$0xff]
    %v4345 = vld [vmem:[#allocation9 + $0xc88] sm:$0xff]
    %v4346 = vld [vmem:[#allocation9 + $0xc90] sm:$0xff]
    %v4347 = vld [vmem:[#allocation9 + $0xc98] sm:$0xff]
    %v4348 = vld [vmem:[#allocation9 + $0xca0] sm:$0xff]
    %v4349 = vld [vmem:[#allocation9 + $0xca8] sm:$0xff]
    %v4350 = vld [vmem:[#allocation9 + $0xcb0] sm:$0xff]
    %v4351 = vld [vmem:[#allocation9 + $0xcb8] sm:$0xff]
    %v4352 = vld [vmem:[#allocation9 + $0xcc0] sm:$0xff]
    %v4353 = vld [vmem:[#allocation9 + $0xcc8] sm:$0xff]
    %v4354 = vld [vmem:[#allocation9 + $0xcd0] sm:$0xff]
    %v4355 = vld [vmem:[#allocation9 + $0xcd8] sm:$0xff]
    %v4356 = vld [vmem:[#allocation9 + $0xce0] sm:$0xff]
    %v4357 = vld [vmem:[#allocation9 + $0xce8] sm:$0xff]
    %v4358 = vld [vmem:[#allocation9 + $0xcf0] sm:$0xff]
    %v4359 = vld [vmem:[#allocation9 + $0xcf8] sm:$0xff]
    %v4360 = vld [vmem:[#allocation9 + $0xd00] sm:$0xff]
    %v4361 = vld [vmem:[#allocation9 + $0xd08] sm:$0xff]
    %v4362 = vld [vmem:[#allocation9 + $0xd10] sm:$0xff]
    %v4363 = vld [vmem:[#allocation9 + $0xd18] sm:$0xff]
    %v4364 = vld [vmem:[#allocation9 + $0xd20] sm:$0xff]
    %v4365 = vld [vmem:[#allocation9 + $0xd28] sm:$0xff]
    %v4366 = vld [vmem:[#allocation9 + $0xd30] sm:$0xff]
    %v4367 = vld [vmem:[#allocation9 + $0xd38] sm:$0xff]
    %v4368 = vld [vmem:[#allocation9 + $0xd40] sm:$0xff]
    %v4369 = vld [vmem:[#allocation9 + $0xd48] sm:$0xff]
    %v4370 = vld [vmem:[#allocation9 + $0xd50] sm:$0xff]
    %v4371 = vld [vmem:[#allocation9 + $0xd58] sm:$0xff]
    %v4372 = vld [vmem:[#allocation9 + $0xd60] sm:$0xff]
    %v4373 = vld [vmem:[#allocation9 + $0xd68] sm:$0xff]
    %v4374 = vld [vmem:[#allocation9 + $0xd70] sm:$0xff]
    %v4375 = vld [vmem:[#allocation9 + $0xd78] sm:$0xff]
    %v4376 = vld [vmem:[#allocation9 + $0xd80] sm:$0xff]
    %v4377 = vld [vmem:[#allocation9 + $0xd88] sm:$0xff]
    %v4378 = vld [vmem:[#allocation9 + $0xd90] sm:$0xff]
    %v4379 = vld [vmem:[#allocation9 + $0xd98] sm:$0xff]
    %v4380 = vld [vmem:[#allocation9 + $0xda0] sm:$0xff]
    %v4381 = vld [vmem:[#allocation9 + $0xda8] sm:$0xff]
    %v4382 = vld [vmem:[#allocation9 + $0xdb0] sm:$0xff]
    %v4383 = vld [vmem:[#allocation9 + $0xdb8] sm:$0xff]
    %v4384 = vld [vmem:[#allocation9 + $0xdc0] sm:$0xff]
    %v4385 = vld [vmem:[#allocation9 + $0xdc8] sm:$0xff]
    %v4386 = vld [vmem:[#allocation9 + $0xdd0] sm:$0xff]
    %v4387 = vld [vmem:[#allocation9 + $0xdd8] sm:$0xff]
    %v4388 = vld [vmem:[#allocation9 + $0xde0] sm:$0xff]
    %v4389 = vld [vmem:[#allocation9 + $0xde8] sm:$0xff]
    %v4390 = vld [vmem:[#allocation9 + $0xdf0] sm:$0xff]
    %v4391 = vld [vmem:[#allocation9 + $0xdf8] sm:$0xff]
    %v4392 = vld [vmem:[#allocation9 + $0xe00] sm:$0xff]
    %v4393 = vld [vmem:[#allocation9 + $0xe08] sm:$0xff]
    %v4394 = vld [vmem:[#allocation9 + $0xe10] sm:$0xff]
    %v4395 = vld [vmem:[#allocation9 + $0xe18] sm:$0xff]
    %v4396 = vld [vmem:[#allocation9 + $0xe20] sm:$0xff]
    %v4397 = vld [vmem:[#allocation9 + $0xe28] sm:$0xff]
    %v4398 = vld [vmem:[#allocation9 + $0xe30] sm:$0xff]
    %v4399 = vld [vmem:[#allocation9 + $0xe38] sm:$0xff]
    %v4400 = vld [vmem:[#allocation9 + $0xe40] sm:$0xff]
    %v4401 = vld [vmem:[#allocation9 + $0xe48] sm:$0xff]
    %v4402 = vld [vmem:[#allocation9 + $0xe50] sm:$0xff]
    %v4403 = vld [vmem:[#allocation9 + $0xe58] sm:$0xff]
    %v4404 = vld [vmem:[#allocation9 + $0xe60] sm:$0xff]
    %v4405 = vld [vmem:[#allocation9 + $0xe68] sm:$0xff]
    %v4406 = vld [vmem:[#allocation9 + $0xe70] sm:$0xff]
    %v4407 = vld [vmem:[#allocation9 + $0xe78] sm:$0xff]
    %v4408 = vld [vmem:[#allocation9 + $0xe80] sm:$0xff]
    %v4409 = vld [vmem:[#allocation9 + $0xe88] sm:$0xff]
    %v4410 = vld [vmem:[#allocation9 + $0xe90] sm:$0xff]
    %v4411 = vld [vmem:[#allocation9 + $0xe98] sm:$0xff]
    %v4412 = vld [vmem:[#allocation9 + $0xea0] sm:$0xff]
    %v4413 = vld [vmem:[#allocation9 + $0xea8] sm:$0xff]
    %v4414 = vld [vmem:[#allocation9 + $0xeb0] sm:$0xff]
    %v4415 = vld [vmem:[#allocation9 + $0xeb8] sm:$0xff]
    %v4416 = vld [vmem:[#allocation9 + $0xec0] sm:$0xff]
    %v4417 = vld [vmem:[#allocation9 + $0xec8] sm:$0xff]
    %v4418 = vld [vmem:[#allocation9 + $0xed0] sm:$0xff]
    %v4419 = vld [vmem:[#allocation9 + $0xed8] sm:$0xff]
    %v4420 = vld [vmem:[#allocation9 + $0xee0] sm:$0xff]
    %v4421 = vld [vmem:[#allocation9 + $0xee8] sm:$0xff]
    %v4422 = vld [vmem:[#allocation9 + $0xef0] sm:$0xff]
    %v4423 = vld [vmem:[#allocation9 + $0xef8] sm:$0xff]
    %v4424 = vld [vmem:[#allocation9 + $0xf00] sm:$0xff]
    %v4425 = vld [vmem:[#allocation9 + $0xf08] sm:$0xff]
    %v4426 = vld [vmem:[#allocation9 + $0xf10] sm:$0xff]
    %v4427 = vld [vmem:[#allocation9 + $0xf18] sm:$0xff]
    %v4428 = vld [vmem:[#allocation9 + $0xf20] sm:$0xff]
    %v4429 = vld [vmem:[#allocation9 + $0xf28] sm:$0xff]
    %v4430 = vld [vmem:[#allocation9 + $0xf30] sm:$0xff]
    %v4431 = vld [vmem:[#allocation9 + $0xf38] sm:$0xff]
    %v4432 = vld [vmem:[#allocation9 + $0xf40] sm:$0xff]
    %v4433 = vld [vmem:[#allocation9 + $0xf48] sm:$0xff]
    %v4434 = vld [vmem:[#allocation9 + $0xf50] sm:$0xff]
    %v4435 = vld [vmem:[#allocation9 + $0xf58] sm:$0xff]
    %v4436 = vld [vmem:[#allocation9 + $0xf60] sm:$0xff]
    %v4437 = vld [vmem:[#allocation9 + $0xf68] sm:$0xff]
    %v4438 = vld [vmem:[#allocation9 + $0xf70] sm:$0xff]
    %v4439 = vld [vmem:[#allocation9 + $0xf78] sm:$0xff]
    %v4440 = vld [vmem:[#allocation9 + $0xf80] sm:$0xff]
    %v4441 = vld [vmem:[#allocation9 + $0xf88] sm:$0xff]
    %v4442 = vld [vmem:[#allocation9 + $0xf90] sm:$0xff]
    %v4443 = vld [vmem:[#allocation9 + $0xf98] sm:$0xff]
    %v4444 = vld [vmem:[#allocation9 + $0xfa0] sm:$0xff]
    %v4445 = vld [vmem:[#allocation9 + $0xfa8] sm:$0xff]
    %v4446 = vld [vmem:[#allocation9 + $0xfb0] sm:$0xff]
    %v4447 = vld [vmem:[#allocation9 + $0xfb8] sm:$0xff]
    %v4448 = vld [vmem:[#allocation9 + $0xfc0] sm:$0xff]
    %v4449 = vld [vmem:[#allocation9 + $0xfc8] sm:$0xff]
    %v4450 = vld [vmem:[#allocation9 + $0xfd0] sm:$0xff]
    %v4451 = vld [vmem:[#allocation9 + $0xfd8] sm:$0xff]
    %v4452 = vld [vmem:[#allocation9 + $0xfe0] sm:$0xff]
    %v4453 = vld [vmem:[#allocation9 + $0xfe8] sm:$0xff]
    %v4454 = vld [vmem:[#allocation9 + $0xff0] sm:$0xff]
    %v4455 = vld [vmem:[#allocation9 + $0xff8] sm:$0xff]
    %v4456 = vld [vmem:[#allocation9 + $0x1000] sm:$0xff]
    %v4457 = vld [vmem:[#allocation9 + $0x1008] sm:$0xff]
    %v4458 = vld [vmem:[#allocation9 + $0x1010] sm:$0xff]
    %v4459 = vld [vmem:[#allocation9 + $0x1018] sm:$0xff]
    %v4460 = vld [vmem:[#allocation9 + $0x1020] sm:$0xff]
    %v4461 = vld [vmem:[#allocation9 + $0x1028] sm:$0xff]
    %v4462 = vld [vmem:[#allocation9 + $0x1030] sm:$0xff]
    %v4463 = vld [vmem:[#allocation9 + $0x1038] sm:$0xff]
    %v4464 = vld [vmem:[#allocation9 + $0x1040] sm:$0xff]
    %v4465 = vld [vmem:[#allocation9 + $0x1048] sm:$0xff]
    %v4466 = vld [vmem:[#allocation9 + $0x1050] sm:$0xff]
    %v4467 = vld [vmem:[#allocation9 + $0x1058] sm:$0xff]
    %v4468 = vld [vmem:[#allocation9 + $0x1060] sm:$0xff]
    %v4469 = vld [vmem:[#allocation9 + $0x1068] sm:$0xff]
    %v4470 = vld [vmem:[#allocation9 + $0x1070] sm:$0xff]
    %v4471 = vld [vmem:[#allocation9 + $0x1078] sm:$0xff]
    %v4472 = vld [vmem:[#allocation9 + $0x1080] sm:$0xff]
    %v4473 = vld [vmem:[#allocation9 + $0x1088] sm:$0xff]
    %v4474 = vld [vmem:[#allocation9 + $0x1090] sm:$0xff]
    %v4475 = vld [vmem:[#allocation9 + $0x1098] sm:$0xff]
    %v4476 = vld [vmem:[#allocation9 + $0x10a0] sm:$0xff]
    %v4477 = vld [vmem:[#allocation9 + $0x10a8] sm:$0xff]
    %v4478 = vld [vmem:[#allocation9 + $0x10b0] sm:$0xff]
    %v4479 = vld [vmem:[#allocation9 + $0x10b8] sm:$0xff]
    %v4480 = vld [vmem:[#allocation9 + $0x10c0] sm:$0xff]
    %v4481 = vld [vmem:[#allocation9 + $0x10c8] sm:$0xff]
    %v4482 = vld [vmem:[#allocation9 + $0x10d0] sm:$0xff]
    %v4483 = vld [vmem:[#allocation9 + $0x10d8] sm:$0xff]
    %v4484 = vld [vmem:[#allocation9 + $0x10e0] sm:$0xff]
    %v4485 = vld [vmem:[#allocation9 + $0x10e8] sm:$0xff]
    %v4486 = vld [vmem:[#allocation9 + $0x10f0] sm:$0xff]
    %v4487 = vld [vmem:[#allocation9 + $0x10f8] sm:$0xff]
    %v4488 = vld [vmem:[#allocation9 + $0x1100] sm:$0xff]
    %v4489 = vld [vmem:[#allocation9 + $0x1108] sm:$0xff]
    %v4490 = vld [vmem:[#allocation9 + $0x1110] sm:$0xff]
    %v4491 = vld [vmem:[#allocation9 + $0x1118] sm:$0xff]
    %v4492 = vld [vmem:[#allocation9 + $0x1120] sm:$0xff]
    %v4493 = vld [vmem:[#allocation9 + $0x1128] sm:$0xff]
    %v4494 = vld [vmem:[#allocation9 + $0x1130] sm:$0xff]
    %v4495 = vld [vmem:[#allocation9 + $0x1138] sm:$0xff]
    %v4496 = vld [vmem:[#allocation9 + $0x1140] sm:$0xff]
    %v4497 = vld [vmem:[#allocation9 + $0x1148] sm:$0xff]
    %v4498 = vld [vmem:[#allocation9 + $0x1150] sm:$0xff]
    %v4499 = vld [vmem:[#allocation9 + $0x1158] sm:$0xff]
    %v4500 = vld [vmem:[#allocation9 + $0x1160] sm:$0xff]
    %v4501 = vld [vmem:[#allocation9 + $0x1168] sm:$0xff]
    %v4502 = vld [vmem:[#allocation9 + $0x1170] sm:$0xff]
    %v4503 = vld [vmem:[#allocation9 + $0x1178] sm:$0xff]
    %v4504 = vld [vmem:[#allocation9 + $0x1180] sm:$0xff]
    %v4505 = vld [vmem:[#allocation9 + $0x1188] sm:$0xff]
    %v4506 = vld [vmem:[#allocation9 + $0x1190] sm:$0xff]
    %v4507 = vld [vmem:[#allocation9 + $0x1198] sm:$0xff]
    %v4508 = vld [vmem:[#allocation9 + $0x11a0] sm:$0xff]
    %v4509 = vld [vmem:[#allocation9 + $0x11a8] sm:$0xff]
    %v4510 = vld [vmem:[#allocation9 + $0x11b0] sm:$0xff]
    %v4511 = vld [vmem:[#allocation9 + $0x11b8] sm:$0xff]
    %v4512 = vld [vmem:[#allocation9 + $0x11c0] sm:$0xff]
    %v4513 = vld [vmem:[#allocation9 + $0x11c8] sm:$0xff]
    %v4514 = vld [vmem:[#allocation9 + $0x11d0] sm:$0xff]
    %v4515 = vld [vmem:[#allocation9 + $0x11d8] sm:$0xff]
    %v4516 = vld [vmem:[#allocation9 + $0x11e0] sm:$0xff]
    %v4517 = vld [vmem:[#allocation9 + $0x11e8] sm:$0xff]
    %v4518 = vld [vmem:[#allocation9 + $0x11f0] sm:$0xff]
    %v4519 = vld [vmem:[#allocation9 + $0x11f8] sm:$0xff]
    %v4520 = vld [vmem:[#allocation9 + $0x1200] sm:$0xff]
    %v4521 = vld [vmem:[#allocation9 + $0x1208] sm:$0xff]
    %v4522 = vld [vmem:[#allocation9 + $0x1210] sm:$0xff]
    %v4523 = vld [vmem:[#allocation9 + $0x1218] sm:$0xff]
    %v4524 = vld [vmem:[#allocation9 + $0x1220] sm:$0xff]
    %v4525 = vld [vmem:[#allocation9 + $0x1228] sm:$0xff]
    %v4526 = vld [vmem:[#allocation9 + $0x1230] sm:$0xff]
    %v4527 = vld [vmem:[#allocation9 + $0x1238] sm:$0xff]
    %v4528 = vld [vmem:[#allocation9 + $0x1240] sm:$0xff]
    %v4529 = vld [vmem:[#allocation9 + $0x1248] sm:$0xff]
    %v4530 = vld [vmem:[#allocation9 + $0x1250] sm:$0xff]
    %v4531 = vld [vmem:[#allocation9 + $0x1258] sm:$0xff]
    %v4532 = vld [vmem:[#allocation9 + $0x1260] sm:$0xff]
    %v4533 = vld [vmem:[#allocation9 + $0x1268] sm:$0xff]
    %v4534 = vld [vmem:[#allocation9 + $0x1270] sm:$0xff]
    %v4535 = vld [vmem:[#allocation9 + $0x1278] sm:$0xff]
    %v4536 = vld [vmem:[#allocation9 + $0x1280] sm:$0xff]
    %v4537 = vld [vmem:[#allocation9 + $0x1288] sm:$0xff]
    %v4538 = vld [vmem:[#allocation9 + $0x1290] sm:$0xff]
    %v4539 = vld [vmem:[#allocation9 + $0x1298] sm:$0xff]
    %v4540 = vld [vmem:[#allocation9 + $0x12a0] sm:$0xff]
    %v4541 = vld [vmem:[#allocation9 + $0x12a8] sm:$0xff]
    %v4542 = vld [vmem:[#allocation9 + $0x12b0] sm:$0xff]
    %v4543 = vld [vmem:[#allocation9 + $0x12b8] sm:$0xff]
    %v4544 = vld [vmem:[#allocation9 + $0x12c0] sm:$0xff]
    %v4545 = vld [vmem:[#allocation9 + $0x12c8] sm:$0xff]
    %v4546 = vld [vmem:[#allocation9 + $0x12d0] sm:$0xff]
    %v4547 = vld [vmem:[#allocation9 + $0x12d8] sm:$0xff]
    %v4548 = vld [vmem:[#allocation9 + $0x12e0] sm:$0xff]
    %v4549 = vld [vmem:[#allocation9 + $0x12e8] sm:$0xff]
    %v4550 = vld [vmem:[#allocation9 + $0x12f0] sm:$0xff]
    %v4551 = vld [vmem:[#allocation9 + $0x12f8] sm:$0xff]
    %v4552 = vld [vmem:[#allocation9 + $0x1300] sm:$0xff]
    %v4553 = vld [vmem:[#allocation9 + $0x1308] sm:$0xff]
    %v4554 = vld [vmem:[#allocation9 + $0x1310] sm:$0xff]
    %v4555 = vld [vmem:[#allocation9 + $0x1318] sm:$0xff]
    %v4556 = vld [vmem:[#allocation9 + $0x1320] sm:$0xff]
    %v4557 = vld [vmem:[#allocation9 + $0x1328] sm:$0xff]
    %v4558 = vld [vmem:[#allocation9 + $0x1330] sm:$0xff]
    %v4559 = vld [vmem:[#allocation9 + $0x1338] sm:$0xff]
    %v4560 = vld [vmem:[#allocation9 + $0x1340] sm:$0xff]
    %v4561 = vld [vmem:[#allocation9 + $0x1348] sm:$0xff]
    %v4562 = vld [vmem:[#allocation9 + $0x1350] sm:$0xff]
    %v4563 = vld [vmem:[#allocation9 + $0x1358] sm:$0xff]
    %v4564 = vld [vmem:[#allocation9 + $0x1360] sm:$0xff]
    %v4565 = vld [vmem:[#allocation9 + $0x1368] sm:$0xff]
    %v4566 = vld [vmem:[#allocation9 + $0x1370] sm:$0xff]
    %v4567 = vld [vmem:[#allocation9 + $0x1378] sm:$0xff]
    %v4568 = vld [vmem:[#allocation9 + $0x1380] sm:$0xff]
    %v4569 = vld [vmem:[#allocation9 + $0x1388] sm:$0xff]
    %v4570 = vld [vmem:[#allocation9 + $0x1390] sm:$0xff]
    %v4571 = vld [vmem:[#allocation9 + $0x1398] sm:$0xff]
    %v4572 = vld [vmem:[#allocation9 + $0x13a0] sm:$0xff]
    %v4573 = vld [vmem:[#allocation9 + $0x13a8] sm:$0xff]
    %v4574 = vld [vmem:[#allocation9 + $0x13b0] sm:$0xff]
    %v4575 = vld [vmem:[#allocation9 + $0x13b8] sm:$0xff]
    %v4576 = vld [vmem:[#allocation9 + $0x13c0] sm:$0xff]
    %v4577 = vld [vmem:[#allocation9 + $0x13c8] sm:$0xff]
    %v4578 = vld [vmem:[#allocation9 + $0x13d0] sm:$0xff]
    %v4579 = vld [vmem:[#allocation9 + $0x13d8] sm:$0xff]
    %v4580 = vld [vmem:[#allocation9 + $0x13e0] sm:$0xff]
    %v4581 = vld [vmem:[#allocation9 + $0x13e8] sm:$0xff]
    %v4582 = vld [vmem:[#allocation9 + $0x13f0] sm:$0xff]
    %v4583 = vld [vmem:[#allocation9 + $0x13f8] sm:$0xff]
    %v4584 = vld [vmem:[#allocation9 + $0x1400] sm:$0xff]
    %v4585 = vld [vmem:[#allocation9 + $0x1408] sm:$0xff]
    %v4586 = vld [vmem:[#allocation9 + $0x1410] sm:$0xff]
    %v4587 = vld [vmem:[#allocation9 + $0x1418] sm:$0xff]
    %v4588 = vld [vmem:[#allocation9 + $0x1420] sm:$0xff]
    %v4589 = vld [vmem:[#allocation9 + $0x1428] sm:$0xff]
    %v4590 = vld [vmem:[#allocation9 + $0x1430] sm:$0xff]
    %v4591 = vld [vmem:[#allocation9 + $0x1438] sm:$0xff]
    %v4592 = vld [vmem:[#allocation9 + $0x1440] sm:$0xff]
    %v4593 = vld [vmem:[#allocation9 + $0x1448] sm:$0xff]
    %v4594 = vld [vmem:[#allocation9 + $0x1450] sm:$0xff]
    %v4595 = vld [vmem:[#allocation9 + $0x1458] sm:$0xff]
    %v4596 = vld [vmem:[#allocation9 + $0x1460] sm:$0xff]
    %v4597 = vld [vmem:[#allocation9 + $0x1468] sm:$0xff]
    %v4598 = vld [vmem:[#allocation9 + $0x1470] sm:$0xff]
    %v4599 = vld [vmem:[#allocation9 + $0x1478] sm:$0xff]
    %v4600 = vld [vmem:[#allocation9 + $0x1480] sm:$0xff]
    %v4601 = vld [vmem:[#allocation9 + $0x1488] sm:$0xff]
    %v4602 = vld [vmem:[#allocation9 + $0x1490] sm:$0xff]
    %v4603 = vld [vmem:[#allocation9 + $0x1498] sm:$0xff]
    %v4604 = vld [vmem:[#allocation9 + $0x14a0] sm:$0xff]
    %v4605 = vld [vmem:[#allocation9 + $0x14a8] sm:$0xff]
    %v4606 = vld [vmem:[#allocation9 + $0x14b0] sm:$0xff]
    %v4607 = vld [vmem:[#allocation9 + $0x14b8] sm:$0xff]
    %v4608 = vld [vmem:[#allocation9 + $0x14c0] sm:$0xff]
    %v4609 = vld [vmem:[#allocation9 + $0x14c8] sm:$0xff]
    %v4610 = vld [vmem:[#allocation9 + $0x14d0] sm:$0xff]
    %v4611 = vld [vmem:[#allocation9 + $0x14d8] sm:$0xff]
    %v4612 = vld [vmem:[#allocation9 + $0x14e0] sm:$0xff]
    %v4613 = vld [vmem:[#allocation9 + $0x14e8] sm:$0xff]
    %v4614 = vld [vmem:[#allocation9 + $0x14f0] sm:$0xff]
    %v4615 = vld [vmem:[#allocation9 + $0x14f8] sm:$0xff]
    %v4616 = vld [vmem:[#allocation9 + $0x1500] sm:$0xff]
    %v4617 = vld [vmem:[#allocation9 + $0x1508] sm:$0xff]
    %v4618 = vld [vmem:[#allocation9 + $0x1510] sm:$0xff]
    %v4619 = vld [vmem:[#allocation9 + $0x1518] sm:$0xff]
    %v4620 = vld [vmem:[#allocation9 + $0x1520] sm:$0xff]
    %v4621 = vld [vmem:[#allocation9 + $0x1528] sm:$0xff]
    %v4622 = vld [vmem:[#allocation9 + $0x1530] sm:$0xff]
    %v4623 = vld [vmem:[#allocation9 + $0x1538] sm:$0xff]
    %v4624 = vld [vmem:[#allocation9 + $0x1540] sm:$0xff]
    %v4625 = vld [vmem:[#allocation9 + $0x1548] sm:$0xff]
    %v4626 = vld [vmem:[#allocation9 + $0x1550] sm:$0xff]
    %v4627 = vld [vmem:[#allocation9 + $0x1558] sm:$0xff]
    %v4628 = vld [vmem:[#allocation9 + $0x1560] sm:$0xff]
    %v4629 = vld [vmem:[#allocation9 + $0x1568] sm:$0xff]
    %v4630 = vld [vmem:[#allocation9 + $0x1570] sm:$0xff]
    %v4631 = vld [vmem:[#allocation9 + $0x1578] sm:$0xff]
    %v4632 = vld [vmem:[#allocation9 + $0x1580] sm:$0xff]
    %v4633 = vld [vmem:[#allocation9 + $0x1588] sm:$0xff]
    %v4634 = vld [vmem:[#allocation9 + $0x1590] sm:$0xff]
    %v4635 = vld [vmem:[#allocation9 + $0x1598] sm:$0xff]
    %v4636 = vld [vmem:[#allocation9 + $0x15a0] sm:$0xff]
    %v4637 = vld [vmem:[#allocation9 + $0x15a8] sm:$0xff]
    %v4638 = vld [vmem:[#allocation9 + $0x15b0] sm:$0xff]
    %v4639 = vld [vmem:[#allocation9 + $0x15b8] sm:$0xff]
    %v4640 = vld [vmem:[#allocation9 + $0x15c0] sm:$0xff]
    %v4641 = vld [vmem:[#allocation9 + $0x15c8] sm:$0xff]
    %v4642 = vld [vmem:[#allocation9 + $0x15d0] sm:$0xff]
    %v4643 = vld [vmem:[#allocation9 + $0x15d8] sm:$0xff]
    %v4644 = vld [vmem:[#allocation9 + $0x15e0] sm:$0xff]
    %v4645 = vld [vmem:[#allocation9 + $0x15e8] sm:$0xff]
    %v4646 = vld [vmem:[#allocation9 + $0x15f0] sm:$0xff]
    %v4647 = vld [vmem:[#allocation9 + $0x15f8] sm:$0xff]
    %v4648 = vld [vmem:[#allocation9 + $0x1600] sm:$0xff]
    %v4649 = vld [vmem:[#allocation9 + $0x1608] sm:$0xff]
    %v4650 = vld [vmem:[#allocation9 + $0x1610] sm:$0xff]
    %v4651 = vld [vmem:[#allocation9 + $0x1618] sm:$0xff]
    %v4652 = vld [vmem:[#allocation9 + $0x1620] sm:$0xff]
    %v4653 = vld [vmem:[#allocation9 + $0x1628] sm:$0xff]
    %v4654 = vld [vmem:[#allocation9 + $0x1630] sm:$0xff]
    %v4655 = vld [vmem:[#allocation9 + $0x1638] sm:$0xff]
    %v4656 = vld [vmem:[#allocation9 + $0x1640] sm:$0xff]
    %v4657 = vld [vmem:[#allocation9 + $0x1648] sm:$0xff]
    %v4658 = vld [vmem:[#allocation9 + $0x1650] sm:$0xff]
    %v4659 = vld [vmem:[#allocation9 + $0x1658] sm:$0xff]
    %v4660 = vld [vmem:[#allocation9 + $0x1660] sm:$0xff]
    %v4661 = vld [vmem:[#allocation9 + $0x1668] sm:$0xff]
    %v4662 = vld [vmem:[#allocation9 + $0x1670] sm:$0xff]
    %v4663 = vld [vmem:[#allocation9 + $0x1678] sm:$0xff]
    %v4664 = vld [vmem:[#allocation9 + $0x1680] sm:$0xff]
    %v4665 = vld [vmem:[#allocation9 + $0x1688] sm:$0xff]
    %v4666 = vld [vmem:[#allocation9 + $0x1690] sm:$0xff]
    %v4667 = vld [vmem:[#allocation9 + $0x1698] sm:$0xff]
    %v4668 = vld [vmem:[#allocation9 + $0x16a0] sm:$0xff]
    %v4669 = vld [vmem:[#allocation9 + $0x16a8] sm:$0xff]
    %v4670 = vld [vmem:[#allocation9 + $0x16b0] sm:$0xff]
    %v4671 = vld [vmem:[#allocation9 + $0x16b8] sm:$0xff]
    %v4672 = vld [vmem:[#allocation9 + $0x16c0] sm:$0xff]
    %v4673 = vld [vmem:[#allocation9 + $0x16c8] sm:$0xff]
    %v4674 = vld [vmem:[#allocation9 + $0x16d0] sm:$0xff]
    %v4675 = vld [vmem:[#allocation9 + $0x16d8] sm:$0xff]
    %v4676 = vld [vmem:[#allocation9 + $0x16e0] sm:$0xff]
    %v4677 = vld [vmem:[#allocation9 + $0x16e8] sm:$0xff]
    %v4678 = vld [vmem:[#allocation9 + $0x16f0] sm:$0xff]
    %v4679 = vld [vmem:[#allocation9 + $0x16f8] sm:$0xff]
    %v4680 = vld [vmem:[#allocation9 + $0x1700] sm:$0xff]
    %v4681 = vld [vmem:[#allocation9 + $0x1708] sm:$0xff]
    %v4682 = vld [vmem:[#allocation9 + $0x1710] sm:$0xff]
    %v4683 = vld [vmem:[#allocation9 + $0x1718] sm:$0xff]
    %v4684 = vld [vmem:[#allocation9 + $0x1720] sm:$0xff]
    %v4685 = vld [vmem:[#allocation9 + $0x1728] sm:$0xff]
    %v4686 = vld [vmem:[#allocation9 + $0x1730] sm:$0xff]
    %v4687 = vld [vmem:[#allocation9 + $0x1738] sm:$0xff]
    %v4688 = vld [vmem:[#allocation9 + $0x1740] sm:$0xff]
    %v4689 = vld [vmem:[#allocation9 + $0x1748] sm:$0xff]
    %v4690 = vld [vmem:[#allocation9 + $0x1750] sm:$0xff]
    %v4691 = vld [vmem:[#allocation9 + $0x1758] sm:$0xff]
    %v4692 = vld [vmem:[#allocation9 + $0x1760] sm:$0xff]
    %v4693 = vld [vmem:[#allocation9 + $0x1768] sm:$0xff]
    %v4694 = vld [vmem:[#allocation9 + $0x1770] sm:$0xff]
    %v4695 = vld [vmem:[#allocation9 + $0x1778] sm:$0xff]
    %v4696 = vld [vmem:[#allocation9 + $0x1780] sm:$0xff]
    %v4697 = vld [vmem:[#allocation9 + $0x1788] sm:$0xff]
    %v4698 = vld [vmem:[#allocation9 + $0x1790] sm:$0xff]
    %v4699 = vld [vmem:[#allocation9 + $0x1798] sm:$0xff]
    %v4700 = vld [vmem:[#allocation9 + $0x17a0] sm:$0xff]
    %v4701 = vld [vmem:[#allocation9 + $0x17a8] sm:$0xff]
    %v4702 = vld [vmem:[#allocation9 + $0x17b0] sm:$0xff]
    %v4703 = vld [vmem:[#allocation9 + $0x17b8] sm:$0xff]
    %v4704 = vld [vmem:[#allocation9 + $0x17c0] sm:$0xff]
    %v4705 = vld [vmem:[#allocation9 + $0x17c8] sm:$0xff]
    %v4706 = vld [vmem:[#allocation9 + $0x17d0] sm:$0xff]
    %v4707 = vld [vmem:[#allocation9 + $0x17d8] sm:$0xff]
    %v4708 = vld [vmem:[#allocation9 + $0x17e0] sm:$0xff]
    %v4709 = vld [vmem:[#allocation9 + $0x17e8] sm:$0xff]
    %v4710 = vld [vmem:[#allocation9 + $0x17f0] sm:$0xff]
    %v4711 = vld [vmem:[#allocation9 + $0x17f8] sm:$0xff]
    %v4712 = vld [vmem:[#allocation10] sm:$0xff]
    %v4713 = vld [vmem:[#allocation10 + $0x8] sm:$0xf]
    %v4716 = vlaneseq
    %v4717 = vshrl.u32 %v4716, 7
    %v4718 = vsub.s32 0, %v4717
    %v4719 = vrot.slane %v4712, %v4718
    %v4720 = vlaneseq
    %v4721 = vshrl.u32 %v4720, 7
    %v4722 = vsub.s32 1, %v4721
    %v4723 = vrot.slane %v4712, %v4722
    %v4724 = vlaneseq
    %v4725 = vshrl.u32 %v4724, 7
    %v4726 = vsub.s32 2, %v4725
    %v4727 = vrot.slane %v4712, %v4726
    %v4728 = vlaneseq
    %v4729 = vshrl.u32 %v4728, 7
    %v4730 = vsub.s32 3, %v4729
    %v4731 = vrot.slane %v4712, %v4730
    %v4732 = vlaneseq
    %v4733 = vshrl.u32 %v4732, 7
    %v4734 = vsub.s32 4, %v4733
    %v4735 = vrot.slane %v4712, %v4734
    %v4736 = vlaneseq
    %v4737 = vshrl.u32 %v4736, 7
    %v4738 = vsub.s32 5, %v4737
    %v4739 = vrot.slane %v4712, %v4738
    %v4740 = vlaneseq
    %v4741 = vshrl.u32 %v4740, 7
    %v4742 = vsub.s32 6, %v4741
    %v4743 = vrot.slane %v4712, %v4742
    %v4744 = vlaneseq
    %v4745 = vshrl.u32 %v4744, 7
    %v4746 = vsub.s32 7, %v4745
    %v4747 = vrot.slane %v4712, %v4746
    %v4748 = vlaneseq
    %v4749 = vshrl.u32 %v4748, 7
    %v4750 = vsub.s32 0, %v4749
    %v4751 = vrot.slane %v4713, %v4750
    %v4752 = vlaneseq
    %v4753 = vshrl.u32 %v4752, 7
    %v4754 = vsub.s32 1, %v4753
    %v4755 = vrot.slane %v4713, %v4754
    %v4756 = vlaneseq
    %v4757 = vshrl.u32 %v4756, 7
    %v4758 = vsub.s32 2, %v4757
    %v4759 = vrot.slane %v4713, %v4758
    %v4760 = vlaneseq
    %v4761 = vshrl.u32 %v4760, 7
    %v4762 = vsub.s32 3, %v4761
    %v4763 = vrot.slane %v4713, %v4762
    %v5544 = vunpack.c.l.b16 %v3944
    %v5545 = vunpack.c.h.b16 %v3944
    %v5546 = vunpack.c.l.b16 %v3945
    %v5547 = vunpack.c.h.b16 %v3945
    %v5548 = vunpack.c.l.b16 %v3946
    %v5549 = vunpack.c.h.b16 %v3946
    %v5550 = vunpack.c.l.b16 %v3947
    %v5551 = vunpack.c.h.b16 %v3947
    %v5552 = vunpack.c.l.b16 %v3948
    %v5553 = vunpack.c.h.b16 %v3948
    %v5554 = vunpack.c.l.b16 %v3949
    %v5555 = vunpack.c.h.b16 %v3949
    %v5556 = vunpack.c.l.b16 %v3950
    %v5557 = vunpack.c.h.b16 %v3950
    %v5558 = vunpack.c.l.b16 %v3951
    %v5559 = vunpack.c.h.b16 %v3951
    %v5560 = vunpack.c.l.b16 %v3952
    %v5561 = vunpack.c.h.b16 %v3952
    %v5562 = vunpack.c.l.b16 %v3953
    %v5563 = vunpack.c.h.b16 %v3953
    %v5564 = vunpack.c.l.b16 %v3954
    %v5565 = vunpack.c.h.b16 %v3954
    %v5566 = vunpack.c.l.b16 %v3955
    %v5567 = vunpack.c.h.b16 %v3955
    %v5568 = vunpack.c.l.b16 %v3956
    %v5569 = vunpack.c.h.b16 %v3956
    %v5570 = vunpack.c.l.b16 %v3957
    %v5571 = vunpack.c.h.b16 %v3957
    %v5572 = vunpack.c.l.b16 %v3958
    %v5573 = vunpack.c.h.b16 %v3958
    %v5574 = vunpack.c.l.b16 %v3959
    %v5575 = vunpack.c.h.b16 %v3959
    %v5576 = vunpack.c.l.b16 %v3960
    %v5577 = vunpack.c.h.b16 %v3960
    %v5578 = vunpack.c.l.b16 %v3961
    %v5579 = vunpack.c.h.b16 %v3961
    %v5580 = vunpack.c.l.b16 %v3962
    %v5581 = vunpack.c.h.b16 %v3962
    %v5582 = vunpack.c.l.b16 %v3963
    %v5583 = vunpack.c.h.b16 %v3963
    %v5584 = vunpack.c.l.b16 %v3964
    %v5585 = vunpack.c.h.b16 %v3964
    %v5586 = vunpack.c.l.b16 %v3965
    %v5587 = vunpack.c.h.b16 %v3965
    %v5588 = vunpack.c.l.b16 %v3966
    %v5589 = vunpack.c.h.b16 %v3966
    %v5590 = vunpack.c.l.b16 %v3967
    %v5591 = vunpack.c.h.b16 %v3967
    %v5592 = vunpack.c.l.b16 %v3968
    %v5593 = vunpack.c.h.b16 %v3968
    %v5594 = vunpack.c.l.b16 %v3969
    %v5595 = vunpack.c.h.b16 %v3969
    %v5596 = vunpack.c.l.b16 %v3970
    %v5597 = vunpack.c.h.b16 %v3970
    %v5598 = vunpack.c.l.b16 %v3971
    %v5599 = vunpack.c.h.b16 %v3971
    %v5600 = vunpack.c.l.b16 %v3972
    %v5601 = vunpack.c.h.b16 %v3972
    %v5602 = vunpack.c.l.b16 %v3973
    %v5603 = vunpack.c.h.b16 %v3973
    %v5604 = vunpack.c.l.b16 %v3974
    %v5605 = vunpack.c.h.b16 %v3974
    %v5606 = vunpack.c.l.b16 %v3975
    %v5607 = vunpack.c.h.b16 %v3975
    %v5608 = vunpack.c.l.b16 %v3976
    %v5609 = vunpack.c.h.b16 %v3976
    %v5610 = vunpack.c.l.b16 %v3977
    %v5611 = vunpack.c.h.b16 %v3977
    %v5612 = vunpack.c.l.b16 %v3978
    %v5613 = vunpack.c.h.b16 %v3978
    %v5614 = vunpack.c.l.b16 %v3979
    %v5615 = vunpack.c.h.b16 %v3979
    %v5616 = vunpack.c.l.b16 %v3980
    %v5617 = vunpack.c.h.b16 %v3980
    %v5618 = vunpack.c.l.b16 %v3981
    %v5619 = vunpack.c.h.b16 %v3981
    %v5620 = vunpack.c.l.b16 %v3982
    %v5621 = vunpack.c.h.b16 %v3982
    %v5622 = vunpack.c.l.b16 %v3983
    %v5623 = vunpack.c.h.b16 %v3983
    %v5624 = vunpack.c.l.b16 %v3984
    %v5625 = vunpack.c.h.b16 %v3984
    %v5626 = vunpack.c.l.b16 %v3985
    %v5627 = vunpack.c.h.b16 %v3985
    %v5628 = vunpack.c.l.b16 %v3986
    %v5629 = vunpack.c.h.b16 %v3986
    %v5630 = vunpack.c.l.b16 %v3987
    %v5631 = vunpack.c.h.b16 %v3987
    %v5632 = vunpack.c.l.b16 %v3988
    %v5633 = vunpack.c.h.b16 %v3988
    %v5634 = vunpack.c.l.b16 %v3989
    %v5635 = vunpack.c.h.b16 %v3989
    %v5636 = vunpack.c.l.b16 %v3990
    %v5637 = vunpack.c.h.b16 %v3990
    %v5638 = vunpack.c.l.b16 %v3991
    %v5639 = vunpack.c.h.b16 %v3991
    %v5640 = vunpack.c.l.b16 %v3992
    %v5641 = vunpack.c.h.b16 %v3992
    %v5642 = vunpack.c.l.b16 %v3993
    %v5643 = vunpack.c.h.b16 %v3993
    %v5644 = vunpack.c.l.b16 %v3994
    %v5645 = vunpack.c.h.b16 %v3994
    %v5646 = vunpack.c.l.b16 %v3995
    %v5647 = vunpack.c.h.b16 %v3995
    %v5648 = vunpack.c.l.b16 %v3996
    %v5649 = vunpack.c.h.b16 %v3996
    %v5650 = vunpack.c.l.b16 %v3997
    %v5651 = vunpack.c.h.b16 %v3997
    %v5652 = vunpack.c.l.b16 %v3998
    %v5653 = vunpack.c.h.b16 %v3998
    %v5654 = vunpack.c.l.b16 %v3999
    %v5655 = vunpack.c.h.b16 %v3999
    %v5656 = vunpack.c.l.b16 %v4000
    %v5657 = vunpack.c.h.b16 %v4000
    %v5658 = vunpack.c.l.b16 %v4001
    %v5659 = vunpack.c.h.b16 %v4001
    %v5660 = vunpack.c.l.b16 %v4002
    %v5661 = vunpack.c.h.b16 %v4002
    %v5662 = vunpack.c.l.b16 %v4003
    %v5663 = vunpack.c.h.b16 %v4003
    %v5664 = vunpack.c.l.b16 %v4004
    %v5665 = vunpack.c.h.b16 %v4004
    %v5666 = vunpack.c.l.b16 %v4005
    %v5667 = vunpack.c.h.b16 %v4005
    %v5668 = vunpack.c.l.b16 %v4006
    %v5669 = vunpack.c.h.b16 %v4006
    %v5670 = vunpack.c.l.b16 %v4007
    %v5671 = vunpack.c.h.b16 %v4007
    %v5672 = vunpack.c.l.b16 %v4008
    %v5673 = vunpack.c.h.b16 %v4008
    %v5674 = vunpack.c.l.b16 %v4009
    %v5675 = vunpack.c.h.b16 %v4009
    %v5676 = vunpack.c.l.b16 %v4010
    %v5677 = vunpack.c.h.b16 %v4010
    %v5678 = vunpack.c.l.b16 %v4011
    %v5679 = vunpack.c.h.b16 %v4011
    %v5680 = vunpack.c.l.b16 %v4012
    %v5681 = vunpack.c.h.b16 %v4012
    %v5682 = vunpack.c.l.b16 %v4013
    %v5683 = vunpack.c.h.b16 %v4013
    %v5684 = vunpack.c.l.b16 %v4014
    %v5685 = vunpack.c.h.b16 %v4014
    %v5686 = vunpack.c.l.b16 %v4015
    %v5687 = vunpack.c.h.b16 %v4015
    %v5688 = vunpack.c.l.b16 %v4016
    %v5689 = vunpack.c.h.b16 %v4016
    %v5690 = vunpack.c.l.b16 %v4017
    %v5691 = vunpack.c.h.b16 %v4017
    %v5692 = vunpack.c.l.b16 %v4018
    %v5693 = vunpack.c.h.b16 %v4018
    %v5694 = vunpack.c.l.b16 %v4019
    %v5695 = vunpack.c.h.b16 %v4019
    %v5696 = vunpack.c.l.b16 %v4020
    %v5697 = vunpack.c.h.b16 %v4020
    %v5698 = vunpack.c.l.b16 %v4021
    %v5699 = vunpack.c.h.b16 %v4021
    %v5700 = vunpack.c.l.b16 %v4022
    %v5701 = vunpack.c.h.b16 %v4022
    %v5702 = vunpack.c.l.b16 %v4023
    %v5703 = vunpack.c.h.b16 %v4023
    %v5704 = vunpack.c.l.b16 %v4024
    %v5705 = vunpack.c.h.b16 %v4024
    %v5706 = vunpack.c.l.b16 %v4025
    %v5707 = vunpack.c.h.b16 %v4025
    %v5708 = vunpack.c.l.b16 %v4026
    %v5709 = vunpack.c.h.b16 %v4026
    %v5710 = vunpack.c.l.b16 %v4027
    %v5711 = vunpack.c.h.b16 %v4027
    %v5712 = vunpack.c.l.b16 %v4028
    %v5713 = vunpack.c.h.b16 %v4028
    %v5714 = vunpack.c.l.b16 %v4029
    %v5715 = vunpack.c.h.b16 %v4029
    %v5716 = vunpack.c.l.b16 %v4030
    %v5717 = vunpack.c.h.b16 %v4030
    %v5718 = vunpack.c.l.b16 %v4031
    %v5719 = vunpack.c.h.b16 %v4031
    %v5720 = vunpack.c.l.b16 %v4032
    %v5721 = vunpack.c.h.b16 %v4032
    %v5722 = vunpack.c.l.b16 %v4033
    %v5723 = vunpack.c.h.b16 %v4033
    %v5724 = vunpack.c.l.b16 %v4034
    %v5725 = vunpack.c.h.b16 %v4034
    %v5726 = vunpack.c.l.b16 %v4035
    %v5727 = vunpack.c.h.b16 %v4035
    %v5728 = vunpack.c.l.b16 %v4036
    %v5729 = vunpack.c.h.b16 %v4036
    %v5730 = vunpack.c.l.b16 %v4037
    %v5731 = vunpack.c.h.b16 %v4037
    %v5732 = vunpack.c.l.b16 %v4038
    %v5733 = vunpack.c.h.b16 %v4038
    %v5734 = vunpack.c.l.b16 %v4039
    %v5735 = vunpack.c.h.b16 %v4039
    %v5736 = vunpack.c.l.b16 %v4040
    %v5737 = vunpack.c.h.b16 %v4040
    %v5738 = vunpack.c.l.b16 %v4041
    %v5739 = vunpack.c.h.b16 %v4041
    %v5740 = vunpack.c.l.b16 %v4042
    %v5741 = vunpack.c.h.b16 %v4042
    %v5742 = vunpack.c.l.b16 %v4043
    %v5743 = vunpack.c.h.b16 %v4043
    %v5744 = vunpack.c.l.b16 %v4044
    %v5745 = vunpack.c.h.b16 %v4044
    %v5746 = vunpack.c.l.b16 %v4045
    %v5747 = vunpack.c.h.b16 %v4045
    %v5748 = vunpack.c.l.b16 %v4046
    %v5749 = vunpack.c.h.b16 %v4046
    %v5750 = vunpack.c.l.b16 %v4047
    %v5751 = vunpack.c.h.b16 %v4047
    %v5752 = vunpack.c.l.b16 %v4048
    %v5753 = vunpack.c.h.b16 %v4048
    %v5754 = vunpack.c.l.b16 %v4049
    %v5755 = vunpack.c.h.b16 %v4049
    %v5756 = vunpack.c.l.b16 %v4050
    %v5757 = vunpack.c.h.b16 %v4050
    %v5758 = vunpack.c.l.b16 %v4051
    %v5759 = vunpack.c.h.b16 %v4051
    %v5760 = vunpack.c.l.b16 %v4052
    %v5761 = vunpack.c.h.b16 %v4052
    %v5762 = vunpack.c.l.b16 %v4053
    %v5763 = vunpack.c.h.b16 %v4053
    %v5764 = vunpack.c.l.b16 %v4054
    %v5765 = vunpack.c.h.b16 %v4054
    %v5766 = vunpack.c.l.b16 %v4055
    %v5767 = vunpack.c.h.b16 %v4055
    %v5768 = vunpack.c.l.b16 %v4056
    %v5769 = vunpack.c.h.b16 %v4056
    %v5770 = vunpack.c.l.b16 %v4057
    %v5771 = vunpack.c.h.b16 %v4057
    %v5772 = vunpack.c.l.b16 %v4058
    %v5773 = vunpack.c.h.b16 %v4058
    %v5774 = vunpack.c.l.b16 %v4059
    %v5775 = vunpack.c.h.b16 %v4059
    %v5776 = vunpack.c.l.b16 %v4060
    %v5777 = vunpack.c.h.b16 %v4060
    %v5778 = vunpack.c.l.b16 %v4061
    %v5779 = vunpack.c.h.b16 %v4061
    %v5780 = vunpack.c.l.b16 %v4062
    %v5781 = vunpack.c.h.b16 %v4062
    %v5782 = vunpack.c.l.b16 %v4063
    %v5783 = vunpack.c.h.b16 %v4063
    %v5784 = vunpack.c.l.b16 %v4064
    %v5785 = vunpack.c.h.b16 %v4064
    %v5786 = vunpack.c.l.b16 %v4065
    %v5787 = vunpack.c.h.b16 %v4065
    %v5788 = vunpack.c.l.b16 %v4066
    %v5789 = vunpack.c.h.b16 %v4066
    %v5790 = vunpack.c.l.b16 %v4067
    %v5791 = vunpack.c.h.b16 %v4067
    %v5792 = vunpack.c.l.b16 %v4068
    %v5793 = vunpack.c.h.b16 %v4068
    %v5794 = vunpack.c.l.b16 %v4069
    %v5795 = vunpack.c.h.b16 %v4069
    %v5796 = vunpack.c.l.b16 %v4070
    %v5797 = vunpack.c.h.b16 %v4070
    %v5798 = vunpack.c.l.b16 %v4071
    %v5799 = vunpack.c.h.b16 %v4071
    %v5800 = vunpack.c.l.b16 %v4072
    %v5801 = vunpack.c.h.b16 %v4072
    %v5802 = vunpack.c.l.b16 %v4073
    %v5803 = vunpack.c.h.b16 %v4073
    %v5804 = vunpack.c.l.b16 %v4074
    %v5805 = vunpack.c.h.b16 %v4074
    %v5806 = vunpack.c.l.b16 %v4075
    %v5807 = vunpack.c.h.b16 %v4075
    %v5808 = vunpack.c.l.b16 %v4076
    %v5809 = vunpack.c.h.b16 %v4076
    %v5810 = vunpack.c.l.b16 %v4077
    %v5811 = vunpack.c.h.b16 %v4077
    %v5812 = vunpack.c.l.b16 %v4078
    %v5813 = vunpack.c.h.b16 %v4078
    %v5814 = vunpack.c.l.b16 %v4079
    %v5815 = vunpack.c.h.b16 %v4079
    %v5816 = vunpack.c.l.b16 %v4080
    %v5817 = vunpack.c.h.b16 %v4080
    %v5818 = vunpack.c.l.b16 %v4081
    %v5819 = vunpack.c.h.b16 %v4081
    %v5820 = vunpack.c.l.b16 %v4082
    %v5821 = vunpack.c.h.b16 %v4082
    %v5822 = vunpack.c.l.b16 %v4083
    %v5823 = vunpack.c.h.b16 %v4083
    %v5824 = vunpack.c.l.b16 %v4084
    %v5825 = vunpack.c.h.b16 %v4084
    %v5826 = vunpack.c.l.b16 %v4085
    %v5827 = vunpack.c.h.b16 %v4085
    %v5828 = vunpack.c.l.b16 %v4086
    %v5829 = vunpack.c.h.b16 %v4086
    %v5830 = vunpack.c.l.b16 %v4087
    %v5831 = vunpack.c.h.b16 %v4087
    %v5832 = vunpack.c.l.b16 %v4088
    %v5833 = vunpack.c.h.b16 %v4088
    %v5834 = vunpack.c.l.b16 %v4089
    %v5835 = vunpack.c.h.b16 %v4089
    %v5836 = vunpack.c.l.b16 %v4090
    %v5837 = vunpack.c.h.b16 %v4090
    %v5838 = vunpack.c.l.b16 %v4091
    %v5839 = vunpack.c.h.b16 %v4091
    %v5840 = vunpack.c.l.b16 %v4092
    %v5841 = vunpack.c.h.b16 %v4092
    %v5842 = vunpack.c.l.b16 %v4093
    %v5843 = vunpack.c.h.b16 %v4093
    %v5844 = vunpack.c.l.b16 %v4094
    %v5845 = vunpack.c.h.b16 %v4094
    %v5846 = vunpack.c.l.b16 %v4095
    %v5847 = vunpack.c.h.b16 %v4095
    %v5848 = vunpack.c.l.b16 %v4096
    %v5849 = vunpack.c.h.b16 %v4096
    %v5850 = vunpack.c.l.b16 %v4097
    %v5851 = vunpack.c.h.b16 %v4097
    %v5852 = vunpack.c.l.b16 %v4098
    %v5853 = vunpack.c.h.b16 %v4098
    %v5854 = vunpack.c.l.b16 %v4099
    %v5855 = vunpack.c.h.b16 %v4099
    %v5856 = vunpack.c.l.b16 %v4100
    %v5857 = vunpack.c.h.b16 %v4100
    %v5858 = vunpack.c.l.b16 %v4101
    %v5859 = vunpack.c.h.b16 %v4101
    %v5860 = vunpack.c.l.b16 %v4102
    %v5861 = vunpack.c.h.b16 %v4102
    %v5862 = vunpack.c.l.b16 %v4103
    %v5863 = vunpack.c.h.b16 %v4103
    %v5864 = vunpack.c.l.b16 %v4104
    %v5865 = vunpack.c.h.b16 %v4104
    %v5866 = vunpack.c.l.b16 %v4105
    %v5867 = vunpack.c.h.b16 %v4105
    %v5868 = vunpack.c.l.b16 %v4106
    %v5869 = vunpack.c.h.b16 %v4106
    %v5870 = vunpack.c.l.b16 %v4107
    %v5871 = vunpack.c.h.b16 %v4107
    %v5872 = vunpack.c.l.b16 %v4108
    %v5873 = vunpack.c.h.b16 %v4108
    %v5874 = vunpack.c.l.b16 %v4109
    %v5875 = vunpack.c.h.b16 %v4109
    %v5876 = vunpack.c.l.b16 %v4110
    %v5877 = vunpack.c.h.b16 %v4110
    %v5878 = vunpack.c.l.b16 %v4111
    %v5879 = vunpack.c.h.b16 %v4111
    %v5880 = vunpack.c.l.b16 %v4112
    %v5881 = vunpack.c.h.b16 %v4112
    %v5882 = vunpack.c.l.b16 %v4113
    %v5883 = vunpack.c.h.b16 %v4113
    %v5884 = vunpack.c.l.b16 %v4114
    %v5885 = vunpack.c.h.b16 %v4114
    %v5886 = vunpack.c.l.b16 %v4115
    %v5887 = vunpack.c.h.b16 %v4115
    %v5888 = vunpack.c.l.b16 %v4116
    %v5889 = vunpack.c.h.b16 %v4116
    %v5890 = vunpack.c.l.b16 %v4117
    %v5891 = vunpack.c.h.b16 %v4117
    %v5892 = vunpack.c.l.b16 %v4118
    %v5893 = vunpack.c.h.b16 %v4118
    %v5894 = vunpack.c.l.b16 %v4119
    %v5895 = vunpack.c.h.b16 %v4119
    %v5896 = vunpack.c.l.b16 %v4120
    %v5897 = vunpack.c.h.b16 %v4120
    %v5898 = vunpack.c.l.b16 %v4121
    %v5899 = vunpack.c.h.b16 %v4121
    %v5900 = vunpack.c.l.b16 %v4122
    %v5901 = vunpack.c.h.b16 %v4122
    %v5902 = vunpack.c.l.b16 %v4123
    %v5903 = vunpack.c.h.b16 %v4123
    %v5904 = vunpack.c.l.b16 %v4124
    %v5905 = vunpack.c.h.b16 %v4124
    %v5906 = vunpack.c.l.b16 %v4125
    %v5907 = vunpack.c.h.b16 %v4125
    %v5908 = vunpack.c.l.b16 %v4126
    %v5909 = vunpack.c.h.b16 %v4126
    %v5910 = vunpack.c.l.b16 %v4127
    %v5911 = vunpack.c.h.b16 %v4127
    %v5912 = vunpack.c.l.b16 %v4128
    %v5913 = vunpack.c.h.b16 %v4128
    %v5914 = vunpack.c.l.b16 %v4129
    %v5915 = vunpack.c.h.b16 %v4129
    %v5916 = vunpack.c.l.b16 %v4130
    %v5917 = vunpack.c.h.b16 %v4130
    %v5918 = vunpack.c.l.b16 %v4131
    %v5919 = vunpack.c.h.b16 %v4131
    %v5920 = vunpack.c.l.b16 %v4132
    %v5921 = vunpack.c.h.b16 %v4132
    %v5922 = vunpack.c.l.b16 %v4133
    %v5923 = vunpack.c.h.b16 %v4133
    %v5924 = vunpack.c.l.b16 %v4134
    %v5925 = vunpack.c.h.b16 %v4134
    %v5926 = vunpack.c.l.b16 %v4135
    %v5927 = vunpack.c.h.b16 %v4135
    %v5928 = vunpack.c.l.b16 %v4136
    %v5929 = vunpack.c.h.b16 %v4136
    %v5930 = vunpack.c.l.b16 %v4137
    %v5931 = vunpack.c.h.b16 %v4137
    %v5932 = vunpack.c.l.b16 %v4138
    %v5933 = vunpack.c.h.b16 %v4138
    %v5934 = vunpack.c.l.b16 %v4139
    %v5935 = vunpack.c.h.b16 %v4139
    %v5936 = vunpack.c.l.b16 %v4140
    %v5937 = vunpack.c.h.b16 %v4140
    %v5938 = vunpack.c.l.b16 %v4141
    %v5939 = vunpack.c.h.b16 %v4141
    %v5940 = vunpack.c.l.b16 %v4142
    %v5941 = vunpack.c.h.b16 %v4142
    %v5942 = vunpack.c.l.b16 %v4143
    %v5943 = vunpack.c.h.b16 %v4143
    %v5944 = vunpack.c.l.b16 %v4144
    %v5945 = vunpack.c.h.b16 %v4144
    %v5946 = vunpack.c.l.b16 %v4145
    %v5947 = vunpack.c.h.b16 %v4145
    %v5948 = vunpack.c.l.b16 %v4146
    %v5949 = vunpack.c.h.b16 %v4146
    %v5950 = vunpack.c.l.b16 %v4147
    %v5951 = vunpack.c.h.b16 %v4147
    %v5952 = vunpack.c.l.b16 %v4148
    %v5953 = vunpack.c.h.b16 %v4148
    %v5954 = vunpack.c.l.b16 %v4149
    %v5955 = vunpack.c.h.b16 %v4149
    %v5956 = vunpack.c.l.b16 %v4150
    %v5957 = vunpack.c.h.b16 %v4150
    %v5958 = vunpack.c.l.b16 %v4151
    %v5959 = vunpack.c.h.b16 %v4151
    %v5960 = vunpack.c.l.b16 %v4152
    %v5961 = vunpack.c.h.b16 %v4152
    %v5962 = vunpack.c.l.b16 %v4153
    %v5963 = vunpack.c.h.b16 %v4153
    %v5964 = vunpack.c.l.b16 %v4154
    %v5965 = vunpack.c.h.b16 %v4154
    %v5966 = vunpack.c.l.b16 %v4155
    %v5967 = vunpack.c.h.b16 %v4155
    %v5968 = vunpack.c.l.b16 %v4156
    %v5969 = vunpack.c.h.b16 %v4156
    %v5970 = vunpack.c.l.b16 %v4157
    %v5971 = vunpack.c.h.b16 %v4157
    %v5972 = vunpack.c.l.b16 %v4158
    %v5973 = vunpack.c.h.b16 %v4158
    %v5974 = vunpack.c.l.b16 %v4159
    %v5975 = vunpack.c.h.b16 %v4159
    %v5976 = vunpack.c.l.b16 %v4160
    %v5977 = vunpack.c.h.b16 %v4160
    %v5978 = vunpack.c.l.b16 %v4161
    %v5979 = vunpack.c.h.b16 %v4161
    %v5980 = vunpack.c.l.b16 %v4162
    %v5981 = vunpack.c.h.b16 %v4162
    %v5982 = vunpack.c.l.b16 %v4163
    %v5983 = vunpack.c.h.b16 %v4163
    %v5984 = vunpack.c.l.b16 %v4164
    %v5985 = vunpack.c.h.b16 %v4164
    %v5986 = vunpack.c.l.b16 %v4165
    %v5987 = vunpack.c.h.b16 %v4165
    %v5988 = vunpack.c.l.b16 %v4166
    %v5989 = vunpack.c.h.b16 %v4166
    %v5990 = vunpack.c.l.b16 %v4167
    %v5991 = vunpack.c.h.b16 %v4167
    %v5992 = vunpack.c.l.b16 %v4168
    %v5993 = vunpack.c.h.b16 %v4168
    %v5994 = vunpack.c.l.b16 %v4169
    %v5995 = vunpack.c.h.b16 %v4169
    %v5996 = vunpack.c.l.b16 %v4170
    %v5997 = vunpack.c.h.b16 %v4170
    %v5998 = vunpack.c.l.b16 %v4171
    %v5999 = vunpack.c.h.b16 %v4171
    %v6000 = vunpack.c.l.b16 %v4172
    %v6001 = vunpack.c.h.b16 %v4172
    %v6002 = vunpack.c.l.b16 %v4173
    %v6003 = vunpack.c.h.b16 %v4173
    %v6004 = vunpack.c.l.b16 %v4174
    %v6005 = vunpack.c.h.b16 %v4174
    %v6006 = vunpack.c.l.b16 %v4175
    %v6007 = vunpack.c.h.b16 %v4175
    %v6008 = vunpack.c.l.b16 %v4176
    %v6009 = vunpack.c.h.b16 %v4176
    %v6010 = vunpack.c.l.b16 %v4177
    %v6011 = vunpack.c.h.b16 %v4177
    %v6012 = vunpack.c.l.b16 %v4178
    %v6013 = vunpack.c.h.b16 %v4178
    %v6014 = vunpack.c.l.b16 %v4179
    %v6015 = vunpack.c.h.b16 %v4179
    %v6016 = vunpack.c.l.b16 %v4180
    %v6017 = vunpack.c.h.b16 %v4180
    %v6018 = vunpack.c.l.b16 %v4181
    %v6019 = vunpack.c.h.b16 %v4181
    %v6020 = vunpack.c.l.b16 %v4182
    %v6021 = vunpack.c.h.b16 %v4182
    %v6022 = vunpack.c.l.b16 %v4183
    %v6023 = vunpack.c.h.b16 %v4183
    %v6024 = vunpack.c.l.b16 %v4184
    %v6025 = vunpack.c.h.b16 %v4184
    %v6026 = vunpack.c.l.b16 %v4185
    %v6027 = vunpack.c.h.b16 %v4185
    %v6028 = vunpack.c.l.b16 %v4186
    %v6029 = vunpack.c.h.b16 %v4186
    %v6030 = vunpack.c.l.b16 %v4187
    %v6031 = vunpack.c.h.b16 %v4187
    %v6032 = vunpack.c.l.b16 %v4188
    %v6033 = vunpack.c.h.b16 %v4188
    %v6034 = vunpack.c.l.b16 %v4189
    %v6035 = vunpack.c.h.b16 %v4189
    %v6036 = vunpack.c.l.b16 %v4190
    %v6037 = vunpack.c.h.b16 %v4190
    %v6038 = vunpack.c.l.b16 %v4191
    %v6039 = vunpack.c.h.b16 %v4191
    %v6040 = vunpack.c.l.b16 %v4192
    %v6041 = vunpack.c.h.b16 %v4192
    %v6042 = vunpack.c.l.b16 %v4193
    %v6043 = vunpack.c.h.b16 %v4193
    %v6044 = vunpack.c.l.b16 %v4194
    %v6045 = vunpack.c.h.b16 %v4194
    %v6046 = vunpack.c.l.b16 %v4195
    %v6047 = vunpack.c.h.b16 %v4195
    %v6048 = vunpack.c.l.b16 %v4196
    %v6049 = vunpack.c.h.b16 %v4196
    %v6050 = vunpack.c.l.b16 %v4197
    %v6051 = vunpack.c.h.b16 %v4197
    %v6052 = vunpack.c.l.b16 %v4198
    %v6053 = vunpack.c.h.b16 %v4198
    %v6054 = vunpack.c.l.b16 %v4199
    %v6055 = vunpack.c.h.b16 %v4199
    %v6056 = vunpack.c.l.b16 %v4200
    %v6057 = vunpack.c.h.b16 %v4200
    %v6058 = vunpack.c.l.b16 %v4201
    %v6059 = vunpack.c.h.b16 %v4201
    %v6060 = vunpack.c.l.b16 %v4202
    %v6061 = vunpack.c.h.b16 %v4202
    %v6062 = vunpack.c.l.b16 %v4203
    %v6063 = vunpack.c.h.b16 %v4203
    %v6064 = vunpack.c.l.b16 %v4204
    %v6065 = vunpack.c.h.b16 %v4204
    %v6066 = vunpack.c.l.b16 %v4205
    %v6067 = vunpack.c.h.b16 %v4205
    %v6068 = vunpack.c.l.b16 %v4206
    %v6069 = vunpack.c.h.b16 %v4206
    %v6070 = vunpack.c.l.b16 %v4207
    %v6071 = vunpack.c.h.b16 %v4207
    %v6072 = vunpack.c.l.b16 %v4208
    %v6073 = vunpack.c.h.b16 %v4208
    %v6074 = vunpack.c.l.b16 %v4209
    %v6075 = vunpack.c.h.b16 %v4209
    %v6076 = vunpack.c.l.b16 %v4210
    %v6077 = vunpack.c.h.b16 %v4210
    %v6078 = vunpack.c.l.b16 %v4211
    %v6079 = vunpack.c.h.b16 %v4211
    %v6080 = vunpack.c.l.b16 %v4212
    %v6081 = vunpack.c.h.b16 %v4212
    %v6082 = vunpack.c.l.b16 %v4213
    %v6083 = vunpack.c.h.b16 %v4213
    %v6084 = vunpack.c.l.b16 %v4214
    %v6085 = vunpack.c.h.b16 %v4214
    %v6086 = vunpack.c.l.b16 %v4215
    %v6087 = vunpack.c.h.b16 %v4215
    %v6088 = vunpack.c.l.b16 %v4216
    %v6089 = vunpack.c.h.b16 %v4216
    %v6090 = vunpack.c.l.b16 %v4217
    %v6091 = vunpack.c.h.b16 %v4217
    %v6092 = vunpack.c.l.b16 %v4218
    %v6093 = vunpack.c.h.b16 %v4218
    %v6094 = vunpack.c.l.b16 %v4219
    %v6095 = vunpack.c.h.b16 %v4219
    %v6096 = vunpack.c.l.b16 %v4220
    %v6097 = vunpack.c.h.b16 %v4220
    %v6098 = vunpack.c.l.b16 %v4221
    %v6099 = vunpack.c.h.b16 %v4221
    %v6100 = vunpack.c.l.b16 %v4222
    %v6101 = vunpack.c.h.b16 %v4222
    %v6102 = vunpack.c.l.b16 %v4223
    %v6103 = vunpack.c.h.b16 %v4223
    %v6104 = vunpack.c.l.b16 %v4224
    %v6105 = vunpack.c.h.b16 %v4224
    %v6106 = vunpack.c.l.b16 %v4225
    %v6107 = vunpack.c.h.b16 %v4225
    %v6108 = vunpack.c.l.b16 %v4226
    %v6109 = vunpack.c.h.b16 %v4226
    %v6110 = vunpack.c.l.b16 %v4227
    %v6111 = vunpack.c.h.b16 %v4227
    %v6112 = vunpack.c.l.b16 %v4228
    %v6113 = vunpack.c.h.b16 %v4228
    %v6114 = vunpack.c.l.b16 %v4229
    %v6115 = vunpack.c.h.b16 %v4229
    %v6116 = vunpack.c.l.b16 %v4230
    %v6117 = vunpack.c.h.b16 %v4230
    %v6118 = vunpack.c.l.b16 %v4231
    %v6119 = vunpack.c.h.b16 %v4231
    %v6120 = vunpack.c.l.b16 %v4232
    %v6121 = vunpack.c.h.b16 %v4232
    %v6122 = vunpack.c.l.b16 %v4233
    %v6123 = vunpack.c.h.b16 %v4233
    %v6124 = vunpack.c.l.b16 %v4234
    %v6125 = vunpack.c.h.b16 %v4234
    %v6126 = vunpack.c.l.b16 %v4235
    %v6127 = vunpack.c.h.b16 %v4235
    %v6128 = vunpack.c.l.b16 %v4236
    %v6129 = vunpack.c.h.b16 %v4236
    %v6130 = vunpack.c.l.b16 %v4237
    %v6131 = vunpack.c.h.b16 %v4237
    %v6132 = vunpack.c.l.b16 %v4238
    %v6133 = vunpack.c.h.b16 %v4238
    %v6134 = vunpack.c.l.b16 %v4239
    %v6135 = vunpack.c.h.b16 %v4239
    %v6136 = vunpack.c.l.b16 %v4240
    %v6137 = vunpack.c.h.b16 %v4240
    %v6138 = vunpack.c.l.b16 %v4241
    %v6139 = vunpack.c.h.b16 %v4241
    %v6140 = vunpack.c.l.b16 %v4242
    %v6141 = vunpack.c.h.b16 %v4242
    %v6142 = vunpack.c.l.b16 %v4243
    %v6143 = vunpack.c.h.b16 %v4243
    %v6144 = vunpack.c.l.b16 %v4244
    %v6145 = vunpack.c.h.b16 %v4244
    %v6146 = vunpack.c.l.b16 %v4245
    %v6147 = vunpack.c.h.b16 %v4245
    %v6148 = vunpack.c.l.b16 %v4246
    %v6149 = vunpack.c.h.b16 %v4246
    %v6150 = vunpack.c.l.b16 %v4247
    %v6151 = vunpack.c.h.b16 %v4247
    %v6152 = vunpack.c.l.b16 %v4248
    %v6153 = vunpack.c.h.b16 %v4248
    %v6154 = vunpack.c.l.b16 %v4249
    %v6155 = vunpack.c.h.b16 %v4249
    %v6156 = vunpack.c.l.b16 %v4250
    %v6157 = vunpack.c.h.b16 %v4250
    %v6158 = vunpack.c.l.b16 %v4251
    %v6159 = vunpack.c.h.b16 %v4251
    %v6160 = vunpack.c.l.b16 %v4252
    %v6161 = vunpack.c.h.b16 %v4252
    %v6162 = vunpack.c.l.b16 %v4253
    %v6163 = vunpack.c.h.b16 %v4253
    %v6164 = vunpack.c.l.b16 %v4254
    %v6165 = vunpack.c.h.b16 %v4254
    %v6166 = vunpack.c.l.b16 %v4255
    %v6167 = vunpack.c.h.b16 %v4255
    %v6168 = vunpack.c.l.b16 %v4256
    %v6169 = vunpack.c.h.b16 %v4256
    %v6170 = vunpack.c.l.b16 %v4257
    %v6171 = vunpack.c.h.b16 %v4257
    %v6172 = vunpack.c.l.b16 %v4258
    %v6173 = vunpack.c.h.b16 %v4258
    %v6174 = vunpack.c.l.b16 %v4259
    %v6175 = vunpack.c.h.b16 %v4259
    %v6176 = vunpack.c.l.b16 %v4260
    %v6177 = vunpack.c.h.b16 %v4260
    %v6178 = vunpack.c.l.b16 %v4261
    %v6179 = vunpack.c.h.b16 %v4261
    %v6180 = vunpack.c.l.b16 %v4262
    %v6181 = vunpack.c.h.b16 %v4262
    %v6182 = vunpack.c.l.b16 %v4263
    %v6183 = vunpack.c.h.b16 %v4263
    %v6184 = vunpack.c.l.b16 %v4264
    %v6185 = vunpack.c.h.b16 %v4264
    %v6186 = vunpack.c.l.b16 %v4265
    %v6187 = vunpack.c.h.b16 %v4265
    %v6188 = vunpack.c.l.b16 %v4266
    %v6189 = vunpack.c.h.b16 %v4266
    %v6190 = vunpack.c.l.b16 %v4267
    %v6191 = vunpack.c.h.b16 %v4267
    %v6192 = vunpack.c.l.b16 %v4268
    %v6193 = vunpack.c.h.b16 %v4268
    %v6194 = vunpack.c.l.b16 %v4269
    %v6195 = vunpack.c.h.b16 %v4269
    %v6196 = vunpack.c.l.b16 %v4270
    %v6197 = vunpack.c.h.b16 %v4270
    %v6198 = vunpack.c.l.b16 %v4271
    %v6199 = vunpack.c.h.b16 %v4271
    %v6200 = vunpack.c.l.b16 %v4272
    %v6201 = vunpack.c.h.b16 %v4272
    %v6202 = vunpack.c.l.b16 %v4273
    %v6203 = vunpack.c.h.b16 %v4273
    %v6204 = vunpack.c.l.b16 %v4274
    %v6205 = vunpack.c.h.b16 %v4274
    %v6206 = vunpack.c.l.b16 %v4275
    %v6207 = vunpack.c.h.b16 %v4275
    %v6208 = vunpack.c.l.b16 %v4276
    %v6209 = vunpack.c.h.b16 %v4276
    %v6210 = vunpack.c.l.b16 %v4277
    %v6211 = vunpack.c.h.b16 %v4277
    %v6212 = vunpack.c.l.b16 %v4278
    %v6213 = vunpack.c.h.b16 %v4278
    %v6214 = vunpack.c.l.b16 %v4279
    %v6215 = vunpack.c.h.b16 %v4279
    %v6216 = vunpack.c.l.b16 %v4280
    %v6217 = vunpack.c.h.b16 %v4280
    %v6218 = vunpack.c.l.b16 %v4281
    %v6219 = vunpack.c.h.b16 %v4281
    %v6220 = vunpack.c.l.b16 %v4282
    %v6221 = vunpack.c.h.b16 %v4282
    %v6222 = vunpack.c.l.b16 %v4283
    %v6223 = vunpack.c.h.b16 %v4283
    %v6224 = vunpack.c.l.b16 %v4284
    %v6225 = vunpack.c.h.b16 %v4284
    %v6226 = vunpack.c.l.b16 %v4285
    %v6227 = vunpack.c.h.b16 %v4285
    %v6228 = vunpack.c.l.b16 %v4286
    %v6229 = vunpack.c.h.b16 %v4286
    %v6230 = vunpack.c.l.b16 %v4287
    %v6231 = vunpack.c.h.b16 %v4287
    %v6232 = vunpack.c.l.b16 %v4288
    %v6233 = vunpack.c.h.b16 %v4288
    %v6234 = vunpack.c.l.b16 %v4289
    %v6235 = vunpack.c.h.b16 %v4289
    %v6236 = vunpack.c.l.b16 %v4290
    %v6237 = vunpack.c.h.b16 %v4290
    %v6238 = vunpack.c.l.b16 %v4291
    %v6239 = vunpack.c.h.b16 %v4291
    %v6240 = vunpack.c.l.b16 %v4292
    %v6241 = vunpack.c.h.b16 %v4292
    %v6242 = vunpack.c.l.b16 %v4293
    %v6243 = vunpack.c.h.b16 %v4293
    %v6244 = vunpack.c.l.b16 %v4294
    %v6245 = vunpack.c.h.b16 %v4294
    %v6246 = vunpack.c.l.b16 %v4295
    %v6247 = vunpack.c.h.b16 %v4295
    %v6248 = vunpack.c.l.b16 %v4296
    %v6249 = vunpack.c.h.b16 %v4296
    %v6250 = vunpack.c.l.b16 %v4297
    %v6251 = vunpack.c.h.b16 %v4297
    %v6252 = vunpack.c.l.b16 %v4298
    %v6253 = vunpack.c.h.b16 %v4298
    %v6254 = vunpack.c.l.b16 %v4299
    %v6255 = vunpack.c.h.b16 %v4299
    %v6256 = vunpack.c.l.b16 %v4300
    %v6257 = vunpack.c.h.b16 %v4300
    %v6258 = vunpack.c.l.b16 %v4301
    %v6259 = vunpack.c.h.b16 %v4301
    %v6260 = vunpack.c.l.b16 %v4302
    %v6261 = vunpack.c.h.b16 %v4302
    %v6262 = vunpack.c.l.b16 %v4303
    %v6263 = vunpack.c.h.b16 %v4303
    %v6264 = vunpack.c.l.b16 %v4304
    %v6265 = vunpack.c.h.b16 %v4304
    %v6266 = vunpack.c.l.b16 %v4305
    %v6267 = vunpack.c.h.b16 %v4305
    %v6268 = vunpack.c.l.b16 %v4306
    %v6269 = vunpack.c.h.b16 %v4306
    %v6270 = vunpack.c.l.b16 %v4307
    %v6271 = vunpack.c.h.b16 %v4307
    %v6272 = vunpack.c.l.b16 %v4308
    %v6273 = vunpack.c.h.b16 %v4308
    %v6274 = vunpack.c.l.b16 %v4309
    %v6275 = vunpack.c.h.b16 %v4309
    %v6276 = vunpack.c.l.b16 %v4310
    %v6277 = vunpack.c.h.b16 %v4310
    %v6278 = vunpack.c.l.b16 %v4311
    %v6279 = vunpack.c.h.b16 %v4311
    %v6280 = vunpack.c.l.b16 %v4312
    %v6281 = vunpack.c.h.b16 %v4312
    %v6282 = vunpack.c.l.b16 %v4313
    %v6283 = vunpack.c.h.b16 %v4313
    %v6284 = vunpack.c.l.b16 %v4314
    %v6285 = vunpack.c.h.b16 %v4314
    %v6286 = vunpack.c.l.b16 %v4315
    %v6287 = vunpack.c.h.b16 %v4315
    %v6288 = vunpack.c.l.b16 %v4316
    %v6289 = vunpack.c.h.b16 %v4316
    %v6290 = vunpack.c.l.b16 %v4317
    %v6291 = vunpack.c.h.b16 %v4317
    %v6292 = vunpack.c.l.b16 %v4318
    %v6293 = vunpack.c.h.b16 %v4318
    %v6294 = vunpack.c.l.b16 %v4319
    %v6295 = vunpack.c.h.b16 %v4319
    %v6296 = vunpack.c.l.b16 %v4320
    %v6297 = vunpack.c.h.b16 %v4320
    %v6298 = vunpack.c.l.b16 %v4321
    %v6299 = vunpack.c.h.b16 %v4321
    %v6300 = vunpack.c.l.b16 %v4322
    %v6301 = vunpack.c.h.b16 %v4322
    %v6302 = vunpack.c.l.b16 %v4323
    %v6303 = vunpack.c.h.b16 %v4323
    %v6304 = vunpack.c.l.b16 %v4324
    %v6305 = vunpack.c.h.b16 %v4324
    %v6306 = vunpack.c.l.b16 %v4325
    %v6307 = vunpack.c.h.b16 %v4325
    %v6308 = vunpack.c.l.b16 %v4326
    %v6309 = vunpack.c.h.b16 %v4326
    %v6310 = vunpack.c.l.b16 %v4327
    %v6311 = vunpack.c.h.b16 %v4327
    %v6312 = vunpack.c.l.b16 %v4328
    %v6313 = vunpack.c.h.b16 %v4328
    %v6314 = vunpack.c.l.b16 %v4329
    %v6315 = vunpack.c.h.b16 %v4329
    %v6316 = vunpack.c.l.b16 %v4330
    %v6317 = vunpack.c.h.b16 %v4330
    %v6318 = vunpack.c.l.b16 %v4331
    %v6319 = vunpack.c.h.b16 %v4331
    %v6320 = vunpack.c.l.b16 %v4332
    %v6321 = vunpack.c.h.b16 %v4332
    %v6322 = vunpack.c.l.b16 %v4333
    %v6323 = vunpack.c.h.b16 %v4333
    %v6324 = vunpack.c.l.b16 %v4334
    %v6325 = vunpack.c.h.b16 %v4334
    %v6326 = vunpack.c.l.b16 %v4335
    %v6327 = vunpack.c.h.b16 %v4335
    %v6328 = vunpack.c.l.b16 %v4336
    %v6329 = vunpack.c.h.b16 %v4336
    %v6330 = vunpack.c.l.b16 %v4337
    %v6331 = vunpack.c.h.b16 %v4337
    %v6332 = vunpack.c.l.b16 %v4338
    %v6333 = vunpack.c.h.b16 %v4338
    %v6334 = vunpack.c.l.b16 %v4339
    %v6335 = vunpack.c.h.b16 %v4339
    %v6336 = vunpack.c.l.b16 %v4340
    %v6337 = vunpack.c.h.b16 %v4340
    %v6338 = vunpack.c.l.b16 %v4341
    %v6339 = vunpack.c.h.b16 %v4341
    %v6340 = vunpack.c.l.b16 %v4342
    %v6341 = vunpack.c.h.b16 %v4342
    %v6342 = vunpack.c.l.b16 %v4343
    %v6343 = vunpack.c.h.b16 %v4343
    %v6344 = vunpack.c.l.b16 %v4344
    %v6345 = vunpack.c.h.b16 %v4344
    %v6346 = vunpack.c.l.b16 %v4345
    %v6347 = vunpack.c.h.b16 %v4345
    %v6348 = vunpack.c.l.b16 %v4346
    %v6349 = vunpack.c.h.b16 %v4346
    %v6350 = vunpack.c.l.b16 %v4347
    %v6351 = vunpack.c.h.b16 %v4347
    %v6352 = vunpack.c.l.b16 %v4348
    %v6353 = vunpack.c.h.b16 %v4348
    %v6354 = vunpack.c.l.b16 %v4349
    %v6355 = vunpack.c.h.b16 %v4349
    %v6356 = vunpack.c.l.b16 %v4350
    %v6357 = vunpack.c.h.b16 %v4350
    %v6358 = vunpack.c.l.b16 %v4351
    %v6359 = vunpack.c.h.b16 %v4351
    %v6360 = vunpack.c.l.b16 %v4352
    %v6361 = vunpack.c.h.b16 %v4352
    %v6362 = vunpack.c.l.b16 %v4353
    %v6363 = vunpack.c.h.b16 %v4353
    %v6364 = vunpack.c.l.b16 %v4354
    %v6365 = vunpack.c.h.b16 %v4354
    %v6366 = vunpack.c.l.b16 %v4355
    %v6367 = vunpack.c.h.b16 %v4355
    %v6368 = vunpack.c.l.b16 %v4356
    %v6369 = vunpack.c.h.b16 %v4356
    %v6370 = vunpack.c.l.b16 %v4357
    %v6371 = vunpack.c.h.b16 %v4357
    %v6372 = vunpack.c.l.b16 %v4358
    %v6373 = vunpack.c.h.b16 %v4358
    %v6374 = vunpack.c.l.b16 %v4359
    %v6375 = vunpack.c.h.b16 %v4359
    %v6376 = vunpack.c.l.b16 %v4360
    %v6377 = vunpack.c.h.b16 %v4360
    %v6378 = vunpack.c.l.b16 %v4361
    %v6379 = vunpack.c.h.b16 %v4361
    %v6380 = vunpack.c.l.b16 %v4362
    %v6381 = vunpack.c.h.b16 %v4362
    %v6382 = vunpack.c.l.b16 %v4363
    %v6383 = vunpack.c.h.b16 %v4363
    %v6384 = vunpack.c.l.b16 %v4364
    %v6385 = vunpack.c.h.b16 %v4364
    %v6386 = vunpack.c.l.b16 %v4365
    %v6387 = vunpack.c.h.b16 %v4365
    %v6388 = vunpack.c.l.b16 %v4366
    %v6389 = vunpack.c.h.b16 %v4366
    %v6390 = vunpack.c.l.b16 %v4367
    %v6391 = vunpack.c.h.b16 %v4367
    %v6392 = vunpack.c.l.b16 %v4368
    %v6393 = vunpack.c.h.b16 %v4368
    %v6394 = vunpack.c.l.b16 %v4369
    %v6395 = vunpack.c.h.b16 %v4369
    %v6396 = vunpack.c.l.b16 %v4370
    %v6397 = vunpack.c.h.b16 %v4370
    %v6398 = vunpack.c.l.b16 %v4371
    %v6399 = vunpack.c.h.b16 %v4371
    %v6400 = vunpack.c.l.b16 %v4372
    %v6401 = vunpack.c.h.b16 %v4372
    %v6402 = vunpack.c.l.b16 %v4373
    %v6403 = vunpack.c.h.b16 %v4373
    %v6404 = vunpack.c.l.b16 %v4374
    %v6405 = vunpack.c.h.b16 %v4374
    %v6406 = vunpack.c.l.b16 %v4375
    %v6407 = vunpack.c.h.b16 %v4375
    %v6408 = vunpack.c.l.b16 %v4376
    %v6409 = vunpack.c.h.b16 %v4376
    %v6410 = vunpack.c.l.b16 %v4377
    %v6411 = vunpack.c.h.b16 %v4377
    %v6412 = vunpack.c.l.b16 %v4378
    %v6413 = vunpack.c.h.b16 %v4378
    %v6414 = vunpack.c.l.b16 %v4379
    %v6415 = vunpack.c.h.b16 %v4379
    %v6416 = vunpack.c.l.b16 %v4380
    %v6417 = vunpack.c.h.b16 %v4380
    %v6418 = vunpack.c.l.b16 %v4381
    %v6419 = vunpack.c.h.b16 %v4381
    %v6420 = vunpack.c.l.b16 %v4382
    %v6421 = vunpack.c.h.b16 %v4382
    %v6422 = vunpack.c.l.b16 %v4383
    %v6423 = vunpack.c.h.b16 %v4383
    %v6424 = vunpack.c.l.b16 %v4384
    %v6425 = vunpack.c.h.b16 %v4384
    %v6426 = vunpack.c.l.b16 %v4385
    %v6427 = vunpack.c.h.b16 %v4385
    %v6428 = vunpack.c.l.b16 %v4386
    %v6429 = vunpack.c.h.b16 %v4386
    %v6430 = vunpack.c.l.b16 %v4387
    %v6431 = vunpack.c.h.b16 %v4387
    %v6432 = vunpack.c.l.b16 %v4388
    %v6433 = vunpack.c.h.b16 %v4388
    %v6434 = vunpack.c.l.b16 %v4389
    %v6435 = vunpack.c.h.b16 %v4389
    %v6436 = vunpack.c.l.b16 %v4390
    %v6437 = vunpack.c.h.b16 %v4390
    %v6438 = vunpack.c.l.b16 %v4391
    %v6439 = vunpack.c.h.b16 %v4391
    %v6440 = vunpack.c.l.b16 %v4392
    %v6441 = vunpack.c.h.b16 %v4392
    %v6442 = vunpack.c.l.b16 %v4393
    %v6443 = vunpack.c.h.b16 %v4393
    %v6444 = vunpack.c.l.b16 %v4394
    %v6445 = vunpack.c.h.b16 %v4394
    %v6446 = vunpack.c.l.b16 %v4395
    %v6447 = vunpack.c.h.b16 %v4395
    %v6448 = vunpack.c.l.b16 %v4396
    %v6449 = vunpack.c.h.b16 %v4396
    %v6450 = vunpack.c.l.b16 %v4397
    %v6451 = vunpack.c.h.b16 %v4397
    %v6452 = vunpack.c.l.b16 %v4398
    %v6453 = vunpack.c.h.b16 %v4398
    %v6454 = vunpack.c.l.b16 %v4399
    %v6455 = vunpack.c.h.b16 %v4399
    %v6456 = vunpack.c.l.b16 %v4400
    %v6457 = vunpack.c.h.b16 %v4400
    %v6458 = vunpack.c.l.b16 %v4401
    %v6459 = vunpack.c.h.b16 %v4401
    %v6460 = vunpack.c.l.b16 %v4402
    %v6461 = vunpack.c.h.b16 %v4402
    %v6462 = vunpack.c.l.b16 %v4403
    %v6463 = vunpack.c.h.b16 %v4403
    %v6464 = vunpack.c.l.b16 %v4404
    %v6465 = vunpack.c.h.b16 %v4404
    %v6466 = vunpack.c.l.b16 %v4405
    %v6467 = vunpack.c.h.b16 %v4405
    %v6468 = vunpack.c.l.b16 %v4406
    %v6469 = vunpack.c.h.b16 %v4406
    %v6470 = vunpack.c.l.b16 %v4407
    %v6471 = vunpack.c.h.b16 %v4407
    %v6472 = vunpack.c.l.b16 %v4408
    %v6473 = vunpack.c.h.b16 %v4408
    %v6474 = vunpack.c.l.b16 %v4409
    %v6475 = vunpack.c.h.b16 %v4409
    %v6476 = vunpack.c.l.b16 %v4410
    %v6477 = vunpack.c.h.b16 %v4410
    %v6478 = vunpack.c.l.b16 %v4411
    %v6479 = vunpack.c.h.b16 %v4411
    %v6480 = vunpack.c.l.b16 %v4412
    %v6481 = vunpack.c.h.b16 %v4412
    %v6482 = vunpack.c.l.b16 %v4413
    %v6483 = vunpack.c.h.b16 %v4413
    %v6484 = vunpack.c.l.b16 %v4414
    %v6485 = vunpack.c.h.b16 %v4414
    %v6486 = vunpack.c.l.b16 %v4415
    %v6487 = vunpack.c.h.b16 %v4415
    %v6488 = vunpack.c.l.b16 %v4416
    %v6489 = vunpack.c.h.b16 %v4416
    %v6490 = vunpack.c.l.b16 %v4417
    %v6491 = vunpack.c.h.b16 %v4417
    %v6492 = vunpack.c.l.b16 %v4418
    %v6493 = vunpack.c.h.b16 %v4418
    %v6494 = vunpack.c.l.b16 %v4419
    %v6495 = vunpack.c.h.b16 %v4419
    %v6496 = vunpack.c.l.b16 %v4420
    %v6497 = vunpack.c.h.b16 %v4420
    %v6498 = vunpack.c.l.b16 %v4421
    %v6499 = vunpack.c.h.b16 %v4421
    %v6500 = vunpack.c.l.b16 %v4422
    %v6501 = vunpack.c.h.b16 %v4422
    %v6502 = vunpack.c.l.b16 %v4423
    %v6503 = vunpack.c.h.b16 %v4423
    %v6504 = vunpack.c.l.b16 %v4424
    %v6505 = vunpack.c.h.b16 %v4424
    %v6506 = vunpack.c.l.b16 %v4425
    %v6507 = vunpack.c.h.b16 %v4425
    %v6508 = vunpack.c.l.b16 %v4426
    %v6509 = vunpack.c.h.b16 %v4426
    %v6510 = vunpack.c.l.b16 %v4427
    %v6511 = vunpack.c.h.b16 %v4427
    %v6512 = vunpack.c.l.b16 %v4428
    %v6513 = vunpack.c.h.b16 %v4428
    %v6514 = vunpack.c.l.b16 %v4429
    %v6515 = vunpack.c.h.b16 %v4429
    %v6516 = vunpack.c.l.b16 %v4430
    %v6517 = vunpack.c.h.b16 %v4430
    %v6518 = vunpack.c.l.b16 %v4431
    %v6519 = vunpack.c.h.b16 %v4431
    %v6520 = vunpack.c.l.b16 %v4432
    %v6521 = vunpack.c.h.b16 %v4432
    %v6522 = vunpack.c.l.b16 %v4433
    %v6523 = vunpack.c.h.b16 %v4433
    %v6524 = vunpack.c.l.b16 %v4434
    %v6525 = vunpack.c.h.b16 %v4434
    %v6526 = vunpack.c.l.b16 %v4435
    %v6527 = vunpack.c.h.b16 %v4435
    %v6528 = vunpack.c.l.b16 %v4436
    %v6529 = vunpack.c.h.b16 %v4436
    %v6530 = vunpack.c.l.b16 %v4437
    %v6531 = vunpack.c.h.b16 %v4437
    %v6532 = vunpack.c.l.b16 %v4438
    %v6533 = vunpack.c.h.b16 %v4438
    %v6534 = vunpack.c.l.b16 %v4439
    %v6535 = vunpack.c.h.b16 %v4439
    %v6536 = vunpack.c.l.b16 %v4440
    %v6537 = vunpack.c.h.b16 %v4440
    %v6538 = vunpack.c.l.b16 %v4441
    %v6539 = vunpack.c.h.b16 %v4441
    %v6540 = vunpack.c.l.b16 %v4442
    %v6541 = vunpack.c.h.b16 %v4442
    %v6542 = vunpack.c.l.b16 %v4443
    %v6543 = vunpack.c.h.b16 %v4443
    %v6544 = vunpack.c.l.b16 %v4444
    %v6545 = vunpack.c.h.b16 %v4444
    %v6546 = vunpack.c.l.b16 %v4445
    %v6547 = vunpack.c.h.b16 %v4445
    %v6548 = vunpack.c.l.b16 %v4446
    %v6549 = vunpack.c.h.b16 %v4446
    %v6550 = vunpack.c.l.b16 %v4447
    %v6551 = vunpack.c.h.b16 %v4447
    %v6552 = vunpack.c.l.b16 %v4448
    %v6553 = vunpack.c.h.b16 %v4448
    %v6554 = vunpack.c.l.b16 %v4449
    %v6555 = vunpack.c.h.b16 %v4449
    %v6556 = vunpack.c.l.b16 %v4450
    %v6557 = vunpack.c.h.b16 %v4450
    %v6558 = vunpack.c.l.b16 %v4451
    %v6559 = vunpack.c.h.b16 %v4451
    %v6560 = vunpack.c.l.b16 %v4452
    %v6561 = vunpack.c.h.b16 %v4452
    %v6562 = vunpack.c.l.b16 %v4453
    %v6563 = vunpack.c.h.b16 %v4453
    %v6564 = vunpack.c.l.b16 %v4454
    %v6565 = vunpack.c.h.b16 %v4454
    %v6566 = vunpack.c.l.b16 %v4455
    %v6567 = vunpack.c.h.b16 %v4455
    %v6568 = vunpack.c.l.b16 %v4456
    %v6569 = vunpack.c.h.b16 %v4456
    %v6570 = vunpack.c.l.b16 %v4457
    %v6571 = vunpack.c.h.b16 %v4457
    %v6572 = vunpack.c.l.b16 %v4458
    %v6573 = vunpack.c.h.b16 %v4458
    %v6574 = vunpack.c.l.b16 %v4459
    %v6575 = vunpack.c.h.b16 %v4459
    %v6576 = vunpack.c.l.b16 %v4460
    %v6577 = vunpack.c.h.b16 %v4460
    %v6578 = vunpack.c.l.b16 %v4461
    %v6579 = vunpack.c.h.b16 %v4461
    %v6580 = vunpack.c.l.b16 %v4462
    %v6581 = vunpack.c.h.b16 %v4462
    %v6582 = vunpack.c.l.b16 %v4463
    %v6583 = vunpack.c.h.b16 %v4463
    %v6584 = vunpack.c.l.b16 %v4464
    %v6585 = vunpack.c.h.b16 %v4464
    %v6586 = vunpack.c.l.b16 %v4465
    %v6587 = vunpack.c.h.b16 %v4465
    %v6588 = vunpack.c.l.b16 %v4466
    %v6589 = vunpack.c.h.b16 %v4466
    %v6590 = vunpack.c.l.b16 %v4467
    %v6591 = vunpack.c.h.b16 %v4467
    %v6592 = vunpack.c.l.b16 %v4468
    %v6593 = vunpack.c.h.b16 %v4468
    %v6594 = vunpack.c.l.b16 %v4469
    %v6595 = vunpack.c.h.b16 %v4469
    %v6596 = vunpack.c.l.b16 %v4470
    %v6597 = vunpack.c.h.b16 %v4470
    %v6598 = vunpack.c.l.b16 %v4471
    %v6599 = vunpack.c.h.b16 %v4471
    %v6600 = vunpack.c.l.b16 %v4472
    %v6601 = vunpack.c.h.b16 %v4472
    %v6602 = vunpack.c.l.b16 %v4473
    %v6603 = vunpack.c.h.b16 %v4473
    %v6604 = vunpack.c.l.b16 %v4474
    %v6605 = vunpack.c.h.b16 %v4474
    %v6606 = vunpack.c.l.b16 %v4475
    %v6607 = vunpack.c.h.b16 %v4475
    %v6608 = vunpack.c.l.b16 %v4476
    %v6609 = vunpack.c.h.b16 %v4476
    %v6610 = vunpack.c.l.b16 %v4477
    %v6611 = vunpack.c.h.b16 %v4477
    %v6612 = vunpack.c.l.b16 %v4478
    %v6613 = vunpack.c.h.b16 %v4478
    %v6614 = vunpack.c.l.b16 %v4479
    %v6615 = vunpack.c.h.b16 %v4479
    %v6616 = vunpack.c.l.b16 %v4480
    %v6617 = vunpack.c.h.b16 %v4480
    %v6618 = vunpack.c.l.b16 %v4481
    %v6619 = vunpack.c.h.b16 %v4481
    %v6620 = vunpack.c.l.b16 %v4482
    %v6621 = vunpack.c.h.b16 %v4482
    %v6622 = vunpack.c.l.b16 %v4483
    %v6623 = vunpack.c.h.b16 %v4483
    %v6624 = vunpack.c.l.b16 %v4484
    %v6625 = vunpack.c.h.b16 %v4484
    %v6626 = vunpack.c.l.b16 %v4485
    %v6627 = vunpack.c.h.b16 %v4485
    %v6628 = vunpack.c.l.b16 %v4486
    %v6629 = vunpack.c.h.b16 %v4486
    %v6630 = vunpack.c.l.b16 %v4487
    %v6631 = vunpack.c.h.b16 %v4487
    %v6632 = vunpack.c.l.b16 %v4488
    %v6633 = vunpack.c.h.b16 %v4488
    %v6634 = vunpack.c.l.b16 %v4489
    %v6635 = vunpack.c.h.b16 %v4489
    %v6636 = vunpack.c.l.b16 %v4490
    %v6637 = vunpack.c.h.b16 %v4490
    %v6638 = vunpack.c.l.b16 %v4491
    %v6639 = vunpack.c.h.b16 %v4491
    %v6640 = vunpack.c.l.b16 %v4492
    %v6641 = vunpack.c.h.b16 %v4492
    %v6642 = vunpack.c.l.b16 %v4493
    %v6643 = vunpack.c.h.b16 %v4493
    %v6644 = vunpack.c.l.b16 %v4494
    %v6645 = vunpack.c.h.b16 %v4494
    %v6646 = vunpack.c.l.b16 %v4495
    %v6647 = vunpack.c.h.b16 %v4495
    %v6648 = vunpack.c.l.b16 %v4496
    %v6649 = vunpack.c.h.b16 %v4496
    %v6650 = vunpack.c.l.b16 %v4497
    %v6651 = vunpack.c.h.b16 %v4497
    %v6652 = vunpack.c.l.b16 %v4498
    %v6653 = vunpack.c.h.b16 %v4498
    %v6654 = vunpack.c.l.b16 %v4499
    %v6655 = vunpack.c.h.b16 %v4499
    %v6656 = vunpack.c.l.b16 %v4500
    %v6657 = vunpack.c.h.b16 %v4500
    %v6658 = vunpack.c.l.b16 %v4501
    %v6659 = vunpack.c.h.b16 %v4501
    %v6660 = vunpack.c.l.b16 %v4502
    %v6661 = vunpack.c.h.b16 %v4502
    %v6662 = vunpack.c.l.b16 %v4503
    %v6663 = vunpack.c.h.b16 %v4503
    %v6664 = vunpack.c.l.b16 %v4504
    %v6665 = vunpack.c.h.b16 %v4504
    %v6666 = vunpack.c.l.b16 %v4505
    %v6667 = vunpack.c.h.b16 %v4505
    %v6668 = vunpack.c.l.b16 %v4506
    %v6669 = vunpack.c.h.b16 %v4506
    %v6670 = vunpack.c.l.b16 %v4507
    %v6671 = vunpack.c.h.b16 %v4507
    %v6672 = vunpack.c.l.b16 %v4508
    %v6673 = vunpack.c.h.b16 %v4508
    %v6674 = vunpack.c.l.b16 %v4509
    %v6675 = vunpack.c.h.b16 %v4509
    %v6676 = vunpack.c.l.b16 %v4510
    %v6677 = vunpack.c.h.b16 %v4510
    %v6678 = vunpack.c.l.b16 %v4511
    %v6679 = vunpack.c.h.b16 %v4511
    %v6680 = vunpack.c.l.b16 %v4512
    %v6681 = vunpack.c.h.b16 %v4512
    %v6682 = vunpack.c.l.b16 %v4513
    %v6683 = vunpack.c.h.b16 %v4513
    %v6684 = vunpack.c.l.b16 %v4514
    %v6685 = vunpack.c.h.b16 %v4514
    %v6686 = vunpack.c.l.b16 %v4515
    %v6687 = vunpack.c.h.b16 %v4515
    %v6688 = vunpack.c.l.b16 %v4516
    %v6689 = vunpack.c.h.b16 %v4516
    %v6690 = vunpack.c.l.b16 %v4517
    %v6691 = vunpack.c.h.b16 %v4517
    %v6692 = vunpack.c.l.b16 %v4518
    %v6693 = vunpack.c.h.b16 %v4518
    %v6694 = vunpack.c.l.b16 %v4519
    %v6695 = vunpack.c.h.b16 %v4519
    %v6696 = vunpack.c.l.b16 %v4520
    %v6697 = vunpack.c.h.b16 %v4520
    %v6698 = vunpack.c.l.b16 %v4521
    %v6699 = vunpack.c.h.b16 %v4521
    %v6700 = vunpack.c.l.b16 %v4522
    %v6701 = vunpack.c.h.b16 %v4522
    %v6702 = vunpack.c.l.b16 %v4523
    %v6703 = vunpack.c.h.b16 %v4523
    %v6704 = vunpack.c.l.b16 %v4524
    %v6705 = vunpack.c.h.b16 %v4524
    %v6706 = vunpack.c.l.b16 %v4525
    %v6707 = vunpack.c.h.b16 %v4525
    %v6708 = vunpack.c.l.b16 %v4526
    %v6709 = vunpack.c.h.b16 %v4526
    %v6710 = vunpack.c.l.b16 %v4527
    %v6711 = vunpack.c.h.b16 %v4527
    %v6712 = vunpack.c.l.b16 %v4528
    %v6713 = vunpack.c.h.b16 %v4528
    %v6714 = vunpack.c.l.b16 %v4529
    %v6715 = vunpack.c.h.b16 %v4529
    %v6716 = vunpack.c.l.b16 %v4530
    %v6717 = vunpack.c.h.b16 %v4530
    %v6718 = vunpack.c.l.b16 %v4531
    %v6719 = vunpack.c.h.b16 %v4531
    %v6720 = vunpack.c.l.b16 %v4532
    %v6721 = vunpack.c.h.b16 %v4532
    %v6722 = vunpack.c.l.b16 %v4533
    %v6723 = vunpack.c.h.b16 %v4533
    %v6724 = vunpack.c.l.b16 %v4534
    %v6725 = vunpack.c.h.b16 %v4534
    %v6726 = vunpack.c.l.b16 %v4535
    %v6727 = vunpack.c.h.b16 %v4535
    %v6728 = vunpack.c.l.b16 %v4536
    %v6729 = vunpack.c.h.b16 %v4536
    %v6730 = vunpack.c.l.b16 %v4537
    %v6731 = vunpack.c.h.b16 %v4537
    %v6732 = vunpack.c.l.b16 %v4538
    %v6733 = vunpack.c.h.b16 %v4538
    %v6734 = vunpack.c.l.b16 %v4539
    %v6735 = vunpack.c.h.b16 %v4539
    %v6736 = vunpack.c.l.b16 %v4540
    %v6737 = vunpack.c.h.b16 %v4540
    %v6738 = vunpack.c.l.b16 %v4541
    %v6739 = vunpack.c.h.b16 %v4541
    %v6740 = vunpack.c.l.b16 %v4542
    %v6741 = vunpack.c.h.b16 %v4542
    %v6742 = vunpack.c.l.b16 %v4543
    %v6743 = vunpack.c.h.b16 %v4543
    %v6744 = vunpack.c.l.b16 %v4544
    %v6745 = vunpack.c.h.b16 %v4544
    %v6746 = vunpack.c.l.b16 %v4545
    %v6747 = vunpack.c.h.b16 %v4545
    %v6748 = vunpack.c.l.b16 %v4546
    %v6749 = vunpack.c.h.b16 %v4546
    %v6750 = vunpack.c.l.b16 %v4547
    %v6751 = vunpack.c.h.b16 %v4547
    %v6752 = vunpack.c.l.b16 %v4548
    %v6753 = vunpack.c.h.b16 %v4548
    %v6754 = vunpack.c.l.b16 %v4549
    %v6755 = vunpack.c.h.b16 %v4549
    %v6756 = vunpack.c.l.b16 %v4550
    %v6757 = vunpack.c.h.b16 %v4550
    %v6758 = vunpack.c.l.b16 %v4551
    %v6759 = vunpack.c.h.b16 %v4551
    %v6760 = vunpack.c.l.b16 %v4552
    %v6761 = vunpack.c.h.b16 %v4552
    %v6762 = vunpack.c.l.b16 %v4553
    %v6763 = vunpack.c.h.b16 %v4553
    %v6764 = vunpack.c.l.b16 %v4554
    %v6765 = vunpack.c.h.b16 %v4554
    %v6766 = vunpack.c.l.b16 %v4555
    %v6767 = vunpack.c.h.b16 %v4555
    %v6768 = vunpack.c.l.b16 %v4556
    %v6769 = vunpack.c.h.b16 %v4556
    %v6770 = vunpack.c.l.b16 %v4557
    %v6771 = vunpack.c.h.b16 %v4557
    %v6772 = vunpack.c.l.b16 %v4558
    %v6773 = vunpack.c.h.b16 %v4558
    %v6774 = vunpack.c.l.b16 %v4559
    %v6775 = vunpack.c.h.b16 %v4559
    %v6776 = vunpack.c.l.b16 %v4560
    %v6777 = vunpack.c.h.b16 %v4560
    %v6778 = vunpack.c.l.b16 %v4561
    %v6779 = vunpack.c.h.b16 %v4561
    %v6780 = vunpack.c.l.b16 %v4562
    %v6781 = vunpack.c.h.b16 %v4562
    %v6782 = vunpack.c.l.b16 %v4563
    %v6783 = vunpack.c.h.b16 %v4563
    %v6784 = vunpack.c.l.b16 %v4564
    %v6785 = vunpack.c.h.b16 %v4564
    %v6786 = vunpack.c.l.b16 %v4565
    %v6787 = vunpack.c.h.b16 %v4565
    %v6788 = vunpack.c.l.b16 %v4566
    %v6789 = vunpack.c.h.b16 %v4566
    %v6790 = vunpack.c.l.b16 %v4567
    %v6791 = vunpack.c.h.b16 %v4567
    %v6792 = vunpack.c.l.b16 %v4568
    %v6793 = vunpack.c.h.b16 %v4568
    %v6794 = vunpack.c.l.b16 %v4569
    %v6795 = vunpack.c.h.b16 %v4569
    %v6796 = vunpack.c.l.b16 %v4570
    %v6797 = vunpack.c.h.b16 %v4570
    %v6798 = vunpack.c.l.b16 %v4571
    %v6799 = vunpack.c.h.b16 %v4571
    %v6800 = vunpack.c.l.b16 %v4572
    %v6801 = vunpack.c.h.b16 %v4572
    %v6802 = vunpack.c.l.b16 %v4573
    %v6803 = vunpack.c.h.b16 %v4573
    %v6804 = vunpack.c.l.b16 %v4574
    %v6805 = vunpack.c.h.b16 %v4574
    %v6806 = vunpack.c.l.b16 %v4575
    %v6807 = vunpack.c.h.b16 %v4575
    %v6808 = vunpack.c.l.b16 %v4576
    %v6809 = vunpack.c.h.b16 %v4576
    %v6810 = vunpack.c.l.b16 %v4577
    %v6811 = vunpack.c.h.b16 %v4577
    %v6812 = vunpack.c.l.b16 %v4578
    %v6813 = vunpack.c.h.b16 %v4578
    %v6814 = vunpack.c.l.b16 %v4579
    %v6815 = vunpack.c.h.b16 %v4579
    %v6816 = vunpack.c.l.b16 %v4580
    %v6817 = vunpack.c.h.b16 %v4580
    %v6818 = vunpack.c.l.b16 %v4581
    %v6819 = vunpack.c.h.b16 %v4581
    %v6820 = vunpack.c.l.b16 %v4582
    %v6821 = vunpack.c.h.b16 %v4582
    %v6822 = vunpack.c.l.b16 %v4583
    %v6823 = vunpack.c.h.b16 %v4583
    %v6824 = vunpack.c.l.b16 %v4584
    %v6825 = vunpack.c.h.b16 %v4584
    %v6826 = vunpack.c.l.b16 %v4585
    %v6827 = vunpack.c.h.b16 %v4585
    %v6828 = vunpack.c.l.b16 %v4586
    %v6829 = vunpack.c.h.b16 %v4586
    %v6830 = vunpack.c.l.b16 %v4587
    %v6831 = vunpack.c.h.b16 %v4587
    %v6832 = vunpack.c.l.b16 %v4588
    %v6833 = vunpack.c.h.b16 %v4588
    %v6834 = vunpack.c.l.b16 %v4589
    %v6835 = vunpack.c.h.b16 %v4589
    %v6836 = vunpack.c.l.b16 %v4590
    %v6837 = vunpack.c.h.b16 %v4590
    %v6838 = vunpack.c.l.b16 %v4591
    %v6839 = vunpack.c.h.b16 %v4591
    %v6840 = vunpack.c.l.b16 %v4592
    %v6841 = vunpack.c.h.b16 %v4592
    %v6842 = vunpack.c.l.b16 %v4593
    %v6843 = vunpack.c.h.b16 %v4593
    %v6844 = vunpack.c.l.b16 %v4594
    %v6845 = vunpack.c.h.b16 %v4594
    %v6846 = vunpack.c.l.b16 %v4595
    %v6847 = vunpack.c.h.b16 %v4595
    %v6848 = vunpack.c.l.b16 %v4596
    %v6849 = vunpack.c.h.b16 %v4596
    %v6850 = vunpack.c.l.b16 %v4597
    %v6851 = vunpack.c.h.b16 %v4597
    %v6852 = vunpack.c.l.b16 %v4598
    %v6853 = vunpack.c.h.b16 %v4598
    %v6854 = vunpack.c.l.b16 %v4599
    %v6855 = vunpack.c.h.b16 %v4599
    %v6856 = vunpack.c.l.b16 %v4600
    %v6857 = vunpack.c.h.b16 %v4600
    %v6858 = vunpack.c.l.b16 %v4601
    %v6859 = vunpack.c.h.b16 %v4601
    %v6860 = vunpack.c.l.b16 %v4602
    %v6861 = vunpack.c.h.b16 %v4602
    %v6862 = vunpack.c.l.b16 %v4603
    %v6863 = vunpack.c.h.b16 %v4603
    %v6864 = vunpack.c.l.b16 %v4604
    %v6865 = vunpack.c.h.b16 %v4604
    %v6866 = vunpack.c.l.b16 %v4605
    %v6867 = vunpack.c.h.b16 %v4605
    %v6868 = vunpack.c.l.b16 %v4606
    %v6869 = vunpack.c.h.b16 %v4606
    %v6870 = vunpack.c.l.b16 %v4607
    %v6871 = vunpack.c.h.b16 %v4607
    %v6872 = vunpack.c.l.b16 %v4608
    %v6873 = vunpack.c.h.b16 %v4608
    %v6874 = vunpack.c.l.b16 %v4609
    %v6875 = vunpack.c.h.b16 %v4609
    %v6876 = vunpack.c.l.b16 %v4610
    %v6877 = vunpack.c.h.b16 %v4610
    %v6878 = vunpack.c.l.b16 %v4611
    %v6879 = vunpack.c.h.b16 %v4611
    %v6880 = vunpack.c.l.b16 %v4612
    %v6881 = vunpack.c.h.b16 %v4612
    %v6882 = vunpack.c.l.b16 %v4613
    %v6883 = vunpack.c.h.b16 %v4613
    %v6884 = vunpack.c.l.b16 %v4614
    %v6885 = vunpack.c.h.b16 %v4614
    %v6886 = vunpack.c.l.b16 %v4615
    %v6887 = vunpack.c.h.b16 %v4615
    %v6888 = vunpack.c.l.b16 %v4616
    %v6889 = vunpack.c.h.b16 %v4616
    %v6890 = vunpack.c.l.b16 %v4617
    %v6891 = vunpack.c.h.b16 %v4617
    %v6892 = vunpack.c.l.b16 %v4618
    %v6893 = vunpack.c.h.b16 %v4618
    %v6894 = vunpack.c.l.b16 %v4619
    %v6895 = vunpack.c.h.b16 %v4619
    %v6896 = vunpack.c.l.b16 %v4620
    %v6897 = vunpack.c.h.b16 %v4620
    %v6898 = vunpack.c.l.b16 %v4621
    %v6899 = vunpack.c.h.b16 %v4621
    %v6900 = vunpack.c.l.b16 %v4622
    %v6901 = vunpack.c.h.b16 %v4622
    %v6902 = vunpack.c.l.b16 %v4623
    %v6903 = vunpack.c.h.b16 %v4623
    %v6904 = vunpack.c.l.b16 %v4624
    %v6905 = vunpack.c.h.b16 %v4624
    %v6906 = vunpack.c.l.b16 %v4625
    %v6907 = vunpack.c.h.b16 %v4625
    %v6908 = vunpack.c.l.b16 %v4626
    %v6909 = vunpack.c.h.b16 %v4626
    %v6910 = vunpack.c.l.b16 %v4627
    %v6911 = vunpack.c.h.b16 %v4627
    %v6912 = vunpack.c.l.b16 %v4628
    %v6913 = vunpack.c.h.b16 %v4628
    %v6914 = vunpack.c.l.b16 %v4629
    %v6915 = vunpack.c.h.b16 %v4629
    %v6916 = vunpack.c.l.b16 %v4630
    %v6917 = vunpack.c.h.b16 %v4630
    %v6918 = vunpack.c.l.b16 %v4631
    %v6919 = vunpack.c.h.b16 %v4631
    %v6920 = vunpack.c.l.b16 %v4632
    %v6921 = vunpack.c.h.b16 %v4632
    %v6922 = vunpack.c.l.b16 %v4633
    %v6923 = vunpack.c.h.b16 %v4633
    %v6924 = vunpack.c.l.b16 %v4634
    %v6925 = vunpack.c.h.b16 %v4634
    %v6926 = vunpack.c.l.b16 %v4635
    %v6927 = vunpack.c.h.b16 %v4635
    %v6928 = vunpack.c.l.b16 %v4636
    %v6929 = vunpack.c.h.b16 %v4636
    %v6930 = vunpack.c.l.b16 %v4637
    %v6931 = vunpack.c.h.b16 %v4637
    %v6932 = vunpack.c.l.b16 %v4638
    %v6933 = vunpack.c.h.b16 %v4638
    %v6934 = vunpack.c.l.b16 %v4639
    %v6935 = vunpack.c.h.b16 %v4639
    %v6936 = vunpack.c.l.b16 %v4640
    %v6937 = vunpack.c.h.b16 %v4640
    %v6938 = vunpack.c.l.b16 %v4641
    %v6939 = vunpack.c.h.b16 %v4641
    %v6940 = vunpack.c.l.b16 %v4642
    %v6941 = vunpack.c.h.b16 %v4642
    %v6942 = vunpack.c.l.b16 %v4643
    %v6943 = vunpack.c.h.b16 %v4643
    %v6944 = vunpack.c.l.b16 %v4644
    %v6945 = vunpack.c.h.b16 %v4644
    %v6946 = vunpack.c.l.b16 %v4645
    %v6947 = vunpack.c.h.b16 %v4645
    %v6948 = vunpack.c.l.b16 %v4646
    %v6949 = vunpack.c.h.b16 %v4646
    %v6950 = vunpack.c.l.b16 %v4647
    %v6951 = vunpack.c.h.b16 %v4647
    %v6952 = vunpack.c.l.b16 %v4648
    %v6953 = vunpack.c.h.b16 %v4648
    %v6954 = vunpack.c.l.b16 %v4649
    %v6955 = vunpack.c.h.b16 %v4649
    %v6956 = vunpack.c.l.b16 %v4650
    %v6957 = vunpack.c.h.b16 %v4650
    %v6958 = vunpack.c.l.b16 %v4651
    %v6959 = vunpack.c.h.b16 %v4651
    %v6960 = vunpack.c.l.b16 %v4652
    %v6961 = vunpack.c.h.b16 %v4652
    %v6962 = vunpack.c.l.b16 %v4653
    %v6963 = vunpack.c.h.b16 %v4653
    %v6964 = vunpack.c.l.b16 %v4654
    %v6965 = vunpack.c.h.b16 %v4654
    %v6966 = vunpack.c.l.b16 %v4655
    %v6967 = vunpack.c.h.b16 %v4655
    %v6968 = vunpack.c.l.b16 %v4656
    %v6969 = vunpack.c.h.b16 %v4656
    %v6970 = vunpack.c.l.b16 %v4657
    %v6971 = vunpack.c.h.b16 %v4657
    %v6972 = vunpack.c.l.b16 %v4658
    %v6973 = vunpack.c.h.b16 %v4658
    %v6974 = vunpack.c.l.b16 %v4659
    %v6975 = vunpack.c.h.b16 %v4659
    %v6976 = vunpack.c.l.b16 %v4660
    %v6977 = vunpack.c.h.b16 %v4660
    %v6978 = vunpack.c.l.b16 %v4661
    %v6979 = vunpack.c.h.b16 %v4661
    %v6980 = vunpack.c.l.b16 %v4662
    %v6981 = vunpack.c.h.b16 %v4662
    %v6982 = vunpack.c.l.b16 %v4663
    %v6983 = vunpack.c.h.b16 %v4663
    %v6984 = vunpack.c.l.b16 %v4664
    %v6985 = vunpack.c.h.b16 %v4664
    %v6986 = vunpack.c.l.b16 %v4665
    %v6987 = vunpack.c.h.b16 %v4665
    %v6988 = vunpack.c.l.b16 %v4666
    %v6989 = vunpack.c.h.b16 %v4666
    %v6990 = vunpack.c.l.b16 %v4667
    %v6991 = vunpack.c.h.b16 %v4667
    %v6992 = vunpack.c.l.b16 %v4668
    %v6993 = vunpack.c.h.b16 %v4668
    %v6994 = vunpack.c.l.b16 %v4669
    %v6995 = vunpack.c.h.b16 %v4669
    %v6996 = vunpack.c.l.b16 %v4670
    %v6997 = vunpack.c.h.b16 %v4670
    %v6998 = vunpack.c.l.b16 %v4671
    %v6999 = vunpack.c.h.b16 %v4671
    %v7000 = vunpack.c.l.b16 %v4672
    %v7001 = vunpack.c.h.b16 %v4672
    %v7002 = vunpack.c.l.b16 %v4673
    %v7003 = vunpack.c.h.b16 %v4673
    %v7004 = vunpack.c.l.b16 %v4674
    %v7005 = vunpack.c.h.b16 %v4674
    %v7006 = vunpack.c.l.b16 %v4675
    %v7007 = vunpack.c.h.b16 %v4675
    %v7008 = vunpack.c.l.b16 %v4676
    %v7009 = vunpack.c.h.b16 %v4676
    %v7010 = vunpack.c.l.b16 %v4677
    %v7011 = vunpack.c.h.b16 %v4677
    %v7012 = vunpack.c.l.b16 %v4678
    %v7013 = vunpack.c.h.b16 %v4678
    %v7014 = vunpack.c.l.b16 %v4679
    %v7015 = vunpack.c.h.b16 %v4679
    %v7016 = vunpack.c.l.b16 %v4680
    %v7017 = vunpack.c.h.b16 %v4680
    %v7018 = vunpack.c.l.b16 %v4681
    %v7019 = vunpack.c.h.b16 %v4681
    %v7020 = vunpack.c.l.b16 %v4682
    %v7021 = vunpack.c.h.b16 %v4682
    %v7022 = vunpack.c.l.b16 %v4683
    %v7023 = vunpack.c.h.b16 %v4683
    %v7024 = vunpack.c.l.b16 %v4684
    %v7025 = vunpack.c.h.b16 %v4684
    %v7026 = vunpack.c.l.b16 %v4685
    %v7027 = vunpack.c.h.b16 %v4685
    %v7028 = vunpack.c.l.b16 %v4686
    %v7029 = vunpack.c.h.b16 %v4686
    %v7030 = vunpack.c.l.b16 %v4687
    %v7031 = vunpack.c.h.b16 %v4687
    %v7032 = vunpack.c.l.b16 %v4688
    %v7033 = vunpack.c.h.b16 %v4688
    %v7034 = vunpack.c.l.b16 %v4689
    %v7035 = vunpack.c.h.b16 %v4689
    %v7036 = vunpack.c.l.b16 %v4690
    %v7037 = vunpack.c.h.b16 %v4690
    %v7038 = vunpack.c.l.b16 %v4691
    %v7039 = vunpack.c.h.b16 %v4691
    %v7040 = vunpack.c.l.b16 %v4692
    %v7041 = vunpack.c.h.b16 %v4692
    %v7042 = vunpack.c.l.b16 %v4693
    %v7043 = vunpack.c.h.b16 %v4693
    %v7044 = vunpack.c.l.b16 %v4694
    %v7045 = vunpack.c.h.b16 %v4694
    %v7046 = vunpack.c.l.b16 %v4695
    %v7047 = vunpack.c.h.b16 %v4695
    %v7048 = vunpack.c.l.b16 %v4696
    %v7049 = vunpack.c.h.b16 %v4696
    %v7050 = vunpack.c.l.b16 %v4697
    %v7051 = vunpack.c.h.b16 %v4697
    %v7052 = vunpack.c.l.b16 %v4698
    %v7053 = vunpack.c.h.b16 %v4698
    %v7054 = vunpack.c.l.b16 %v4699
    %v7055 = vunpack.c.h.b16 %v4699
    %v7056 = vunpack.c.l.b16 %v4700
    %v7057 = vunpack.c.h.b16 %v4700
    %v7058 = vunpack.c.l.b16 %v4701
    %v7059 = vunpack.c.h.b16 %v4701
    %v7060 = vunpack.c.l.b16 %v4702
    %v7061 = vunpack.c.h.b16 %v4702
    %v7062 = vunpack.c.l.b16 %v4703
    %v7063 = vunpack.c.h.b16 %v4703
    %v7064 = vunpack.c.l.b16 %v4704
    %v7065 = vunpack.c.h.b16 %v4704
    %v7066 = vunpack.c.l.b16 %v4705
    %v7067 = vunpack.c.h.b16 %v4705
    %v7068 = vunpack.c.l.b16 %v4706
    %v7069 = vunpack.c.h.b16 %v4706
    %v7070 = vunpack.c.l.b16 %v4707
    %v7071 = vunpack.c.h.b16 %v4707
    %v7072 = vunpack.c.l.b16 %v4708
    %v7073 = vunpack.c.h.b16 %v4708
    %v7074 = vunpack.c.l.b16 %v4709
    %v7075 = vunpack.c.h.b16 %v4709
    %v7076 = vunpack.c.l.b16 %v4710
    %v7077 = vunpack.c.h.b16 %v4710
    %v7078 = vunpack.c.l.b16 %v4711
    %v7079 = vunpack.c.h.b16 %v4711
    %v7080 = vpack.c.b16 %v5556, %v5544
    %v7081 = vpack.c.b16 %v5557, %v5545
    %v7082 = vpack.c.b16 %v5558, %v5546
    %v7083 = vpack.c.b16 %v5559, %v5547
    %v7084 = vpack.c.b16 %v5560, %v5548
    %v7085 = vpack.c.b16 %v5561, %v5549
    %v7086 = vpack.c.b16 %v5562, %v5550
    %v7087 = vpack.c.b16 %v5563, %v5551
    %v7088 = vpack.c.b16 %v5564, %v5552
    %v7089 = vpack.c.b16 %v5565, %v5553
    %v7090 = vpack.c.b16 %v5566, %v5554
    %v7091 = vpack.c.b16 %v5567, %v5555
    %v7092 = vpack.c.b16 %v5580, %v5568
    %v7093 = vpack.c.b16 %v5581, %v5569
    %v7094 = vpack.c.b16 %v5582, %v5570
    %v7095 = vpack.c.b16 %v5583, %v5571
    %v7096 = vpack.c.b16 %v5584, %v5572
    %v7097 = vpack.c.b16 %v5585, %v5573
    %v7098 = vpack.c.b16 %v5586, %v5574
    %v7099 = vpack.c.b16 %v5587, %v5575
    %v7100 = vpack.c.b16 %v5588, %v5576
    %v7101 = vpack.c.b16 %v5589, %v5577
    %v7102 = vpack.c.b16 %v5590, %v5578
    %v7103 = vpack.c.b16 %v5591, %v5579
    %v7104 = vpack.c.b16 %v5604, %v5592
    %v7105 = vpack.c.b16 %v5605, %v5593
    %v7106 = vpack.c.b16 %v5606, %v5594
    %v7107 = vpack.c.b16 %v5607, %v5595
    %v7108 = vpack.c.b16 %v5608, %v5596
    %v7109 = vpack.c.b16 %v5609, %v5597
    %v7110 = vpack.c.b16 %v5610, %v5598
    %v7111 = vpack.c.b16 %v5611, %v5599
    %v7112 = vpack.c.b16 %v5612, %v5600
    %v7113 = vpack.c.b16 %v5613, %v5601
    %v7114 = vpack.c.b16 %v5614, %v5602
    %v7115 = vpack.c.b16 %v5615, %v5603
    %v7116 = vpack.c.b16 %v5628, %v5616
    %v7117 = vpack.c.b16 %v5629, %v5617
    %v7118 = vpack.c.b16 %v5630, %v5618
    %v7119 = vpack.c.b16 %v5631, %v5619
    %v7120 = vpack.c.b16 %v5632, %v5620
    %v7121 = vpack.c.b16 %v5633, %v5621
    %v7122 = vpack.c.b16 %v5634, %v5622
    %v7123 = vpack.c.b16 %v5635, %v5623
    %v7124 = vpack.c.b16 %v5636, %v5624
    %v7125 = vpack.c.b16 %v5637, %v5625
    %v7126 = vpack.c.b16 %v5638, %v5626
    %v7127 = vpack.c.b16 %v5639, %v5627
    %v7128 = vpack.c.b16 %v5652, %v5640
    %v7129 = vpack.c.b16 %v5653, %v5641
    %v7130 = vpack.c.b16 %v5654, %v5642
    %v7131 = vpack.c.b16 %v5655, %v5643
    %v7132 = vpack.c.b16 %v5656, %v5644
    %v7133 = vpack.c.b16 %v5657, %v5645
    %v7134 = vpack.c.b16 %v5658, %v5646
    %v7135 = vpack.c.b16 %v5659, %v5647
    %v7136 = vpack.c.b16 %v5660, %v5648
    %v7137 = vpack.c.b16 %v5661, %v5649
    %v7138 = vpack.c.b16 %v5662, %v5650
    %v7139 = vpack.c.b16 %v5663, %v5651
    %v7140 = vpack.c.b16 %v5676, %v5664
    %v7141 = vpack.c.b16 %v5677, %v5665
    %v7142 = vpack.c.b16 %v5678, %v5666
    %v7143 = vpack.c.b16 %v5679, %v5667
    %v7144 = vpack.c.b16 %v5680, %v5668
    %v7145 = vpack.c.b16 %v5681, %v5669
    %v7146 = vpack.c.b16 %v5682, %v5670
    %v7147 = vpack.c.b16 %v5683, %v5671
    %v7148 = vpack.c.b16 %v5684, %v5672
    %v7149 = vpack.c.b16 %v5685, %v5673
    %v7150 = vpack.c.b16 %v5686, %v5674
    %v7151 = vpack.c.b16 %v5687, %v5675
    %v7152 = vpack.c.b16 %v5700, %v5688
    %v7153 = vpack.c.b16 %v5701, %v5689
    %v7154 = vpack.c.b16 %v5702, %v5690
    %v7155 = vpack.c.b16 %v5703, %v5691
    %v7156 = vpack.c.b16 %v5704, %v5692
    %v7157 = vpack.c.b16 %v5705, %v5693
    %v7158 = vpack.c.b16 %v5706, %v5694
    %v7159 = vpack.c.b16 %v5707, %v5695
    %v7160 = vpack.c.b16 %v5708, %v5696
    %v7161 = vpack.c.b16 %v5709, %v5697
    %v7162 = vpack.c.b16 %v5710, %v5698
    %v7163 = vpack.c.b16 %v5711, %v5699
    %v7164 = vpack.c.b16 %v5724, %v5712
    %v7165 = vpack.c.b16 %v5725, %v5713
    %v7166 = vpack.c.b16 %v5726, %v5714
    %v7167 = vpack.c.b16 %v5727, %v5715
    %v7168 = vpack.c.b16 %v5728, %v5716
    %v7169 = vpack.c.b16 %v5729, %v5717
    %v7170 = vpack.c.b16 %v5730, %v5718
    %v7171 = vpack.c.b16 %v5731, %v5719
    %v7172 = vpack.c.b16 %v5732, %v5720
    %v7173 = vpack.c.b16 %v5733, %v5721
    %v7174 = vpack.c.b16 %v5734, %v5722
    %v7175 = vpack.c.b16 %v5735, %v5723
    %v7176 = vpack.c.b16 %v5748, %v5736
    %v7177 = vpack.c.b16 %v5749, %v5737
    %v7178 = vpack.c.b16 %v5750, %v5738
    %v7179 = vpack.c.b16 %v5751, %v5739
    %v7180 = vpack.c.b16 %v5752, %v5740
    %v7181 = vpack.c.b16 %v5753, %v5741
    %v7182 = vpack.c.b16 %v5754, %v5742
    %v7183 = vpack.c.b16 %v5755, %v5743
    %v7184 = vpack.c.b16 %v5756, %v5744
    %v7185 = vpack.c.b16 %v5757, %v5745
    %v7186 = vpack.c.b16 %v5758, %v5746
    %v7187 = vpack.c.b16 %v5759, %v5747
    %v7188 = vpack.c.b16 %v5772, %v5760
    %v7189 = vpack.c.b16 %v5773, %v5761
    %v7190 = vpack.c.b16 %v5774, %v5762
    %v7191 = vpack.c.b16 %v5775, %v5763
    %v7192 = vpack.c.b16 %v5776, %v5764
    %v7193 = vpack.c.b16 %v5777, %v5765
    %v7194 = vpack.c.b16 %v5778, %v5766
    %v7195 = vpack.c.b16 %v5779, %v5767
    %v7196 = vpack.c.b16 %v5780, %v5768
    %v7197 = vpack.c.b16 %v5781, %v5769
    %v7198 = vpack.c.b16 %v5782, %v5770
    %v7199 = vpack.c.b16 %v5783, %v5771
    %v7200 = vpack.c.b16 %v5796, %v5784
    %v7201 = vpack.c.b16 %v5797, %v5785
    %v7202 = vpack.c.b16 %v5798, %v5786
    %v7203 = vpack.c.b16 %v5799, %v5787
    %v7204 = vpack.c.b16 %v5800, %v5788
    %v7205 = vpack.c.b16 %v5801, %v5789
    %v7206 = vpack.c.b16 %v5802, %v5790
    %v7207 = vpack.c.b16 %v5803, %v5791
    %v7208 = vpack.c.b16 %v5804, %v5792
    %v7209 = vpack.c.b16 %v5805, %v5793
    %v7210 = vpack.c.b16 %v5806, %v5794
    %v7211 = vpack.c.b16 %v5807, %v5795
    %v7212 = vpack.c.b16 %v5820, %v5808
    %v7213 = vpack.c.b16 %v5821, %v5809
    %v7214 = vpack.c.b16 %v5822, %v5810
    %v7215 = vpack.c.b16 %v5823, %v5811
    %v7216 = vpack.c.b16 %v5824, %v5812
    %v7217 = vpack.c.b16 %v5825, %v5813
    %v7218 = vpack.c.b16 %v5826, %v5814
    %v7219 = vpack.c.b16 %v5827, %v5815
    %v7220 = vpack.c.b16 %v5828, %v5816
    %v7221 = vpack.c.b16 %v5829, %v5817
    %v7222 = vpack.c.b16 %v5830, %v5818
    %v7223 = vpack.c.b16 %v5831, %v5819
    %v7224 = vpack.c.b16 %v5844, %v5832
    %v7225 = vpack.c.b16 %v5845, %v5833
    %v7226 = vpack.c.b16 %v5846, %v5834
    %v7227 = vpack.c.b16 %v5847, %v5835
    %v7228 = vpack.c.b16 %v5848, %v5836
    %v7229 = vpack.c.b16 %v5849, %v5837
    %v7230 = vpack.c.b16 %v5850, %v5838
    %v7231 = vpack.c.b16 %v5851, %v5839
    %v7232 = vpack.c.b16 %v5852, %v5840
    %v7233 = vpack.c.b16 %v5853, %v5841
    %v7234 = vpack.c.b16 %v5854, %v5842
    %v7235 = vpack.c.b16 %v5855, %v5843
    %v7236 = vpack.c.b16 %v5868, %v5856
    %v7237 = vpack.c.b16 %v5869, %v5857
    %v7238 = vpack.c.b16 %v5870, %v5858
    %v7239 = vpack.c.b16 %v5871, %v5859
    %v7240 = vpack.c.b16 %v5872, %v5860
    %v7241 = vpack.c.b16 %v5873, %v5861
    %v7242 = vpack.c.b16 %v5874, %v5862
    %v7243 = vpack.c.b16 %v5875, %v5863
    %v7244 = vpack.c.b16 %v5876, %v5864
    %v7245 = vpack.c.b16 %v5877, %v5865
    %v7246 = vpack.c.b16 %v5878, %v5866
    %v7247 = vpack.c.b16 %v5879, %v5867
    %v7248 = vpack.c.b16 %v5892, %v5880
    %v7249 = vpack.c.b16 %v5893, %v5881
    %v7250 = vpack.c.b16 %v5894, %v5882
    %v7251 = vpack.c.b16 %v5895, %v5883
    %v7252 = vpack.c.b16 %v5896, %v5884
    %v7253 = vpack.c.b16 %v5897, %v5885
    %v7254 = vpack.c.b16 %v5898, %v5886
    %v7255 = vpack.c.b16 %v5899, %v5887
    %v7256 = vpack.c.b16 %v5900, %v5888
    %v7257 = vpack.c.b16 %v5901, %v5889
    %v7258 = vpack.c.b16 %v5902, %v5890
    %v7259 = vpack.c.b16 %v5903, %v5891
    %v7260 = vpack.c.b16 %v5916, %v5904
    %v7261 = vpack.c.b16 %v5917, %v5905
    %v7262 = vpack.c.b16 %v5918, %v5906
    %v7263 = vpack.c.b16 %v5919, %v5907
    %v7264 = vpack.c.b16 %v5920, %v5908
    %v7265 = vpack.c.b16 %v5921, %v5909
    %v7266 = vpack.c.b16 %v5922, %v5910
    %v7267 = vpack.c.b16 %v5923, %v5911
    %v7268 = vpack.c.b16 %v5924, %v5912
    %v7269 = vpack.c.b16 %v5925, %v5913
    %v7270 = vpack.c.b16 %v5926, %v5914
    %v7271 = vpack.c.b16 %v5927, %v5915
    %v7272 = vpack.c.b16 %v5940, %v5928
    %v7273 = vpack.c.b16 %v5941, %v5929
    %v7274 = vpack.c.b16 %v5942, %v5930
    %v7275 = vpack.c.b16 %v5943, %v5931
    %v7276 = vpack.c.b16 %v5944, %v5932
    %v7277 = vpack.c.b16 %v5945, %v5933
    %v7278 = vpack.c.b16 %v5946, %v5934
    %v7279 = vpack.c.b16 %v5947, %v5935
    %v7280 = vpack.c.b16 %v5948, %v5936
    %v7281 = vpack.c.b16 %v5949, %v5937
    %v7282 = vpack.c.b16 %v5950, %v5938
    %v7283 = vpack.c.b16 %v5951, %v5939
    %v7284 = vpack.c.b16 %v5964, %v5952
    %v7285 = vpack.c.b16 %v5965, %v5953
    %v7286 = vpack.c.b16 %v5966, %v5954
    %v7287 = vpack.c.b16 %v5967, %v5955
    %v7288 = vpack.c.b16 %v5968, %v5956
    %v7289 = vpack.c.b16 %v5969, %v5957
    %v7290 = vpack.c.b16 %v5970, %v5958
    %v7291 = vpack.c.b16 %v5971, %v5959
    %v7292 = vpack.c.b16 %v5972, %v5960
    %v7293 = vpack.c.b16 %v5973, %v5961
    %v7294 = vpack.c.b16 %v5974, %v5962
    %v7295 = vpack.c.b16 %v5975, %v5963
    %v7296 = vpack.c.b16 %v5988, %v5976
    %v7297 = vpack.c.b16 %v5989, %v5977
    %v7298 = vpack.c.b16 %v5990, %v5978
    %v7299 = vpack.c.b16 %v5991, %v5979
    %v7300 = vpack.c.b16 %v5992, %v5980
    %v7301 = vpack.c.b16 %v5993, %v5981
    %v7302 = vpack.c.b16 %v5994, %v5982
    %v7303 = vpack.c.b16 %v5995, %v5983
    %v7304 = vpack.c.b16 %v5996, %v5984
    %v7305 = vpack.c.b16 %v5997, %v5985
    %v7306 = vpack.c.b16 %v5998, %v5986
    %v7307 = vpack.c.b16 %v5999, %v5987
    %v7308 = vpack.c.b16 %v6012, %v6000
    %v7309 = vpack.c.b16 %v6013, %v6001
    %v7310 = vpack.c.b16 %v6014, %v6002
    %v7311 = vpack.c.b16 %v6015, %v6003
    %v7312 = vpack.c.b16 %v6016, %v6004
    %v7313 = vpack.c.b16 %v6017, %v6005
    %v7314 = vpack.c.b16 %v6018, %v6006
    %v7315 = vpack.c.b16 %v6019, %v6007
    %v7316 = vpack.c.b16 %v6020, %v6008
    %v7317 = vpack.c.b16 %v6021, %v6009
    %v7318 = vpack.c.b16 %v6022, %v6010
    %v7319 = vpack.c.b16 %v6023, %v6011
    %v7320 = vpack.c.b16 %v6036, %v6024
    %v7321 = vpack.c.b16 %v6037, %v6025
    %v7322 = vpack.c.b16 %v6038, %v6026
    %v7323 = vpack.c.b16 %v6039, %v6027
    %v7324 = vpack.c.b16 %v6040, %v6028
    %v7325 = vpack.c.b16 %v6041, %v6029
    %v7326 = vpack.c.b16 %v6042, %v6030
    %v7327 = vpack.c.b16 %v6043, %v6031
    %v7328 = vpack.c.b16 %v6044, %v6032
    %v7329 = vpack.c.b16 %v6045, %v6033
    %v7330 = vpack.c.b16 %v6046, %v6034
    %v7331 = vpack.c.b16 %v6047, %v6035
    %v7332 = vpack.c.b16 %v6060, %v6048
    %v7333 = vpack.c.b16 %v6061, %v6049
    %v7334 = vpack.c.b16 %v6062, %v6050
    %v7335 = vpack.c.b16 %v6063, %v6051
    %v7336 = vpack.c.b16 %v6064, %v6052
    %v7337 = vpack.c.b16 %v6065, %v6053
    %v7338 = vpack.c.b16 %v6066, %v6054
    %v7339 = vpack.c.b16 %v6067, %v6055
    %v7340 = vpack.c.b16 %v6068, %v6056
    %v7341 = vpack.c.b16 %v6069, %v6057
    %v7342 = vpack.c.b16 %v6070, %v6058
    %v7343 = vpack.c.b16 %v6071, %v6059
    %v7344 = vpack.c.b16 %v6084, %v6072
    %v7345 = vpack.c.b16 %v6085, %v6073
    %v7346 = vpack.c.b16 %v6086, %v6074
    %v7347 = vpack.c.b16 %v6087, %v6075
    %v7348 = vpack.c.b16 %v6088, %v6076
    %v7349 = vpack.c.b16 %v6089, %v6077
    %v7350 = vpack.c.b16 %v6090, %v6078
    %v7351 = vpack.c.b16 %v6091, %v6079
    %v7352 = vpack.c.b16 %v6092, %v6080
    %v7353 = vpack.c.b16 %v6093, %v6081
    %v7354 = vpack.c.b16 %v6094, %v6082
    %v7355 = vpack.c.b16 %v6095, %v6083
    %v7356 = vpack.c.b16 %v6108, %v6096
    %v7357 = vpack.c.b16 %v6109, %v6097
    %v7358 = vpack.c.b16 %v6110, %v6098
    %v7359 = vpack.c.b16 %v6111, %v6099
    %v7360 = vpack.c.b16 %v6112, %v6100
    %v7361 = vpack.c.b16 %v6113, %v6101
    %v7362 = vpack.c.b16 %v6114, %v6102
    %v7363 = vpack.c.b16 %v6115, %v6103
    %v7364 = vpack.c.b16 %v6116, %v6104
    %v7365 = vpack.c.b16 %v6117, %v6105
    %v7366 = vpack.c.b16 %v6118, %v6106
    %v7367 = vpack.c.b16 %v6119, %v6107
    %v7368 = vpack.c.b16 %v6132, %v6120
    %v7369 = vpack.c.b16 %v6133, %v6121
    %v7370 = vpack.c.b16 %v6134, %v6122
    %v7371 = vpack.c.b16 %v6135, %v6123
    %v7372 = vpack.c.b16 %v6136, %v6124
    %v7373 = vpack.c.b16 %v6137, %v6125
    %v7374 = vpack.c.b16 %v6138, %v6126
    %v7375 = vpack.c.b16 %v6139, %v6127
    %v7376 = vpack.c.b16 %v6140, %v6128
    %v7377 = vpack.c.b16 %v6141, %v6129
    %v7378 = vpack.c.b16 %v6142, %v6130
    %v7379 = vpack.c.b16 %v6143, %v6131
    %v7380 = vpack.c.b16 %v6156, %v6144
    %v7381 = vpack.c.b16 %v6157, %v6145
    %v7382 = vpack.c.b16 %v6158, %v6146
    %v7383 = vpack.c.b16 %v6159, %v6147
    %v7384 = vpack.c.b16 %v6160, %v6148
    %v7385 = vpack.c.b16 %v6161, %v6149
    %v7386 = vpack.c.b16 %v6162, %v6150
    %v7387 = vpack.c.b16 %v6163, %v6151
    %v7388 = vpack.c.b16 %v6164, %v6152
    %v7389 = vpack.c.b16 %v6165, %v6153
    %v7390 = vpack.c.b16 %v6166, %v6154
    %v7391 = vpack.c.b16 %v6167, %v6155
    %v7392 = vpack.c.b16 %v6180, %v6168
    %v7393 = vpack.c.b16 %v6181, %v6169
    %v7394 = vpack.c.b16 %v6182, %v6170
    %v7395 = vpack.c.b16 %v6183, %v6171
    %v7396 = vpack.c.b16 %v6184, %v6172
    %v7397 = vpack.c.b16 %v6185, %v6173
    %v7398 = vpack.c.b16 %v6186, %v6174
    %v7399 = vpack.c.b16 %v6187, %v6175
    %v7400 = vpack.c.b16 %v6188, %v6176
    %v7401 = vpack.c.b16 %v6189, %v6177
    %v7402 = vpack.c.b16 %v6190, %v6178
    %v7403 = vpack.c.b16 %v6191, %v6179
    %v7404 = vpack.c.b16 %v6204, %v6192
    %v7405 = vpack.c.b16 %v6205, %v6193
    %v7406 = vpack.c.b16 %v6206, %v6194
    %v7407 = vpack.c.b16 %v6207, %v6195
    %v7408 = vpack.c.b16 %v6208, %v6196
    %v7409 = vpack.c.b16 %v6209, %v6197
    %v7410 = vpack.c.b16 %v6210, %v6198
    %v7411 = vpack.c.b16 %v6211, %v6199
    %v7412 = vpack.c.b16 %v6212, %v6200
    %v7413 = vpack.c.b16 %v6213, %v6201
    %v7414 = vpack.c.b16 %v6214, %v6202
    %v7415 = vpack.c.b16 %v6215, %v6203
    %v7416 = vpack.c.b16 %v6228, %v6216
    %v7417 = vpack.c.b16 %v6229, %v6217
    %v7418 = vpack.c.b16 %v6230, %v6218
    %v7419 = vpack.c.b16 %v6231, %v6219
    %v7420 = vpack.c.b16 %v6232, %v6220
    %v7421 = vpack.c.b16 %v6233, %v6221
    %v7422 = vpack.c.b16 %v6234, %v6222
    %v7423 = vpack.c.b16 %v6235, %v6223
    %v7424 = vpack.c.b16 %v6236, %v6224
    %v7425 = vpack.c.b16 %v6237, %v6225
    %v7426 = vpack.c.b16 %v6238, %v6226
    %v7427 = vpack.c.b16 %v6239, %v6227
    %v7428 = vpack.c.b16 %v6252, %v6240
    %v7429 = vpack.c.b16 %v6253, %v6241
    %v7430 = vpack.c.b16 %v6254, %v6242
    %v7431 = vpack.c.b16 %v6255, %v6243
    %v7432 = vpack.c.b16 %v6256, %v6244
    %v7433 = vpack.c.b16 %v6257, %v6245
    %v7434 = vpack.c.b16 %v6258, %v6246
    %v7435 = vpack.c.b16 %v6259, %v6247
    %v7436 = vpack.c.b16 %v6260, %v6248
    %v7437 = vpack.c.b16 %v6261, %v6249
    %v7438 = vpack.c.b16 %v6262, %v6250
    %v7439 = vpack.c.b16 %v6263, %v6251
    %v7440 = vpack.c.b16 %v6276, %v6264
    %v7441 = vpack.c.b16 %v6277, %v6265
    %v7442 = vpack.c.b16 %v6278, %v6266
    %v7443 = vpack.c.b16 %v6279, %v6267
    %v7444 = vpack.c.b16 %v6280, %v6268
    %v7445 = vpack.c.b16 %v6281, %v6269
    %v7446 = vpack.c.b16 %v6282, %v6270
    %v7447 = vpack.c.b16 %v6283, %v6271
    %v7448 = vpack.c.b16 %v6284, %v6272
    %v7449 = vpack.c.b16 %v6285, %v6273
    %v7450 = vpack.c.b16 %v6286, %v6274
    %v7451 = vpack.c.b16 %v6287, %v6275
    %v7452 = vpack.c.b16 %v6300, %v6288
    %v7453 = vpack.c.b16 %v6301, %v6289
    %v7454 = vpack.c.b16 %v6302, %v6290
    %v7455 = vpack.c.b16 %v6303, %v6291
    %v7456 = vpack.c.b16 %v6304, %v6292
    %v7457 = vpack.c.b16 %v6305, %v6293
    %v7458 = vpack.c.b16 %v6306, %v6294
    %v7459 = vpack.c.b16 %v6307, %v6295
    %v7460 = vpack.c.b16 %v6308, %v6296
    %v7461 = vpack.c.b16 %v6309, %v6297
    %v7462 = vpack.c.b16 %v6310, %v6298
    %v7463 = vpack.c.b16 %v6311, %v6299
    %v7464 = vpack.c.b16 %v6324, %v6312
    %v7465 = vpack.c.b16 %v6325, %v6313
    %v7466 = vpack.c.b16 %v6326, %v6314
    %v7467 = vpack.c.b16 %v6327, %v6315
    %v7468 = vpack.c.b16 %v6328, %v6316
    %v7469 = vpack.c.b16 %v6329, %v6317
    %v7470 = vpack.c.b16 %v6330, %v6318
    %v7471 = vpack.c.b16 %v6331, %v6319
    %v7472 = vpack.c.b16 %v6332, %v6320
    %v7473 = vpack.c.b16 %v6333, %v6321
    %v7474 = vpack.c.b16 %v6334, %v6322
    %v7475 = vpack.c.b16 %v6335, %v6323
    %v7476 = vpack.c.b16 %v6348, %v6336
    %v7477 = vpack.c.b16 %v6349, %v6337
    %v7478 = vpack.c.b16 %v6350, %v6338
    %v7479 = vpack.c.b16 %v6351, %v6339
    %v7480 = vpack.c.b16 %v6352, %v6340
    %v7481 = vpack.c.b16 %v6353, %v6341
    %v7482 = vpack.c.b16 %v6354, %v6342
    %v7483 = vpack.c.b16 %v6355, %v6343
    %v7484 = vpack.c.b16 %v6356, %v6344
    %v7485 = vpack.c.b16 %v6357, %v6345
    %v7486 = vpack.c.b16 %v6358, %v6346
    %v7487 = vpack.c.b16 %v6359, %v6347
    %v7488 = vpack.c.b16 %v6372, %v6360
    %v7489 = vpack.c.b16 %v6373, %v6361
    %v7490 = vpack.c.b16 %v6374, %v6362
    %v7491 = vpack.c.b16 %v6375, %v6363
    %v7492 = vpack.c.b16 %v6376, %v6364
    %v7493 = vpack.c.b16 %v6377, %v6365
    %v7494 = vpack.c.b16 %v6378, %v6366
    %v7495 = vpack.c.b16 %v6379, %v6367
    %v7496 = vpack.c.b16 %v6380, %v6368
    %v7497 = vpack.c.b16 %v6381, %v6369
    %v7498 = vpack.c.b16 %v6382, %v6370
    %v7499 = vpack.c.b16 %v6383, %v6371
    %v7500 = vpack.c.b16 %v6396, %v6384
    %v7501 = vpack.c.b16 %v6397, %v6385
    %v7502 = vpack.c.b16 %v6398, %v6386
    %v7503 = vpack.c.b16 %v6399, %v6387
    %v7504 = vpack.c.b16 %v6400, %v6388
    %v7505 = vpack.c.b16 %v6401, %v6389
    %v7506 = vpack.c.b16 %v6402, %v6390
    %v7507 = vpack.c.b16 %v6403, %v6391
    %v7508 = vpack.c.b16 %v6404, %v6392
    %v7509 = vpack.c.b16 %v6405, %v6393
    %v7510 = vpack.c.b16 %v6406, %v6394
    %v7511 = vpack.c.b16 %v6407, %v6395
    %v7512 = vpack.c.b16 %v6420, %v6408
    %v7513 = vpack.c.b16 %v6421, %v6409
    %v7514 = vpack.c.b16 %v6422, %v6410
    %v7515 = vpack.c.b16 %v6423, %v6411
    %v7516 = vpack.c.b16 %v6424, %v6412
    %v7517 = vpack.c.b16 %v6425, %v6413
    %v7518 = vpack.c.b16 %v6426, %v6414
    %v7519 = vpack.c.b16 %v6427, %v6415
    %v7520 = vpack.c.b16 %v6428, %v6416
    %v7521 = vpack.c.b16 %v6429, %v6417
    %v7522 = vpack.c.b16 %v6430, %v6418
    %v7523 = vpack.c.b16 %v6431, %v6419
    %v7524 = vpack.c.b16 %v6444, %v6432
    %v7525 = vpack.c.b16 %v6445, %v6433
    %v7526 = vpack.c.b16 %v6446, %v6434
    %v7527 = vpack.c.b16 %v6447, %v6435
    %v7528 = vpack.c.b16 %v6448, %v6436
    %v7529 = vpack.c.b16 %v6449, %v6437
    %v7530 = vpack.c.b16 %v6450, %v6438
    %v7531 = vpack.c.b16 %v6451, %v6439
    %v7532 = vpack.c.b16 %v6452, %v6440
    %v7533 = vpack.c.b16 %v6453, %v6441
    %v7534 = vpack.c.b16 %v6454, %v6442
    %v7535 = vpack.c.b16 %v6455, %v6443
    %v7536 = vpack.c.b16 %v6468, %v6456
    %v7537 = vpack.c.b16 %v6469, %v6457
    %v7538 = vpack.c.b16 %v6470, %v6458
    %v7539 = vpack.c.b16 %v6471, %v6459
    %v7540 = vpack.c.b16 %v6472, %v6460
    %v7541 = vpack.c.b16 %v6473, %v6461
    %v7542 = vpack.c.b16 %v6474, %v6462
    %v7543 = vpack.c.b16 %v6475, %v6463
    %v7544 = vpack.c.b16 %v6476, %v6464
    %v7545 = vpack.c.b16 %v6477, %v6465
    %v7546 = vpack.c.b16 %v6478, %v6466
    %v7547 = vpack.c.b16 %v6479, %v6467
    %v7548 = vpack.c.b16 %v6492, %v6480
    %v7549 = vpack.c.b16 %v6493, %v6481
    %v7550 = vpack.c.b16 %v6494, %v6482
    %v7551 = vpack.c.b16 %v6495, %v6483
    %v7552 = vpack.c.b16 %v6496, %v6484
    %v7553 = vpack.c.b16 %v6497, %v6485
    %v7554 = vpack.c.b16 %v6498, %v6486
    %v7555 = vpack.c.b16 %v6499, %v6487
    %v7556 = vpack.c.b16 %v6500, %v6488
    %v7557 = vpack.c.b16 %v6501, %v6489
    %v7558 = vpack.c.b16 %v6502, %v6490
    %v7559 = vpack.c.b16 %v6503, %v6491
    %v7560 = vpack.c.b16 %v6516, %v6504
    %v7561 = vpack.c.b16 %v6517, %v6505
    %v7562 = vpack.c.b16 %v6518, %v6506
    %v7563 = vpack.c.b16 %v6519, %v6507
    %v7564 = vpack.c.b16 %v6520, %v6508
    %v7565 = vpack.c.b16 %v6521, %v6509
    %v7566 = vpack.c.b16 %v6522, %v6510
    %v7567 = vpack.c.b16 %v6523, %v6511
    %v7568 = vpack.c.b16 %v6524, %v6512
    %v7569 = vpack.c.b16 %v6525, %v6513
    %v7570 = vpack.c.b16 %v6526, %v6514
    %v7571 = vpack.c.b16 %v6527, %v6515
    %v7572 = vpack.c.b16 %v6540, %v6528
    %v7573 = vpack.c.b16 %v6541, %v6529
    %v7574 = vpack.c.b16 %v6542, %v6530
    %v7575 = vpack.c.b16 %v6543, %v6531
    %v7576 = vpack.c.b16 %v6544, %v6532
    %v7577 = vpack.c.b16 %v6545, %v6533
    %v7578 = vpack.c.b16 %v6546, %v6534
    %v7579 = vpack.c.b16 %v6547, %v6535
    %v7580 = vpack.c.b16 %v6548, %v6536
    %v7581 = vpack.c.b16 %v6549, %v6537
    %v7582 = vpack.c.b16 %v6550, %v6538
    %v7583 = vpack.c.b16 %v6551, %v6539
    %v7584 = vpack.c.b16 %v6564, %v6552
    %v7585 = vpack.c.b16 %v6565, %v6553
    %v7586 = vpack.c.b16 %v6566, %v6554
    %v7587 = vpack.c.b16 %v6567, %v6555
    %v7588 = vpack.c.b16 %v6568, %v6556
    %v7589 = vpack.c.b16 %v6569, %v6557
    %v7590 = vpack.c.b16 %v6570, %v6558
    %v7591 = vpack.c.b16 %v6571, %v6559
    %v7592 = vpack.c.b16 %v6572, %v6560
    %v7593 = vpack.c.b16 %v6573, %v6561
    %v7594 = vpack.c.b16 %v6574, %v6562
    %v7595 = vpack.c.b16 %v6575, %v6563
    %v7596 = vpack.c.b16 %v6588, %v6576
    %v7597 = vpack.c.b16 %v6589, %v6577
    %v7598 = vpack.c.b16 %v6590, %v6578
    %v7599 = vpack.c.b16 %v6591, %v6579
    %v7600 = vpack.c.b16 %v6592, %v6580
    %v7601 = vpack.c.b16 %v6593, %v6581
    %v7602 = vpack.c.b16 %v6594, %v6582
    %v7603 = vpack.c.b16 %v6595, %v6583
    %v7604 = vpack.c.b16 %v6596, %v6584
    %v7605 = vpack.c.b16 %v6597, %v6585
    %v7606 = vpack.c.b16 %v6598, %v6586
    %v7607 = vpack.c.b16 %v6599, %v6587
    %v7608 = vpack.c.b16 %v6612, %v6600
    %v7609 = vpack.c.b16 %v6613, %v6601
    %v7610 = vpack.c.b16 %v6614, %v6602
    %v7611 = vpack.c.b16 %v6615, %v6603
    %v7612 = vpack.c.b16 %v6616, %v6604
    %v7613 = vpack.c.b16 %v6617, %v6605
    %v7614 = vpack.c.b16 %v6618, %v6606
    %v7615 = vpack.c.b16 %v6619, %v6607
    %v7616 = vpack.c.b16 %v6620, %v6608
    %v7617 = vpack.c.b16 %v6621, %v6609
    %v7618 = vpack.c.b16 %v6622, %v6610
    %v7619 = vpack.c.b16 %v6623, %v6611
    %v7620 = vpack.c.b16 %v6636, %v6624
    %v7621 = vpack.c.b16 %v6637, %v6625
    %v7622 = vpack.c.b16 %v6638, %v6626
    %v7623 = vpack.c.b16 %v6639, %v6627
    %v7624 = vpack.c.b16 %v6640, %v6628
    %v7625 = vpack.c.b16 %v6641, %v6629
    %v7626 = vpack.c.b16 %v6642, %v6630
    %v7627 = vpack.c.b16 %v6643, %v6631
    %v7628 = vpack.c.b16 %v6644, %v6632
    %v7629 = vpack.c.b16 %v6645, %v6633
    %v7630 = vpack.c.b16 %v6646, %v6634
    %v7631 = vpack.c.b16 %v6647, %v6635
    %v7632 = vpack.c.b16 %v6660, %v6648
    %v7633 = vpack.c.b16 %v6661, %v6649
    %v7634 = vpack.c.b16 %v6662, %v6650
    %v7635 = vpack.c.b16 %v6663, %v6651
    %v7636 = vpack.c.b16 %v6664, %v6652
    %v7637 = vpack.c.b16 %v6665, %v6653
    %v7638 = vpack.c.b16 %v6666, %v6654
    %v7639 = vpack.c.b16 %v6667, %v6655
    %v7640 = vpack.c.b16 %v6668, %v6656
    %v7641 = vpack.c.b16 %v6669, %v6657
    %v7642 = vpack.c.b16 %v6670, %v6658
    %v7643 = vpack.c.b16 %v6671, %v6659
    %v7644 = vpack.c.b16 %v6684, %v6672
    %v7645 = vpack.c.b16 %v6685, %v6673
    %v7646 = vpack.c.b16 %v6686, %v6674
    %v7647 = vpack.c.b16 %v6687, %v6675
    %v7648 = vpack.c.b16 %v6688, %v6676
    %v7649 = vpack.c.b16 %v6689, %v6677
    %v7650 = vpack.c.b16 %v6690, %v6678
    %v7651 = vpack.c.b16 %v6691, %v6679
    %v7652 = vpack.c.b16 %v6692, %v6680
    %v7653 = vpack.c.b16 %v6693, %v6681
    %v7654 = vpack.c.b16 %v6694, %v6682
    %v7655 = vpack.c.b16 %v6695, %v6683
    %v7656 = vpack.c.b16 %v6708, %v6696
    %v7657 = vpack.c.b16 %v6709, %v6697
    %v7658 = vpack.c.b16 %v6710, %v6698
    %v7659 = vpack.c.b16 %v6711, %v6699
    %v7660 = vpack.c.b16 %v6712, %v6700
    %v7661 = vpack.c.b16 %v6713, %v6701
    %v7662 = vpack.c.b16 %v6714, %v6702
    %v7663 = vpack.c.b16 %v6715, %v6703
    %v7664 = vpack.c.b16 %v6716, %v6704
    %v7665 = vpack.c.b16 %v6717, %v6705
    %v7666 = vpack.c.b16 %v6718, %v6706
    %v7667 = vpack.c.b16 %v6719, %v6707
    %v7668 = vpack.c.b16 %v6732, %v6720
    %v7669 = vpack.c.b16 %v6733, %v6721
    %v7670 = vpack.c.b16 %v6734, %v6722
    %v7671 = vpack.c.b16 %v6735, %v6723
    %v7672 = vpack.c.b16 %v6736, %v6724
    %v7673 = vpack.c.b16 %v6737, %v6725
    %v7674 = vpack.c.b16 %v6738, %v6726
    %v7675 = vpack.c.b16 %v6739, %v6727
    %v7676 = vpack.c.b16 %v6740, %v6728
    %v7677 = vpack.c.b16 %v6741, %v6729
    %v7678 = vpack.c.b16 %v6742, %v6730
    %v7679 = vpack.c.b16 %v6743, %v6731
    %v7680 = vpack.c.b16 %v6756, %v6744
    %v7681 = vpack.c.b16 %v6757, %v6745
    %v7682 = vpack.c.b16 %v6758, %v6746
    %v7683 = vpack.c.b16 %v6759, %v6747
    %v7684 = vpack.c.b16 %v6760, %v6748
    %v7685 = vpack.c.b16 %v6761, %v6749
    %v7686 = vpack.c.b16 %v6762, %v6750
    %v7687 = vpack.c.b16 %v6763, %v6751
    %v7688 = vpack.c.b16 %v6764, %v6752
    %v7689 = vpack.c.b16 %v6765, %v6753
    %v7690 = vpack.c.b16 %v6766, %v6754
    %v7691 = vpack.c.b16 %v6767, %v6755
    %v7692 = vpack.c.b16 %v6780, %v6768
    %v7693 = vpack.c.b16 %v6781, %v6769
    %v7694 = vpack.c.b16 %v6782, %v6770
    %v7695 = vpack.c.b16 %v6783, %v6771
    %v7696 = vpack.c.b16 %v6784, %v6772
    %v7697 = vpack.c.b16 %v6785, %v6773
    %v7698 = vpack.c.b16 %v6786, %v6774
    %v7699 = vpack.c.b16 %v6787, %v6775
    %v7700 = vpack.c.b16 %v6788, %v6776
    %v7701 = vpack.c.b16 %v6789, %v6777
    %v7702 = vpack.c.b16 %v6790, %v6778
    %v7703 = vpack.c.b16 %v6791, %v6779
    %v7704 = vpack.c.b16 %v6804, %v6792
    %v7705 = vpack.c.b16 %v6805, %v6793
    %v7706 = vpack.c.b16 %v6806, %v6794
    %v7707 = vpack.c.b16 %v6807, %v6795
    %v7708 = vpack.c.b16 %v6808, %v6796
    %v7709 = vpack.c.b16 %v6809, %v6797
    %v7710 = vpack.c.b16 %v6810, %v6798
    %v7711 = vpack.c.b16 %v6811, %v6799
    %v7712 = vpack.c.b16 %v6812, %v6800
    %v7713 = vpack.c.b16 %v6813, %v6801
    %v7714 = vpack.c.b16 %v6814, %v6802
    %v7715 = vpack.c.b16 %v6815, %v6803
    %v7716 = vpack.c.b16 %v6828, %v6816
    %v7717 = vpack.c.b16 %v6829, %v6817
    %v7718 = vpack.c.b16 %v6830, %v6818
    %v7719 = vpack.c.b16 %v6831, %v6819
    %v7720 = vpack.c.b16 %v6832, %v6820
    %v7721 = vpack.c.b16 %v6833, %v6821
    %v7722 = vpack.c.b16 %v6834, %v6822
    %v7723 = vpack.c.b16 %v6835, %v6823
    %v7724 = vpack.c.b16 %v6836, %v6824
    %v7725 = vpack.c.b16 %v6837, %v6825
    %v7726 = vpack.c.b16 %v6838, %v6826
    %v7727 = vpack.c.b16 %v6839, %v6827
    %v7728 = vpack.c.b16 %v6852, %v6840
    %v7729 = vpack.c.b16 %v6853, %v6841
    %v7730 = vpack.c.b16 %v6854, %v6842
    %v7731 = vpack.c.b16 %v6855, %v6843
    %v7732 = vpack.c.b16 %v6856, %v6844
    %v7733 = vpack.c.b16 %v6857, %v6845
    %v7734 = vpack.c.b16 %v6858, %v6846
    %v7735 = vpack.c.b16 %v6859, %v6847
    %v7736 = vpack.c.b16 %v6860, %v6848
    %v7737 = vpack.c.b16 %v6861, %v6849
    %v7738 = vpack.c.b16 %v6862, %v6850
    %v7739 = vpack.c.b16 %v6863, %v6851
    %v7740 = vpack.c.b16 %v6876, %v6864
    %v7741 = vpack.c.b16 %v6877, %v6865
    %v7742 = vpack.c.b16 %v6878, %v6866
    %v7743 = vpack.c.b16 %v6879, %v6867
    %v7744 = vpack.c.b16 %v6880, %v6868
    %v7745 = vpack.c.b16 %v6881, %v6869
    %v7746 = vpack.c.b16 %v6882, %v6870
    %v7747 = vpack.c.b16 %v6883, %v6871
    %v7748 = vpack.c.b16 %v6884, %v6872
    %v7749 = vpack.c.b16 %v6885, %v6873
    %v7750 = vpack.c.b16 %v6886, %v6874
    %v7751 = vpack.c.b16 %v6887, %v6875
    %v7752 = vpack.c.b16 %v6900, %v6888
    %v7753 = vpack.c.b16 %v6901, %v6889
    %v7754 = vpack.c.b16 %v6902, %v6890
    %v7755 = vpack.c.b16 %v6903, %v6891
    %v7756 = vpack.c.b16 %v6904, %v6892
    %v7757 = vpack.c.b16 %v6905, %v6893
    %v7758 = vpack.c.b16 %v6906, %v6894
    %v7759 = vpack.c.b16 %v6907, %v6895
    %v7760 = vpack.c.b16 %v6908, %v6896
    %v7761 = vpack.c.b16 %v6909, %v6897
    %v7762 = vpack.c.b16 %v6910, %v6898
    %v7763 = vpack.c.b16 %v6911, %v6899
    %v7764 = vpack.c.b16 %v6924, %v6912
    %v7765 = vpack.c.b16 %v6925, %v6913
    %v7766 = vpack.c.b16 %v6926, %v6914
    %v7767 = vpack.c.b16 %v6927, %v6915
    %v7768 = vpack.c.b16 %v6928, %v6916
    %v7769 = vpack.c.b16 %v6929, %v6917
    %v7770 = vpack.c.b16 %v6930, %v6918
    %v7771 = vpack.c.b16 %v6931, %v6919
    %v7772 = vpack.c.b16 %v6932, %v6920
    %v7773 = vpack.c.b16 %v6933, %v6921
    %v7774 = vpack.c.b16 %v6934, %v6922
    %v7775 = vpack.c.b16 %v6935, %v6923
    %v7776 = vpack.c.b16 %v6948, %v6936
    %v7777 = vpack.c.b16 %v6949, %v6937
    %v7778 = vpack.c.b16 %v6950, %v6938
    %v7779 = vpack.c.b16 %v6951, %v6939
    %v7780 = vpack.c.b16 %v6952, %v6940
    %v7781 = vpack.c.b16 %v6953, %v6941
    %v7782 = vpack.c.b16 %v6954, %v6942
    %v7783 = vpack.c.b16 %v6955, %v6943
    %v7784 = vpack.c.b16 %v6956, %v6944
    %v7785 = vpack.c.b16 %v6957, %v6945
    %v7786 = vpack.c.b16 %v6958, %v6946
    %v7787 = vpack.c.b16 %v6959, %v6947
    %v7788 = vpack.c.b16 %v6972, %v6960
    %v7789 = vpack.c.b16 %v6973, %v6961
    %v7790 = vpack.c.b16 %v6974, %v6962
    %v7791 = vpack.c.b16 %v6975, %v6963
    %v7792 = vpack.c.b16 %v6976, %v6964
    %v7793 = vpack.c.b16 %v6977, %v6965
    %v7794 = vpack.c.b16 %v6978, %v6966
    %v7795 = vpack.c.b16 %v6979, %v6967
    %v7796 = vpack.c.b16 %v6980, %v6968
    %v7797 = vpack.c.b16 %v6981, %v6969
    %v7798 = vpack.c.b16 %v6982, %v6970
    %v7799 = vpack.c.b16 %v6983, %v6971
    %v7800 = vpack.c.b16 %v6996, %v6984
    %v7801 = vpack.c.b16 %v6997, %v6985
    %v7802 = vpack.c.b16 %v6998, %v6986
    %v7803 = vpack.c.b16 %v6999, %v6987
    %v7804 = vpack.c.b16 %v7000, %v6988
    %v7805 = vpack.c.b16 %v7001, %v6989
    %v7806 = vpack.c.b16 %v7002, %v6990
    %v7807 = vpack.c.b16 %v7003, %v6991
    %v7808 = vpack.c.b16 %v7004, %v6992
    %v7809 = vpack.c.b16 %v7005, %v6993
    %v7810 = vpack.c.b16 %v7006, %v6994
    %v7811 = vpack.c.b16 %v7007, %v6995
    %v7812 = vpack.c.b16 %v7020, %v7008
    %v7813 = vpack.c.b16 %v7021, %v7009
    %v7814 = vpack.c.b16 %v7022, %v7010
    %v7815 = vpack.c.b16 %v7023, %v7011
    %v7816 = vpack.c.b16 %v7024, %v7012
    %v7817 = vpack.c.b16 %v7025, %v7013
    %v7818 = vpack.c.b16 %v7026, %v7014
    %v7819 = vpack.c.b16 %v7027, %v7015
    %v7820 = vpack.c.b16 %v7028, %v7016
    %v7821 = vpack.c.b16 %v7029, %v7017
    %v7822 = vpack.c.b16 %v7030, %v7018
    %v7823 = vpack.c.b16 %v7031, %v7019
    %v7824 = vpack.c.b16 %v7044, %v7032
    %v7825 = vpack.c.b16 %v7045, %v7033
    %v7826 = vpack.c.b16 %v7046, %v7034
    %v7827 = vpack.c.b16 %v7047, %v7035
    %v7828 = vpack.c.b16 %v7048, %v7036
    %v7829 = vpack.c.b16 %v7049, %v7037
    %v7830 = vpack.c.b16 %v7050, %v7038
    %v7831 = vpack.c.b16 %v7051, %v7039
    %v7832 = vpack.c.b16 %v7052, %v7040
    %v7833 = vpack.c.b16 %v7053, %v7041
    %v7834 = vpack.c.b16 %v7054, %v7042
    %v7835 = vpack.c.b16 %v7055, %v7043
    %v7836 = vpack.c.b16 %v7068, %v7056
    %v7837 = vpack.c.b16 %v7069, %v7057
    %v7838 = vpack.c.b16 %v7070, %v7058
    %v7839 = vpack.c.b16 %v7071, %v7059
    %v7840 = vpack.c.b16 %v7072, %v7060
    %v7841 = vpack.c.b16 %v7073, %v7061
    %v7842 = vpack.c.b16 %v7074, %v7062
    %v7843 = vpack.c.b16 %v7075, %v7063
    %v7844 = vpack.c.b16 %v7076, %v7064
    %v7845 = vpack.c.b16 %v7077, %v7065
    %v7846 = vpack.c.b16 %v7078, %v7066
    %v7847 = vpack.c.b16 %v7079, %v7067
    %8616 = vmatprep.subr.bf16.mxu0 %v7081
    %8617 = vmatpush1.bf16.msra.mxu0 %v7080
    %8618 = vmatprep.subr.bf16.mxu0 %v7093
    %8619 = vmatpush1.bf16.msra.mxu0 %v7092
    %8620 = vmatprep.subr.bf16.mxu0 %v7105
    %8621 = vmatpush1.bf16.msra.mxu0 %v7104
    %8622 = vmatprep.subr.bf16.mxu0 %v7117
    %8623 = vmatpush1.bf16.msra.mxu0 %v7116
    %8624 = vmatprep.subr.bf16.mxu0 %v7129
    %8625 = vmatpush1.bf16.msra.mxu0 %v7128
    %8626 = vmatprep.subr.bf16.mxu0 %v7141
    %8627 = vmatpush1.bf16.msra.mxu0 %v7140
    %8628 = vmatprep.subr.bf16.mxu0 %v7153
    %8629 = vmatpush1.bf16.msra.mxu0 %v7152
    %8630 = vmatprep.subr.bf16.mxu0 %v7165
    %8631 = vmatpush1.bf16.msra.mxu0 %v7164
    %8632 = vmatprep.subr.bf16.mxu0 %v7177
    %8633 = vmatpush1.bf16.msra.mxu0 %v7176
    %8634 = vmatprep.subr.bf16.mxu0 %v7189
    %8635 = vmatpush1.bf16.msra.mxu0 %v7188
    %8636 = vmatprep.subr.bf16.mxu0 %v7201
    %8637 = vmatpush1.bf16.msra.mxu0 %v7200
    %8638 = vmatprep.subr.bf16.mxu0 %v7213
    %8639 = vmatpush1.bf16.msra.mxu0 %v7212
    %8640 = vmatprep.subr.bf16.mxu0 %v7225
    %8641 = vmatpush1.bf16.msra.mxu0 %v7224
    %8642 = vmatprep.subr.bf16.mxu0 %v7237
    %8643 = vmatpush1.bf16.msra.mxu0 %v7236
    %8644 = vmatprep.subr.bf16.mxu0 %v7249
    %8645 = vmatpush1.bf16.msra.mxu0 %v7248
    %8646 = vmatprep.subr.bf16.mxu0 %v7261
    %8647 = vmatpush1.bf16.msra.mxu0 %v7260
    %8648 = vmatprep.mubr.bf16.mxu0 %v3937
    %8649 = vmatmul.mubr.bf16.gmra.mrb[0].mxu0 %v3936
    %v8650 = vpop.f32.mrb[0].mxu0
    %v8651 = vadd.f32 %v4719, %v8650
    %v8652 = vpop.f32.mrb[0].mxu0
    %v8653 = vadd.f32 %v4723, %v8652
    %v8654 = vpop.f32.mrb[0].mxu0
    %v8655 = vpop.f32.mrb[0].mxu0
    %8656 = vdwg.mxu0
    %8657 = vmatprep.subr.bf16.mxu0 %v7273
    %8658 = vmatpush1.bf16.msra.mxu0 %v7272
    %8659 = vmatprep.subr.bf16.mxu0 %v7285
    %8660 = vmatpush1.bf16.msra.mxu0 %v7284
    %8661 = vmatprep.subr.bf16.mxu0 %v7297
    %8662 = vmatpush1.bf16.msra.mxu0 %v7296
    %8663 = vmatprep.subr.bf16.mxu0 %v7309
    %8664 = vmatpush1.bf16.msra.mxu0 %v7308
    %8665 = vmatprep.subr.bf16.mxu0 %v7321
    %8666 = vmatpush1.bf16.msra.mxu0 %v7320
    %8667 = vmatprep.subr.bf16.mxu0 %v7333
    %8668 = vmatpush1.bf16.msra.mxu0 %v7332
    %8669 = vmatprep.subr.bf16.mxu0 %v7345
    %8670 = vmatpush1.bf16.msra.mxu0 %v7344
    %8671 = vmatprep.subr.bf16.mxu0 %v7357
    %8672 = vmatpush1.bf16.msra.mxu0 %v7356
    %8673 = vmatprep.subr.bf16.mxu0 %v7369
    %8674 = vmatpush1.bf16.msra.mxu0 %v7368
    %8675 = vmatprep.subr.bf16.mxu0 %v7381
    %8676 = vmatpush1.bf16.msra.mxu0 %v7380
    %8677 = vmatprep.subr.bf16.mxu0 %v7393
    %8678 = vmatpush1.bf16.msra.mxu0 %v7392
    %8679 = vmatprep.subr.bf16.mxu0 %v7405
    %8680 = vmatpush1.bf16.msra.mxu0 %v7404
    %8681 = vmatprep.subr.bf16.mxu0 %v7417
    %8682 = vmatpush1.bf16.msra.mxu0 %v7416
    %8683 = vmatprep.subr.bf16.mxu0 %v7429
    %8684 = vmatpush1.bf16.msra.mxu0 %v7428
    %8685 = vmatprep.subr.bf16.mxu0 %v7441
    %8686 = vmatpush1.bf16.msra.mxu0 %v7440
    %8687 = vmatprep.subr.bf16.mxu0 %v7453
    %8688 = vmatpush1.bf16.msra.mxu0 %v7452
    %8689 = vmatprep.mubr.bf16.mxu0 %v3939
    %8690 = vmatmul.mubr.bf16.gmra.mrb[0].mxu0 %v3938
    %v8691 = vpop.f32.mrb[0].mxu0
    %v8692 = vadd.f32 %v8651, %v8691
    %v8693 = vpop.f32.mrb[0].mxu0
    %v8694 = vadd.f32 %v8653, %v8693
    %v8695 = vpop.f32.mrb[0].mxu0
    %v8696 = vpop.f32.mrb[0].mxu0
    %8697 = vdwg.mxu0
    %8698 = vmatprep.subr.bf16.mxu0 %v7465
    %8699 = vmatpush1.bf16.msra.mxu0 %v7464
    %8700 = vmatprep.subr.bf16.mxu0 %v7477
    %8701 = vmatpush1.bf16.msra.mxu0 %v7476
    %8702 = vmatprep.subr.bf16.mxu0 %v7489
    %8703 = vmatpush1.bf16.msra.mxu0 %v7488
    %8704 = vmatprep.subr.bf16.mxu0 %v7501
    %8705 = vmatpush1.bf16.msra.mxu0 %v7500
    %8706 = vmatprep.subr.bf16.mxu0 %v7513
    %8707 = vmatpush1.bf16.msra.mxu0 %v7512
    %8708 = vmatprep.subr.bf16.mxu0 %v7525
    %8709 = vmatpush1.bf16.msra.mxu0 %v7524
    %8710 = vmatprep.subr.bf16.mxu0 %v7537
    %8711 = vmatpush1.bf16.msra.mxu0 %v7536
    %8712 = vmatprep.subr.bf16.mxu0 %v7549
    %8713 = vmatpush1.bf16.msra.mxu0 %v7548
    %8714 = vmatprep.subr.bf16.mxu0 %v7561
    %8715 = vmatpush1.bf16.msra.mxu0 %v7560
    %8716 = vmatprep.subr.bf16.mxu0 %v7573
    %8717 = vmatpush1.bf16.msra.mxu0 %v7572
    %8718 = vmatprep.subr.bf16.mxu0 %v7585
    %8719 = vmatpush1.bf16.msra.mxu0 %v7584
    %8720 = vmatprep.subr.bf16.mxu0 %v7597
    %8721 = vmatpush1.bf16.msra.mxu0 %v7596
    %8722 = vmatprep.subr.bf16.mxu0 %v7609
    %8723 = vmatpush1.bf16.msra.mxu0 %v7608
    %8724 = vmatprep.subr.bf16.mxu0 %v7621
    %8725 = vmatpush1.bf16.msra.mxu0 %v7620
    %8726 = vmatprep.subr.bf16.mxu0 %v7633
    %8727 = vmatpush1.bf16.msra.mxu0 %v7632
    %8728 = vmatprep.subr.bf16.mxu0 %v7645
    %8729 = vmatpush1.bf16.msra.mxu0 %v7644
    %8730 = vmatprep.mubr.bf16.mxu0 %v3941
    %8731 = vmatmul.mubr.bf16.gmra.mrb[0].mxu0 %v3940
    %v8732 = vpop.f32.mrb[0].mxu0
    %v8733 = vadd.f32 %v8692, %v8732
    %v8734 = vpop.f32.mrb[0].mxu0
    %v8735 = vadd.f32 %v8694, %v8734
    %v8736 = vpop.f32.mrb[0].mxu0
    %v8737 = vpop.f32.mrb[0].mxu0
    %8738 = vdwg.mxu0
    %8739 = vmatprep.subr.bf16.mxu0 %v7657
    %8740 = vmatpush1.bf16.msra.mxu0 %v7656
    %8741 = vmatprep.subr.bf16.mxu0 %v7669
    %8742 = vmatpush1.bf16.msra.mxu0 %v7668
    %8743 = vmatprep.subr.bf16.mxu0 %v7681
    %8744 = vmatpush1.bf16.msra.mxu0 %v7680
    %8745 = vmatprep.subr.bf16.mxu0 %v7693
    %8746 = vmatpush1.bf16.msra.mxu0 %v7692
    %8747 = vmatprep.subr.bf16.mxu0 %v7705
    %8748 = vmatpush1.bf16.msra.mxu0 %v7704
    %8749 = vmatprep.subr.bf16.mxu0 %v7717
    %8750 = vmatpush1.bf16.msra.mxu0 %v7716
    %8751 = vmatprep.subr.bf16.mxu0 %v7729
    %8752 = vmatpush1.bf16.msra.mxu0 %v7728
    %8753 = vmatprep.subr.bf16.mxu0 %v7741
    %8754 = vmatpush1.bf16.msra.mxu0 %v7740
    %8755 = vmatprep.subr.bf16.mxu0 %v7753
    %8756 = vmatpush1.bf16.msra.mxu0 %v7752
    %8757 = vmatprep.subr.bf16.mxu0 %v7765
    %8758 = vmatpush1.bf16.msra.mxu0 %v7764
    %8759 = vmatprep.subr.bf16.mxu0 %v7777
    %8760 = vmatpush1.bf16.msra.mxu0 %v7776
    %8761 = vmatprep.subr.bf16.mxu0 %v7789
    %8762 = vmatpush1.bf16.msra.mxu0 %v7788
    %8763 = vmatprep.subr.bf16.mxu0 %v7801
    %8764 = vmatpush1.bf16.msra.mxu0 %v7800
    %8765 = vmatprep.subr.bf16.mxu0 %v7813
    %8766 = vmatpush1.bf16.msra.mxu0 %v7812
    %8767 = vmatprep.subr.bf16.mxu0 %v7825
    %8768 = vmatpush1.bf16.msra.mxu0 %v7824
    %8769 = vmatprep.subr.bf16.mxu0 %v7837
    %8770 = vmatpush1.bf16.msra.mxu0 %v7836
    %8771 = vmatprep.mubr.bf16.mxu0 %v3943
    %8772 = vmatmul.mubr.bf16.gmra.mrb[0].mxu0 %v3942
    %v8773 = vpop.f32.mrb[0].mxu0
    %v8774 = vadd.f32 %v8733, %v8773
    %v8775 = vpop.f32.mrb[0].mxu0
    %v8776 = vadd.f32 %v8735, %v8775
    %v8777 = vpop.f32.mrb[0].mxu0
    %v8778 = vpop.f32.mrb[0].mxu0
    %8779 = vdwg.mxu0
    %8780 = vmatprep.subr.bf16.mxu0 %v7083
    %8781 = vmatpush1.bf16.msra.mxu0 %v7082
    %8782 = vmatprep.subr.bf16.mxu0 %v7095
    %8783 = vmatpush1.bf16.msra.mxu0 %v7094
    %8784 = vmatprep.subr.bf16.mxu0 %v7107
    %8785 = vmatpush1.bf16.msra.mxu0 %v7106
    %8786 = vmatprep.subr.bf16.mxu0 %v7119
    %8787 = vmatpush1.bf16.msra.mxu0 %v7118
    %8788 = vmatprep.subr.bf16.mxu0 %v7131
    %8789 = vmatpush1.bf16.msra.mxu0 %v7130
    %8790 = vmatprep.subr.bf16.mxu0 %v7143
    %8791 = vmatpush1.bf16.msra.mxu0 %v7142
    %8792 = vmatprep.subr.bf16.mxu0 %v7155
    %8793 = vmatpush1.bf16.msra.mxu0 %v7154
    %8794 = vmatprep.subr.bf16.mxu0 %v7167
    %8795 = vmatpush1.bf16.msra.mxu0 %v7166
    %8796 = vmatprep.subr.bf16.mxu0 %v7179
    %8797 = vmatpush1.bf16.msra.mxu0 %v7178
    %8798 = vmatprep.subr.bf16.mxu0 %v7191
    %8799 = vmatpush1.bf16.msra.mxu0 %v7190
    %8800 = vmatprep.subr.bf16.mxu0 %v7203
    %8801 = vmatpush1.bf16.msra.mxu0 %v7202
    %8802 = vmatprep.subr.bf16.mxu0 %v7215
    %8803 = vmatpush1.bf16.msra.mxu0 %v7214
    %8804 = vmatprep.subr.bf16.mxu0 %v7227
    %8805 = vmatpush1.bf16.msra.mxu0 %v7226
    %8806 = vmatprep.subr.bf16.mxu0 %v7239
    %8807 = vmatpush1.bf16.msra.mxu0 %v7238
    %8808 = vmatprep.subr.bf16.mxu0 %v7251
    %8809 = vmatpush1.bf16.msra.mxu0 %v7250
    %8810 = vmatprep.subr.bf16.mxu0 %v7263
    %8811 = vmatpush1.bf16.msra.mxu0 %v7262
    %8812 = vmatprep.mubr.bf16.mxu0 %v3937
    %8813 = vmatmul.mubr.bf16.gmra.mrb[0].mxu0 %v3936
    %v8814 = vpop.f32.mrb[0].mxu0
    %v8815 = vadd.f32 %v4727, %v8814
    %v8816 = vpop.f32.mrb[0].mxu0
    %v8817 = vadd.f32 %v4731, %v8816
    %v8818 = vpop.f32.mrb[0].mxu0
    %v8819 = vpop.f32.mrb[0].mxu0
    %8820 = vdwg.mxu0
    %8821 = vmatprep.subr.bf16.mxu0 %v7275
    %8822 = vmatpush1.bf16.msra.mxu0 %v7274
    %8823 = vmatprep.subr.bf16.mxu0 %v7287
    %8824 = vmatpush1.bf16.msra.mxu0 %v7286
    %8825 = vmatprep.subr.bf16.mxu0 %v7299
    %8826 = vmatpush1.bf16.msra.mxu0 %v7298
    %8827 = vmatprep.subr.bf16.mxu0 %v7311
    %8828 = vmatpush1.bf16.msra.mxu0 %v7310
    %8829 = vmatprep.subr.bf16.mxu0 %v7323
    %8830 = vmatpush1.bf16.msra.mxu0 %v7322
    %8831 = vmatprep.subr.bf16.mxu0 %v7335
    %8832 = vmatpush1.bf16.msra.mxu0 %v7334
    %8833 = vmatprep.subr.bf16.mxu0 %v7347
    %8834 = vmatpush1.bf16.msra.mxu0 %v7346
    %8835 = vmatprep.subr.bf16.mxu0 %v7359
    %8836 = vmatpush1.bf16.msra.mxu0 %v7358
    %8837 = vmatprep.subr.bf16.mxu0 %v7371
    %8838 = vmatpush1.bf16.msra.mxu0 %v7370
    %8839 = vmatprep.subr.bf16.mxu0 %v7383
    %8840 = vmatpush1.bf16.msra.mxu0 %v7382
    %8841 = vmatprep.subr.bf16.mxu0 %v7395
    %8842 = vmatpush1.bf16.msra.mxu0 %v7394
    %8843 = vmatprep.subr.bf16.mxu0 %v7407
    %8844 = vmatpush1.bf16.msra.mxu0 %v7406
    %8845 = vmatprep.subr.bf16.mxu0 %v7419
    %8846 = vmatpush1.bf16.msra.mxu0 %v7418
    %8847 = vmatprep.subr.bf16.mxu0 %v7431
    %8848 = vmatpush1.bf16.msra.mxu0 %v7430
    %8849 = vmatprep.subr.bf16.mxu0 %v7443
    %8850 = vmatpush1.bf16.msra.mxu0 %v7442
    %8851 = vmatprep.subr.bf16.mxu0 %v7455
    %8852 = vmatpush1.bf16.msra.mxu0 %v7454
    %8853 = vmatprep.mubr.bf16.mxu0 %v3939
    %8854 = vmatmul.mubr.bf16.gmra.mrb[0].mxu0 %v3938
    %v8855 = vpop.f32.mrb[0].mxu0
    %v8856 = vadd.f32 %v8815, %v8855
    %v8857 = vpop.f32.mrb[0].mxu0
    %v8858 = vadd.f32 %v8817, %v8857
    %v8859 = vpop.f32.mrb[0].mxu0
    %v8860 = vpop.f32.mrb[0].mxu0
    %8861 = vdwg.mxu0
    %8862 = vmatprep.subr.bf16.mxu0 %v7467
    %8863 = vmatpush1.bf16.msra.mxu0 %v7466
    %8864 = vmatprep.subr.bf16.mxu0 %v7479
    %8865 = vmatpush1.bf16.msra.mxu0 %v7478
    %8866 = vmatprep.subr.bf16.mxu0 %v7491
    %8867 = vmatpush1.bf16.msra.mxu0 %v7490
    %8868 = vmatprep.subr.bf16.mxu0 %v7503
    %8869 = vmatpush1.bf16.msra.mxu0 %v7502
    %8870 = vmatprep.subr.bf16.mxu0 %v7515
    %8871 = vmatpush1.bf16.msra.mxu0 %v7514
    %8872 = vmatprep.subr.bf16.mxu0 %v7527
    %8873 = vmatpush1.bf16.msra.mxu0 %v7526
    %8874 = vmatprep.subr.bf16.mxu0 %v7539
    %8875 = vmatpush1.bf16.msra.mxu0 %v7538
    %8876 = vmatprep.subr.bf16.mxu0 %v7551
    %8877 = vmatpush1.bf16.msra.mxu0 %v7550
    %8878 = vmatprep.subr.bf16.mxu0 %v7563
    %8879 = vmatpush1.bf16.msra.mxu0 %v7562
    %8880 = vmatprep.subr.bf16.mxu0 %v7575
    %8881 = vmatpush1.bf16.msra.mxu0 %v7574
    %8882 = vmatprep.subr.bf16.mxu0 %v7587
    %8883 = vmatpush1.bf16.msra.mxu0 %v7586
    %8884 = vmatprep.subr.bf16.mxu0 %v7599
    %8885 = vmatpush1.bf16.msra.mxu0 %v7598
    %8886 = vmatprep.subr.bf16.mxu0 %v7611
    %8887 = vmatpush1.bf16.msra.mxu0 %v7610
    %8888 = vmatprep.subr.bf16.mxu0 %v7623
    %8889 = vmatpush1.bf16.msra.mxu0 %v7622
    %8890 = vmatprep.subr.bf16.mxu0 %v7635
    %8891 = vmatpush1.bf16.msra.mxu0 %v7634
    %8892 = vmatprep.subr.bf16.mxu0 %v7647
    %8893 = vmatpush1.bf16.msra.mxu0 %v7646
    %8894 = vmatprep.mubr.bf16.mxu0 %v3941
    %8895 = vmatmul.mubr.bf16.gmra.mrb[0].mxu0 %v3940
    %v8896 = vpop.f32.mrb[0].mxu0
    %v8897 = vadd.f32 %v8856, %v8896
    %v8898 = vpop.f32.mrb[0].mxu0
    %v8899 = vadd.f32 %v8858, %v8898
    %v8900 = vpop.f32.mrb[0].mxu0
    %v8901 = vpop.f32.mrb[0].mxu0
    %8902 = vdwg.mxu0
    %8903 = vmatprep.subr.bf16.mxu0 %v7659
    %8904 = vmatpush1.bf16.msra.mxu0 %v7658
    %8905 = vmatprep.subr.bf16.mxu0 %v7671
    %8906 = vmatpush1.bf16.msra.mxu0 %v7670
    %8907 = vmatprep.subr.bf16.mxu0 %v7683
    %8908 = vmatpush1.bf16.msra.mxu0 %v7682
    %8909 = vmatprep.subr.bf16.mxu0 %v7695
    %8910 = vmatpush1.bf16.msra.mxu0 %v7694
    %8911 = vmatprep.subr.bf16.mxu0 %v7707
    %8912 = vmatpush1.bf16.msra.mxu0 %v7706
    %8913 = vmatprep.subr.bf16.mxu0 %v7719
    %8914 = vmatpush1.bf16.msra.mxu0 %v7718
    %8915 = vmatprep.subr.bf16.mxu0 %v7731
    %8916 = vmatpush1.bf16.msra.mxu0 %v7730
    %8917 = vmatprep.subr.bf16.mxu0 %v7743
    %8918 = vmatpush1.bf16.msra.mxu0 %v7742
    %8919 = vmatprep.subr.bf16.mxu0 %v7755
    %8920 = vmatpush1.bf16.msra.mxu0 %v7754
    %8921 = vmatprep.subr.bf16.mxu0 %v7767
    %8922 = vmatpush1.bf16.msra.mxu0 %v7766
    %8923 = vmatprep.subr.bf16.mxu0 %v7779
    %8924 = vmatpush1.bf16.msra.mxu0 %v7778
    %8925 = vmatprep.subr.bf16.mxu0 %v7791
    %8926 = vmatpush1.bf16.msra.mxu0 %v7790
    %8927 = vmatprep.subr.bf16.mxu0 %v7803
    %8928 = vmatpush1.bf16.msra.mxu0 %v7802
    %8929 = vmatprep.subr.bf16.mxu0 %v7815
    %8930 = vmatpush1.bf16.msra.mxu0 %v7814
    %8931 = vmatprep.subr.bf16.mxu0 %v7827
    %8932 = vmatpush1.bf16.msra.mxu0 %v7826
    %8933 = vmatprep.subr.bf16.mxu0 %v7839
    %8934 = vmatpush1.bf16.msra.mxu0 %v7838
    %8935 = vmatprep.mubr.bf16.mxu0 %v3943
    %8936 = vmatmul.mubr.bf16.gmra.mrb[0].mxu0 %v3942
    %v8937 = vpop.f32.mrb[0].mxu0
    %v8938 = vadd.f32 %v8897, %v8937
    %v8939 = vpop.f32.mrb[0].mxu0
    %v8940 = vadd.f32 %v8899, %v8939
    %v8941 = vpop.f32.mrb[0].mxu0
    %v8942 = vpop.f32.mrb[0].mxu0
    %8943 = vdwg.mxu0
    %8944 = vmatprep.subr.bf16.mxu0 %v7085
    %8945 = vmatpush1.bf16.msra.mxu0 %v7084
    %8946 = vmatprep.subr.bf16.mxu0 %v7097
    %8947 = vmatpush1.bf16.msra.mxu0 %v7096
    %8948 = vmatprep.subr.bf16.mxu0 %v7109
    %8949 = vmatpush1.bf16.msra.mxu0 %v7108
    %8950 = vmatprep.subr.bf16.mxu0 %v7121
    %8951 = vmatpush1.bf16.msra.mxu0 %v7120
    %8952 = vmatprep.subr.bf16.mxu0 %v7133
    %8953 = vmatpush1.bf16.msra.mxu0 %v7132
    %8954 = vmatprep.subr.bf16.mxu0 %v7145
    %8955 = vmatpush1.bf16.msra.mxu0 %v7144
    %8956 = vmatprep.subr.bf16.mxu0 %v7157
    %8957 = vmatpush1.bf16.msra.mxu0 %v7156
    %8958 = vmatprep.subr.bf16.mxu0 %v7169
    %8959 = vmatpush1.bf16.msra.mxu0 %v7168
    %8960 = vmatprep.subr.bf16.mxu0 %v7181
    %8961 = vmatpush1.bf16.msra.mxu0 %v7180
    %8962 = vmatprep.subr.bf16.mxu0 %v7193
    %8963 = vmatpush1.bf16.msra.mxu0 %v7192
    %8964 = vmatprep.subr.bf16.mxu0 %v7205
    %8965 = vmatpush1.bf16.msra.mxu0 %v7204
    %8966 = vmatprep.subr.bf16.mxu0 %v7217
    %8967 = vmatpush1.bf16.msra.mxu0 %v7216
    %8968 = vmatprep.subr.bf16.mxu0 %v7229
    %8969 = vmatpush1.bf16.msra.mxu0 %v7228
    %8970 = vmatprep.subr.bf16.mxu0 %v7241
    %8971 = vmatpush1.bf16.msra.mxu0 %v7240
    %8972 = vmatprep.subr.bf16.mxu0 %v7253
    %8973 = vmatpush1.bf16.msra.mxu0 %v7252
    %8974 = vmatprep.subr.bf16.mxu0 %v7265
    %8975 = vmatpush1.bf16.msra.mxu0 %v7264
    %8976 = vmatprep.mubr.bf16.mxu0 %v3937
    %8977 = vmatmul.mubr.bf16.gmra.mrb[0].mxu0 %v3936
    %v8978 = vpop.f32.mrb[0].mxu0
    %v8979 = vadd.f32 %v4735, %v8978
    %v8980 = vpop.f32.mrb[0].mxu0
    %v8981 = vadd.f32 %v4739, %v8980
    %v8982 = vpop.f32.mrb[0].mxu0
    %v8983 = vpop.f32.mrb[0].mxu0
    %8984 = vdwg.mxu0
    %8985 = vmatprep.subr.bf16.mxu0 %v7277
    %8986 = vmatpush1.bf16.msra.mxu0 %v7276
    %8987 = vmatprep.subr.bf16.mxu0 %v7289
    %8988 = vmatpush1.bf16.msra.mxu0 %v7288
    %8989 = vmatprep.subr.bf16.mxu0 %v7301
    %8990 = vmatpush1.bf16.msra.mxu0 %v7300
    %8991 = vmatprep.subr.bf16.mxu0 %v7313
    %8992 = vmatpush1.bf16.msra.mxu0 %v7312
    %8993 = vmatprep.subr.bf16.mxu0 %v7325
    %8994 = vmatpush1.bf16.msra.mxu0 %v7324
    %8995 = vmatprep.subr.bf16.mxu0 %v7337
    %8996 = vmatpush1.bf16.msra.mxu0 %v7336
    %8997 = vmatprep.subr.bf16.mxu0 %v7349
    %8998 = vmatpush1.bf16.msra.mxu0 %v7348
    %8999 = vmatprep.subr.bf16.mxu0 %v7361
    %9000 = vmatpush1.bf16.msra.mxu0 %v7360
    %9001 = vmatprep.subr.bf16.mxu0 %v7373
    %9002 = vmatpush1.bf16.msra.mxu0 %v7372
    %9003 = vmatprep.subr.bf16.mxu0 %v7385
    %9004 = vmatpush1.bf16.msra.mxu0 %v7384
    %9005 = vmatprep.subr.bf16.mxu0 %v7397
    %9006 = vmatpush1.bf16.msra.mxu0 %v7396
    %9007 = vmatprep.subr.bf16.mxu0 %v7409
    %9008 = vmatpush1.bf16.msra.mxu0 %v7408
    %9009 = vmatprep.subr.bf16.mxu0 %v7421
    %9010 = vmatpush1.bf16.msra.mxu0 %v7420
    %9011 = vmatprep.subr.bf16.mxu0 %v7433
    %9012 = vmatpush1.bf16.msra.mxu0 %v7432
    %9013 = vmatprep.subr.bf16.mxu0 %v7445
    %9014 = vmatpush1.bf16.msra.mxu0 %v7444
    %9015 = vmatprep.subr.bf16.mxu0 %v7457
    %9016 = vmatpush1.bf16.msra.mxu0 %v7456
    %9017 = vmatprep.mubr.bf16.mxu0 %v3939
    %9018 = vmatmul.mubr.bf16.gmra.mrb[0].mxu0 %v3938
    %v9019 = vpop.f32.mrb[0].mxu0
    %v9020 = vadd.f32 %v8979, %v9019
    %v9021 = vpop.f32.mrb[0].mxu0
    %v9022 = vadd.f32 %v8981, %v9021
    %v9023 = vpop.f32.mrb[0].mxu0
    %v9024 = vpop.f32.mrb[0].mxu0
    %9025 = vdwg.mxu0
    %9026 = vmatprep.subr.bf16.mxu0 %v7469
    %9027 = vmatpush1.bf16.msra.mxu0 %v7468
    %9028 = vmatprep.subr.bf16.mxu0 %v7481
    %9029 = vmatpush1.bf16.msra.mxu0 %v7480
    %9030 = vmatprep.subr.bf16.mxu0 %v7493
    %9031 = vmatpush1.bf16.msra.mxu0 %v7492
    %9032 = vmatprep.subr.bf16.mxu0 %v7505
    %9033 = vmatpush1.bf16.msra.mxu0 %v7504
    %9034 = vmatprep.subr.bf16.mxu0 %v7517
    %9035 = vmatpush1.bf16.msra.mxu0 %v7516
    %9036 = vmatprep.subr.bf16.mxu0 %v7529
    %9037 = vmatpush1.bf16.msra.mxu0 %v7528
    %9038 = vmatprep.subr.bf16.mxu0 %v7541
    %9039 = vmatpush1.bf16.msra.mxu0 %v7540
    %9040 = vmatprep.subr.bf16.mxu0 %v7553
    %9041 = vmatpush1.bf16.msra.mxu0 %v7552
    %9042 = vmatprep.subr.bf16.mxu0 %v7565
    %9043 = vmatpush1.bf16.msra.mxu0 %v7564
    %9044 = vmatprep.subr.bf16.mxu0 %v7577
    %9045 = vmatpush1.bf16.msra.mxu0 %v7576
    %9046 = vmatprep.subr.bf16.mxu0 %v7589
    %9047 = vmatpush1.bf16.msra.mxu0 %v7588
    %9048 = vmatprep.subr.bf16.mxu0 %v7601
    %9049 = vmatpush1.bf16.msra.mxu0 %v7600
    %9050 = vmatprep.subr.bf16.mxu0 %v7613
    %9051 = vmatpush1.bf16.msra.mxu0 %v7612
    %9052 = vmatprep.subr.bf16.mxu0 %v7625
    %9053 = vmatpush1.bf16.msra.mxu0 %v7624
    %9054 = vmatprep.subr.bf16.mxu0 %v7637
    %9055 = vmatpush1.bf16.msra.mxu0 %v7636
    %9056 = vmatprep.subr.bf16.mxu0 %v7649
    %9057 = vmatpush1.bf16.msra.mxu0 %v7648
    %9058 = vmatprep.mubr.bf16.mxu0 %v3941
    %9059 = vmatmul.mubr.bf16.gmra.mrb[0].mxu0 %v3940
    %v9060 = vpop.f32.mrb[0].mxu0
    %v9061 = vadd.f32 %v9020, %v9060
    %v9062 = vpop.f32.mrb[0].mxu0
    %v9063 = vadd.f32 %v9022, %v9062
    %v9064 = vpop.f32.mrb[0].mxu0
    %v9065 = vpop.f32.mrb[0].mxu0
    %9066 = vdwg.mxu0
    %9067 = vmatprep.subr.bf16.mxu0 %v7661
    %9068 = vmatpush1.bf16.msra.mxu0 %v7660
    %9069 = vmatprep.subr.bf16.mxu0 %v7673
    %9070 = vmatpush1.bf16.msra.mxu0 %v7672
    %9071 = vmatprep.subr.bf16.mxu0 %v7685
    %9072 = vmatpush1.bf16.msra.mxu0 %v7684
    %9073 = vmatprep.subr.bf16.mxu0 %v7697
    %9074 = vmatpush1.bf16.msra.mxu0 %v7696
    %9075 = vmatprep.subr.bf16.mxu0 %v7709
    %9076 = vmatpush1.bf16.msra.mxu0 %v7708
    %9077 = vmatprep.subr.bf16.mxu0 %v7721
    %9078 = vmatpush1.bf16.msra.mxu0 %v7720
    %9079 = vmatprep.subr.bf16.mxu0 %v7733
    %9080 = vmatpush1.bf16.msra.mxu0 %v7732
    %9081 = vmatprep.subr.bf16.mxu0 %v7745
    %9082 = vmatpush1.bf16.msra.mxu0 %v7744
    %9083 = vmatprep.subr.bf16.mxu0 %v7757
    %9084 = vmatpush1.bf16.msra.mxu0 %v7756
    %9085 = vmatprep.subr.bf16.mxu0 %v7769
    %9086 = vmatpush1.bf16.msra.mxu0 %v7768
    %9087 = vmatprep.subr.bf16.mxu0 %v7781
    %9088 = vmatpush1.bf16.msra.mxu0 %v7780
    %9089 = vmatprep.subr.bf16.mxu0 %v7793
    %9090 = vmatpush1.bf16.msra.mxu0 %v7792
    %9091 = vmatprep.subr.bf16.mxu0 %v7805
    %9092 = vmatpush1.bf16.msra.mxu0 %v7804
    %9093 = vmatprep.subr.bf16.mxu0 %v7817
    %9094 = vmatpush1.bf16.msra.mxu0 %v7816
    %9095 = vmatprep.subr.bf16.mxu0 %v7829
    %9096 = vmatpush1.bf16.msra.mxu0 %v7828
    %9097 = vmatprep.subr.bf16.mxu0 %v7841
    %9098 = vmatpush1.bf16.msra.mxu0 %v7840
    %9099 = vmatprep.mubr.bf16.mxu0 %v3943
    %9100 = vmatmul.mubr.bf16.gmra.mrb[0].mxu0 %v3942
    %v9101 = vpop.f32.mrb[0].mxu0
    %v9102 = vadd.f32 %v9061, %v9101
    %v9103 = vpop.f32.mrb[0].mxu0
    %v9104 = vadd.f32 %v9063, %v9103
    %v9105 = vpop.f32.mrb[0].mxu0
    %v9106 = vpop.f32.mrb[0].mxu0
    %9107 = vdwg.mxu0
    %9108 = vmatprep.subr.bf16.mxu0 %v7087
    %9109 = vmatpush1.bf16.msra.mxu0 %v7086
    %9110 = vmatprep.subr.bf16.mxu0 %v7099
    %9111 = vmatpush1.bf16.msra.mxu0 %v7098
    %9112 = vmatprep.subr.bf16.mxu0 %v7111
    %9113 = vmatpush1.bf16.msra.mxu0 %v7110
    %9114 = vmatprep.subr.bf16.mxu0 %v7123
    %9115 = vmatpush1.bf16.msra.mxu0 %v7122
    %9116 = vmatprep.subr.bf16.mxu0 %v7135
    %9117 = vmatpush1.bf16.msra.mxu0 %v7134
    %9118 = vmatprep.subr.bf16.mxu0 %v7147
    %9119 = vmatpush1.bf16.msra.mxu0 %v7146
    %9120 = vmatprep.subr.bf16.mxu0 %v7159
    %9121 = vmatpush1.bf16.msra.mxu0 %v7158
    %9122 = vmatprep.subr.bf16.mxu0 %v7171
    %9123 = vmatpush1.bf16.msra.mxu0 %v7170
    %9124 = vmatprep.subr.bf16.mxu0 %v7183
    %9125 = vmatpush1.bf16.msra.mxu0 %v7182
    %9126 = vmatprep.subr.bf16.mxu0 %v7195
    %9127 = vmatpush1.bf16.msra.mxu0 %v7194
    %9128 = vmatprep.subr.bf16.mxu0 %v7207
    %9129 = vmatpush1.bf16.msra.mxu0 %v7206
    %9130 = vmatprep.subr.bf16.mxu0 %v7219
    %9131 = vmatpush1.bf16.msra.mxu0 %v7218
    %9132 = vmatprep.subr.bf16.mxu0 %v7231
    %9133 = vmatpush1.bf16.msra.mxu0 %v7230
    %9134 = vmatprep.subr.bf16.mxu0 %v7243
    %9135 = vmatpush1.bf16.msra.mxu0 %v7242
    %9136 = vmatprep.subr.bf16.mxu0 %v7255
    %9137 = vmatpush1.bf16.msra.mxu0 %v7254
    %9138 = vmatprep.subr.bf16.mxu0 %v7267
    %9139 = vmatpush1.bf16.msra.mxu0 %v7266
    %9140 = vmatprep.mubr.bf16.mxu0 %v3937
    %9141 = vmatmul.mubr.bf16.gmra.mrb[0].mxu0 %v3936
    %v9142 = vpop.f32.mrb[0].mxu0
    %v9143 = vadd.f32 %v4743, %v9142
    %v9144 = vpop.f32.mrb[0].mxu0
    %v9145 = vadd.f32 %v4747, %v9144
    %v9146 = vpop.f32.mrb[0].mxu0
    %v9147 = vpop.f32.mrb[0].mxu0
    %9148 = vdwg.mxu0
    %9149 = vmatprep.subr.bf16.mxu0 %v7279
    %9150 = vmatpush1.bf16.msra.mxu0 %v7278
    %9151 = vmatprep.subr.bf16.mxu0 %v7291
    %9152 = vmatpush1.bf16.msra.mxu0 %v7290
    %9153 = vmatprep.subr.bf16.mxu0 %v7303
    %9154 = vmatpush1.bf16.msra.mxu0 %v7302
    %9155 = vmatprep.subr.bf16.mxu0 %v7315
    %9156 = vmatpush1.bf16.msra.mxu0 %v7314
    %9157 = vmatprep.subr.bf16.mxu0 %v7327
    %9158 = vmatpush1.bf16.msra.mxu0 %v7326
    %9159 = vmatprep.subr.bf16.mxu0 %v7339
    %9160 = vmatpush1.bf16.msra.mxu0 %v7338
    %9161 = vmatprep.subr.bf16.mxu0 %v7351
    %9162 = vmatpush1.bf16.msra.mxu0 %v7350
    %9163 = vmatprep.subr.bf16.mxu0 %v7363
    %9164 = vmatpush1.bf16.msra.mxu0 %v7362
    %9165 = vmatprep.subr.bf16.mxu0 %v7375
    %9166 = vmatpush1.bf16.msra.mxu0 %v7374
    %9167 = vmatprep.subr.bf16.mxu0 %v7387
    %9168 = vmatpush1.bf16.msra.mxu0 %v7386
    %9169 = vmatprep.subr.bf16.mxu0 %v7399
    %9170 = vmatpush1.bf16.msra.mxu0 %v7398
    %9171 = vmatprep.subr.bf16.mxu0 %v7411
    %9172 = vmatpush1.bf16.msra.mxu0 %v7410
    %9173 = vmatprep.subr.bf16.mxu0 %v7423
    %9174 = vmatpush1.bf16.msra.mxu0 %v7422
    %9175 = vmatprep.subr.bf16.mxu0 %v7435
    %9176 = vmatpush1.bf16.msra.mxu0 %v7434
    %9177 = vmatprep.subr.bf16.mxu0 %v7447
    %9178 = vmatpush1.bf16.msra.mxu0 %v7446
    %9179 = vmatprep.subr.bf16.mxu0 %v7459
    %9180 = vmatpush1.bf16.msra.mxu0 %v7458
    %9181 = vmatprep.mubr.bf16.mxu0 %v3939
    %9182 = vmatmul.mubr.bf16.gmra.mrb[0].mxu0 %v3938
    %v9183 = vpop.f32.mrb[0].mxu0
    %v9184 = vadd.f32 %v9143, %v9183
    %v9185 = vpop.f32.mrb[0].mxu0
    %v9186 = vadd.f32 %v9145, %v9185
    %v9187 = vpop.f32.mrb[0].mxu0
    %v9188 = vpop.f32.mrb[0].mxu0
    %9189 = vdwg.mxu0
    %9190 = vmatprep.subr.bf16.mxu0 %v7471
    %9191 = vmatpush1.bf16.msra.mxu0 %v7470
    %9192 = vmatprep.subr.bf16.mxu0 %v7483
    %9193 = vmatpush1.bf16.msra.mxu0 %v7482
    %9194 = vmatprep.subr.bf16.mxu0 %v7495
    %9195 = vmatpush1.bf16.msra.mxu0 %v7494
    %9196 = vmatprep.subr.bf16.mxu0 %v7507
    %9197 = vmatpush1.bf16.msra.mxu0 %v7506
    %9198 = vmatprep.subr.bf16.mxu0 %v7519
    %9199 = vmatpush1.bf16.msra.mxu0 %v7518
    %9200 = vmatprep.subr.bf16.mxu0 %v7531
    %9201 = vmatpush1.bf16.msra.mxu0 %v7530
    %9202 = vmatprep.subr.bf16.mxu0 %v7543
    %9203 = vmatpush1.bf16.msra.mxu0 %v7542
    %9204 = vmatprep.subr.bf16.mxu0 %v7555
    %9205 = vmatpush1.bf16.msra.mxu0 %v7554
    %9206 = vmatprep.subr.bf16.mxu0 %v7567
    %9207 = vmatpush1.bf16.msra.mxu0 %v7566
    %9208 = vmatprep.subr.bf16.mxu0 %v7579
    %9209 = vmatpush1.bf16.msra.mxu0 %v7578
    %9210 = vmatprep.subr.bf16.mxu0 %v7591
    %9211 = vmatpush1.bf16.msra.mxu0 %v7590
    %9212 = vmatprep.subr.bf16.mxu0 %v7603
    %9213 = vmatpush1.bf16.msra.mxu0 %v7602
    %9214 = vmatprep.subr.bf16.mxu0 %v7615
    %9215 = vmatpush1.bf16.msra.mxu0 %v7614
    %9216 = vmatprep.subr.bf16.mxu0 %v7627
    %9217 = vmatpush1.bf16.msra.mxu0 %v7626
    %9218 = vmatprep.subr.bf16.mxu0 %v7639
    %9219 = vmatpush1.bf16.msra.mxu0 %v7638
    %9220 = vmatprep.subr.bf16.mxu0 %v7651
    %9221 = vmatpush1.bf16.msra.mxu0 %v7650
    %9222 = vmatprep.mubr.bf16.mxu0 %v3941
    %9223 = vmatmul.mubr.bf16.gmra.mrb[0].mxu0 %v3940
    %v9224 = vpop.f32.mrb[0].mxu0
    %v9225 = vadd.f32 %v9184, %v9224
    %v9226 = vpop.f32.mrb[0].mxu0
    %v9227 = vadd.f32 %v9186, %v9226
    %v9228 = vpop.f32.mrb[0].mxu0
    %v9229 = vpop.f32.mrb[0].mxu0
    %9230 = vdwg.mxu0
    %9231 = vmatprep.subr.bf16.mxu0 %v7663
    %9232 = vmatpush1.bf16.msra.mxu0 %v7662
    %9233 = vmatprep.subr.bf16.mxu0 %v7675
    %9234 = vmatpush1.bf16.msra.mxu0 %v7674
    %9235 = vmatprep.subr.bf16.mxu0 %v7687
    %9236 = vmatpush1.bf16.msra.mxu0 %v7686
    %9237 = vmatprep.subr.bf16.mxu0 %v7699
    %9238 = vmatpush1.bf16.msra.mxu0 %v7698
    %9239 = vmatprep.subr.bf16.mxu0 %v7711
    %9240 = vmatpush1.bf16.msra.mxu0 %v7710
    %9241 = vmatprep.subr.bf16.mxu0 %v7723
    %9242 = vmatpush1.bf16.msra.mxu0 %v7722
    %9243 = vmatprep.subr.bf16.mxu0 %v7735
    %9244 = vmatpush1.bf16.msra.mxu0 %v7734
    %9245 = vmatprep.subr.bf16.mxu0 %v7747
    %9246 = vmatpush1.bf16.msra.mxu0 %v7746
    %9247 = vmatprep.subr.bf16.mxu0 %v7759
    %9248 = vmatpush1.bf16.msra.mxu0 %v7758
    %9249 = vmatprep.subr.bf16.mxu0 %v7771
    %9250 = vmatpush1.bf16.msra.mxu0 %v7770
    %9251 = vmatprep.subr.bf16.mxu0 %v7783
    %9252 = vmatpush1.bf16.msra.mxu0 %v7782
    %9253 = vmatprep.subr.bf16.mxu0 %v7795
    %9254 = vmatpush1.bf16.msra.mxu0 %v7794
    %9255 = vmatprep.subr.bf16.mxu0 %v7807
    %9256 = vmatpush1.bf16.msra.mxu0 %v7806
    %9257 = vmatprep.subr.bf16.mxu0 %v7819
    %9258 = vmatpush1.bf16.msra.mxu0 %v7818
    %9259 = vmatprep.subr.bf16.mxu0 %v7831
    %9260 = vmatpush1.bf16.msra.mxu0 %v7830
    %9261 = vmatprep.subr.bf16.mxu0 %v7843
    %9262 = vmatpush1.bf16.msra.mxu0 %v7842
    %9263 = vmatprep.mubr.bf16.mxu0 %v3943
    %9264 = vmatmul.mubr.bf16.gmra.mrb[0].mxu0 %v3942
    %v9265 = vpop.f32.mrb[0].mxu0
    %v9266 = vadd.f32 %v9225, %v9265
    %v9267 = vpop.f32.mrb[0].mxu0
    %v9268 = vadd.f32 %v9227, %v9267
    %v9269 = vpop.f32.mrb[0].mxu0
    %v9270 = vpop.f32.mrb[0].mxu0
    %9271 = vdwg.mxu0
    %9272 = vmatprep.subr.bf16.mxu0 %v7089
    %9273 = vmatpush1.bf16.msra.mxu0 %v7088
    %9274 = vmatprep.subr.bf16.mxu0 %v7101
    %9275 = vmatpush1.bf16.msra.mxu0 %v7100
    %9276 = vmatprep.subr.bf16.mxu0 %v7113
    %9277 = vmatpush1.bf16.msra.mxu0 %v7112
    %9278 = vmatprep.subr.bf16.mxu0 %v7125
    %9279 = vmatpush1.bf16.msra.mxu0 %v7124
    %9280 = vmatprep.subr.bf16.mxu0 %v7137
    %9281 = vmatpush1.bf16.msra.mxu0 %v7136
    %9282 = vmatprep.subr.bf16.mxu0 %v7149
    %9283 = vmatpush1.bf16.msra.mxu0 %v7148
    %9284 = vmatprep.subr.bf16.mxu0 %v7161
    %9285 = vmatpush1.bf16.msra.mxu0 %v7160
    %9286 = vmatprep.subr.bf16.mxu0 %v7173
    %9287 = vmatpush1.bf16.msra.mxu0 %v7172
    %9288 = vmatprep.subr.bf16.mxu0 %v7185
    %9289 = vmatpush1.bf16.msra.mxu0 %v7184
    %9290 = vmatprep.subr.bf16.mxu0 %v7197
    %9291 = vmatpush1.bf16.msra.mxu0 %v7196
    %9292 = vmatprep.subr.bf16.mxu0 %v7209
    %9293 = vmatpush1.bf16.msra.mxu0 %v7208
    %9294 = vmatprep.subr.bf16.mxu0 %v7221
    %9295 = vmatpush1.bf16.msra.mxu0 %v7220
    %9296 = vmatprep.subr.bf16.mxu0 %v7233
    %9297 = vmatpush1.bf16.msra.mxu0 %v7232
    %9298 = vmatprep.subr.bf16.mxu0 %v7245
    %9299 = vmatpush1.bf16.msra.mxu0 %v7244
    %9300 = vmatprep.subr.bf16.mxu0 %v7257
    %9301 = vmatpush1.bf16.msra.mxu0 %v7256
    %9302 = vmatprep.subr.bf16.mxu0 %v7269
    %9303 = vmatpush1.bf16.msra.mxu0 %v7268
    %9304 = vmatprep.mubr.bf16.mxu0 %v3937
    %9305 = vmatmul.mubr.bf16.gmra.mrb[0].mxu0 %v3936
    %v9306 = vpop.f32.mrb[0].mxu0
    %v9307 = vadd.f32 %v4751, %v9306
    %v9308 = vpop.f32.mrb[0].mxu0
    %v9309 = vadd.f32 %v4755, %v9308
    %v9310 = vpop.f32.mrb[0].mxu0
    %v9311 = vpop.f32.mrb[0].mxu0
    %9312 = vdwg.mxu0
    %9313 = vmatprep.subr.bf16.mxu0 %v7281
    %9314 = vmatpush1.bf16.msra.mxu0 %v7280
    %9315 = vmatprep.subr.bf16.mxu0 %v7293
    %9316 = vmatpush1.bf16.msra.mxu0 %v7292
    %9317 = vmatprep.subr.bf16.mxu0 %v7305
    %9318 = vmatpush1.bf16.msra.mxu0 %v7304
    %9319 = vmatprep.subr.bf16.mxu0 %v7317
    %9320 = vmatpush1.bf16.msra.mxu0 %v7316
    %9321 = vmatprep.subr.bf16.mxu0 %v7329
    %9322 = vmatpush1.bf16.msra.mxu0 %v7328
    %9323 = vmatprep.subr.bf16.mxu0 %v7341
    %9324 = vmatpush1.bf16.msra.mxu0 %v7340
    %9325 = vmatprep.subr.bf16.mxu0 %v7353
    %9326 = vmatpush1.bf16.msra.mxu0 %v7352
    %9327 = vmatprep.subr.bf16.mxu0 %v7365
    %9328 = vmatpush1.bf16.msra.mxu0 %v7364
    %9329 = vmatprep.subr.bf16.mxu0 %v7377
    %9330 = vmatpush1.bf16.msra.mxu0 %v7376
    %9331 = vmatprep.subr.bf16.mxu0 %v7389
    %9332 = vmatpush1.bf16.msra.mxu0 %v7388
    %9333 = vmatprep.subr.bf16.mxu0 %v7401
    %9334 = vmatpush1.bf16.msra.mxu0 %v7400
    %9335 = vmatprep.subr.bf16.mxu0 %v7413
    %9336 = vmatpush1.bf16.msra.mxu0 %v7412
    %9337 = vmatprep.subr.bf16.mxu0 %v7425
    %9338 = vmatpush1.bf16.msra.mxu0 %v7424
    %9339 = vmatprep.subr.bf16.mxu0 %v7437
    %9340 = vmatpush1.bf16.msra.mxu0 %v7436
    %9341 = vmatprep.subr.bf16.mxu0 %v7449
    %9342 = vmatpush1.bf16.msra.mxu0 %v7448
    %9343 = vmatprep.subr.bf16.mxu0 %v7461
    %9344 = vmatpush1.bf16.msra.mxu0 %v7460
    %9345 = vmatprep.mubr.bf16.mxu0 %v3939
    %9346 = vmatmul.mubr.bf16.gmra.mrb[0].mxu0 %v3938
    %v9347 = vpop.f32.mrb[0].mxu0
    %v9348 = vadd.f32 %v9307, %v9347
    %v9349 = vpop.f32.mrb[0].mxu0
    %v9350 = vadd.f32 %v9309, %v9349
    %v9351 = vpop.f32.mrb[0].mxu0
    %v9352 = vpop.f32.mrb[0].mxu0
    %9353 = vdwg.mxu0
    %9354 = vmatprep.subr.bf16.mxu0 %v7473
    %9355 = vmatpush1.bf16.msra.mxu0 %v7472
    %9356 = vmatprep.subr.bf16.mxu0 %v7485
    %9357 = vmatpush1.bf16.msra.mxu0 %v7484
    %9358 = vmatprep.subr.bf16.mxu0 %v7497
    %9359 = vmatpush1.bf16.msra.mxu0 %v7496
    %9360 = vmatprep.subr.bf16.mxu0 %v7509
    %9361 = vmatpush1.bf16.msra.mxu0 %v7508
    %9362 = vmatprep.subr.bf16.mxu0 %v7521
    %9363 = vmatpush1.bf16.msra.mxu0 %v7520
    %9364 = vmatprep.subr.bf16.mxu0 %v7533
    %9365 = vmatpush1.bf16.msra.mxu0 %v7532
    %9366 = vmatprep.subr.bf16.mxu0 %v7545
    %9367 = vmatpush1.bf16.msra.mxu0 %v7544
    %9368 = vmatprep.subr.bf16.mxu0 %v7557
    %9369 = vmatpush1.bf16.msra.mxu0 %v7556
    %9370 = vmatprep.subr.bf16.mxu0 %v7569
    %9371 = vmatpush1.bf16.msra.mxu0 %v7568
    %9372 = vmatprep.subr.bf16.mxu0 %v7581
    %9373 = vmatpush1.bf16.msra.mxu0 %v7580
    %9374 = vmatprep.subr.bf16.mxu0 %v7593
    %9375 = vmatpush1.bf16.msra.mxu0 %v7592
    %9376 = vmatprep.subr.bf16.mxu0 %v7605
    %9377 = vmatpush1.bf16.msra.mxu0 %v7604
    %9378 = vmatprep.subr.bf16.mxu0 %v7617
    %9379 = vmatpush1.bf16.msra.mxu0 %v7616
    %9380 = vmatprep.subr.bf16.mxu0 %v7629
    %9381 = vmatpush1.bf16.msra.mxu0 %v7628
    %9382 = vmatprep.subr.bf16.mxu0 %v7641
    %9383 = vmatpush1.bf16.msra.mxu0 %v7640
    %9384 = vmatprep.subr.bf16.mxu0 %v7653
    %9385 = vmatpush1.bf16.msra.mxu0 %v7652
    %9386 = vmatprep.mubr.bf16.mxu0 %v3941
    %9387 = vmatmul.mubr.bf16.gmra.mrb[0].mxu0 %v3940
    %v9388 = vpop.f32.mrb[0].mxu0
    %v9389 = vadd.f32 %v9348, %v9388
    %v9390 = vpop.f32.mrb[0].mxu0
    %v9391 = vadd.f32 %v9350, %v9390
    %v9392 = vpop.f32.mrb[0].mxu0
    %v9393 = vpop.f32.mrb[0].mxu0
    %9394 = vdwg.mxu0
    %9395 = vmatprep.subr.bf16.mxu0 %v7665
    %9396 = vmatpush1.bf16.msra.mxu0 %v7664
    %9397 = vmatprep.subr.bf16.mxu0 %v7677
    %9398 = vmatpush1.bf16.msra.mxu0 %v7676
    %9399 = vmatprep.subr.bf16.mxu0 %v7689
    %9400 = vmatpush1.bf16.msra.mxu0 %v7688
    %9401 = vmatprep.subr.bf16.mxu0 %v7701
    %9402 = vmatpush1.bf16.msra.mxu0 %v7700
    %9403 = vmatprep.subr.bf16.mxu0 %v7713
    %9404 = vmatpush1.bf16.msra.mxu0 %v7712
    %9405 = vmatprep.subr.bf16.mxu0 %v7725
    %9406 = vmatpush1.bf16.msra.mxu0 %v7724
    %9407 = vmatprep.subr.bf16.mxu0 %v7737
    %9408 = vmatpush1.bf16.msra.mxu0 %v7736
    %9409 = vmatprep.subr.bf16.mxu0 %v7749
    %9410 = vmatpush1.bf16.msra.mxu0 %v7748
    %9411 = vmatprep.subr.bf16.mxu0 %v7761
    %9412 = vmatpush1.bf16.msra.mxu0 %v7760
    %9413 = vmatprep.subr.bf16.mxu0 %v7773
    %9414 = vmatpush1.bf16.msra.mxu0 %v7772
    %9415 = vmatprep.subr.bf16.mxu0 %v7785
    %9416 = vmatpush1.bf16.msra.mxu0 %v7784
    %9417 = vmatprep.subr.bf16.mxu0 %v7797
    %9418 = vmatpush1.bf16.msra.mxu0 %v7796
    %9419 = vmatprep.subr.bf16.mxu0 %v7809
    %9420 = vmatpush1.bf16.msra.mxu0 %v7808
    %9421 = vmatprep.subr.bf16.mxu0 %v7821
    %9422 = vmatpush1.bf16.msra.mxu0 %v7820
    %9423 = vmatprep.subr.bf16.mxu0 %v7833
    %9424 = vmatpush1.bf16.msra.mxu0 %v7832
    %9425 = vmatprep.subr.bf16.mxu0 %v7845
    %9426 = vmatpush1.bf16.msra.mxu0 %v7844
    %9427 = vmatprep.mubr.bf16.mxu0 %v3943
    %9428 = vmatmul.mubr.bf16.gmra.mrb[0].mxu0 %v3942
    %v9429 = vpop.f32.mrb[0].mxu0
    %v9430 = vadd.f32 %v9389, %v9429
    %v9431 = vpop.f32.mrb[0].mxu0
    %v9432 = vadd.f32 %v9391, %v9431
    %v9433 = vpop.f32.mrb[0].mxu0
    %v9434 = vpop.f32.mrb[0].mxu0
    %9435 = vdwg.mxu0
    %9436 = vmatprep.subr.bf16.mxu0 %v7091
    %9437 = vmatpush1.bf16.msra.mxu0 %v7090
    %9438 = vmatprep.subr.bf16.mxu0 %v7103
    %9439 = vmatpush1.bf16.msra.mxu0 %v7102
    %9440 = vmatprep.subr.bf16.mxu0 %v7115
    %9441 = vmatpush1.bf16.msra.mxu0 %v7114
    %9442 = vmatprep.subr.bf16.mxu0 %v7127
    %9443 = vmatpush1.bf16.msra.mxu0 %v7126
    %9444 = vmatprep.subr.bf16.mxu0 %v7139
    %9445 = vmatpush1.bf16.msra.mxu0 %v7138
    %9446 = vmatprep.subr.bf16.mxu0 %v7151
    %9447 = vmatpush1.bf16.msra.mxu0 %v7150
    %9448 = vmatprep.subr.bf16.mxu0 %v7163
    %9449 = vmatpush1.bf16.msra.mxu0 %v7162
    %9450 = vmatprep.subr.bf16.mxu0 %v7175
    %9451 = vmatpush1.bf16.msra.mxu0 %v7174
    %9452 = vmatprep.subr.bf16.mxu0 %v7187
    %9453 = vmatpush1.bf16.msra.mxu0 %v7186
    %9454 = vmatprep.subr.bf16.mxu0 %v7199
    %9455 = vmatpush1.bf16.msra.mxu0 %v7198
    %9456 = vmatprep.subr.bf16.mxu0 %v7211
    %9457 = vmatpush1.bf16.msra.mxu0 %v7210
    %9458 = vmatprep.subr.bf16.mxu0 %v7223
    %9459 = vmatpush1.bf16.msra.mxu0 %v7222
    %9460 = vmatprep.subr.bf16.mxu0 %v7235
    %9461 = vmatpush1.bf16.msra.mxu0 %v7234
    %9462 = vmatprep.subr.bf16.mxu0 %v7247
    %9463 = vmatpush1.bf16.msra.mxu0 %v7246
    %9464 = vmatprep.subr.bf16.mxu0 %v7259
    %9465 = vmatpush1.bf16.msra.mxu0 %v7258
    %9466 = vmatprep.subr.bf16.mxu0 %v7271
    %9467 = vmatpush1.bf16.msra.mxu0 %v7270
    %9468 = vmatprep.mubr.bf16.mxu0 %v3937
    %9469 = vmatmul.mubr.bf16.gmra.mrb[0].mxu0 %v3936
    %v9470 = vpop.f32.mrb[0].mxu0
    %v9471 = vadd.f32 %v4759, %v9470
    %v9472 = vpop.f32.mrb[0].mxu0
    %v9473 = vadd.f32 %v4763, %v9472
    %v9474 = vpop.f32.mrb[0].mxu0
    %v9475 = vpop.f32.mrb[0].mxu0
    %9476 = vdwg.mxu0
    %9477 = vmatprep.subr.bf16.mxu0 %v7283
    %9478 = vmatpush1.bf16.msra.mxu0 %v7282
    %9479 = vmatprep.subr.bf16.mxu0 %v7295
    %9480 = vmatpush1.bf16.msra.mxu0 %v7294
    %9481 = vmatprep.subr.bf16.mxu0 %v7307
    %9482 = vmatpush1.bf16.msra.mxu0 %v7306
    %9483 = vmatprep.subr.bf16.mxu0 %v7319
    %9484 = vmatpush1.bf16.msra.mxu0 %v7318
    %9485 = vmatprep.subr.bf16.mxu0 %v7331
    %9486 = vmatpush1.bf16.msra.mxu0 %v7330
    %9487 = vmatprep.subr.bf16.mxu0 %v7343
    %9488 = vmatpush1.bf16.msra.mxu0 %v7342
    %9489 = vmatprep.subr.bf16.mxu0 %v7355
    %9490 = vmatpush1.bf16.msra.mxu0 %v7354
    %9491 = vmatprep.subr.bf16.mxu0 %v7367
    %9492 = vmatpush1.bf16.msra.mxu0 %v7366
    %9493 = vmatprep.subr.bf16.mxu0 %v7379
    %9494 = vmatpush1.bf16.msra.mxu0 %v7378
    %9495 = vmatprep.subr.bf16.mxu0 %v7391
    %9496 = vmatpush1.bf16.msra.mxu0 %v7390
    %9497 = vmatprep.subr.bf16.mxu0 %v7403
    %9498 = vmatpush1.bf16.msra.mxu0 %v7402
    %9499 = vmatprep.subr.bf16.mxu0 %v7415
    %9500 = vmatpush1.bf16.msra.mxu0 %v7414
    %9501 = vmatprep.subr.bf16.mxu0 %v7427
    %9502 = vmatpush1.bf16.msra.mxu0 %v7426
    %9503 = vmatprep.subr.bf16.mxu0 %v7439
    %9504 = vmatpush1.bf16.msra.mxu0 %v7438
    %9505 = vmatprep.subr.bf16.mxu0 %v7451
    %9506 = vmatpush1.bf16.msra.mxu0 %v7450
    %9507 = vmatprep.subr.bf16.mxu0 %v7463
    %9508 = vmatpush1.bf16.msra.mxu0 %v7462
    %9509 = vmatprep.mubr.bf16.mxu0 %v3939
    %9510 = vmatmul.mubr.bf16.gmra.mrb[0].mxu0 %v3938
    %v9511 = vpop.f32.mrb[0].mxu0
    %v9512 = vadd.f32 %v9471, %v9511
    %v9513 = vpop.f32.mrb[0].mxu0
    %v9514 = vadd.f32 %v9473, %v9513
    %v9515 = vpop.f32.mrb[0].mxu0
    %v9516 = vpop.f32.mrb[0].mxu0
    %9517 = vdwg.mxu0
    %9518 = vmatprep.subr.bf16.mxu0 %v7475
    %9519 = vmatpush1.bf16.msra.mxu0 %v7474
    %9520 = vmatprep.subr.bf16.mxu0 %v7487
    %9521 = vmatpush1.bf16.msra.mxu0 %v7486
    %9522 = vmatprep.subr.bf16.mxu0 %v7499
    %9523 = vmatpush1.bf16.msra.mxu0 %v7498
    %9524 = vmatprep.subr.bf16.mxu0 %v7511
    %9525 = vmatpush1.bf16.msra.mxu0 %v7510
    %9526 = vmatprep.subr.bf16.mxu0 %v7523
    %9527 = vmatpush1.bf16.msra.mxu0 %v7522
    %9528 = vmatprep.subr.bf16.mxu0 %v7535
    %9529 = vmatpush1.bf16.msra.mxu0 %v7534
    %9530 = vmatprep.subr.bf16.mxu0 %v7547
    %9531 = vmatpush1.bf16.msra.mxu0 %v7546
    %9532 = vmatprep.subr.bf16.mxu0 %v7559
    %9533 = vmatpush1.bf16.msra.mxu0 %v7558
    %9534 = vmatprep.subr.bf16.mxu0 %v7571
    %9535 = vmatpush1.bf16.msra.mxu0 %v7570
    %9536 = vmatprep.subr.bf16.mxu0 %v7583
    %9537 = vmatpush1.bf16.msra.mxu0 %v7582
    %9538 = vmatprep.subr.bf16.mxu0 %v7595
    %9539 = vmatpush1.bf16.msra.mxu0 %v7594
    %9540 = vmatprep.subr.bf16.mxu0 %v7607
    %9541 = vmatpush1.bf16.msra.mxu0 %v7606
    %9542 = vmatprep.subr.bf16.mxu0 %v7619
    %9543 = vmatpush1.bf16.msra.mxu0 %v7618
    %9544 = vmatprep.subr.bf16.mxu0 %v7631
    %9545 = vmatpush1.bf16.msra.mxu0 %v7630
    %9546 = vmatprep.subr.bf16.mxu0 %v7643
    %9547 = vmatpush1.bf16.msra.mxu0 %v7642
    %9548 = vmatprep.subr.bf16.mxu0 %v7655
    %9549 = vmatpush1.bf16.msra.mxu0 %v7654
    %9550 = vmatprep.mubr.bf16.mxu0 %v3941
    %9551 = vmatmul.mubr.bf16.gmra.mrb[0].mxu0 %v3940
    %v9552 = vpop.f32.mrb[0].mxu0
    %v9553 = vadd.f32 %v9512, %v9552
    %v9554 = vpop.f32.mrb[0].mxu0
    %v9555 = vadd.f32 %v9514, %v9554
    %v9556 = vpop.f32.mrb[0].mxu0
    %v9557 = vpop.f32.mrb[0].mxu0
    %9558 = vdwg.mxu0
    %9559 = vmatprep.subr.bf16.mxu0 %v7667
    %9560 = vmatpush1.bf16.msra.mxu0 %v7666
    %9561 = vmatprep.subr.bf16.mxu0 %v7679
    %9562 = vmatpush1.bf16.msra.mxu0 %v7678
    %9563 = vmatprep.subr.bf16.mxu0 %v7691
    %9564 = vmatpush1.bf16.msra.mxu0 %v7690
    %9565 = vmatprep.subr.bf16.mxu0 %v7703
    %9566 = vmatpush1.bf16.msra.mxu0 %v7702
    %9567 = vmatprep.subr.bf16.mxu0 %v7715
    %9568 = vmatpush1.bf16.msra.mxu0 %v7714
    %9569 = vmatprep.subr.bf16.mxu0 %v7727
    %9570 = vmatpush1.bf16.msra.mxu0 %v7726
    %9571 = vmatprep.subr.bf16.mxu0 %v7739
    %9572 = vmatpush1.bf16.msra.mxu0 %v7738
    %9573 = vmatprep.subr.bf16.mxu0 %v7751
    %9574 = vmatpush1.bf16.msra.mxu0 %v7750
    %9575 = vmatprep.subr.bf16.mxu0 %v7763
    %9576 = vmatpush1.bf16.msra.mxu0 %v7762
    %9577 = vmatprep.subr.bf16.mxu0 %v7775
    %9578 = vmatpush1.bf16.msra.mxu0 %v7774
    %9579 = vmatprep.subr.bf16.mxu0 %v7787
    %9580 = vmatpush1.bf16.msra.mxu0 %v7786
    %9581 = vmatprep.subr.bf16.mxu0 %v7799
    %9582 = vmatpush1.bf16.msra.mxu0 %v7798
    %9583 = vmatprep.subr.bf16.mxu0 %v7811
    %9584 = vmatpush1.bf16.msra.mxu0 %v7810
    %9585 = vmatprep.subr.bf16.mxu0 %v7823
    %9586 = vmatpush1.bf16.msra.mxu0 %v7822
    %9587 = vmatprep.subr.bf16.mxu0 %v7835
    %9588 = vmatpush1.bf16.msra.mxu0 %v7834
    %9589 = vmatprep.subr.bf16.mxu0 %v7847
    %9590 = vmatpush1.bf16.msra.mxu0 %v7846
    %9591 = vmatprep.mubr.bf16.mxu0 %v3943
    %9592 = vmatmul.mubr.bf16.gmra.mrb[0].mxu0 %v3942
    %v9593 = vpop.f32.mrb[0].mxu0
    %v9594 = vadd.f32 %v9553, %v9593
    %v9595 = vpop.f32.mrb[0].mxu0
    %v9596 = vadd.f32 %v9555, %v9595
    %v9597 = vpop.f32.mrb[0].mxu0
    %v9598 = vpop.f32.mrb[0].mxu0
    %9599 = vdwg.mxu0
    %v9600 = vmax.f32 %v8774, 0.0
    %v9601 = vmax.f32 %v8776, 0.0
    %v9602 = vmax.f32 %v8938, 0.0
    %v9603 = vmax.f32 %v8940, 0.0
    %v9604 = vmax.f32 %v9102, 0.0
    %v9605 = vmax.f32 %v9104, 0.0
    %v9606 = vmax.f32 %v9266, 0.0
    %v9607 = vmax.f32 %v9268, 0.0
    %v9608 = vmax.f32 %v9430, 0.0
    %v9609 = vmax.f32 %v9432, 0.0
    %v9610 = vmax.f32 %v9594, 0.0
    %v9611 = vmax.f32 %v9596, 0.0
    %v9612 = vpack.c.bf16 %v9600, %v9600
    %v9613 = vpack.c.bf16 %v9601, %v9601
    %v9614 = vpack.c.bf16 %v9602, %v9602
    %v9615 = vpack.c.bf16 %v9603, %v9603
    %v9616 = vpack.c.bf16 %v9604, %v9604
    %v9617 = vpack.c.bf16 %v9605, %v9605
    %v9618 = vpack.c.bf16 %v9606, %v9606
    %v9619 = vpack.c.bf16 %v9607, %v9607
    %v9620 = vpack.c.bf16 %v9608, %v9608
    %v9621 = vpack.c.bf16 %v9609, %v9609
    %v9622 = vpack.c.bf16 %v9610, %v9610
    %v9623 = vpack.c.bf16 %v9611, %v9611
    %v9624 = vld [vmem:[#allocation12] sm:$0xf]
    %v9625 = vld [vmem:[#allocation12 + $0x4] sm:$0xf]
    %v9626 = vld [vmem:[#allocation12 + $0x8] sm:$0xf]
    %v9627 = vld [vmem:[#allocation12 + $0xc] sm:$0xf]
    %v9628 = vld [vmem:[#allocation12 + $0x10] sm:$0xf]
    %v9629 = vld [vmem:[#allocation12 + $0x14] sm:$0xf]
    %v9630 = vld [vmem:[#allocation12 + $0x18] sm:$0xf]
    %v9631 = vld [vmem:[#allocation12 + $0x1c] sm:$0xf]
    %v9632 = vld [vmem:[#allocation12 + $0x20] sm:$0xf]
    %v9633 = vld [vmem:[#allocation12 + $0x24] sm:$0xf]
    %v9634 = vld [vmem:[#allocation12 + $0x28] sm:$0xf]
    %v9635 = vld [vmem:[#allocation12 + $0x2c] sm:$0xf]
    %v9636 = vld [vmem:[#allocation12 + $0x30] sm:$0xf]
    %v9637 = vld [vmem:[#allocation12 + $0x34] sm:$0xf]
    %v9638 = vld [vmem:[#allocation12 + $0x38] sm:$0xf]
    %v9639 = vld [vmem:[#allocation12 + $0x3c] sm:$0xf]
    %v9640 = vld [vmem:[#allocation12 + $0x40] sm:$0xf]
    %v9641 = vld [vmem:[#allocation12 + $0x44] sm:$0xf]
    %v9642 = vld [vmem:[#allocation12 + $0x48] sm:$0xf]
    %v9643 = vld [vmem:[#allocation12 + $0x4c] sm:$0xf]
    %v9644 = vld [vmem:[#allocation12 + $0x50] sm:$0xf]
    %v9645 = vld [vmem:[#allocation12 + $0x54] sm:$0xf]
    %v9646 = vld [vmem:[#allocation12 + $0x58] sm:$0xf]
    %v9647 = vld [vmem:[#allocation12 + $0x5c] sm:$0xf]
    %v9648 = vld [vmem:[#allocation12 + $0x60] sm:$0xf]
    %v9649 = vld [vmem:[#allocation12 + $0x64] sm:$0xf]
    %v9650 = vld [vmem:[#allocation12 + $0x68] sm:$0xf]
    %v9651 = vld [vmem:[#allocation12 + $0x6c] sm:$0xf]
    %v9652 = vld [vmem:[#allocation12 + $0x70] sm:$0xf]
    %v9653 = vld [vmem:[#allocation12 + $0x74] sm:$0xf]
    %v9654 = vld [vmem:[#allocation12 + $0x78] sm:$0xf]
    %v9655 = vld [vmem:[#allocation12 + $0x7c] sm:$0xf]
    %v9656 = vld [vmem:[#allocation12 + $0x80] sm:$0xf]
    %v9657 = vld [vmem:[#allocation12 + $0x84] sm:$0xf]
    %v9658 = vld [vmem:[#allocation12 + $0x88] sm:$0xf]
    %v9659 = vld [vmem:[#allocation12 + $0x8c] sm:$0xf]
    %v9660 = vld [vmem:[#allocation12 + $0x90] sm:$0xf]
    %v9661 = vld [vmem:[#allocation12 + $0x94] sm:$0xf]
    %v9662 = vld [vmem:[#allocation12 + $0x98] sm:$0xf]
    %v9663 = vld [vmem:[#allocation12 + $0x9c] sm:$0xf]
    %v9664 = vld [vmem:[#allocation12 + $0xa0] sm:$0xf]
    %v9665 = vld [vmem:[#allocation12 + $0xa4] sm:$0xf]
    %v9666 = vld [vmem:[#allocation12 + $0xa8] sm:$0xf]
    %v9667 = vld [vmem:[#allocation12 + $0xac] sm:$0xf]
    %v9668 = vld [vmem:[#allocation12 + $0xb0] sm:$0xf]
    %v9669 = vld [vmem:[#allocation12 + $0xb4] sm:$0xf]
    %v9670 = vld [vmem:[#allocation12 + $0xb8] sm:$0xf]
    %v9671 = vld [vmem:[#allocation12 + $0xbc] sm:$0xf]
    %v9672 = vld [vmem:[#allocation12 + $0xc0] sm:$0xf]
    %v9673 = vld [vmem:[#allocation12 + $0xc4] sm:$0xf]
    %v9674 = vld [vmem:[#allocation12 + $0xc8] sm:$0xf]
    %v9675 = vld [vmem:[#allocation12 + $0xcc] sm:$0xf]
    %v9676 = vld [vmem:[#allocation12 + $0xd0] sm:$0xf]
    %v9677 = vld [vmem:[#allocation12 + $0xd4] sm:$0xf]
    %v9678 = vld [vmem:[#allocation12 + $0xd8] sm:$0xf]
    %v9679 = vld [vmem:[#allocation12 + $0xdc] sm:$0xf]
    %v9680 = vld [vmem:[#allocation12 + $0xe0] sm:$0xf]
    %v9681 = vld [vmem:[#allocation12 + $0xe4] sm:$0xf]
    %v9682 = vld [vmem:[#allocation12 + $0xe8] sm:$0xf]
    %v9683 = vld [vmem:[#allocation12 + $0xec] sm:$0xf]
    %v9684 = vld [vmem:[#allocation12 + $0xf0] sm:$0xf]
    %v9685 = vld [vmem:[#allocation12 + $0xf4] sm:$0xf]
    %v9686 = vld [vmem:[#allocation12 + $0xf8] sm:$0xf]
    %v9687 = vld [vmem:[#allocation12 + $0xfc] sm:$0xf]
    %v9688 = vld [vmem:[#allocation13] sm:$0x1]
    %v9690 = vlaneseq
    %v9691 = vshrl.u32 %v9690, 7
    %v9692 = vsub.s32 0, %v9691
    %v9693 = vrot.slane %v9688, %v9692
    %v9759 = vunpack.c.l.b16 %v9624
    %v9760 = vunpack.c.l.b16 %v9625
    %v9761 = vunpack.c.l.b16 %v9626
    %v9762 = vunpack.c.l.b16 %v9627
    %v9763 = vunpack.c.l.b16 %v9628
    %v9764 = vunpack.c.l.b16 %v9629
    %v9765 = vunpack.c.l.b16 %v9630
    %v9766 = vunpack.c.l.b16 %v9631
    %v9767 = vunpack.c.l.b16 %v9632
    %v9768 = vunpack.c.l.b16 %v9633
    %v9769 = vunpack.c.l.b16 %v9634
    %v9770 = vunpack.c.l.b16 %v9635
    %v9771 = vunpack.c.l.b16 %v9636
    %v9772 = vunpack.c.l.b16 %v9637
    %v9773 = vunpack.c.l.b16 %v9638
    %v9774 = vunpack.c.l.b16 %v9639
    %v9775 = vunpack.c.l.b16 %v9640
    %v9776 = vunpack.c.l.b16 %v9641
    %v9777 = vunpack.c.l.b16 %v9642
    %v9778 = vunpack.c.l.b16 %v9643
    %v9779 = vunpack.c.l.b16 %v9644
    %v9780 = vunpack.c.l.b16 %v9645
    %v9781 = vunpack.c.l.b16 %v9646
    %v9782 = vunpack.c.l.b16 %v9647
    %v9783 = vunpack.c.l.b16 %v9648
    %v9784 = vunpack.c.l.b16 %v9649
    %v9785 = vunpack.c.l.b16 %v9650
    %v9786 = vunpack.c.l.b16 %v9651
    %v9787 = vunpack.c.l.b16 %v9652
    %v9788 = vunpack.c.l.b16 %v9653
    %v9789 = vunpack.c.l.b16 %v9654
    %v9790 = vunpack.c.l.b16 %v9655
    %v9791 = vunpack.c.l.b16 %v9656
    %v9792 = vunpack.c.l.b16 %v9657
    %v9793 = vunpack.c.l.b16 %v9658
    %v9794 = vunpack.c.l.b16 %v9659
    %v9795 = vunpack.c.l.b16 %v9660
    %v9796 = vunpack.c.l.b16 %v9661
    %v9797 = vunpack.c.l.b16 %v9662
    %v9798 = vunpack.c.l.b16 %v9663
    %v9799 = vunpack.c.l.b16 %v9664
    %v9800 = vunpack.c.l.b16 %v9665
    %v9801 = vunpack.c.l.b16 %v9666
    %v9802 = vunpack.c.l.b16 %v9667
    %v9803 = vunpack.c.l.b16 %v9668
    %v9804 = vunpack.c.l.b16 %v9669
    %v9805 = vunpack.c.l.b16 %v9670
    %v9806 = vunpack.c.l.b16 %v9671
    %v9807 = vunpack.c.l.b16 %v9672
    %v9808 = vunpack.c.l.b16 %v9673
    %v9809 = vunpack.c.l.b16 %v9674
    %v9810 = vunpack.c.l.b16 %v9675
    %v9811 = vunpack.c.l.b16 %v9676
    %v9812 = vunpack.c.l.b16 %v9677
    %v9813 = vunpack.c.l.b16 %v9678
    %v9814 = vunpack.c.l.b16 %v9679
    %v9815 = vunpack.c.l.b16 %v9680
    %v9816 = vunpack.c.l.b16 %v9681
    %v9817 = vunpack.c.l.b16 %v9682
    %v9818 = vunpack.c.l.b16 %v9683
    %v9819 = vunpack.c.l.b16 %v9684
    %v9820 = vunpack.c.l.b16 %v9685
    %v9821 = vunpack.c.l.b16 %v9686
    %v9822 = vunpack.c.l.b16 %v9687
    %v9823 = vpack.c.b16 %v9760, %v9759
    %v9824 = vpack.c.b16 %v9762, %v9761
    %v9825 = vpack.c.b16 %v9764, %v9763
    %v9826 = vpack.c.b16 %v9766, %v9765
    %v9827 = vpack.c.b16 %v9768, %v9767
    %v9828 = vpack.c.b16 %v9770, %v9769
    %v9829 = vpack.c.b16 %v9772, %v9771
    %v9830 = vpack.c.b16 %v9774, %v9773
    %v9831 = vpack.c.b16 %v9776, %v9775
    %v9832 = vpack.c.b16 %v9778, %v9777
    %v9833 = vpack.c.b16 %v9780, %v9779
    %v9834 = vpack.c.b16 %v9782, %v9781
    %v9835 = vpack.c.b16 %v9784, %v9783
    %v9836 = vpack.c.b16 %v9786, %v9785
    %v9837 = vpack.c.b16 %v9788, %v9787
    %v9838 = vpack.c.b16 %v9790, %v9789
    %v9839 = vpack.c.b16 %v9792, %v9791
    %v9840 = vpack.c.b16 %v9794, %v9793
    %v9841 = vpack.c.b16 %v9796, %v9795
    %v9842 = vpack.c.b16 %v9798, %v9797
    %v9843 = vpack.c.b16 %v9800, %v9799
    %v9844 = vpack.c.b16 %v9802, %v9801
    %v9845 = vpack.c.b16 %v9804, %v9803
    %v9846 = vpack.c.b16 %v9806, %v9805
    %v9847 = vpack.c.b16 %v9808, %v9807
    %v9848 = vpack.c.b16 %v9810, %v9809
    %v9849 = vpack.c.b16 %v9812, %v9811
    %v9850 = vpack.c.b16 %v9814, %v9813
    %v9851 = vpack.c.b16 %v9816, %v9815
    %v9852 = vpack.c.b16 %v9818, %v9817
    %v9853 = vpack.c.b16 %v9820, %v9819
    %v9854 = vpack.c.b16 %v9822, %v9821
    %9887 = vmatprep.subr.bf16.mxu0 0
    %9888 = vmatpush1.bf16.msra.mxu0 %v9823
    %9889 = vmatprep.subr.bf16.mxu0 0
    %9890 = vmatpush1.bf16.msra.mxu0 %v9824
    %9891 = vmatprep.subr.bf16.mxu0 0
    %9892 = vmatpush1.bf16.msra.mxu0 %v9825
    %9893 = vmatprep.subr.bf16.mxu0 0
    %9894 = vmatpush1.bf16.msra.mxu0 %v9826
    %9895 = vmatprep.subr.bf16.mxu0 0
    %9896 = vmatpush1.bf16.msra.mxu0 %v9827
    %9897 = vmatprep.subr.bf16.mxu0 0
    %9898 = vmatpush1.bf16.msra.mxu0 %v9828
    %9899 = vmatprep.subr.bf16.mxu0 0
    %9900 = vmatpush1.bf16.msra.mxu0 %v9829
    %9901 = vmatprep.subr.bf16.mxu0 0
    %9902 = vmatpush1.bf16.msra.mxu0 %v9830
    %9903 = vmatprep.subr.bf16.mxu0 0
    %9904 = vmatpush1.bf16.msra.mxu0 %v9831
    %9905 = vmatprep.subr.bf16.mxu0 0
    %9906 = vmatpush1.bf16.msra.mxu0 %v9832
    %9907 = vmatprep.subr.bf16.mxu0 0
    %9908 = vmatpush1.bf16.msra.mxu0 %v9833
    %9909 = vmatprep.subr.bf16.mxu0 0
    %9910 = vmatpush1.bf16.msra.mxu0 %v9834
    %9911 = vmatprep.subr.bf16.mxu0 0
    %9912 = vmatpush1.bf16.msra.mxu0 %v9835
    %9913 = vmatprep.subr.bf16.mxu0 0
    %9914 = vmatpush1.bf16.msra.mxu0 %v9836
    %9915 = vmatprep.subr.bf16.mxu0 0
    %9916 = vmatpush1.bf16.msra.mxu0 %v9837
    %9917 = vmatprep.subr.bf16.mxu0 0
    %9918 = vmatpush1.bf16.msra.mxu0 %v9838
    %9919 = vmatprep.mubr.bf16.mxu0 %v9613
    %9920 = vmatmul.mubr.bf16.gmra.mrb[0].mxu0 %v9612
    %v9921 = vpop.f32.mrb[0].mxu0
    %v9922 = vadd.f32 %v9693, %v9921
    %v9923 = vpop.f32.mrb[0].mxu0
    %v9924 = vpop.f32.mrb[0].mxu0
    %v9925 = vpop.f32.mrb[0].mxu0
    %9926 = vdwg.mxu0
    %9927 = vmatprep.subr.bf16.mxu0 0
    %9928 = vmatpush1.bf16.msra.mxu0 %v9839
    %9929 = vmatprep.subr.bf16.mxu0 0
    %9930 = vmatpush1.bf16.msra.mxu0 %v9840
    %9931 = vmatprep.subr.bf16.mxu0 0
    %9932 = vmatpush1.bf16.msra.mxu0 %v9841
    %9933 = vmatprep.subr.bf16.mxu0 0
    %9934 = vmatpush1.bf16.msra.mxu0 %v9842
    %9935 = vmatprep.subr.bf16.mxu0 0
    %9936 = vmatpush1.bf16.msra.mxu0 %v9843
    %9937 = vmatprep.subr.bf16.mxu0 0
    %9938 = vmatpush1.bf16.msra.mxu0 %v9844
    %9939 = vmatprep.subr.bf16.mxu0 0
    %9940 = vmatpush1.bf16.msra.mxu0 %v9845
    %9941 = vmatprep.subr.bf16.mxu0 0
    %9942 = vmatpush1.bf16.msra.mxu0 %v9846
    %9943 = vmatprep.subr.bf16.mxu0 0
    %9944 = vmatpush1.bf16.msra.mxu0 %v9847
    %9945 = vmatprep.subr.bf16.mxu0 0
    %9946 = vmatpush1.bf16.msra.mxu0 %v9848
    %9947 = vmatprep.subr.bf16.mxu0 0
    %9948 = vmatpush1.bf16.msra.mxu0 %v9849
    %9949 = vmatprep.subr.bf16.mxu0 0
    %9950 = vmatpush1.bf16.msra.mxu0 %v9850
    %9951 = vmatprep.subr.bf16.mxu0 0
    %9952 = vmatpush1.bf16.msra.mxu0 %v9851
    %9953 = vmatprep.subr.bf16.mxu0 0
    %9954 = vmatpush1.bf16.msra.mxu0 %v9852
    %9955 = vmatprep.subr.bf16.mxu0 0
    %9956 = vmatpush1.bf16.msra.mxu0 %v9853
    %9957 = vmatprep.subr.bf16.mxu0 0
    %9958 = vmatpush1.bf16.msra.mxu0 %v9854
    %9959 = vmatprep.mubr.bf16.mxu0 %v9615
    %9960 = vmatmul.mubr.bf16.gmra.mrb[0].mxu0 %v9614
    %v9961 = vpop.f32.mrb[0].mxu0
    %v9962 = vadd.f32 %v9922, %v9961
    %v9963 = vpop.f32.mrb[0].mxu0
    %v9964 = vpop.f32.mrb[0].mxu0
    %v9965 = vpop.f32.mrb[0].mxu0
    %9966 = vdwg.mxu0
    %9967 = vst [vmem:[%s9] sm:$0x3] %v9962
    %s9968 = scalar_lea.vmem [#allocation12], 256
    %v9969 = vld [vmem:[%s9968] sm:$0xf]
    %v9970 = vld [vmem:[%s9968 + $0x4] sm:$0xf]
    %v9971 = vld [vmem:[%s9968 + $0x8] sm:$0xf]
    %v9972 = vld [vmem:[%s9968 + $0xc] sm:$0xf]
    %v9973 = vld [vmem:[%s9968 + $0x10] sm:$0xf]
    %v9974 = vld [vmem:[%s9968 + $0x14] sm:$0xf]
    %v9975 = vld [vmem:[%s9968 + $0x18] sm:$0xf]
    %v9976 = vld [vmem:[%s9968 + $0x1c] sm:$0xf]
    %v9977 = vld [vmem:[%s9968 + $0x20] sm:$0xf]
    %v9978 = vld [vmem:[%s9968 + $0x24] sm:$0xf]
    %v9979 = vld [vmem:[%s9968 + $0x28] sm:$0xf]
    %v9980 = vld [vmem:[%s9968 + $0x2c] sm:$0xf]
    %v9981 = vld [vmem:[%s9968 + $0x30] sm:$0xf]
    %v9982 = vld [vmem:[%s9968 + $0x34] sm:$0xf]
    %v9983 = vld [vmem:[%s9968 + $0x38] sm:$0xf]
    %v9984 = vld [vmem:[%s9968 + $0x3c] sm:$0xf]
    %v9985 = vld [vmem:[%s9968 + $0x40] sm:$0xf]
    %v9986 = vld [vmem:[%s9968 + $0x44] sm:$0xf]
    %v9987 = vld [vmem:[%s9968 + $0x48] sm:$0xf]
    %v9988 = vld [vmem:[%s9968 + $0x4c] sm:$0xf]
    %v9989 = vld [vmem:[%s9968 + $0x50] sm:$0xf]
    %v9990 = vld [vmem:[%s9968 + $0x54] sm:$0xf]
    %v9991 = vld [vmem:[%s9968 + $0x58] sm:$0xf]
    %v9992 = vld [vmem:[%s9968 + $0x5c] sm:$0xf]
    %v9993 = vld [vmem:[%s9968 + $0x60] sm:$0xf]
    %v9994 = vld [vmem:[%s9968 + $0x64] sm:$0xf]
    %v9995 = vld [vmem:[%s9968 + $0x68] sm:$0xf]
    %v9996 = vld [vmem:[%s9968 + $0x6c] sm:$0xf]
    %v9997 = vld [vmem:[%s9968 + $0x70] sm:$0xf]
    %v9998 = vld [vmem:[%s9968 + $0x74] sm:$0xf]
    %v9999 = vld [vmem:[%s9968 + $0x78] sm:$0xf]
    %v10000 = vld [vmem:[%s9968 + $0x7c] sm:$0xf]
    %v10001 = vld [vmem:[%s9968 + $0x80] sm:$0xf]
    %v10002 = vld [vmem:[%s9968 + $0x84] sm:$0xf]
    %v10003 = vld [vmem:[%s9968 + $0x88] sm:$0xf]
    %v10004 = vld [vmem:[%s9968 + $0x8c] sm:$0xf]
    %v10005 = vld [vmem:[%s9968 + $0x90] sm:$0xf]
    %v10006 = vld [vmem:[%s9968 + $0x94] sm:$0xf]
    %v10007 = vld [vmem:[%s9968 + $0x98] sm:$0xf]
    %v10008 = vld [vmem:[%s9968 + $0x9c] sm:$0xf]
    %v10009 = vld [vmem:[%s9968 + $0xa0] sm:$0xf]
    %v10010 = vld [vmem:[%s9968 + $0xa4] sm:$0xf]
    %v10011 = vld [vmem:[%s9968 + $0xa8] sm:$0xf]
    %v10012 = vld [vmem:[%s9968 + $0xac] sm:$0xf]
    %v10013 = vld [vmem:[%s9968 + $0xb0] sm:$0xf]
    %v10014 = vld [vmem:[%s9968 + $0xb4] sm:$0xf]
    %v10015 = vld [vmem:[%s9968 + $0xb8] sm:$0xf]
    %v10016 = vld [vmem:[%s9968 + $0xbc] sm:$0xf]
    %v10017 = vld [vmem:[%s9968 + $0xc0] sm:$0xf]
    %v10018 = vld [vmem:[%s9968 + $0xc4] sm:$0xf]
    %v10019 = vld [vmem:[%s9968 + $0xc8] sm:$0xf]
    %v10020 = vld [vmem:[%s9968 + $0xcc] sm:$0xf]
    %v10021 = vld [vmem:[%s9968 + $0xd0] sm:$0xf]
    %v10022 = vld [vmem:[%s9968 + $0xd4] sm:$0xf]
    %v10023 = vld [vmem:[%s9968 + $0xd8] sm:$0xf]
    %v10024 = vld [vmem:[%s9968 + $0xdc] sm:$0xf]
    %v10025 = vld [vmem:[%s9968 + $0xe0] sm:$0xf]
    %v10026 = vld [vmem:[%s9968 + $0xe4] sm:$0xf]
    %v10027 = vld [vmem:[%s9968 + $0xe8] sm:$0xf]
    %v10028 = vld [vmem:[%s9968 + $0xec] sm:$0xf]
    %v10029 = vld [vmem:[%s9968 + $0xf0] sm:$0xf]
    %v10030 = vld [vmem:[%s9968 + $0xf4] sm:$0xf]
    %v10031 = vld [vmem:[%s9968 + $0xf8] sm:$0xf]
    %v10032 = vld [vmem:[%s9968 + $0xfc] sm:$0xf]
    %v10033 = vld [vmem:[#allocation13 + $0x1] sm:$0x1]
    %v10035 = vlaneseq
    %v10036 = vshrl.u32 %v10035, 7
    %v10037 = vsub.s32 0, %v10036
    %v10038 = vrot.slane %v10033, %v10037
    %v10104 = vunpack.c.l.b16 %v9969
    %v10105 = vunpack.c.l.b16 %v9970
    %v10106 = vunpack.c.l.b16 %v9971
    %v10107 = vunpack.c.l.b16 %v9972
    %v10108 = vunpack.c.l.b16 %v9973
    %v10109 = vunpack.c.l.b16 %v9974
    %v10110 = vunpack.c.l.b16 %v9975
    %v10111 = vunpack.c.l.b16 %v9976
    %v10112 = vunpack.c.l.b16 %v9977
    %v10113 = vunpack.c.l.b16 %v9978
    %v10114 = vunpack.c.l.b16 %v9979
    %v10115 = vunpack.c.l.b16 %v9980
    %v10116 = vunpack.c.l.b16 %v9981
    %v10117 = vunpack.c.l.b16 %v9982
    %v10118 = vunpack.c.l.b16 %v9983
    %v10119 = vunpack.c.l.b16 %v9984
    %v10120 = vunpack.c.l.b16 %v9985
    %v10121 = vunpack.c.l.b16 %v9986
    %v10122 = vunpack.c.l.b16 %v9987
    %v10123 = vunpack.c.l.b16 %v9988
    %v10124 = vunpack.c.l.b16 %v9989
    %v10125 = vunpack.c.l.b16 %v9990
    %v10126 = vunpack.c.l.b16 %v9991
    %v10127 = vunpack.c.l.b16 %v9992
    %v10128 = vunpack.c.l.b16 %v9993
    %v10129 = vunpack.c.l.b16 %v9994
    %v10130 = vunpack.c.l.b16 %v9995
    %v10131 = vunpack.c.l.b16 %v9996
    %v10132 = vunpack.c.l.b16 %v9997
    %v10133 = vunpack.c.l.b16 %v9998
    %v10134 = vunpack.c.l.b16 %v9999
    %v10135 = vunpack.c.l.b16 %v10000
    %v10136 = vunpack.c.l.b16 %v10001
    %v10137 = vunpack.c.l.b16 %v10002
    %v10138 = vunpack.c.l.b16 %v10003
    %v10139 = vunpack.c.l.b16 %v10004
    %v10140 = vunpack.c.l.b16 %v10005
    %v10141 = vunpack.c.l.b16 %v10006
    %v10142 = vunpack.c.l.b16 %v10007
    %v10143 = vunpack.c.l.b16 %v10008
    %v10144 = vunpack.c.l.b16 %v10009
    %v10145 = vunpack.c.l.b16 %v10010
    %v10146 = vunpack.c.l.b16 %v10011
    %v10147 = vunpack.c.l.b16 %v10012
    %v10148 = vunpack.c.l.b16 %v10013
    %v10149 = vunpack.c.l.b16 %v10014
    %v10150 = vunpack.c.l.b16 %v10015
    %v10151 = vunpack.c.l.b16 %v10016
    %v10152 = vunpack.c.l.b16 %v10017
    %v10153 = vunpack.c.l.b16 %v10018
    %v10154 = vunpack.c.l.b16 %v10019
    %v10155 = vunpack.c.l.b16 %v10020
    %v10156 = vunpack.c.l.b16 %v10021
    %v10157 = vunpack.c.l.b16 %v10022
    %v10158 = vunpack.c.l.b16 %v10023
    %v10159 = vunpack.c.l.b16 %v10024
    %v10160 = vunpack.c.l.b16 %v10025
    %v10161 = vunpack.c.l.b16 %v10026
    %v10162 = vunpack.c.l.b16 %v10027
    %v10163 = vunpack.c.l.b16 %v10028
    %v10164 = vunpack.c.l.b16 %v10029
    %v10165 = vunpack.c.l.b16 %v10030
    %v10166 = vunpack.c.l.b16 %v10031
    %v10167 = vunpack.c.l.b16 %v10032
    %v10168 = vpack.c.b16 %v10105, %v10104
    %v10169 = vpack.c.b16 %v10107, %v10106
    %v10170 = vpack.c.b16 %v10109, %v10108
    %v10171 = vpack.c.b16 %v10111, %v10110
    %v10172 = vpack.c.b16 %v10113, %v10112
    %v10173 = vpack.c.b16 %v10115, %v10114
    %v10174 = vpack.c.b16 %v10117, %v10116
    %v10175 = vpack.c.b16 %v10119, %v10118
    %v10176 = vpack.c.b16 %v10121, %v10120
    %v10177 = vpack.c.b16 %v10123, %v10122
    %v10178 = vpack.c.b16 %v10125, %v10124
    %v10179 = vpack.c.b16 %v10127, %v10126
    %v10180 = vpack.c.b16 %v10129, %v10128
    %v10181 = vpack.c.b16 %v10131, %v10130
    %v10182 = vpack.c.b16 %v10133, %v10132
    %v10183 = vpack.c.b16 %v10135, %v10134
    %v10184 = vpack.c.b16 %v10137, %v10136
    %v10185 = vpack.c.b16 %v10139, %v10138
    %v10186 = vpack.c.b16 %v10141, %v10140
    %v10187 = vpack.c.b16 %v10143, %v10142
    %v10188 = vpack.c.b16 %v10145, %v10144
    %v10189 = vpack.c.b16 %v10147, %v10146
    %v10190 = vpack.c.b16 %v10149, %v10148
    %v10191 = vpack.c.b16 %v10151, %v10150
    %v10192 = vpack.c.b16 %v10153, %v10152
    %v10193 = vpack.c.b16 %v10155, %v10154
    %v10194 = vpack.c.b16 %v10157, %v10156
    %v10195 = vpack.c.b16 %v10159, %v10158
    %v10196 = vpack.c.b16 %v10161, %v10160
    %v10197 = vpack.c.b16 %v10163, %v10162
    %v10198 = vpack.c.b16 %v10165, %v10164
    %v10199 = vpack.c.b16 %v10167, %v10166
    %10232 = vmatprep.subr.bf16.mxu0 0
    %10233 = vmatpush1.bf16.msra.mxu0 %v10168
    %10234 = vmatprep.subr.bf16.mxu0 0
    %10235 = vmatpush1.bf16.msra.mxu0 %v10169
    %10236 = vmatprep.subr.bf16.mxu0 0
    %10237 = vmatpush1.bf16.msra.mxu0 %v10170
    %10238 = vmatprep.subr.bf16.mxu0 0
    %10239 = vmatpush1.bf16.msra.mxu0 %v10171
    %10240 = vmatprep.subr.bf16.mxu0 0
    %10241 = vmatpush1.bf16.msra.mxu0 %v10172
    %10242 = vmatprep.subr.bf16.mxu0 0
    %10243 = vmatpush1.bf16.msra.mxu0 %v10173
    %10244 = vmatprep.subr.bf16.mxu0 0
    %10245 = vmatpush1.bf16.msra.mxu0 %v10174
    %10246 = vmatprep.subr.bf16.mxu0 0
    %10247 = vmatpush1.bf16.msra.mxu0 %v10175
    %10248 = vmatprep.subr.bf16.mxu0 0
    %10249 = vmatpush1.bf16.msra.mxu0 %v10176
    %10250 = vmatprep.subr.bf16.mxu0 0
    %10251 = vmatpush1.bf16.msra.mxu0 %v10177
    %10252 = vmatprep.subr.bf16.mxu0 0
    %10253 = vmatpush1.bf16.msra.mxu0 %v10178
    %10254 = vmatprep.subr.bf16.mxu0 0
    %10255 = vmatpush1.bf16.msra.mxu0 %v10179
    %10256 = vmatprep.subr.bf16.mxu0 0
    %10257 = vmatpush1.bf16.msra.mxu0 %v10180
    %10258 = vmatprep.subr.bf16.mxu0 0
    %10259 = vmatpush1.bf16.msra.mxu0 %v10181
    %10260 = vmatprep.subr.bf16.mxu0 0
    %10261 = vmatpush1.bf16.msra.mxu0 %v10182
    %10262 = vmatprep.subr.bf16.mxu0 0
    %10263 = vmatpush1.bf16.msra.mxu0 %v10183
    %10264 = vmatprep.mubr.bf16.mxu0 %v9617
    %10265 = vmatmul.mubr.bf16.gmra.mrb[0].mxu0 %v9616
    %v10266 = vpop.f32.mrb[0].mxu0
    %v10267 = vadd.f32 %v10038, %v10266
    %v10268 = vpop.f32.mrb[0].mxu0
    %v10269 = vpop.f32.mrb[0].mxu0
    %v10270 = vpop.f32.mrb[0].mxu0
    %10271 = vdwg.mxu0
    %10272 = vmatprep.subr.bf16.mxu0 0
    %10273 = vmatpush1.bf16.msra.mxu0 %v10184
    %10274 = vmatprep.subr.bf16.mxu0 0
    %10275 = vmatpush1.bf16.msra.mxu0 %v10185
    %10276 = vmatprep.subr.bf16.mxu0 0
    %10277 = vmatpush1.bf16.msra.mxu0 %v10186
    %10278 = vmatprep.subr.bf16.mxu0 0
    %10279 = vmatpush1.bf16.msra.mxu0 %v10187
    %10280 = vmatprep.subr.bf16.mxu0 0
    %10281 = vmatpush1.bf16.msra.mxu0 %v10188
    %10282 = vmatprep.subr.bf16.mxu0 0
    %10283 = vmatpush1.bf16.msra.mxu0 %v10189
    %10284 = vmatprep.subr.bf16.mxu0 0
    %10285 = vmatpush1.bf16.msra.mxu0 %v10190
    %10286 = vmatprep.subr.bf16.mxu0 0
    %10287 = vmatpush1.bf16.msra.mxu0 %v10191
    %10288 = vmatprep.subr.bf16.mxu0 0
    %10289 = vmatpush1.bf16.msra.mxu0 %v10192
    %10290 = vmatprep.subr.bf16.mxu0 0
    %10291 = vmatpush1.bf16.msra.mxu0 %v10193
    %10292 = vmatprep.subr.bf16.mxu0 0
    %10293 = vmatpush1.bf16.msra.mxu0 %v10194
    %10294 = vmatprep.subr.bf16.mxu0 0
    %10295 = vmatpush1.bf16.msra.mxu0 %v10195
    %10296 = vmatprep.subr.bf16.mxu0 0
    %10297 = vmatpush1.bf16.msra.mxu0 %v10196
    %10298 = vmatprep.subr.bf16.mxu0 0
    %10299 = vmatpush1.bf16.msra.mxu0 %v10197
    %10300 = vmatprep.subr.bf16.mxu0 0
    %10301 = vmatpush1.bf16.msra.mxu0 %v10198
    %10302 = vmatprep.subr.bf16.mxu0 0
    %10303 = vmatpush1.bf16.msra.mxu0 %v10199
    %10304 = vmatprep.mubr.bf16.mxu0 %v9619
    %10305 = vmatmul.mubr.bf16.gmra.mrb[0].mxu0 %v9618
    %v10306 = vpop.f32.mrb[0].mxu0
    %v10307 = vadd.f32 %v10267, %v10306
    %v10308 = vpop.f32.mrb[0].mxu0
    %v10309 = vpop.f32.mrb[0].mxu0
    %v10310 = vpop.f32.mrb[0].mxu0
    %10311 = vdwg.mxu0
    %v10312 = vxor.u32 %v10307, 2147483648
    %v10313 = vmul.f32 %v10312, 1.442695
    %v10314 = vpow.pop %v10313
    %v10315 = vadd.f32 %v10314, 1.0
    %v10316 = vrcp.pop %v10315
    %v10317 = vmul.f32 1.0, %v10316
    %v10318 = vmul.f32 %v10317, 224.0
    %10319 = vst [vmem:[%s9 + $0x2] sm:$0x3] %v10318
    %s10320 = scalar_lea.vmem [#allocation12], 512
    %v10321 = vld [vmem:[%s10320] sm:$0xf]
    %v10322 = vld [vmem:[%s10320 + $0x4] sm:$0xf]
    %v10323 = vld [vmem:[%s10320 + $0x8] sm:$0xf]
    %v10324 = vld [vmem:[%s10320 + $0xc] sm:$0xf]
    %v10325 = vld [vmem:[%s10320 + $0x10] sm:$0xf]
    %v10326 = vld [vmem:[%s10320 + $0x14] sm:$0xf]
    %v10327 = vld [vmem:[%s10320 + $0x18] sm:$0xf]
    %v10328 = vld [vmem:[%s10320 + $0x1c] sm:$0xf]
    %v10329 = vld [vmem:[%s10320 + $0x20] sm:$0xf]
    %v10330 = vld [vmem:[%s10320 + $0x24] sm:$0xf]
    %v10331 = vld [vmem:[%s10320 + $0x28] sm:$0xf]
    %v10332 = vld [vmem:[%s10320 + $0x2c] sm:$0xf]
    %v10333 = vld [vmem:[%s10320 + $0x30] sm:$0xf]
    %v10334 = vld [vmem:[%s10320 + $0x34] sm:$0xf]
    %v10335 = vld [vmem:[%s10320 + $0x38] sm:$0xf]
    %v10336 = vld [vmem:[%s10320 + $0x3c] sm:$0xf]
    %v10337 = vld [vmem:[%s10320 + $0x40] sm:$0xf]
    %v10338 = vld [vmem:[%s10320 + $0x44] sm:$0xf]
    %v10339 = vld [vmem:[%s10320 + $0x48] sm:$0xf]
    %v10340 = vld [vmem:[%s10320 + $0x4c] sm:$0xf]
    %v10341 = vld [vmem:[%s10320 + $0x50] sm:$0xf]
    %v10342 = vld [vmem:[%s10320 + $0x54] sm:$0xf]
    %v10343 = vld [vmem:[%s10320 + $0x58] sm:$0xf]
    %v10344 = vld [vmem:[%s10320 + $0x5c] sm:$0xf]
    %v10345 = vld [vmem:[%s10320 + $0x60] sm:$0xf]
    %v10346 = vld [vmem:[%s10320 + $0x64] sm:$0xf]
    %v10347 = vld [vmem:[%s10320 + $0x68] sm:$0xf]
    %v10348 = vld [vmem:[%s10320 + $0x6c] sm:$0xf]
    %v10349 = vld [vmem:[%s10320 + $0x70] sm:$0xf]
    %v10350 = vld [vmem:[%s10320 + $0x74] sm:$0xf]
    %v10351 = vld [vmem:[%s10320 + $0x78] sm:$0xf]
    %v10352 = vld [vmem:[%s10320 + $0x7c] sm:$0xf]
    %v10353 = vld [vmem:[%s10320 + $0x80] sm:$0xf]
    %v10354 = vld [vmem:[%s10320 + $0x84] sm:$0xf]
    %v10355 = vld [vmem:[%s10320 + $0x88] sm:$0xf]
    %v10356 = vld [vmem:[%s10320 + $0x8c] sm:$0xf]
    %v10357 = vld [vmem:[%s10320 + $0x90] sm:$0xf]
    %v10358 = vld [vmem:[%s10320 + $0x94] sm:$0xf]
    %v10359 = vld [vmem:[%s10320 + $0x98] sm:$0xf]
    %v10360 = vld [vmem:[%s10320 + $0x9c] sm:$0xf]
    %v10361 = vld [vmem:[%s10320 + $0xa0] sm:$0xf]
    %v10362 = vld [vmem:[%s10320 + $0xa4] sm:$0xf]
    %v10363 = vld [vmem:[%s10320 + $0xa8] sm:$0xf]
    %v10364 = vld [vmem:[%s10320 + $0xac] sm:$0xf]
    %v10365 = vld [vmem:[%s10320 + $0xb0] sm:$0xf]
    %v10366 = vld [vmem:[%s10320 + $0xb4] sm:$0xf]
    %v10367 = vld [vmem:[%s10320 + $0xb8] sm:$0xf]
    %v10368 = vld [vmem:[%s10320 + $0xbc] sm:$0xf]
    %v10369 = vld [vmem:[%s10320 + $0xc0] sm:$0xf]
    %v10370 = vld [vmem:[%s10320 + $0xc4] sm:$0xf]
    %v10371 = vld [vmem:[%s10320 + $0xc8] sm:$0xf]
    %v10372 = vld [vmem:[%s10320 + $0xcc] sm:$0xf]
    %v10373 = vld [vmem:[%s10320 + $0xd0] sm:$0xf]
    %v10374 = vld [vmem:[%s10320 + $0xd4] sm:$0xf]
    %v10375 = vld [vmem:[%s10320 + $0xd8] sm:$0xf]
    %v10376 = vld [vmem:[%s10320 + $0xdc] sm:$0xf]
    %v10377 = vld [vmem:[%s10320 + $0xe0] sm:$0xf]
    %v10378 = vld [vmem:[%s10320 + $0xe4] sm:$0xf]
    %v10379 = vld [vmem:[%s10320 + $0xe8] sm:$0xf]
    %v10380 = vld [vmem:[%s10320 + $0xec] sm:$0xf]
    %v10381 = vld [vmem:[%s10320 + $0xf0] sm:$0xf]
    %v10382 = vld [vmem:[%s10320 + $0xf4] sm:$0xf]
    %v10383 = vld [vmem:[%s10320 + $0xf8] sm:$0xf]
    %v10384 = vld [vmem:[%s10320 + $0xfc] sm:$0xf]
    %v10385 = vld [vmem:[#allocation13 + $0x2] sm:$0x1]
    %v10387 = vlaneseq
    %v10388 = vshrl.u32 %v10387, 7
    %v10389 = vsub.s32 0, %v10388
    %v10390 = vrot.slane %v10385, %v10389
    %v10456 = vunpack.c.l.b16 %v10321
    %v10457 = vunpack.c.l.b16 %v10322
    %v10458 = vunpack.c.l.b16 %v10323
    %v10459 = vunpack.c.l.b16 %v10324
    %v10460 = vunpack.c.l.b16 %v10325
    %v10461 = vunpack.c.l.b16 %v10326
    %v10462 = vunpack.c.l.b16 %v10327
    %v10463 = vunpack.c.l.b16 %v10328
    %v10464 = vunpack.c.l.b16 %v10329
    %v10465 = vunpack.c.l.b16 %v10330
    %v10466 = vunpack.c.l.b16 %v10331
    %v10467 = vunpack.c.l.b16 %v10332
    %v10468 = vunpack.c.l.b16 %v10333
    %v10469 = vunpack.c.l.b16 %v10334
    %v10470 = vunpack.c.l.b16 %v10335
    %v10471 = vunpack.c.l.b16 %v10336
    %v10472 = vunpack.c.l.b16 %v10337
    %v10473 = vunpack.c.l.b16 %v10338
    %v10474 = vunpack.c.l.b16 %v10339
    %v10475 = vunpack.c.l.b16 %v10340
    %v10476 = vunpack.c.l.b16 %v10341
    %v10477 = vunpack.c.l.b16 %v10342
    %v10478 = vunpack.c.l.b16 %v10343
    %v10479 = vunpack.c.l.b16 %v10344
    %v10480 = vunpack.c.l.b16 %v10345
    %v10481 = vunpack.c.l.b16 %v10346
    %v10482 = vunpack.c.l.b16 %v10347
    %v10483 = vunpack.c.l.b16 %v10348
    %v10484 = vunpack.c.l.b16 %v10349
    %v10485 = vunpack.c.l.b16 %v10350
    %v10486 = vunpack.c.l.b16 %v10351
    %v10487 = vunpack.c.l.b16 %v10352
    %v10488 = vunpack.c.l.b16 %v10353
    %v10489 = vunpack.c.l.b16 %v10354
    %v10490 = vunpack.c.l.b16 %v10355
    %v10491 = vunpack.c.l.b16 %v10356
    %v10492 = vunpack.c.l.b16 %v10357
    %v10493 = vunpack.c.l.b16 %v10358
    %v10494 = vunpack.c.l.b16 %v10359
    %v10495 = vunpack.c.l.b16 %v10360
    %v10496 = vunpack.c.l.b16 %v10361
    %v10497 = vunpack.c.l.b16 %v10362
    %v10498 = vunpack.c.l.b16 %v10363
    %v10499 = vunpack.c.l.b16 %v10364
    %v10500 = vunpack.c.l.b16 %v10365
    %v10501 = vunpack.c.l.b16 %v10366
    %v10502 = vunpack.c.l.b16 %v10367
    %v10503 = vunpack.c.l.b16 %v10368
    %v10504 = vunpack.c.l.b16 %v10369
    %v10505 = vunpack.c.l.b16 %v10370
    %v10506 = vunpack.c.l.b16 %v10371
    %v10507 = vunpack.c.l.b16 %v10372
    %v10508 = vunpack.c.l.b16 %v10373
    %v10509 = vunpack.c.l.b16 %v10374
    %v10510 = vunpack.c.l.b16 %v10375
    %v10511 = vunpack.c.l.b16 %v10376
    %v10512 = vunpack.c.l.b16 %v10377
    %v10513 = vunpack.c.l.b16 %v10378
    %v10514 = vunpack.c.l.b16 %v10379
    %v10515 = vunpack.c.l.b16 %v10380
    %v10516 = vunpack.c.l.b16 %v10381
    %v10517 = vunpack.c.l.b16 %v10382
    %v10518 = vunpack.c.l.b16 %v10383
    %v10519 = vunpack.c.l.b16 %v10384
    %v10520 = vpack.c.b16 %v10457, %v10456
    %v10521 = vpack.c.b16 %v10459, %v10458
    %v10522 = vpack.c.b16 %v10461, %v10460
    %v10523 = vpack.c.b16 %v10463, %v10462
    %v10524 = vpack.c.b16 %v10465, %v10464
    %v10525 = vpack.c.b16 %v10467, %v10466
    %v10526 = vpack.c.b16 %v10469, %v10468
    %v10527 = vpack.c.b16 %v10471, %v10470
    %v10528 = vpack.c.b16 %v10473, %v10472
    %v10529 = vpack.c.b16 %v10475, %v10474
    %v10530 = vpack.c.b16 %v10477, %v10476
    %v10531 = vpack.c.b16 %v10479, %v10478
    %v10532 = vpack.c.b16 %v10481, %v10480
    %v10533 = vpack.c.b16 %v10483, %v10482
    %v10534 = vpack.c.b16 %v10485, %v10484
    %v10535 = vpack.c.b16 %v10487, %v10486
    %v10536 = vpack.c.b16 %v10489, %v10488
    %v10537 = vpack.c.b16 %v10491, %v10490
    %v10538 = vpack.c.b16 %v10493, %v10492
    %v10539 = vpack.c.b16 %v10495, %v10494
    %v10540 = vpack.c.b16 %v10497, %v10496
    %v10541 = vpack.c.b16 %v10499, %v10498
    %v10542 = vpack.c.b16 %v10501, %v10500
    %v10543 = vpack.c.b16 %v10503, %v10502
    %v10544 = vpack.c.b16 %v10505, %v10504
    %v10545 = vpack.c.b16 %v10507, %v10506
    %v10546 = vpack.c.b16 %v10509, %v10508
    %v10547 = vpack.c.b16 %v10511, %v10510
    %v10548 = vpack.c.b16 %v10513, %v10512
    %v10549 = vpack.c.b16 %v10515, %v10514
    %v10550 = vpack.c.b16 %v10517, %v10516
    %v10551 = vpack.c.b16 %v10519, %v10518
    %10584 = vmatprep.subr.bf16.mxu0 0
    %10585 = vmatpush1.bf16.msra.mxu0 %v10520
    %10586 = vmatprep.subr.bf16.mxu0 0
    %10587 = vmatpush1.bf16.msra.mxu0 %v10521
    %10588 = vmatprep.subr.bf16.mxu0 0
    %10589 = vmatpush1.bf16.msra.mxu0 %v10522
    %10590 = vmatprep.subr.bf16.mxu0 0
    %10591 = vmatpush1.bf16.msra.mxu0 %v10523
    %10592 = vmatprep.subr.bf16.mxu0 0
    %10593 = vmatpush1.bf16.msra.mxu0 %v10524
    %10594 = vmatprep.subr.bf16.mxu0 0
    %10595 = vmatpush1.bf16.msra.mxu0 %v10525
    %10596 = vmatprep.subr.bf16.mxu0 0
    %10597 = vmatpush1.bf16.msra.mxu0 %v10526
    %10598 = vmatprep.subr.bf16.mxu0 0
    %10599 = vmatpush1.bf16.msra.mxu0 %v10527
    %10600 = vmatprep.subr.bf16.mxu0 0
    %10601 = vmatpush1.bf16.msra.mxu0 %v10528
    %10602 = vmatprep.subr.bf16.mxu0 0
    %10603 = vmatpush1.bf16.msra.mxu0 %v10529
    %10604 = vmatprep.subr.bf16.mxu0 0
    %10605 = vmatpush1.bf16.msra.mxu0 %v10530
    %10606 = vmatprep.subr.bf16.mxu0 0
    %10607 = vmatpush1.bf16.msra.mxu0 %v10531
    %10608 = vmatprep.subr.bf16.mxu0 0
    %10609 = vmatpush1.bf16.msra.mxu0 %v10532
    %10610 = vmatprep.subr.bf16.mxu0 0
    %10611 = vmatpush1.bf16.msra.mxu0 %v10533
    %10612 = vmatprep.subr.bf16.mxu0 0
    %10613 = vmatpush1.bf16.msra.mxu0 %v10534
    %10614 = vmatprep.subr.bf16.mxu0 0
    %10615 = vmatpush1.bf16.msra.mxu0 %v10535
    %10616 = vmatprep.mubr.bf16.mxu0 %v9621
    %10617 = vmatmul.mubr.bf16.gmra.mrb[0].mxu0 %v9620
    %v10618 = vpop.f32.mrb[0].mxu0
    %v10619 = vadd.f32 %v10390, %v10618
    %v10620 = vpop.f32.mrb[0].mxu0
    %v10621 = vpop.f32.mrb[0].mxu0
    %v10622 = vpop.f32.mrb[0].mxu0
    %10623 = vdwg.mxu0
    %10624 = vmatprep.subr.bf16.mxu0 0
    %10625 = vmatpush1.bf16.msra.mxu0 %v10536
    %10626 = vmatprep.subr.bf16.mxu0 0
    %10627 = vmatpush1.bf16.msra.mxu0 %v10537
    %10628 = vmatprep.subr.bf16.mxu0 0
    %10629 = vmatpush1.bf16.msra.mxu0 %v10538
    %10630 = vmatprep.subr.bf16.mxu0 0
    %10631 = vmatpush1.bf16.msra.mxu0 %v10539
    %10632 = vmatprep.subr.bf16.mxu0 0
    %10633 = vmatpush1.bf16.msra.mxu0 %v10540
    %10634 = vmatprep.subr.bf16.mxu0 0
    %10635 = vmatpush1.bf16.msra.mxu0 %v10541
    %10636 = vmatprep.subr.bf16.mxu0 0
    %10637 = vmatpush1.bf16.msra.mxu0 %v10542
    %10638 = vmatprep.subr.bf16.mxu0 0
    %10639 = vmatpush1.bf16.msra.mxu0 %v10543
    %10640 = vmatprep.subr.bf16.mxu0 0
    %10641 = vmatpush1.bf16.msra.mxu0 %v10544
    %10642 = vmatprep.subr.bf16.mxu0 0
    %10643 = vmatpush1.bf16.msra.mxu0 %v10545
    %10644 = vmatprep.subr.bf16.mxu0 0
    %10645 = vmatpush1.bf16.msra.mxu0 %v10546
    %10646 = vmatprep.subr.bf16.mxu0 0
    %10647 = vmatpush1.bf16.msra.mxu0 %v10547
    %10648 = vmatprep.subr.bf16.mxu0 0
    %10649 = vmatpush1.bf16.msra.mxu0 %v10548
    %10650 = vmatprep.subr.bf16.mxu0 0
    %10651 = vmatpush1.bf16.msra.mxu0 %v10549
    %10652 = vmatprep.subr.bf16.mxu0 0
    %10653 = vmatpush1.bf16.msra.mxu0 %v10550
    %10654 = vmatprep.subr.bf16.mxu0 0
    %10655 = vmatpush1.bf16.msra.mxu0 %v10551
    %10656 = vmatprep.mubr.bf16.mxu0 %v9623
    %10657 = vmatmul.mubr.bf16.gmra.mrb[0].mxu0 %v9622
    %v10658 = vpop.f32.mrb[0].mxu0
    %v10659 = vadd.f32 %v10619, %v10658
    %v10660 = vpop.f32.mrb[0].mxu0
    %v10661 = vpop.f32.mrb[0].mxu0
    %v10662 = vpop.f32.mrb[0].mxu0
    %10663 = vdwg.mxu0
    %10664 = vst [vmem:[%s9 + $0x4] sm:$0x3] %v10659
    // Predicated region
    $region70: #{object_detection_forward.1} parent=1 // pred_check
      _
    $region71: #{object_detection_forward.1} parent=1 // pred_check_branch
      %10666 = sbr.rel (0) target = $region73
    $region72: #{object_detection_forward.1} parent=1 // pred_region
      _
    $region73: #{object_detection_forward.1} parent=1 // pred_fallthru
      _
    // Predicated region
    $region74: #{object_detection_forward.1} parent=1 // pred_check
      _
    $region75: #{object_detection_forward.1} parent=1 // pred_check_branch
      %10668 = sbr.rel (0) target = $region77
    $region76: #{object_detection_forward.1} parent=1 // pred_region
      _
    $region77: #{object_detection_forward.1} parent=1 // pred_fallthru
      _
    %10669 = vsyncpa [#allocation3], 1
    %10670 = vsyncpa [#allocation5], 1
    %10671 = vsyncpa [#allocation8], 1
    %10672 = vsyncpa [#allocation11], 1
    %10673 = vsyncpa [#allocation14], 1

</llo_original>
